<compile_context>
chip_gen: v7x
topology: tpu7x:2x2x1
jax: 0.10.0
libtpu: 0.0.40
codegen_flags: <defaults>
</compile_context>

<pallas_src>
import numpy as np
import jax
import jax.numpy as jnp
from jax.experimental import pallas as pl
from jax.experimental.pallas import tpu as pltpu

D_MODEL = 64
NHEAD = 8
HEAD_DIM = D_MODEL // NHEAD
NUM_LAYERS = 2
DIM_FF = 128
NUM_CLASSES = 1
LN_EPS = 1e-5
OUT_LANES = 128          # lane-dense output width; real logit lives in column 0


def _layernorm(x, gamma, beta):
    mu = jnp.mean(x, axis=-1, keepdims=True)
    xc = x - mu
    var = jnp.mean(xc * xc, axis=-1, keepdims=True)
    return xc * jax.lax.rsqrt(var + LN_EPS) * gamma + beta


def eeg_transformer_kernel(
    x_ref,        # (TB*S, 1)   input samples, row-major (b, s)
    pe_ref,       # (S, D)      sinusoidal positional encoding
    hv_ref,       # (8, 128)    head slab: emb_w / emb_b / fc1_b / fc2_b (padded)
    vec_ref,      # (L, 8, 3D)  per-layer slab: bqkv / bo / b1 / b2 / ln1_g,b / ln2_g,b
    wqkv_ref,     # (L, D, 3D)  fused Q|K|V projection weights
    wo_ref,       # (L, D, D)
    w1_ref,       # (L, D, F)
    w2_ref,       # (L, F, D)
    fc1_w_ref,    # (D, 64)
    fc2_w_ref,    # (64, 128)   real weights in the first NUM_CLASSES columns
    out_ref,      # (TB, 128)   lane-dense output block
):
    S, D = pe_ref.shape
    N = x_ref.shape[0]
    TB = N // S
    scale = 1.0 / np.sqrt(HEAD_DIM)

    hv = hv_ref[...]
    emb_w = hv[0:1, :D]
    emb_b = hv[1:2, :D]
    fc1_b = hv[2:3, :64]
    fc2_b = hv[3:4, :]

    # --- embedding: nn.Linear(1, d_model) == scalar * weight row + bias ---
    h = x_ref[...] * emb_w + emb_b                              # (N, D)

    # --- positional encoding (dropout == identity) ---
    h = (h.reshape(TB, S, D) + pe_ref[...]).reshape(N, D)

    for l in range(NUM_LAYERS):
        vec = vec_ref[l]                                        # (8, 3D)
        bqkv = vec[0:1, :]
        bo = vec[1:2, :D]
        b1 = vec[2:3, :DIM_FF]
        b2 = vec[3:4, :D]
        ln1_g, ln1_b = vec[4:5, :D], vec[5:6, :D]
        ln2_g, ln2_b = vec[6:7, :D], vec[7:8, :D]

        # --- fused QKV projection: single (N,D)@(D,3D) matmul ---
        qkv = jnp.dot(h, wqkv_ref[l], preferred_element_type=jnp.float32) + bqkv
        q = qkv[:, 0 * D:1 * D].reshape(TB, S, D)
        k = qkv[:, 1 * D:2 * D].reshape(TB, S, D)
        v = qkv[:, 2 * D:3 * D].reshape(TB, S, D)

        # --- attention: batched over the batch tile; per-head score matrices
        #     stacked along the sublane axis -> ONE softmax for all heads ---
        scores = jnp.concatenate(
            [jnp.einsum('bqd,bkd->bqk',
                        q[:, :, hh * HEAD_DIM:(hh + 1) * HEAD_DIM],
                        k[:, :, hh * HEAD_DIM:(hh + 1) * HEAD_DIM],
                        preferred_element_type=jnp.float32)
             for hh in range(NHEAD)],
            axis=1) * scale                                     # (TB, H*S, S)
        scores = scores - jnp.max(scores, axis=-1, keepdims=True)
        p = jnp.exp(scores)
        p = p * pl.reciprocal(jnp.sum(p, axis=-1, keepdims=True), approx=True)

        attn = jnp.concatenate(
            [jnp.einsum('bqk,bkd->bqd',
                        p[:, hh * S:(hh + 1) * S, :],
                        v[:, :, hh * HEAD_DIM:(hh + 1) * HEAD_DIM],
                        preferred_element_type=jnp.float32)
             for hh in range(NHEAD)],
            axis=-1).reshape(N, D)                              # (N, D)
        attn = jnp.dot(attn, wo_ref[l], preferred_element_type=jnp.float32) + bo

        # residual + LayerNorm 1 (post-norm)
        h = _layernorm(h + attn, ln1_g, ln1_b)

        # --- feed-forward (ReLU) ---
        ff = jnp.dot(h, w1_ref[l], preferred_element_type=jnp.float32) + b1
        ff = jnp.maximum(ff, 0.0)
        ff = jnp.dot(ff, w2_ref[l], preferred_element_type=jnp.float32) + b2

        # residual + LayerNorm 2
        h = _layernorm(h + ff, ln2_g, ln2_b)

    # --- mean over the sequence dimension ---
    pooled = jnp.mean(h.reshape(TB, S, D), axis=1)              # (TB, D)

    # --- classification head (dropout == identity) ---
    z = jnp.dot(pooled, fc1_w_ref[...], preferred_element_type=jnp.float32) + fc1_b
    z = jnp.maximum(z, 0.0)
    out = jnp.dot(z, fc2_w_ref[...], preferred_element_type=jnp.float32) + fc2_b
    out_ref[...] = out                                          # lane-dense store


def make_params(key, input_dim):
    """Deterministic parameter init, packed into the consolidated slabs."""
    ks = jax.random.split(key, 16)
    ki = iter(ks)

    def rnd(shape, scale=0.1):
        return (scale * jax.random.normal(next(ki), shape)).astype(jnp.float32)

    D, L, F, S = D_MODEL, NUM_LAYERS, DIM_FF, input_dim
    W3 = 3 * D

    # sinusoidal positional encoding (S, D)
    position = np.arange(S, dtype=np.float32)[:, None]
    div_term = np.exp(np.arange(0, D, 2, dtype=np.float32) * (-np.log(10000.0) / D))
    pe = np.zeros((S, D), dtype=np.float32)
    pe[:, 0::2] = np.sin(position * div_term)
    pe[:, 1::2] = np.cos(position * div_term)

    # fused per-layer matrix weights (apply-ready (in, out) layout)
    wqkv = rnd((L, D, W3))
    wo = rnd((L, D, D))
    w1 = rnd((L, D, F))
    w2 = rnd((L, F, D))

    # per-layer vector params packed into one (L, 8, 3D) slab
    def row(v):  # (L, w) -> (L, 1, 3D)
        return jnp.pad(v, ((0, 0), (0, W3 - v.shape[-1])))[:, None, :]

    bqkv = rnd((L, W3))
    bo = rnd((L, D))
    b1 = rnd((L, F))
    b2 = rnd((L, D))
    ones = jnp.ones((L, D), jnp.float32)
    zeros = jnp.zeros((L, D), jnp.float32)
    layer_vec = jnp.concatenate(
        [row(bqkv), row(bo), row(b1), row(b2),
         row(ones), row(zeros), row(ones), row(zeros)], axis=1)   # (L, 8, 3D)

    # head-side vectors packed into one (8, 128) slab
    def hrow(v):  # (1, w) -> (1, 128)
        return jnp.pad(v, ((0, 0), (0, 128 - v.shape[-1])))

    emb_w = rnd((1, D))
    emb_b = rnd((1, D))
    fc1_b = rnd((1, 64))
    fc2_b = rnd((1, NUM_CLASSES))
    head_vec = jnp.concatenate(
        [hrow(emb_w), hrow(emb_b), hrow(fc1_b), hrow(fc2_b),
         jnp.zeros((4, 128), jnp.float32)], axis=0)               # (8, 128)

    fc1_w = rnd((D, 64))
    fc2_w = jnp.pad(rnd((64, NUM_CLASSES)),
                    ((0, 0), (0, OUT_LANES - NUM_CLASSES)))       # (64, 128)

    return dict(pe=jnp.asarray(pe), head_vec=head_vec, layer_vec=layer_vec,
                wqkv=wqkv, wo=wo, w1=w1, w2=w2, fc1_w=fc1_w, fc2_w=fc2_w)


def eeg_transformer_forward(x, params, *, batch_tile=None):
    B, S = x.shape
    if batch_tile is None:
        # batch-tile must be a multiple of 8 (sublane) or the full batch
        batch_tile = 8 if (B % 8 == 0) else B
    assert B % batch_tile == 0
    assert batch_tile == B or batch_tile % 8 == 0
    TB = batch_tile
    nb = B // TB
    L, D, F = NUM_LAYERS, D_MODEL, DIM_FF

    x_flat = x.reshape(B * S, 1).astype(jnp.float32)

    in_specs = [
        pl.BlockSpec((TB * S, 1), lambda b: (b, 0)),              # x (row-major b,s)
        pl.BlockSpec((S, D), lambda b: (0, 0)),                   # pe
        pl.BlockSpec((8, 128), lambda b: (0, 0)),                 # head slab
        pl.BlockSpec((L, 8, 3 * D), lambda b: (0, 0, 0)),         # per-layer slab
        pl.BlockSpec((L, D, 3 * D), lambda b: (0, 0, 0)),         # wqkv
        pl.BlockSpec((L, D, D), lambda b: (0, 0, 0)),             # wo
        pl.BlockSpec((L, D, F), lambda b: (0, 0, 0)),             # w1
        pl.BlockSpec((L, F, D), lambda b: (0, 0, 0)),             # w2
        pl.BlockSpec((D, 64), lambda b: (0, 0)),                  # fc1_w
        pl.BlockSpec((64, OUT_LANES), lambda b: (0, 0)),          # fc2_w (padded)
    ]
    out_specs = pl.BlockSpec((TB, OUT_LANES), lambda b: (b, 0))

    out = pl.pallas_call(
        eeg_transformer_kernel,
        out_shape=jax.ShapeDtypeStruct((B, OUT_LANES), jnp.float32),
        grid=(nb,),
        in_specs=in_specs,
        out_specs=out_specs,
        compiler_params=pltpu.CompilerParams(
            dimension_semantics=("parallel",)),
    )(x_flat, params["pe"], params["head_vec"], params["layer_vec"],
      params["wqkv"], params["wo"], params["w1"], params["w2"],
      params["fc1_w"], params["fc2_w"])
    return out[:, :NUM_CLASSES]


if __name__ == "__main__":
    batch = 2
    input_dim = 8          # sequence length after x.unsqueeze(2)

    key = jax.random.PRNGKey(0)
    kx, kp = jax.random.split(key)
    x = jax.random.normal(kx, (batch, input_dim), dtype=jnp.float32)
    params = make_params(kp, input_dim)

    out = eeg_transformer_forward(x, params)
    out = jax.block_until_ready(out)

    assert out.shape == (batch, NUM_CLASSES), out.shape
    assert bool(jnp.all(jnp.isfinite(out)))
    print("KERNEL_OK")
</pallas_src>

<mosaic_0001>
module attributes {stable_mosaic.version = 11 : i64} {
  func.func @eeg_transformer_kernel(%arg0: i32, %arg1: memref<16x1xf32, #tpu.memory_space<vmem>>, %arg2: memref<8x64xf32, #tpu.memory_space<vmem>>, %arg3: memref<8x128xf32, #tpu.memory_space<vmem>>, %arg4: memref<2x8x192xf32, #tpu.memory_space<vmem>>, %arg5: memref<2x64x192xf32, #tpu.memory_space<vmem>>, %arg6: memref<2x64x64xf32, #tpu.memory_space<vmem>>, %arg7: memref<2x64x128xf32, #tpu.memory_space<vmem>>, %arg8: memref<2x128x64xf32, #tpu.memory_space<vmem>>, %arg9: memref<64x64xf32, #tpu.memory_space<vmem>>, %arg10: memref<64x128xf32, #tpu.memory_space<vmem>>, %arg11: memref<2x128xf32, #tpu.memory_space<vmem>>) attributes {dimension_semantics = [#tpu.dimension_semantics<parallel>], iteration_bounds = array<i64: 1>, scalar_prefetch = 0 : i64, scratch_operands = 0 : i64, tpu.core_type = #tpu.core_type<tc>, window_params = [{transform_indices = @transform_0, window_bounds = array<i64: 16, 1>}, {pipeline_mode = #tpu.pipeline_mode<synchronous>, transform_indices = @transform_1, window_bounds = array<i64: 8, 64>}, {pipeline_mode = #tpu.pipeline_mode<synchronous>, transform_indices = @transform_2, window_bounds = array<i64: 8, 128>}, {pipeline_mode = #tpu.pipeline_mode<synchronous>, transform_indices = @transform_3, window_bounds = array<i64: 2, 8, 192>}, {pipeline_mode = #tpu.pipeline_mode<synchronous>, transform_indices = @transform_4, window_bounds = array<i64: 2, 64, 192>}, {pipeline_mode = #tpu.pipeline_mode<synchronous>, transform_indices = @transform_5, window_bounds = array<i64: 2, 64, 64>}, {pipeline_mode = #tpu.pipeline_mode<synchronous>, transform_indices = @transform_6, window_bounds = array<i64: 2, 64, 128>}, {pipeline_mode = #tpu.pipeline_mode<synchronous>, transform_indices = @transform_7, window_bounds = array<i64: 2, 128, 64>}, {pipeline_mode = #tpu.pipeline_mode<synchronous>, transform_indices = @transform_8, window_bounds = array<i64: 64, 64>}, {pipeline_mode = #tpu.pipeline_mode<synchronous>, transform_indices = @transform_9, window_bounds = array<i64: 64, 128>}, {transform_indices = @transform_10, window_bounds = array<i64: 2, 128>}]} {
    %c0 = arith.constant 0 : index
    %c0_0 = arith.constant 0 : index
    %0 = vector.load %arg3[%c0, %c0_0] : memref<8x128xf32, #tpu.memory_space<vmem>>, vector<8x128xf32>
    %1 = vector.extract_strided_slice %0 {offsets = [0, 0], sizes = [1, 64], strides = [1, 1]} : vector<8x128xf32> to vector<1x64xf32>
    %2 = vector.extract_strided_slice %0 {offsets = [1, 0], sizes = [1, 64], strides = [1, 1]} : vector<8x128xf32> to vector<1x64xf32>
    %3 = vector.extract_strided_slice %0 {offsets = [2, 0], sizes = [1, 64], strides = [1, 1]} : vector<8x128xf32> to vector<1x64xf32>
    %4 = vector.extract_strided_slice %0 {offsets = [3, 0], sizes = [1, 128], strides = [1, 1]} : vector<8x128xf32> to vector<1x128xf32>
    %c0_1 = arith.constant 0 : index
    %c0_2 = arith.constant 0 : index
    %5 = vector.load %arg1[%c0_1, %c0_2] : memref<16x1xf32, #tpu.memory_space<vmem>>, vector<16x1xf32>
    %6 = vector.broadcast %5 : vector<16x1xf32> to vector<16x64xf32>
    %7 = vector.broadcast %1 : vector<1x64xf32> to vector<16x64xf32>
    %8 = arith.mulf %6, %7 : vector<16x64xf32>
    %9 = vector.broadcast %2 : vector<1x64xf32> to vector<16x64xf32>
    %10 = arith.addf %8, %9 : vector<16x64xf32>
    %11 = vector.shape_cast %10 : vector<16x64xf32> to vector<2x8x64xf32>
    %c0_3 = arith.constant 0 : index
    %c0_4 = arith.constant 0 : index
    %12 = vector.load %arg2[%c0_3, %c0_4] : memref<8x64xf32, #tpu.memory_space<vmem>>, vector<8x64xf32>
    %13 = vector.shape_cast %12 : vector<8x64xf32> to vector<1x8x64xf32>
    %14 = vector.broadcast %13 : vector<1x8x64xf32> to vector<2x8x64xf32>
    %15 = arith.addf %11, %14 : vector<2x8x64xf32>
    %16 = vector.shape_cast %15 : vector<2x8x64xf32> to vector<16x64xf32>
    %c0_5 = arith.constant 0 : index
    %c0_6 = arith.constant 0 : index
    %c0_7 = arith.constant 0 : index
    %17 = vector.load %arg4[%c0_5, %c0_6, %c0_7] : memref<2x8x192xf32, #tpu.memory_space<vmem>>, vector<1x8x192xf32>
    %18 = vector.shape_cast %17 : vector<1x8x192xf32> to vector<8x192xf32>
    %19 = vector.extract_strided_slice %18 {offsets = [0, 0], sizes = [1, 192], strides = [1, 1]} : vector<8x192xf32> to vector<1x192xf32>
    %20 = vector.extract_strided_slice %18 {offsets = [1, 0], sizes = [1, 64], strides = [1, 1]} : vector<8x192xf32> to vector<1x64xf32>
    %21 = vector.extract_strided_slice %18 {offsets = [2, 0], sizes = [1, 128], strides = [1, 1]} : vector<8x192xf32> to vector<1x128xf32>
    %22 = vector.extract_strided_slice %18 {offsets = [3, 0], sizes = [1, 64], strides = [1, 1]} : vector<8x192xf32> to vector<1x64xf32>
    %23 = vector.extract_strided_slice %18 {offsets = [4, 0], sizes = [1, 64], strides = [1, 1]} : vector<8x192xf32> to vector<1x64xf32>
    %24 = vector.extract_strided_slice %18 {offsets = [5, 0], sizes = [1, 64], strides = [1, 1]} : vector<8x192xf32> to vector<1x64xf32>
    %25 = vector.extract_strided_slice %18 {offsets = [6, 0], sizes = [1, 64], strides = [1, 1]} : vector<8x192xf32> to vector<1x64xf32>
    %26 = vector.extract_strided_slice %18 {offsets = [7, 0], sizes = [1, 64], strides = [1, 1]} : vector<8x192xf32> to vector<1x64xf32>
    %c0_8 = arith.constant 0 : index
    %c0_9 = arith.constant 0 : index
    %c0_10 = arith.constant 0 : index
    %27 = vector.load %arg5[%c0_8, %c0_9, %c0_10] : memref<2x64x192xf32, #tpu.memory_space<vmem>>, vector<1x64x192xf32>
    %28 = vector.shape_cast %27 : vector<1x64x192xf32> to vector<64x192xf32>
    %cst = arith.constant dense<0.000000e+00> : vector<16x192xf32>
    %29 = tpu.matmul %16, %28, %cst {dimension_numbers = #tpu.dot_dimension_numbers<[1], [0], [0], [1], [0, 0, 1, 1], [], []>} : vector<16x64xf32>, vector<64x192xf32>, vector<16x192xf32> -> vector<16x192xf32>
    %30 = vector.broadcast %19 : vector<1x192xf32> to vector<16x192xf32>
    %31 = arith.addf %29, %30 : vector<16x192xf32>
    %32 = vector.extract_strided_slice %31 {offsets = [0, 0], sizes = [16, 64], strides = [1, 1]} : vector<16x192xf32> to vector<16x64xf32>
    %33 = vector.shape_cast %32 : vector<16x64xf32> to vector<2x8x64xf32>
    %34 = vector.extract_strided_slice %31 {offsets = [0, 64], sizes = [16, 64], strides = [1, 1]} : vector<16x192xf32> to vector<16x64xf32>
    %35 = vector.shape_cast %34 : vector<16x64xf32> to vector<2x8x64xf32>
    %36 = vector.extract_strided_slice %31 {offsets = [0, 128], sizes = [16, 64], strides = [1, 1]} : vector<16x192xf32> to vector<16x64xf32>
    %37 = vector.shape_cast %36 : vector<16x64xf32> to vector<2x8x64xf32>
    %38 = vector.extract_strided_slice %33 {offsets = [0, 0, 0], sizes = [2, 8, 8], strides = [1, 1, 1]} : vector<2x8x64xf32> to vector<2x8x8xf32>
    %39 = vector.extract_strided_slice %35 {offsets = [0, 0, 0], sizes = [2, 8, 8], strides = [1, 1, 1]} : vector<2x8x64xf32> to vector<2x8x8xf32>
    "tpu.trace_start"() <{level = 10 : i32, message = "bqd,bkd->bqk"}> : () -> ()
    %cst_11 = arith.constant dense<0.000000e+00> : vector<2x8x8xf32>
    %40 = tpu.matmul %38, %39, %cst_11 {dimension_numbers = #tpu.dot_dimension_numbers<[2], [2], [1], [1], [0, 0, 0, 1, 1, 1], [0], [0]>} : vector<2x8x8xf32>, vector<2x8x8xf32>, vector<2x8x8xf32> -> vector<2x8x8xf32>
    "tpu.trace_stop"() : () -> ()
    %41 = vector.extract_strided_slice %33 {offsets = [0, 0, 8], sizes = [2, 8, 8], strides = [1, 1, 1]} : vector<2x8x64xf32> to vector<2x8x8xf32>
    %42 = vector.extract_strided_slice %35 {offsets = [0, 0, 8], sizes = [2, 8, 8], strides = [1, 1, 1]} : vector<2x8x64xf32> to vector<2x8x8xf32>
    "tpu.trace_start"() <{level = 10 : i32, message = "bqd,bkd->bqk"}> : () -> ()
    %cst_12 = arith.constant dense<0.000000e+00> : vector<2x8x8xf32>
    %43 = tpu.matmul %41, %42, %cst_12 {dimension_numbers = #tpu.dot_dimension_numbers<[2], [2], [1], [1], [0, 0, 0, 1, 1, 1], [0], [0]>} : vector<2x8x8xf32>, vector<2x8x8xf32>, vector<2x8x8xf32> -> vector<2x8x8xf32>
    "tpu.trace_stop"() : () -> ()
    %44 = vector.extract_strided_slice %33 {offsets = [0, 0, 16], sizes = [2, 8, 8], strides = [1, 1, 1]} : vector<2x8x64xf32> to vector<2x8x8xf32>
    %45 = vector.extract_strided_slice %35 {offsets = [0, 0, 16], sizes = [2, 8, 8], strides = [1, 1, 1]} : vector<2x8x64xf32> to vector<2x8x8xf32>
    "tpu.trace_start"() <{level = 10 : i32, message = "bqd,bkd->bqk"}> : () -> ()
    %cst_13 = arith.constant dense<0.000000e+00> : vector<2x8x8xf32>
    %46 = tpu.matmul %44, %45, %cst_13 {dimension_numbers = #tpu.dot_dimension_numbers<[2], [2], [1], [1], [0, 0, 0, 1, 1, 1], [0], [0]>} : vector<2x8x8xf32>, vector<2x8x8xf32>, vector<2x8x8xf32> -> vector<2x8x8xf32>
    "tpu.trace_stop"() : () -> ()
    %47 = vector.extract_strided_slice %33 {offsets = [0, 0, 24], sizes = [2, 8, 8], strides = [1, 1, 1]} : vector<2x8x64xf32> to vector<2x8x8xf32>
    %48 = vector.extract_strided_slice %35 {offsets = [0, 0, 24], sizes = [2, 8, 8], strides = [1, 1, 1]} : vector<2x8x64xf32> to vector<2x8x8xf32>
    "tpu.trace_start"() <{level = 10 : i32, message = "bqd,bkd->bqk"}> : () -> ()
    %cst_14 = arith.constant dense<0.000000e+00> : vector<2x8x8xf32>
    %49 = tpu.matmul %47, %48, %cst_14 {dimension_numbers = #tpu.dot_dimension_numbers<[2], [2], [1], [1], [0, 0, 0, 1, 1, 1], [0], [0]>} : vector<2x8x8xf32>, vector<2x8x8xf32>, vector<2x8x8xf32> -> vector<2x8x8xf32>
    "tpu.trace_stop"() : () -> ()
    %50 = vector.extract_strided_slice %33 {offsets = [0, 0, 32], sizes = [2, 8, 8], strides = [1, 1, 1]} : vector<2x8x64xf32> to vector<2x8x8xf32>
    %51 = vector.extract_strided_slice %35 {offsets = [0, 0, 32], sizes = [2, 8, 8], strides = [1, 1, 1]} : vector<2x8x64xf32> to vector<2x8x8xf32>
    "tpu.trace_start"() <{level = 10 : i32, message = "bqd,bkd->bqk"}> : () -> ()
    %cst_15 = arith.constant dense<0.000000e+00> : vector<2x8x8xf32>
    %52 = tpu.matmul %50, %51, %cst_15 {dimension_numbers = #tpu.dot_dimension_numbers<[2], [2], [1], [1], [0, 0, 0, 1, 1, 1], [0], [0]>} : vector<2x8x8xf32>, vector<2x8x8xf32>, vector<2x8x8xf32> -> vector<2x8x8xf32>
    "tpu.trace_stop"() : () -> ()
    %53 = vector.extract_strided_slice %33 {offsets = [0, 0, 40], sizes = [2, 8, 8], strides = [1, 1, 1]} : vector<2x8x64xf32> to vector<2x8x8xf32>
    %54 = vector.extract_strided_slice %35 {offsets = [0, 0, 40], sizes = [2, 8, 8], strides = [1, 1, 1]} : vector<2x8x64xf32> to vector<2x8x8xf32>
    "tpu.trace_start"() <{level = 10 : i32, message = "bqd,bkd->bqk"}> : () -> ()
    %cst_16 = arith.constant dense<0.000000e+00> : vector<2x8x8xf32>
    %55 = tpu.matmul %53, %54, %cst_16 {dimension_numbers = #tpu.dot_dimension_numbers<[2], [2], [1], [1], [0, 0, 0, 1, 1, 1], [0], [0]>} : vector<2x8x8xf32>, vector<2x8x8xf32>, vector<2x8x8xf32> -> vector<2x8x8xf32>
    "tpu.trace_stop"() : () -> ()
    %56 = vector.extract_strided_slice %33 {offsets = [0, 0, 48], sizes = [2, 8, 8], strides = [1, 1, 1]} : vector<2x8x64xf32> to vector<2x8x8xf32>
    %57 = vector.extract_strided_slice %35 {offsets = [0, 0, 48], sizes = [2, 8, 8], strides = [1, 1, 1]} : vector<2x8x64xf32> to vector<2x8x8xf32>
    "tpu.trace_start"() <{level = 10 : i32, message = "bqd,bkd->bqk"}> : () -> ()
    %cst_17 = arith.constant dense<0.000000e+00> : vector<2x8x8xf32>
    %58 = tpu.matmul %56, %57, %cst_17 {dimension_numbers = #tpu.dot_dimension_numbers<[2], [2], [1], [1], [0, 0, 0, 1, 1, 1], [0], [0]>} : vector<2x8x8xf32>, vector<2x8x8xf32>, vector<2x8x8xf32> -> vector<2x8x8xf32>
    "tpu.trace_stop"() : () -> ()
    %59 = vector.extract_strided_slice %33 {offsets = [0, 0, 56], sizes = [2, 8, 8], strides = [1, 1, 1]} : vector<2x8x64xf32> to vector<2x8x8xf32>
    %60 = vector.extract_strided_slice %35 {offsets = [0, 0, 56], sizes = [2, 8, 8], strides = [1, 1, 1]} : vector<2x8x64xf32> to vector<2x8x8xf32>
    "tpu.trace_start"() <{level = 10 : i32, message = "bqd,bkd->bqk"}> : () -> ()
    %cst_18 = arith.constant dense<0.000000e+00> : vector<2x8x8xf32>
    %61 = tpu.matmul %59, %60, %cst_18 {dimension_numbers = #tpu.dot_dimension_numbers<[2], [2], [1], [1], [0, 0, 0, 1, 1, 1], [0], [0]>} : vector<2x8x8xf32>, vector<2x8x8xf32>, vector<2x8x8xf32> -> vector<2x8x8xf32>
    "tpu.trace_stop"() : () -> ()
    %62 = tpu.concatenate %40, %43, %46, %49, %52, %55, %58, %61 in 1 : vector<2x8x8xf32>, vector<2x8x8xf32>, vector<2x8x8xf32>, vector<2x8x8xf32>, vector<2x8x8xf32>, vector<2x8x8xf32>, vector<2x8x8xf32>, vector<2x8x8xf32> -> vector<2x64x8xf32>
    %cst_19 = arith.constant 0.353553385 : f32
    %63 = vector.broadcast %cst_19 : f32 to vector<2x64x8xf32>
    %64 = arith.mulf %62, %63 : vector<2x64x8xf32>
    %cst_20 = arith.constant dense<0xFF800000> : vector<2x64xf32>
    %65 = vector.multi_reduction <maximumf>, %64, %cst_20 [2] : vector<2x64x8xf32> to vector<2x64xf32>
    %66 = vector.shape_cast %65 : vector<2x64xf32> to vector<2x64x1xf32>
    %67 = vector.broadcast %66 : vector<2x64x1xf32> to vector<2x64x8xf32>
    %68 = arith.subf %64, %67 : vector<2x64x8xf32>
    %69 = math.exp %68 : vector<2x64x8xf32>
    %cst_21 = arith.constant dense<0.000000e+00> : vector<2x64xf32>
    %70 = vector.multi_reduction <add>, %69, %cst_21 [2] : vector<2x64x8xf32> to vector<2x64xf32>
    %71 = vector.shape_cast %70 : vector<2x64xf32> to vector<2x64x1xf32>
    %72 = tpu.reciprocal %71 {approx = true} : vector<2x64x1xf32> -> vector<2x64x1xf32>
    %73 = vector.broadcast %72 : vector<2x64x1xf32> to vector<2x64x8xf32>
    %74 = arith.mulf %69, %73 : vector<2x64x8xf32>
    %75 = vector.extract_strided_slice %74 {offsets = [0, 0, 0], sizes = [2, 8, 8], strides = [1, 1, 1]} : vector<2x64x8xf32> to vector<2x8x8xf32>
    %76 = vector.extract_strided_slice %37 {offsets = [0, 0, 0], sizes = [2, 8, 8], strides = [1, 1, 1]} : vector<2x8x64xf32> to vector<2x8x8xf32>
    "tpu.trace_start"() <{level = 10 : i32, message = "bqk,bkd->bqd"}> : () -> ()
    %cst_22 = arith.constant dense<0.000000e+00> : vector<2x8x8xf32>
    %77 = tpu.matmul %75, %76, %cst_22 {dimension_numbers = #tpu.dot_dimension_numbers<[2], [1], [1], [2], [0, 0, 0, 1, 1, 2], [0], [0]>} : vector<2x8x8xf32>, vector<2x8x8xf32>, vector<2x8x8xf32> -> vector<2x8x8xf32>
    "tpu.trace_stop"() : () -> ()
    %78 = vector.extract_strided_slice %74 {offsets = [0, 8, 0], sizes = [2, 8, 8], strides = [1, 1, 1]} : vector<2x64x8xf32> to vector<2x8x8xf32>
    %79 = vector.extract_strided_slice %37 {offsets = [0, 0, 8], sizes = [2, 8, 8], strides = [1, 1, 1]} : vector<2x8x64xf32> to vector<2x8x8xf32>
    "tpu.trace_start"() <{level = 10 : i32, message = "bqk,bkd->bqd"}> : () -> ()
    %cst_23 = arith.constant dense<0.000000e+00> : vector<2x8x8xf32>
    %80 = tpu.matmul %78, %79, %cst_23 {dimension_numbers = #tpu.dot_dimension_numbers<[2], [1], [1], [2], [0, 0, 0, 1, 1, 2], [0], [0]>} : vector<2x8x8xf32>, vector<2x8x8xf32>, vector<2x8x8xf32> -> vector<2x8x8xf32>
    "tpu.trace_stop"() : () -> ()
    %81 = vector.extract_strided_slice %74 {offsets = [0, 16, 0], sizes = [2, 8, 8], strides = [1, 1, 1]} : vector<2x64x8xf32> to vector<2x8x8xf32>
    %82 = vector.extract_strided_slice %37 {offsets = [0, 0, 16], sizes = [2, 8, 8], strides = [1, 1, 1]} : vector<2x8x64xf32> to vector<2x8x8xf32>
    "tpu.trace_start"() <{level = 10 : i32, message = "bqk,bkd->bqd"}> : () -> ()
    %cst_24 = arith.constant dense<0.000000e+00> : vector<2x8x8xf32>
    %83 = tpu.matmul %81, %82, %cst_24 {dimension_numbers = #tpu.dot_dimension_numbers<[2], [1], [1], [2], [0, 0, 0, 1, 1, 2], [0], [0]>} : vector<2x8x8xf32>, vector<2x8x8xf32>, vector<2x8x8xf32> -> vector<2x8x8xf32>
    "tpu.trace_stop"() : () -> ()
    %84 = vector.extract_strided_slice %74 {offsets = [0, 24, 0], sizes = [2, 8, 8], strides = [1, 1, 1]} : vector<2x64x8xf32> to vector<2x8x8xf32>
    %85 = vector.extract_strided_slice %37 {offsets = [0, 0, 24], sizes = [2, 8, 8], strides = [1, 1, 1]} : vector<2x8x64xf32> to vector<2x8x8xf32>
    "tpu.trace_start"() <{level = 10 : i32, message = "bqk,bkd->bqd"}> : () -> ()
    %cst_25 = arith.constant dense<0.000000e+00> : vector<2x8x8xf32>
    %86 = tpu.matmul %84, %85, %cst_25 {dimension_numbers = #tpu.dot_dimension_numbers<[2], [1], [1], [2], [0, 0, 0, 1, 1, 2], [0], [0]>} : vector<2x8x8xf32>, vector<2x8x8xf32>, vector<2x8x8xf32> -> vector<2x8x8xf32>
    "tpu.trace_stop"() : () -> ()
    %87 = vector.extract_strided_slice %74 {offsets = [0, 32, 0], sizes = [2, 8, 8], strides = [1, 1, 1]} : vector<2x64x8xf32> to vector<2x8x8xf32>
    %88 = vector.extract_strided_slice %37 {offsets = [0, 0, 32], sizes = [2, 8, 8], strides = [1, 1, 1]} : vector<2x8x64xf32> to vector<2x8x8xf32>
    "tpu.trace_start"() <{level = 10 : i32, message = "bqk,bkd->bqd"}> : () -> ()
    %cst_26 = arith.constant dense<0.000000e+00> : vector<2x8x8xf32>
    %89 = tpu.matmul %87, %88, %cst_26 {dimension_numbers = #tpu.dot_dimension_numbers<[2], [1], [1], [2], [0, 0, 0, 1, 1, 2], [0], [0]>} : vector<2x8x8xf32>, vector<2x8x8xf32>, vector<2x8x8xf32> -> vector<2x8x8xf32>
    "tpu.trace_stop"() : () -> ()
    %90 = vector.extract_strided_slice %74 {offsets = [0, 40, 0], sizes = [2, 8, 8], strides = [1, 1, 1]} : vector<2x64x8xf32> to vector<2x8x8xf32>
    %91 = vector.extract_strided_slice %37 {offsets = [0, 0, 40], sizes = [2, 8, 8], strides = [1, 1, 1]} : vector<2x8x64xf32> to vector<2x8x8xf32>
    "tpu.trace_start"() <{level = 10 : i32, message = "bqk,bkd->bqd"}> : () -> ()
    %cst_27 = arith.constant dense<0.000000e+00> : vector<2x8x8xf32>
    %92 = tpu.matmul %90, %91, %cst_27 {dimension_numbers = #tpu.dot_dimension_numbers<[2], [1], [1], [2], [0, 0, 0, 1, 1, 2], [0], [0]>} : vector<2x8x8xf32>, vector<2x8x8xf32>, vector<2x8x8xf32> -> vector<2x8x8xf32>
    "tpu.trace_stop"() : () -> ()
    %93 = vector.extract_strided_slice %74 {offsets = [0, 48, 0], sizes = [2, 8, 8], strides = [1, 1, 1]} : vector<2x64x8xf32> to vector<2x8x8xf32>
    %94 = vector.extract_strided_slice %37 {offsets = [0, 0, 48], sizes = [2, 8, 8], strides = [1, 1, 1]} : vector<2x8x64xf32> to vector<2x8x8xf32>
    "tpu.trace_start"() <{level = 10 : i32, message = "bqk,bkd->bqd"}> : () -> ()
    %cst_28 = arith.constant dense<0.000000e+00> : vector<2x8x8xf32>
    %95 = tpu.matmul %93, %94, %cst_28 {dimension_numbers = #tpu.dot_dimension_numbers<[2], [1], [1], [2], [0, 0, 0, 1, 1, 2], [0], [0]>} : vector<2x8x8xf32>, vector<2x8x8xf32>, vector<2x8x8xf32> -> vector<2x8x8xf32>
    "tpu.trace_stop"() : () -> ()
    %96 = vector.extract_strided_slice %74 {offsets = [0, 56, 0], sizes = [2, 8, 8], strides = [1, 1, 1]} : vector<2x64x8xf32> to vector<2x8x8xf32>
    %97 = vector.extract_strided_slice %37 {offsets = [0, 0, 56], sizes = [2, 8, 8], strides = [1, 1, 1]} : vector<2x8x64xf32> to vector<2x8x8xf32>
    "tpu.trace_start"() <{level = 10 : i32, message = "bqk,bkd->bqd"}> : () -> ()
    %cst_29 = arith.constant dense<0.000000e+00> : vector<2x8x8xf32>
    %98 = tpu.matmul %96, %97, %cst_29 {dimension_numbers = #tpu.dot_dimension_numbers<[2], [1], [1], [2], [0, 0, 0, 1, 1, 2], [0], [0]>} : vector<2x8x8xf32>, vector<2x8x8xf32>, vector<2x8x8xf32> -> vector<2x8x8xf32>
    "tpu.trace_stop"() : () -> ()
    %99 = tpu.concatenate %77, %80, %83, %86, %89, %92, %95, %98 in 2 : vector<2x8x8xf32>, vector<2x8x8xf32>, vector<2x8x8xf32>, vector<2x8x8xf32>, vector<2x8x8xf32>, vector<2x8x8xf32>, vector<2x8x8xf32>, vector<2x8x8xf32> -> vector<2x8x64xf32>
    %100 = vector.shape_cast %99 : vector<2x8x64xf32> to vector<16x64xf32>
    %c0_30 = arith.constant 0 : index
    %c0_31 = arith.constant 0 : index
    %c0_32 = arith.constant 0 : index
    %101 = vector.load %arg6[%c0_30, %c0_31, %c0_32] : memref<2x64x64xf32, #tpu.memory_space<vmem>>, vector<1x64x64xf32>
    %102 = vector.shape_cast %101 : vector<1x64x64xf32> to vector<64x64xf32>
    %cst_33 = arith.constant dense<0.000000e+00> : vector<16x64xf32>
    %103 = tpu.matmul %100, %102, %cst_33 {dimension_numbers = #tpu.dot_dimension_numbers<[1], [0], [0], [1], [0, 0, 1, 1], [], []>} : vector<16x64xf32>, vector<64x64xf32>, vector<16x64xf32> -> vector<16x64xf32>
    %104 = vector.broadcast %20 : vector<1x64xf32> to vector<16x64xf32>
    %105 = arith.addf %103, %104 : vector<16x64xf32>
    %106 = arith.addf %16, %105 : vector<16x64xf32>
    %cst_34 = arith.constant dense<0.000000e+00> : vector<16xf32>
    %107 = vector.multi_reduction <add>, %106, %cst_34 [1] : vector<16x64xf32> to vector<16xf32>
    %108 = vector.shape_cast %107 : vector<16xf32> to vector<16x1xf32>
    %cst_35 = arith.constant 6.400000e+01 : f32
    %109 = vector.broadcast %cst_35 : f32 to vector<16x1xf32>
    %110 = arith.divf %108, %109 : vector<16x1xf32>
    %111 = vector.broadcast %110 : vector<16x1xf32> to vector<16x64xf32>
    %112 = arith.subf %106, %111 : vector<16x64xf32>
    %113 = arith.mulf %112, %112 : vector<16x64xf32>
    %cst_36 = arith.constant dense<0.000000e+00> : vector<16xf32>
    %114 = vector.multi_reduction <add>, %113, %cst_36 [1] : vector<16x64xf32> to vector<16xf32>
    %115 = vector.shape_cast %114 : vector<16xf32> to vector<16x1xf32>
    %cst_37 = arith.constant 6.400000e+01 : f32
    %116 = vector.broadcast %cst_37 : f32 to vector<16x1xf32>
    %117 = arith.divf %115, %116 : vector<16x1xf32>
    %cst_38 = arith.constant 9.99999974E-6 : f32
    %118 = vector.broadcast %cst_38 : f32 to vector<16x1xf32>
    %119 = arith.addf %117, %118 : vector<16x1xf32>
    %120 = math.rsqrt %119 : vector<16x1xf32>
    %121 = vector.broadcast %120 : vector<16x1xf32> to vector<16x64xf32>
    %122 = arith.mulf %112, %121 : vector<16x64xf32>
    %123 = vector.broadcast %23 : vector<1x64xf32> to vector<16x64xf32>
    %124 = arith.mulf %122, %123 : vector<16x64xf32>
    %125 = vector.broadcast %24 : vector<1x64xf32> to vector<16x64xf32>
    %126 = arith.addf %124, %125 : vector<16x64xf32>
    %c0_39 = arith.constant 0 : index
    %c0_40 = arith.constant 0 : index
    %c0_41 = arith.constant 0 : index
    %127 = vector.load %arg7[%c0_39, %c0_40, %c0_41] : memref<2x64x128xf32, #tpu.memory_space<vmem>>, vector<1x64x128xf32>
    %128 = vector.shape_cast %127 : vector<1x64x128xf32> to vector<64x128xf32>
    %cst_42 = arith.constant dense<0.000000e+00> : vector<16x128xf32>
    %129 = tpu.matmul %126, %128, %cst_42 {dimension_numbers = #tpu.dot_dimension_numbers<[1], [0], [0], [1], [0, 0, 1, 1], [], []>} : vector<16x64xf32>, vector<64x128xf32>, vector<16x128xf32> -> vector<16x128xf32>
    %130 = vector.broadcast %21 : vector<1x128xf32> to vector<16x128xf32>
    %131 = arith.addf %129, %130 : vector<16x128xf32>
    %cst_43 = arith.constant 0.000000e+00 : f32
    %132 = vector.broadcast %cst_43 : f32 to vector<16x128xf32>
    %133 = arith.maximumf %131, %132 : vector<16x128xf32>
    %c0_44 = arith.constant 0 : index
    %c0_45 = arith.constant 0 : index
    %c0_46 = arith.constant 0 : index
    %134 = vector.load %arg8[%c0_44, %c0_45, %c0_46] : memref<2x128x64xf32, #tpu.memory_space<vmem>>, vector<1x128x64xf32>
    %135 = vector.shape_cast %134 : vector<1x128x64xf32> to vector<128x64xf32>
    %cst_47 = arith.constant dense<0.000000e+00> : vector<16x64xf32>
    %136 = tpu.matmul %133, %135, %cst_47 {dimension_numbers = #tpu.dot_dimension_numbers<[1], [0], [0], [1], [0, 0, 1, 1], [], []>} : vector<16x128xf32>, vector<128x64xf32>, vector<16x64xf32> -> vector<16x64xf32>
    %137 = vector.broadcast %22 : vector<1x64xf32> to vector<16x64xf32>
    %138 = arith.addf %136, %137 : vector<16x64xf32>
    %139 = arith.addf %126, %138 : vector<16x64xf32>
    %cst_48 = arith.constant dense<0.000000e+00> : vector<16xf32>
    %140 = vector.multi_reduction <add>, %139, %cst_48 [1] : vector<16x64xf32> to vector<16xf32>
    %141 = vector.shape_cast %140 : vector<16xf32> to vector<16x1xf32>
    %cst_49 = arith.constant 6.400000e+01 : f32
    %142 = vector.broadcast %cst_49 : f32 to vector<16x1xf32>
    %143 = arith.divf %141, %142 : vector<16x1xf32>
    %144 = vector.broadcast %143 : vector<16x1xf32> to vector<16x64xf32>
    %145 = arith.subf %139, %144 : vector<16x64xf32>
    %146 = arith.mulf %145, %145 : vector<16x64xf32>
    %cst_50 = arith.constant dense<0.000000e+00> : vector<16xf32>
    %147 = vector.multi_reduction <add>, %146, %cst_50 [1] : vector<16x64xf32> to vector<16xf32>
    %148 = vector.shape_cast %147 : vector<16xf32> to vector<16x1xf32>
    %cst_51 = arith.constant 6.400000e+01 : f32
    %149 = vector.broadcast %cst_51 : f32 to vector<16x1xf32>
    %150 = arith.divf %148, %149 : vector<16x1xf32>
    %cst_52 = arith.constant 9.99999974E-6 : f32
    %151 = vector.broadcast %cst_52 : f32 to vector<16x1xf32>
    %152 = arith.addf %150, %151 : vector<16x1xf32>
    %153 = math.rsqrt %152 : vector<16x1xf32>
    %154 = vector.broadcast %153 : vector<16x1xf32> to vector<16x64xf32>
    %155 = arith.mulf %145, %154 : vector<16x64xf32>
    %156 = vector.broadcast %25 : vector<1x64xf32> to vector<16x64xf32>
    %157 = arith.mulf %155, %156 : vector<16x64xf32>
    %158 = vector.broadcast %26 : vector<1x64xf32> to vector<16x64xf32>
    %159 = arith.addf %157, %158 : vector<16x64xf32>
    %c1 = arith.constant 1 : index
    %c0_53 = arith.constant 0 : index
    %c0_54 = arith.constant 0 : index
    %160 = vector.load %arg4[%c1, %c0_53, %c0_54] : memref<2x8x192xf32, #tpu.memory_space<vmem>>, vector<1x8x192xf32>
    %161 = vector.shape_cast %160 : vector<1x8x192xf32> to vector<8x192xf32>
    %162 = vector.extract_strided_slice %161 {offsets = [0, 0], sizes = [1, 192], strides = [1, 1]} : vector<8x192xf32> to vector<1x192xf32>
    %163 = vector.extract_strided_slice %161 {offsets = [1, 0], sizes = [1, 64], strides = [1, 1]} : vector<8x192xf32> to vector<1x64xf32>
    %164 = vector.extract_strided_slice %161 {offsets = [2, 0], sizes = [1, 128], strides = [1, 1]} : vector<8x192xf32> to vector<1x128xf32>
    %165 = vector.extract_strided_slice %161 {offsets = [3, 0], sizes = [1, 64], strides = [1, 1]} : vector<8x192xf32> to vector<1x64xf32>
    %166 = vector.extract_strided_slice %161 {offsets = [4, 0], sizes = [1, 64], strides = [1, 1]} : vector<8x192xf32> to vector<1x64xf32>
    %167 = vector.extract_strided_slice %161 {offsets = [5, 0], sizes = [1, 64], strides = [1, 1]} : vector<8x192xf32> to vector<1x64xf32>
    %168 = vector.extract_strided_slice %161 {offsets = [6, 0], sizes = [1, 64], strides = [1, 1]} : vector<8x192xf32> to vector<1x64xf32>
    %169 = vector.extract_strided_slice %161 {offsets = [7, 0], sizes = [1, 64], strides = [1, 1]} : vector<8x192xf32> to vector<1x64xf32>
    %c1_55 = arith.constant 1 : index
    %c0_56 = arith.constant 0 : index
    %c0_57 = arith.constant 0 : index
    %170 = vector.load %arg5[%c1_55, %c0_56, %c0_57] : memref<2x64x192xf32, #tpu.memory_space<vmem>>, vector<1x64x192xf32>
    %171 = vector.shape_cast %170 : vector<1x64x192xf32> to vector<64x192xf32>
    %cst_58 = arith.constant dense<0.000000e+00> : vector<16x192xf32>
    %172 = tpu.matmul %159, %171, %cst_58 {dimension_numbers = #tpu.dot_dimension_numbers<[1], [0], [0], [1], [0, 0, 1, 1], [], []>} : vector<16x64xf32>, vector<64x192xf32>, vector<16x192xf32> -> vector<16x192xf32>
    %173 = vector.broadcast %162 : vector<1x192xf32> to vector<16x192xf32>
    %174 = arith.addf %172, %173 : vector<16x192xf32>
    %175 = vector.extract_strided_slice %174 {offsets = [0, 0], sizes = [16, 64], strides = [1, 1]} : vector<16x192xf32> to vector<16x64xf32>
    %176 = vector.shape_cast %175 : vector<16x64xf32> to vector<2x8x64xf32>
    %177 = vector.extract_strided_slice %174 {offsets = [0, 64], sizes = [16, 64], strides = [1, 1]} : vector<16x192xf32> to vector<16x64xf32>
    %178 = vector.shape_cast %177 : vector<16x64xf32> to vector<2x8x64xf32>
    %179 = vector.extract_strided_slice %174 {offsets = [0, 128], sizes = [16, 64], strides = [1, 1]} : vector<16x192xf32> to vector<16x64xf32>
    %180 = vector.shape_cast %179 : vector<16x64xf32> to vector<2x8x64xf32>
    %181 = vector.extract_strided_slice %176 {offsets = [0, 0, 0], sizes = [2, 8, 8], strides = [1, 1, 1]} : vector<2x8x64xf32> to vector<2x8x8xf32>
    %182 = vector.extract_strided_slice %178 {offsets = [0, 0, 0], sizes = [2, 8, 8], strides = [1, 1, 1]} : vector<2x8x64xf32> to vector<2x8x8xf32>
    "tpu.trace_start"() <{level = 10 : i32, message = "bqd,bkd->bqk"}> : () -> ()
    %cst_59 = arith.constant dense<0.000000e+00> : vector<2x8x8xf32>
    %183 = tpu.matmul %181, %182, %cst_59 {dimension_numbers = #tpu.dot_dimension_numbers<[2], [2], [1], [1], [0, 0, 0, 1, 1, 1], [0], [0]>} : vector<2x8x8xf32>, vector<2x8x8xf32>, vector<2x8x8xf32> -> vector<2x8x8xf32>
    "tpu.trace_stop"() : () -> ()
    %184 = vector.extract_strided_slice %176 {offsets = [0, 0, 8], sizes = [2, 8, 8], strides = [1, 1, 1]} : vector<2x8x64xf32> to vector<2x8x8xf32>
    %185 = vector.extract_strided_slice %178 {offsets = [0, 0, 8], sizes = [2, 8, 8], strides = [1, 1, 1]} : vector<2x8x64xf32> to vector<2x8x8xf32>
    "tpu.trace_start"() <{level = 10 : i32, message = "bqd,bkd->bqk"}> : () -> ()
    %cst_60 = arith.constant dense<0.000000e+00> : vector<2x8x8xf32>
    %186 = tpu.matmul %184, %185, %cst_60 {dimension_numbers = #tpu.dot_dimension_numbers<[2], [2], [1], [1], [0, 0, 0, 1, 1, 1], [0], [0]>} : vector<2x8x8xf32>, vector<2x8x8xf32>, vector<2x8x8xf32> -> vector<2x8x8xf32>
    "tpu.trace_stop"() : () -> ()
    %187 = vector.extract_strided_slice %176 {offsets = [0, 0, 16], sizes = [2, 8, 8], strides = [1, 1, 1]} : vector<2x8x64xf32> to vector<2x8x8xf32>
    %188 = vector.extract_strided_slice %178 {offsets = [0, 0, 16], sizes = [2, 8, 8], strides = [1, 1, 1]} : vector<2x8x64xf32> to vector<2x8x8xf32>
    "tpu.trace_start"() <{level = 10 : i32, message = "bqd,bkd->bqk"}> : () -> ()
    %cst_61 = arith.constant dense<0.000000e+00> : vector<2x8x8xf32>
    %189 = tpu.matmul %187, %188, %cst_61 {dimension_numbers = #tpu.dot_dimension_numbers<[2], [2], [1], [1], [0, 0, 0, 1, 1, 1], [0], [0]>} : vector<2x8x8xf32>, vector<2x8x8xf32>, vector<2x8x8xf32> -> vector<2x8x8xf32>
    "tpu.trace_stop"() : () -> ()
    %190 = vector.extract_strided_slice %176 {offsets = [0, 0, 24], sizes = [2, 8, 8], strides = [1, 1, 1]} : vector<2x8x64xf32> to vector<2x8x8xf32>
    %191 = vector.extract_strided_slice %178 {offsets = [0, 0, 24], sizes = [2, 8, 8], strides = [1, 1, 1]} : vector<2x8x64xf32> to vector<2x8x8xf32>
    "tpu.trace_start"() <{level = 10 : i32, message = "bqd,bkd->bqk"}> : () -> ()
    %cst_62 = arith.constant dense<0.000000e+00> : vector<2x8x8xf32>
    %192 = tpu.matmul %190, %191, %cst_62 {dimension_numbers = #tpu.dot_dimension_numbers<[2], [2], [1], [1], [0, 0, 0, 1, 1, 1], [0], [0]>} : vector<2x8x8xf32>, vector<2x8x8xf32>, vector<2x8x8xf32> -> vector<2x8x8xf32>
    "tpu.trace_stop"() : () -> ()
    %193 = vector.extract_strided_slice %176 {offsets = [0, 0, 32], sizes = [2, 8, 8], strides = [1, 1, 1]} : vector<2x8x64xf32> to vector<2x8x8xf32>
    %194 = vector.extract_strided_slice %178 {offsets = [0, 0, 32], sizes = [2, 8, 8], strides = [1, 1, 1]} : vector<2x8x64xf32> to vector<2x8x8xf32>
    "tpu.trace_start"() <{level = 10 : i32, message = "bqd,bkd->bqk"}> : () -> ()
    %cst_63 = arith.constant dense<0.000000e+00> : vector<2x8x8xf32>
    %195 = tpu.matmul %193, %194, %cst_63 {dimension_numbers = #tpu.dot_dimension_numbers<[2], [2], [1], [1], [0, 0, 0, 1, 1, 1], [0], [0]>} : vector<2x8x8xf32>, vector<2x8x8xf32>, vector<2x8x8xf32> -> vector<2x8x8xf32>
    "tpu.trace_stop"() : () -> ()
    %196 = vector.extract_strided_slice %176 {offsets = [0, 0, 40], sizes = [2, 8, 8], strides = [1, 1, 1]} : vector<2x8x64xf32> to vector<2x8x8xf32>
    %197 = vector.extract_strided_slice %178 {offsets = [0, 0, 40], sizes = [2, 8, 8], strides = [1, 1, 1]} : vector<2x8x64xf32> to vector<2x8x8xf32>
    "tpu.trace_start"() <{level = 10 : i32, message = "bqd,bkd->bqk"}> : () -> ()
    %cst_64 = arith.constant dense<0.000000e+00> : vector<2x8x8xf32>
    %198 = tpu.matmul %196, %197, %cst_64 {dimension_numbers = #tpu.dot_dimension_numbers<[2], [2], [1], [1], [0, 0, 0, 1, 1, 1], [0], [0]>} : vector<2x8x8xf32>, vector<2x8x8xf32>, vector<2x8x8xf32> -> vector<2x8x8xf32>
    "tpu.trace_stop"() : () -> ()
    %199 = vector.extract_strided_slice %176 {offsets = [0, 0, 48], sizes = [2, 8, 8], strides = [1, 1, 1]} : vector<2x8x64xf32> to vector<2x8x8xf32>
    %200 = vector.extract_strided_slice %178 {offsets = [0, 0, 48], sizes = [2, 8, 8], strides = [1, 1, 1]} : vector<2x8x64xf32> to vector<2x8x8xf32>
    "tpu.trace_start"() <{level = 10 : i32, message = "bqd,bkd->bqk"}> : () -> ()
    %cst_65 = arith.constant dense<0.000000e+00> : vector<2x8x8xf32>
    %201 = tpu.matmul %199, %200, %cst_65 {dimension_numbers = #tpu.dot_dimension_numbers<[2], [2], [1], [1], [0, 0, 0, 1, 1, 1], [0], [0]>} : vector<2x8x8xf32>, vector<2x8x8xf32>, vector<2x8x8xf32> -> vector<2x8x8xf32>
    "tpu.trace_stop"() : () -> ()
    %202 = vector.extract_strided_slice %176 {offsets = [0, 0, 56], sizes = [2, 8, 8], strides = [1, 1, 1]} : vector<2x8x64xf32> to vector<2x8x8xf32>
    %203 = vector.extract_strided_slice %178 {offsets = [0, 0, 56], sizes = [2, 8, 8], strides = [1, 1, 1]} : vector<2x8x64xf32> to vector<2x8x8xf32>
    "tpu.trace_start"() <{level = 10 : i32, message = "bqd,bkd->bqk"}> : () -> ()
    %cst_66 = arith.constant dense<0.000000e+00> : vector<2x8x8xf32>
    %204 = tpu.matmul %202, %203, %cst_66 {dimension_numbers = #tpu.dot_dimension_numbers<[2], [2], [1], [1], [0, 0, 0, 1, 1, 1], [0], [0]>} : vector<2x8x8xf32>, vector<2x8x8xf32>, vector<2x8x8xf32> -> vector<2x8x8xf32>
    "tpu.trace_stop"() : () -> ()
    %205 = tpu.concatenate %183, %186, %189, %192, %195, %198, %201, %204 in 1 : vector<2x8x8xf32>, vector<2x8x8xf32>, vector<2x8x8xf32>, vector<2x8x8xf32>, vector<2x8x8xf32>, vector<2x8x8xf32>, vector<2x8x8xf32>, vector<2x8x8xf32> -> vector<2x64x8xf32>
    %cst_67 = arith.constant 0.353553385 : f32
    %206 = vector.broadcast %cst_67 : f32 to vector<2x64x8xf32>
    %207 = arith.mulf %205, %206 : vector<2x64x8xf32>
    %cst_68 = arith.constant dense<0xFF800000> : vector<2x64xf32>
    %208 = vector.multi_reduction <maximumf>, %207, %cst_68 [2] : vector<2x64x8xf32> to vector<2x64xf32>
    %209 = vector.shape_cast %208 : vector<2x64xf32> to vector<2x64x1xf32>
    %210 = vector.broadcast %209 : vector<2x64x1xf32> to vector<2x64x8xf32>
    %211 = arith.subf %207, %210 : vector<2x64x8xf32>
    %212 = math.exp %211 : vector<2x64x8xf32>
    %cst_69 = arith.constant dense<0.000000e+00> : vector<2x64xf32>
    %213 = vector.multi_reduction <add>, %212, %cst_69 [2] : vector<2x64x8xf32> to vector<2x64xf32>
    %214 = vector.shape_cast %213 : vector<2x64xf32> to vector<2x64x1xf32>
    %215 = tpu.reciprocal %214 {approx = true} : vector<2x64x1xf32> -> vector<2x64x1xf32>
    %216 = vector.broadcast %215 : vector<2x64x1xf32> to vector<2x64x8xf32>
    %217 = arith.mulf %212, %216 : vector<2x64x8xf32>
    %218 = vector.extract_strided_slice %217 {offsets = [0, 0, 0], sizes = [2, 8, 8], strides = [1, 1, 1]} : vector<2x64x8xf32> to vector<2x8x8xf32>
    %219 = vector.extract_strided_slice %180 {offsets = [0, 0, 0], sizes = [2, 8, 8], strides = [1, 1, 1]} : vector<2x8x64xf32> to vector<2x8x8xf32>
    "tpu.trace_start"() <{level = 10 : i32, message = "bqk,bkd->bqd"}> : () -> ()
    %cst_70 = arith.constant dense<0.000000e+00> : vector<2x8x8xf32>
    %220 = tpu.matmul %218, %219, %cst_70 {dimension_numbers = #tpu.dot_dimension_numbers<[2], [1], [1], [2], [0, 0, 0, 1, 1, 2], [0], [0]>} : vector<2x8x8xf32>, vector<2x8x8xf32>, vector<2x8x8xf32> -> vector<2x8x8xf32>
    "tpu.trace_stop"() : () -> ()
    %221 = vector.extract_strided_slice %217 {offsets = [0, 8, 0], sizes = [2, 8, 8], strides = [1, 1, 1]} : vector<2x64x8xf32> to vector<2x8x8xf32>
    %222 = vector.extract_strided_slice %180 {offsets = [0, 0, 8], sizes = [2, 8, 8], strides = [1, 1, 1]} : vector<2x8x64xf32> to vector<2x8x8xf32>
    "tpu.trace_start"() <{level = 10 : i32, message = "bqk,bkd->bqd"}> : () -> ()
    %cst_71 = arith.constant dense<0.000000e+00> : vector<2x8x8xf32>
    %223 = tpu.matmul %221, %222, %cst_71 {dimension_numbers = #tpu.dot_dimension_numbers<[2], [1], [1], [2], [0, 0, 0, 1, 1, 2], [0], [0]>} : vector<2x8x8xf32>, vector<2x8x8xf32>, vector<2x8x8xf32> -> vector<2x8x8xf32>
    "tpu.trace_stop"() : () -> ()
    %224 = vector.extract_strided_slice %217 {offsets = [0, 16, 0], sizes = [2, 8, 8], strides = [1, 1, 1]} : vector<2x64x8xf32> to vector<2x8x8xf32>
    %225 = vector.extract_strided_slice %180 {offsets = [0, 0, 16], sizes = [2, 8, 8], strides = [1, 1, 1]} : vector<2x8x64xf32> to vector<2x8x8xf32>
    "tpu.trace_start"() <{level = 10 : i32, message = "bqk,bkd->bqd"}> : () -> ()
    %cst_72 = arith.constant dense<0.000000e+00> : vector<2x8x8xf32>
    %226 = tpu.matmul %224, %225, %cst_72 {dimension_numbers = #tpu.dot_dimension_numbers<[2], [1], [1], [2], [0, 0, 0, 1, 1, 2], [0], [0]>} : vector<2x8x8xf32>, vector<2x8x8xf32>, vector<2x8x8xf32> -> vector<2x8x8xf32>
    "tpu.trace_stop"() : () -> ()
    %227 = vector.extract_strided_slice %217 {offsets = [0, 24, 0], sizes = [2, 8, 8], strides = [1, 1, 1]} : vector<2x64x8xf32> to vector<2x8x8xf32>
    %228 = vector.extract_strided_slice %180 {offsets = [0, 0, 24], sizes = [2, 8, 8], strides = [1, 1, 1]} : vector<2x8x64xf32> to vector<2x8x8xf32>
    "tpu.trace_start"() <{level = 10 : i32, message = "bqk,bkd->bqd"}> : () -> ()
    %cst_73 = arith.constant dense<0.000000e+00> : vector<2x8x8xf32>
    %229 = tpu.matmul %227, %228, %cst_73 {dimension_numbers = #tpu.dot_dimension_numbers<[2], [1], [1], [2], [0, 0, 0, 1, 1, 2], [0], [0]>} : vector<2x8x8xf32>, vector<2x8x8xf32>, vector<2x8x8xf32> -> vector<2x8x8xf32>
    "tpu.trace_stop"() : () -> ()
    %230 = vector.extract_strided_slice %217 {offsets = [0, 32, 0], sizes = [2, 8, 8], strides = [1, 1, 1]} : vector<2x64x8xf32> to vector<2x8x8xf32>
    %231 = vector.extract_strided_slice %180 {offsets = [0, 0, 32], sizes = [2, 8, 8], strides = [1, 1, 1]} : vector<2x8x64xf32> to vector<2x8x8xf32>
    "tpu.trace_start"() <{level = 10 : i32, message = "bqk,bkd->bqd"}> : () -> ()
    %cst_74 = arith.constant dense<0.000000e+00> : vector<2x8x8xf32>
    %232 = tpu.matmul %230, %231, %cst_74 {dimension_numbers = #tpu.dot_dimension_numbers<[2], [1], [1], [2], [0, 0, 0, 1, 1, 2], [0], [0]>} : vector<2x8x8xf32>, vector<2x8x8xf32>, vector<2x8x8xf32> -> vector<2x8x8xf32>
    "tpu.trace_stop"() : () -> ()
    %233 = vector.extract_strided_slice %217 {offsets = [0, 40, 0], sizes = [2, 8, 8], strides = [1, 1, 1]} : vector<2x64x8xf32> to vector<2x8x8xf32>
    %234 = vector.extract_strided_slice %180 {offsets = [0, 0, 40], sizes = [2, 8, 8], strides = [1, 1, 1]} : vector<2x8x64xf32> to vector<2x8x8xf32>
    "tpu.trace_start"() <{level = 10 : i32, message = "bqk,bkd->bqd"}> : () -> ()
    %cst_75 = arith.constant dense<0.000000e+00> : vector<2x8x8xf32>
    %235 = tpu.matmul %233, %234, %cst_75 {dimension_numbers = #tpu.dot_dimension_numbers<[2], [1], [1], [2], [0, 0, 0, 1, 1, 2], [0], [0]>} : vector<2x8x8xf32>, vector<2x8x8xf32>, vector<2x8x8xf32> -> vector<2x8x8xf32>
    "tpu.trace_stop"() : () -> ()
    %236 = vector.extract_strided_slice %217 {offsets = [0, 48, 0], sizes = [2, 8, 8], strides = [1, 1, 1]} : vector<2x64x8xf32> to vector<2x8x8xf32>
    %237 = vector.extract_strided_slice %180 {offsets = [0, 0, 48], sizes = [2, 8, 8], strides = [1, 1, 1]} : vector<2x8x64xf32> to vector<2x8x8xf32>
    "tpu.trace_start"() <{level = 10 : i32, message = "bqk,bkd->bqd"}> : () -> ()
    %cst_76 = arith.constant dense<0.000000e+00> : vector<2x8x8xf32>
    %238 = tpu.matmul %236, %237, %cst_76 {dimension_numbers = #tpu.dot_dimension_numbers<[2], [1], [1], [2], [0, 0, 0, 1, 1, 2], [0], [0]>} : vector<2x8x8xf32>, vector<2x8x8xf32>, vector<2x8x8xf32> -> vector<2x8x8xf32>
    "tpu.trace_stop"() : () -> ()
    %239 = vector.extract_strided_slice %217 {offsets = [0, 56, 0], sizes = [2, 8, 8], strides = [1, 1, 1]} : vector<2x64x8xf32> to vector<2x8x8xf32>
    %240 = vector.extract_strided_slice %180 {offsets = [0, 0, 56], sizes = [2, 8, 8], strides = [1, 1, 1]} : vector<2x8x64xf32> to vector<2x8x8xf32>
    "tpu.trace_start"() <{level = 10 : i32, message = "bqk,bkd->bqd"}> : () -> ()
    %cst_77 = arith.constant dense<0.000000e+00> : vector<2x8x8xf32>
    %241 = tpu.matmul %239, %240, %cst_77 {dimension_numbers = #tpu.dot_dimension_numbers<[2], [1], [1], [2], [0, 0, 0, 1, 1, 2], [0], [0]>} : vector<2x8x8xf32>, vector<2x8x8xf32>, vector<2x8x8xf32> -> vector<2x8x8xf32>
    "tpu.trace_stop"() : () -> ()
    %242 = tpu.concatenate %220, %223, %226, %229, %232, %235, %238, %241 in 2 : vector<2x8x8xf32>, vector<2x8x8xf32>, vector<2x8x8xf32>, vector<2x8x8xf32>, vector<2x8x8xf32>, vector<2x8x8xf32>, vector<2x8x8xf32>, vector<2x8x8xf32> -> vector<2x8x64xf32>
    %243 = vector.shape_cast %242 : vector<2x8x64xf32> to vector<16x64xf32>
    %c1_78 = arith.constant 1 : index
    %c0_79 = arith.constant 0 : index
    %c0_80 = arith.constant 0 : index
    %244 = vector.load %arg6[%c1_78, %c0_79, %c0_80] : memref<2x64x64xf32, #tpu.memory_space<vmem>>, vector<1x64x64xf32>
    %245 = vector.shape_cast %244 : vector<1x64x64xf32> to vector<64x64xf32>
    %cst_81 = arith.constant dense<0.000000e+00> : vector<16x64xf32>
    %246 = tpu.matmul %243, %245, %cst_81 {dimension_numbers = #tpu.dot_dimension_numbers<[1], [0], [0], [1], [0, 0, 1, 1], [], []>} : vector<16x64xf32>, vector<64x64xf32>, vector<16x64xf32> -> vector<16x64xf32>
    %247 = vector.broadcast %163 : vector<1x64xf32> to vector<16x64xf32>
    %248 = arith.addf %246, %247 : vector<16x64xf32>
    %249 = arith.addf %159, %248 : vector<16x64xf32>
    %cst_82 = arith.constant dense<0.000000e+00> : vector<16xf32>
    %250 = vector.multi_reduction <add>, %249, %cst_82 [1] : vector<16x64xf32> to vector<16xf32>
    %251 = vector.shape_cast %250 : vector<16xf32> to vector<16x1xf32>
    %cst_83 = arith.constant 6.400000e+01 : f32
    %252 = vector.broadcast %cst_83 : f32 to vector<16x1xf32>
    %253 = arith.divf %251, %252 : vector<16x1xf32>
    %254 = vector.broadcast %253 : vector<16x1xf32> to vector<16x64xf32>
    %255 = arith.subf %249, %254 : vector<16x64xf32>
    %256 = arith.mulf %255, %255 : vector<16x64xf32>
    %cst_84 = arith.constant dense<0.000000e+00> : vector<16xf32>
    %257 = vector.multi_reduction <add>, %256, %cst_84 [1] : vector<16x64xf32> to vector<16xf32>
    %258 = vector.shape_cast %257 : vector<16xf32> to vector<16x1xf32>
    %cst_85 = arith.constant 6.400000e+01 : f32
    %259 = vector.broadcast %cst_85 : f32 to vector<16x1xf32>
    %260 = arith.divf %258, %259 : vector<16x1xf32>
    %cst_86 = arith.constant 9.99999974E-6 : f32
    %261 = vector.broadcast %cst_86 : f32 to vector<16x1xf32>
    %262 = arith.addf %260, %261 : vector<16x1xf32>
    %263 = math.rsqrt %262 : vector<16x1xf32>
    %264 = vector.broadcast %263 : vector<16x1xf32> to vector<16x64xf32>
    %265 = arith.mulf %255, %264 : vector<16x64xf32>
    %266 = vector.broadcast %166 : vector<1x64xf32> to vector<16x64xf32>
    %267 = arith.mulf %265, %266 : vector<16x64xf32>
    %268 = vector.broadcast %167 : vector<1x64xf32> to vector<16x64xf32>
    %269 = arith.addf %267, %268 : vector<16x64xf32>
    %c1_87 = arith.constant 1 : index
    %c0_88 = arith.constant 0 : index
    %c0_89 = arith.constant 0 : index
    %270 = vector.load %arg7[%c1_87, %c0_88, %c0_89] : memref<2x64x128xf32, #tpu.memory_space<vmem>>, vector<1x64x128xf32>
    %271 = vector.shape_cast %270 : vector<1x64x128xf32> to vector<64x128xf32>
    %cst_90 = arith.constant dense<0.000000e+00> : vector<16x128xf32>
    %272 = tpu.matmul %269, %271, %cst_90 {dimension_numbers = #tpu.dot_dimension_numbers<[1], [0], [0], [1], [0, 0, 1, 1], [], []>} : vector<16x64xf32>, vector<64x128xf32>, vector<16x128xf32> -> vector<16x128xf32>
    %273 = vector.broadcast %164 : vector<1x128xf32> to vector<16x128xf32>
    %274 = arith.addf %272, %273 : vector<16x128xf32>
    %cst_91 = arith.constant 0.000000e+00 : f32
    %275 = vector.broadcast %cst_91 : f32 to vector<16x128xf32>
    %276 = arith.maximumf %274, %275 : vector<16x128xf32>
    %c1_92 = arith.constant 1 : index
    %c0_93 = arith.constant 0 : index
    %c0_94 = arith.constant 0 : index
    %277 = vector.load %arg8[%c1_92, %c0_93, %c0_94] : memref<2x128x64xf32, #tpu.memory_space<vmem>>, vector<1x128x64xf32>
    %278 = vector.shape_cast %277 : vector<1x128x64xf32> to vector<128x64xf32>
    %cst_95 = arith.constant dense<0.000000e+00> : vector<16x64xf32>
    %279 = tpu.matmul %276, %278, %cst_95 {dimension_numbers = #tpu.dot_dimension_numbers<[1], [0], [0], [1], [0, 0, 1, 1], [], []>} : vector<16x128xf32>, vector<128x64xf32>, vector<16x64xf32> -> vector<16x64xf32>
    %280 = vector.broadcast %165 : vector<1x64xf32> to vector<16x64xf32>
    %281 = arith.addf %279, %280 : vector<16x64xf32>
    %282 = arith.addf %269, %281 : vector<16x64xf32>
    %cst_96 = arith.constant dense<0.000000e+00> : vector<16xf32>
    %283 = vector.multi_reduction <add>, %282, %cst_96 [1] : vector<16x64xf32> to vector<16xf32>
    %284 = vector.shape_cast %283 : vector<16xf32> to vector<16x1xf32>
    %cst_97 = arith.constant 6.400000e+01 : f32
    %285 = vector.broadcast %cst_97 : f32 to vector<16x1xf32>
    %286 = arith.divf %284, %285 : vector<16x1xf32>
    %287 = vector.broadcast %286 : vector<16x1xf32> to vector<16x64xf32>
    %288 = arith.subf %282, %287 : vector<16x64xf32>
    %289 = arith.mulf %288, %288 : vector<16x64xf32>
    %cst_98 = arith.constant dense<0.000000e+00> : vector<16xf32>
    %290 = vector.multi_reduction <add>, %289, %cst_98 [1] : vector<16x64xf32> to vector<16xf32>
    %291 = vector.shape_cast %290 : vector<16xf32> to vector<16x1xf32>
    %cst_99 = arith.constant 6.400000e+01 : f32
    %292 = vector.broadcast %cst_99 : f32 to vector<16x1xf32>
    %293 = arith.divf %291, %292 : vector<16x1xf32>
    %cst_100 = arith.constant 9.99999974E-6 : f32
    %294 = vector.broadcast %cst_100 : f32 to vector<16x1xf32>
    %295 = arith.addf %293, %294 : vector<16x1xf32>
    %296 = math.rsqrt %295 : vector<16x1xf32>
    %297 = vector.broadcast %296 : vector<16x1xf32> to vector<16x64xf32>
    %298 = arith.mulf %288, %297 : vector<16x64xf32>
    %299 = vector.broadcast %168 : vector<1x64xf32> to vector<16x64xf32>
    %300 = arith.mulf %298, %299 : vector<16x64xf32>
    %301 = vector.broadcast %169 : vector<1x64xf32> to vector<16x64xf32>
    %302 = arith.addf %300, %301 : vector<16x64xf32>
    %303 = vector.shape_cast %302 : vector<16x64xf32> to vector<2x8x64xf32>
    %cst_101 = arith.constant dense<0.000000e+00> : vector<2x64xf32>
    %304 = vector.multi_reduction <add>, %303, %cst_101 [1] : vector<2x8x64xf32> to vector<2x64xf32>
    %cst_102 = arith.constant 8.000000e+00 : f32
    %305 = vector.broadcast %cst_102 : f32 to vector<2x64xf32>
    %306 = arith.divf %304, %305 : vector<2x64xf32>
    %c0_103 = arith.constant 0 : index
    %c0_104 = arith.constant 0 : index
    %307 = vector.load %arg9[%c0_103, %c0_104] : memref<64x64xf32, #tpu.memory_space<vmem>>, vector<64x64xf32>
    %cst_105 = arith.constant dense<0.000000e+00> : vector<2x64xf32>
    %308 = tpu.matmul %306, %307, %cst_105 {dimension_numbers = #tpu.dot_dimension_numbers<[1], [0], [0], [1], [0, 0, 1, 1], [], []>} : vector<2x64xf32>, vector<64x64xf32>, vector<2x64xf32> -> vector<2x64xf32>
    %309 = vector.broadcast %3 : vector<1x64xf32> to vector<2x64xf32>
    %310 = arith.addf %308, %309 : vector<2x64xf32>
    %cst_106 = arith.constant 0.000000e+00 : f32
    %311 = vector.broadcast %cst_106 : f32 to vector<2x64xf32>
    %312 = arith.maximumf %310, %311 : vector<2x64xf32>
    %c0_107 = arith.constant 0 : index
    %c0_108 = arith.constant 0 : index
    %313 = vector.load %arg10[%c0_107, %c0_108] : memref<64x128xf32, #tpu.memory_space<vmem>>, vector<64x128xf32>
    %cst_109 = arith.constant dense<0.000000e+00> : vector<2x128xf32>
    %314 = tpu.matmul %312, %313, %cst_109 {dimension_numbers = #tpu.dot_dimension_numbers<[1], [0], [0], [1], [0, 0, 1, 1], [], []>} : vector<2x64xf32>, vector<64x128xf32>, vector<2x128xf32> -> vector<2x128xf32>
    %315 = vector.broadcast %4 : vector<1x128xf32> to vector<2x128xf32>
    %316 = arith.addf %314, %315 : vector<2x128xf32>
    %c0_110 = arith.constant 0 : index
    %c0_111 = arith.constant 0 : index
    %317 = vector.load %arg11[%c0_110, %c0_111] : memref<2x128xf32, #tpu.memory_space<vmem>>, vector<2x128xf32>
    tpu.vector_store %arg11[%c0_110, %c0_111], %316 {strides = array<i32>} : memref<2x128xf32, #tpu.memory_space<vmem>>, vector<2x128xf32>,
    return
  }
  func.func @transform_0(%arg0: i32) -> (i32, i32) {
    %c0_i32 = arith.constant 0 : i32
    %c0_i32_0 = arith.constant 0 : i32
    return %arg0, %c0_i32 : i32, i32
  }
  func.func @transform_1(%arg0: i32) -> (i32, i32) {
    %c0_i32 = arith.constant 0 : i32
    %c0_i32_0 = arith.constant 0 : i32
    %c0_i32_1 = arith.constant 0 : i32
    return %c0_i32, %c0_i32_0 : i32, i32
  }
  func.func @transform_2(%arg0: i32) -> (i32, i32) {
    %c0_i32 = arith.constant 0 : i32
    %c0_i32_0 = arith.constant 0 : i32
    %c0_i32_1 = arith.constant 0 : i32
    return %c0_i32, %c0_i32_0 : i32, i32
  }
  func.func @transform_3(%arg0: i32) -> (i32, i32, i32) {
    %c0_i32 = arith.constant 0 : i32
    %c0_i32_0 = arith.constant 0 : i32
    %c0_i32_1 = arith.constant 0 : i32
    %c0_i32_2 = arith.constant 0 : i32
    return %c0_i32, %c0_i32_0, %c0_i32_1 : i32, i32, i32
  }
  func.func @transform_4(%arg0: i32) -> (i32, i32, i32) {
    %c0_i32 = arith.constant 0 : i32
    %c0_i32_0 = arith.constant 0 : i32
    %c0_i32_1 = arith.constant 0 : i32
    %c0_i32_2 = arith.constant 0 : i32
    return %c0_i32, %c0_i32_0, %c0_i32_1 : i32, i32, i32
  }
  func.func @transform_5(%arg0: i32) -> (i32, i32, i32) {
    %c0_i32 = arith.constant 0 : i32
    %c0_i32_0 = arith.constant 0 : i32
    %c0_i32_1 = arith.constant 0 : i32
    %c0_i32_2 = arith.constant 0 : i32
    return %c0_i32, %c0_i32_0, %c0_i32_1 : i32, i32, i32
  }
  func.func @transform_6(%arg0: i32) -> (i32, i32, i32) {
    %c0_i32 = arith.constant 0 : i32
    %c0_i32_0 = arith.constant 0 : i32
    %c0_i32_1 = arith.constant 0 : i32
    %c0_i32_2 = arith.constant 0 : i32
    return %c0_i32, %c0_i32_0, %c0_i32_1 : i32, i32, i32
  }
  func.func @transform_7(%arg0: i32) -> (i32, i32, i32) {
    %c0_i32 = arith.constant 0 : i32
    %c0_i32_0 = arith.constant 0 : i32
    %c0_i32_1 = arith.constant 0 : i32
    %c0_i32_2 = arith.constant 0 : i32
    return %c0_i32, %c0_i32_0, %c0_i32_1 : i32, i32, i32
  }
  func.func @transform_8(%arg0: i32) -> (i32, i32) {
    %c0_i32 = arith.constant 0 : i32
    %c0_i32_0 = arith.constant 0 : i32
    %c0_i32_1 = arith.constant 0 : i32
    return %c0_i32, %c0_i32_0 : i32, i32
  }
  func.func @transform_9(%arg0: i32) -> (i32, i32) {
    %c0_i32 = arith.constant 0 : i32
    %c0_i32_0 = arith.constant 0 : i32
    %c0_i32_1 = arith.constant 0 : i32
    return %c0_i32, %c0_i32_0 : i32, i32
  }
  func.func @transform_10(%arg0: i32) -> (i32, i32) {
    %c0_i32 = arith.constant 0 : i32
    %c0_i32_0 = arith.constant 0 : i32
    return %arg0, %c0_i32 : i32, i32
  }
}

</mosaic_0001>

<llo_original>
// kernel: tpu_custom_call.1
$region0: #{tpu_custom_call.1}
  #allocation0 [shape = 'u32[]', space=smem, size = 0x4, offset = 0x4, fixed_abs, tag = 'smem constant byte address 0x4 - core index']
  #allocation1 [shape = 'u32[144,128]{1,0:T(1,128)}', space=vmem, size = 0x12000, scoped, tag = 'internal scratch']
  %s0 = inlined_call_operand.vmem [shape: f32[16,1], index: 0, kind: input, shape index: {}]
  %s1 = inlined_call_operand.hbm [shape: f32[8,64], index: 1, kind: input, shape index: {}]
  %s2 = inlined_call_operand.hbm [shape: f32[8,128], index: 2, kind: input, shape index: {}]
  %s3 = inlined_call_operand.vmem [shape: f32[2,8,192], index: 3, kind: input, shape index: {}]
  %s4 = inlined_call_operand.vmem [shape: f32[2,64,192], index: 4, kind: input, shape index: {}]
  %s5 = inlined_call_operand.vmem [shape: f32[2,64,64], index: 5, kind: input, shape index: {}]
  %s6 = inlined_call_operand.hbm [shape: f32[2,64,128], index: 6, kind: input, shape index: {}]
  %s7 = inlined_call_operand.vmem [shape: f32[2,128,64], index: 7, kind: input, shape index: {}]
  %s8 = inlined_call_operand.hbm [shape: f32[64,64], index: 8, kind: input, shape index: {}]
  %s9 = inlined_call_operand.hbm [shape: f32[64,128], index: 9, kind: input, shape index: {}]
  %s10 = inlined_call_operand.hbm [shape: f32[2,128], index: 10, kind: output, shape index: {}]
  %s11 = sld [smem:[#allocation0]]
  $region70: #{tpu_custom_call.1} parent=0
    _
  %s13 = ssub.s32 1, %s11
  %s14 = scalar_select 0, %s13, %s11
  $region1: #{tpu_custom_call.1} parent=0
    #allocation2 [shape = 'u8[4096]{0}', space=vmem, size = 0x1000, scoped, tag = 'input window, operand 1, single buffered']
    #allocation3 [shape = 's32[1]{0}', space=sflag, size = 0x4, scoped, tag = 'scoped memory for tpu_custom_call.1']
    #allocation4 [shape = 's32[1]{0}', space=sflag, size = 0x4, scoped, tag = 'scoped memory for tpu_custom_call.1']
    #allocation5 [shape = 'u8[4096]{0}', space=vmem, size = 0x1000, scoped, tag = 'input window, operand 2, single buffered']
    #allocation6 [shape = 's32[1]{0}', space=sflag, size = 0x4, scoped, tag = 'scoped memory for tpu_custom_call.1']
    #allocation7 [shape = 'u8[65536]{0}', space=vmem, size = 0x10000, scoped, tag = 'input window, operand 6, single buffered']
    #allocation8 [shape = 'u8[32768]{0}', space=vmem, size = 0x8000, scoped, tag = 'input window, operand 8, single buffered']
    #allocation9 [shape = 's32[1]{0}', space=sflag, size = 0x4, scoped, tag = 'scoped memory for tpu_custom_call.1']
    #allocation10 [shape = 'u8[32768]{0}', space=vmem, size = 0x8000, scoped, tag = 'input window, operand 9, single buffered']
    #allocation11 [shape = 'u8[1024]{0}', space=vmem, size = 0x400, scoped, tag = 'output window, operand 0, single buffered']
    %15 = vsyncpa [#allocation3], 0
    %16 = vsyncpa [#allocation6], 0
    %17 = vsyncpa [#allocation9], 0
    %18 = vsyncpa [#allocation4], 0
    // Predicated region
    $region2: #{tpu_custom_call.1} parent=1 // pred_check
      _
    $region3: #{tpu_custom_call.1} parent=1 // pred_check_branch
      %20 = sbr.rel (0) target = $region5
    $region4: #{tpu_custom_call.1} parent=1 // pred_region
      _
    $region5: #{tpu_custom_call.1} parent=1 // pred_fallthru
      _
    // Predicated region
    $region6: #{tpu_custom_call.1} parent=1 // pred_check
      _
    $region7: #{tpu_custom_call.1} parent=1 // pred_check_branch
      %22 = sbr.rel (0) target = $region9
    $region8: #{tpu_custom_call.1} parent=1 // pred_region
      %s24 = ssub.s32 128, 128
      %25 = vsyncadd [#allocation3], %s24
      %s27 = sshll.u32 [#allocation2], 4
      %s28 = int_to_ptr.vmem [resolvable:$true] %s27
      %30 = dma.hbm_to_vmem [thread:$0]  %s1, 128, %s28, [#allocation3]
    $region9: #{tpu_custom_call.1} parent=1 // pred_fallthru
      _
    // Predicated region
    $region10: #{tpu_custom_call.1} parent=1 // pred_check
      _
    $region11: #{tpu_custom_call.1} parent=1 // pred_check_branch
      %32 = sbr.rel (0) target = $region13
    $region12: #{tpu_custom_call.1} parent=1 // pred_region
      %s34 = ssub.s32 128, 128
      %35 = vsyncadd [#allocation6], %s34
      %s37 = sshll.u32 [#allocation5], 4
      %s38 = int_to_ptr.vmem [resolvable:$true] %s37
      %40 = dma.hbm_to_vmem [thread:$0]  %s2, 128, %s38, [#allocation6]
    $region13: #{tpu_custom_call.1} parent=1 // pred_fallthru
      _
    // Predicated region
    $region14: #{tpu_custom_call.1} parent=1 // pred_check
      _
    $region15: #{tpu_custom_call.1} parent=1 // pred_check_branch
      %42 = sbr.rel (0) target = $region17
    $region16: #{tpu_custom_call.1} parent=1 // pred_region
      _
    $region17: #{tpu_custom_call.1} parent=1 // pred_fallthru
      _
    // Predicated region
    $region18: #{tpu_custom_call.1} parent=1 // pred_check
      _
    $region19: #{tpu_custom_call.1} parent=1 // pred_check_branch
      %44 = sbr.rel (0) target = $region21
    $region20: #{tpu_custom_call.1} parent=1 // pred_region
      _
    $region21: #{tpu_custom_call.1} parent=1 // pred_fallthru
      _
    // Predicated region
    $region22: #{tpu_custom_call.1} parent=1 // pred_check
      _
    $region23: #{tpu_custom_call.1} parent=1 // pred_check_branch
      %46 = sbr.rel (0) target = $region25
    $region24: #{tpu_custom_call.1} parent=1 // pred_region
      _
    $region25: #{tpu_custom_call.1} parent=1 // pred_fallthru
      _
    // Predicated region
    $region26: #{tpu_custom_call.1} parent=1 // pred_check
      _
    $region27: #{tpu_custom_call.1} parent=1 // pred_check_branch
      %48 = sbr.rel (0) target = $region29
    $region28: #{tpu_custom_call.1} parent=1 // pred_region
      %s50 = ssub.s32 2048, 2048
      %51 = vsyncadd [#allocation6], %s50
      %s52 = sshll.u32 [#allocation7], 4
      %s53 = int_to_ptr.vmem [resolvable:$true] %s52
      %58 = dma.hbm_to_vmem [thread:$0]  %s6, 2048, %s53, [#allocation6], 128, 128, 8
    $region29: #{tpu_custom_call.1} parent=1 // pred_fallthru
      _
    // Predicated region
    $region30: #{tpu_custom_call.1} parent=1 // pred_check
      _
    $region31: #{tpu_custom_call.1} parent=1 // pred_check_branch
      %60 = sbr.rel (0) target = $region33
    $region32: #{tpu_custom_call.1} parent=1 // pred_region
      _
    $region33: #{tpu_custom_call.1} parent=1 // pred_fallthru
      _
    // Predicated region
    $region34: #{tpu_custom_call.1} parent=1 // pred_check
      _
    $region35: #{tpu_custom_call.1} parent=1 // pred_check_branch
      %62 = sbr.rel (0) target = $region37
    $region36: #{tpu_custom_call.1} parent=1 // pred_region
      %s64 = ssub.s32 1024, 1024
      %65 = vsyncadd [#allocation9], %s64
      %s66 = sshll.u32 [#allocation8], 4
      %s67 = int_to_ptr.vmem [resolvable:$true] %s66
      %72 = dma.hbm_to_vmem [thread:$0]  %s8, 1024, %s67, [#allocation9], 128, 128, 8
    $region37: #{tpu_custom_call.1} parent=1 // pred_fallthru
      _
    // Predicated region
    $region38: #{tpu_custom_call.1} parent=1 // pred_check
      _
    $region39: #{tpu_custom_call.1} parent=1 // pred_check_branch
      %74 = sbr.rel (0) target = $region41
    $region40: #{tpu_custom_call.1} parent=1 // pred_region
      %s76 = ssub.s32 1024, 1024
      %77 = vsyncadd [#allocation9], %s76
      %s78 = sshll.u32 [#allocation10], 4
      %s79 = int_to_ptr.vmem [resolvable:$true] %s78
      %84 = dma.hbm_to_vmem [thread:$0]  %s9, 1024, %s79, [#allocation9], 128, 128, 8
    $region41: #{tpu_custom_call.1} parent=1 // pred_fallthru
      _
    // Predicated region
    $region42: #{tpu_custom_call.1} parent=1 // pred_check
      _
    $region43: #{tpu_custom_call.1} parent=1 // pred_check_branch
      %86 = sbr.rel (0) target = $region45
    $region44: #{tpu_custom_call.1} parent=1 // pred_region
      %87 = dma.done [#allocation3], 128
    $region45: #{tpu_custom_call.1} parent=1 // pred_fallthru
      _
    // Predicated region
    $region46: #{tpu_custom_call.1} parent=1 // pred_check
      _
    $region47: #{tpu_custom_call.1} parent=1 // pred_check_branch
      %89 = sbr.rel (0) target = $region49
    $region48: #{tpu_custom_call.1} parent=1 // pred_region
      %90 = dma.done [#allocation6], 128
    $region49: #{tpu_custom_call.1} parent=1 // pred_fallthru
      _
    // Predicated region
    $region50: #{tpu_custom_call.1} parent=1 // pred_check
      _
    $region51: #{tpu_custom_call.1} parent=1 // pred_check_branch
      %92 = sbr.rel (0) target = $region53
    $region52: #{tpu_custom_call.1} parent=1 // pred_region
      %93 = dma.done [#allocation6], 2048
    $region53: #{tpu_custom_call.1} parent=1 // pred_fallthru
      _
    // Predicated region
    $region54: #{tpu_custom_call.1} parent=1 // pred_check
      _
    $region55: #{tpu_custom_call.1} parent=1 // pred_check_branch
      %95 = sbr.rel (0) target = $region57
    $region56: #{tpu_custom_call.1} parent=1 // pred_region
      %96 = dma.done [#allocation9], 1024
    $region57: #{tpu_custom_call.1} parent=1 // pred_fallthru
      _
    // Predicated region
    $region58: #{tpu_custom_call.1} parent=1 // pred_check
      _
    $region59: #{tpu_custom_call.1} parent=1 // pred_check_branch
      %98 = sbr.rel (0) target = $region61
    $region60: #{tpu_custom_call.1} parent=1 // pred_region
      %99 = dma.done [#allocation9], 1024
    $region61: #{tpu_custom_call.1} parent=1 // pred_fallthru
      _
    %v100 = vld [vmem:[#allocation5] sm:$0xff]
    %v101 = vld [vmem:[%s0] sm:$0xff]
    %v102 = vld [vmem:[%s0 + $0x8] sm:$0xff]
    %104 = vset.pattern.permute.xlu0 0
    %105 = vperm.xlu0 %104, %v101
    %v106 = vpop.permute.xlu0 %105
    %109 = vset.pattern.permute.xlu0 0
    %110 = vperm.xlu0 %109, %v102
    %v111 = vpop.permute.xlu0 %110
    %v113 = vlaneseq
    %v114 = vshrl.u32 %v113, 7
    %v115 = vsub.s32 0, %v114
    %v116 = vrot.slane %v100, %v115
    %v117 = vmul.f32 %v106, %v116
    %v118 = vmul.f32 %v111, %v116
    %v119 = vlaneseq
    %v120 = vshrl.u32 %v119, 7
    %v121 = vsub.s32 1, %v120
    %v122 = vrot.slane %v100, %v121
    %v123 = vadd.f32 %v117, %v122
    %v124 = vadd.f32 %v118, %v122
    %v125 = vld [vmem:[#allocation2] sm:$0xff]
    %v126 = vadd.f32 %v123, %v125
    %v127 = vadd.f32 %v124, %v125
    %v128 = vld [vmem:[%s3] sm:$0xff]
    %v129 = vld [vmem:[%s3 + $0x8] sm:$0xff]
    %v130 = vld [vmem:[%s4] sm:$0xff]
    %v131 = vld [vmem:[%s4 + $0x8] sm:$0xff]
    %v132 = vld [vmem:[%s4 + $0x10] sm:$0xff]
    %v133 = vld [vmem:[%s4 + $0x18] sm:$0xff]
    %v134 = vld [vmem:[%s4 + $0x20] sm:$0xff]
    %v135 = vld [vmem:[%s4 + $0x28] sm:$0xff]
    %v136 = vld [vmem:[%s4 + $0x30] sm:$0xff]
    %v137 = vld [vmem:[%s4 + $0x38] sm:$0xff]
    %v138 = vld [vmem:[%s4 + $0x40] sm:$0xff]
    %v139 = vld [vmem:[%s4 + $0x48] sm:$0xff]
    %v140 = vld [vmem:[%s4 + $0x50] sm:$0xff]
    %v141 = vld [vmem:[%s4 + $0x58] sm:$0xff]
    %v142 = vld [vmem:[%s4 + $0x60] sm:$0xff]
    %v143 = vld [vmem:[%s4 + $0x68] sm:$0xff]
    %v144 = vld [vmem:[%s4 + $0x70] sm:$0xff]
    %v145 = vld [vmem:[%s4 + $0x78] sm:$0xff]
    %v146 = vlaneseq
    %v147 = vshrl.u32 %v146, 7
    %v148 = vsub.s32 0, %v147
    %v149 = vrot.slane %v128, %v148
    %v150 = vlaneseq
    %v151 = vshrl.u32 %v150, 7
    %v152 = vsub.s32 0, %v151
    %v153 = vrot.slane %v129, %v152
    %vm154 = vcmask 523264
    %v156 = vsel %vm154, %v126, 0
    %v159 = vsel %vm154, %v127, 0
    %161 = vmatprep.subr.mxu0 %v131
    %162 = vmatpush1.msra.mxu0 %v130
    %163 = vmatprep.subr.mxu0 %v133
    %164 = vmatpush1.msra.mxu0 %v132
    %165 = vmatprep.subr.mxu0 %v135
    %166 = vmatpush1.msra.mxu0 %v134
    %167 = vmatprep.subr.mxu0 %v137
    %168 = vmatpush1.msra.mxu0 %v136
    %169 = vmatprep.subr.mxu0 %v139
    %170 = vmatpush1.msra.mxu0 %v138
    %171 = vmatprep.subr.mxu0 %v141
    %172 = vmatpush1.msra.mxu0 %v140
    %173 = vmatprep.subr.mxu0 %v143
    %174 = vmatpush1.msra.mxu0 %v142
    %175 = vmatprep.subr.mxu0 %v145
    %176 = vmatpush1.msra.mxu0 %v144
    %177 = vmatprep.subr.mxu0 0.0
    %178 = vmatpush1.msra.mxu0 0.0
    %179 = vmatprep.subr.mxu0 0.0
    %180 = vmatpush1.msra.mxu0 0.0
    %181 = vmatprep.subr.mxu0 0.0
    %182 = vmatpush1.msra.mxu0 0.0
    %183 = vmatprep.subr.mxu0 0.0
    %184 = vmatpush1.msra.mxu0 0.0
    %185 = vmatprep.subr.mxu0 0.0
    %186 = vmatpush1.msra.mxu0 0.0
    %187 = vmatprep.subr.mxu0 0.0
    %188 = vmatpush1.msra.mxu0 0.0
    %189 = vmatprep.subr.mxu0 0.0
    %190 = vmatpush1.msra.mxu0 0.0
    %191 = vmatprep.subr.mxu0 0.0
    %192 = vmatpush1.msra.mxu0 0.0
    %193 = vmatprep.subr.mxu0 0.0
    %194 = vmatpush1.msra.mxu0 0.0
    %195 = vmatprep.subr.mxu0 0.0
    %196 = vmatpush1.msra.mxu0 0.0
    %197 = vmatprep.subr.mxu0 0.0
    %198 = vmatpush1.msra.mxu0 0.0
    %199 = vmatprep.subr.mxu0 0.0
    %200 = vmatpush1.msra.mxu0 0.0
    %201 = vmatprep.subr.mxu0 0.0
    %202 = vmatpush1.msra.mxu0 0.0
    %203 = vmatprep.subr.mxu0 0.0
    %204 = vmatpush1.msra.mxu0 0.0
    %205 = vmatprep.subr.mxu0 0.0
    %206 = vmatpush1.msra.mxu0 0.0
    %207 = vmatprep.subr.mxu0 0.0
    %208 = vmatpush1.msra.mxu0 0.0
    %209 = vmatprep.subr.mxu0 0.0
    %210 = vmatpush1.msra.mxu0 0.0
    %211 = vmatprep.subr.mxu0 0.0
    %212 = vmatpush1.msra.mxu0 0.0
    %213 = vmatprep.subr.mxu0 0.0
    %214 = vmatpush1.msra.mxu0 0.0
    %215 = vmatprep.subr.mxu0 0.0
    %216 = vmatpush1.msra.mxu0 0.0
    %217 = vmatprep.subr.mxu0 0.0
    %218 = vmatpush1.msra.mxu0 0.0
    %219 = vmatprep.subr.mxu0 0.0
    %220 = vmatpush1.msra.mxu0 0.0
    %221 = vmatprep.subr.mxu0 0.0
    %222 = vmatpush1.msra.mxu0 0.0
    %223 = vmatprep.subr.mxu0 0.0
    %224 = vmatpush1.msra.mxu0 0.0
    %225 = vmatprep.mubr.f32.mxu0 0.0
    %226 = vmatmul.mubr.f32.gmra.mrb[0].mxu0 %v156
    %v227 = vpop.f32.mrb[0].mxu0
    %v228 = vadd.f32 %v149, %v227
    %v229 = vpop.f32.mrb[0].mxu0
    %v230 = vadd.f32 %v153, %v229
    %231 = vmatprep.mubr.f32.mxu0 0.0
    %232 = vmatmul.mubr.f32.gmra.mrb[0].mxu0 %v159
    %v233 = vpop.f32.mrb[0].mxu0
    %v234 = vadd.f32 %v149, %v233
    %v235 = vpop.f32.mrb[0].mxu0
    %v236 = vadd.f32 %v153, %v235
    %237 = vdwg.mxu0
    %239 = vrot.lane.b32.xlu0 %v228, 64
    %v240 = vpop.permute.xlu0 %239
    %vm241 = vcmask 64512
    %v242 = vsel %vm241, %v228, 0
    %v244 = vsel %vm241, %v240, 0
    %246 = vmatprep.subr.mxu0 0.0
    %247 = vmatpush1.xpose.msra.mxu0 %v244
    %248 = vmatprep.subr.mxu0 0.0
    %249 = vmatpush1.xpose.msra.mxu0 0.0
    %250 = vmatprep.subr.mxu0 0.0
    %251 = vmatpush1.xpose.msra.mxu0 0.0
    %252 = vmatprep.subr.mxu0 0.0
    %253 = vmatpush1.xpose.msra.mxu0 0.0
    %254 = vmatprep.subr.mxu0 0.0
    %255 = vmatpush1.xpose.msra.mxu0 0.0
    %256 = vmatprep.subr.mxu0 0.0
    %257 = vmatpush1.xpose.msra.mxu0 0.0
    %258 = vmatprep.subr.mxu0 0.0
    %259 = vmatpush1.xpose.msra.mxu0 0.0
    %260 = vmatprep.subr.mxu0 0.0
    %261 = vmatpush1.xpose.msra.mxu0 0.0
    %262 = vmatprep.subr.mxu0 0.0
    %263 = vmatpush1.xpose.msra.mxu0 0.0
    %264 = vmatprep.subr.mxu0 0.0
    %265 = vmatpush1.xpose.msra.mxu0 0.0
    %266 = vmatprep.subr.mxu0 0.0
    %267 = vmatpush1.xpose.msra.mxu0 0.0
    %268 = vmatprep.subr.mxu0 0.0
    %269 = vmatpush1.xpose.msra.mxu0 0.0
    %270 = vmatprep.subr.mxu0 0.0
    %271 = vmatpush1.xpose.msra.mxu0 0.0
    %272 = vmatprep.subr.mxu0 0.0
    %273 = vmatpush1.xpose.msra.mxu0 0.0
    %274 = vmatprep.subr.mxu0 0.0
    %275 = vmatpush1.xpose.msra.mxu0 0.0
    %276 = vmatprep.subr.mxu0 0.0
    %277 = vmatpush1.xpose.msra.mxu0 0.0
    %278 = vmatprep.subr.mxu0 0.0
    %279 = vmatpush1.xpose.msra.mxu0 0.0
    %280 = vmatprep.subr.mxu0 0.0
    %281 = vmatpush1.xpose.msra.mxu0 0.0
    %282 = vmatprep.subr.mxu0 0.0
    %283 = vmatpush1.xpose.msra.mxu0 0.0
    %284 = vmatprep.subr.mxu0 0.0
    %285 = vmatpush1.xpose.msra.mxu0 0.0
    %286 = vmatprep.subr.mxu0 0.0
    %287 = vmatpush1.xpose.msra.mxu0 0.0
    %288 = vmatprep.subr.mxu0 0.0
    %289 = vmatpush1.xpose.msra.mxu0 0.0
    %290 = vmatprep.subr.mxu0 0.0
    %291 = vmatpush1.xpose.msra.mxu0 0.0
    %292 = vmatprep.subr.mxu0 0.0
    %293 = vmatpush1.xpose.msra.mxu0 0.0
    %294 = vmatprep.subr.mxu0 0.0
    %295 = vmatpush1.xpose.msra.mxu0 0.0
    %296 = vmatprep.subr.mxu0 0.0
    %297 = vmatpush1.xpose.msra.mxu0 0.0
    %298 = vmatprep.subr.mxu0 0.0
    %299 = vmatpush1.xpose.msra.mxu0 0.0
    %300 = vmatprep.subr.mxu0 0.0
    %301 = vmatpush1.xpose.msra.mxu0 0.0
    %302 = vmatprep.subr.mxu0 0.0
    %303 = vmatpush1.xpose.msra.mxu0 0.0
    %304 = vmatprep.subr.mxu0 0.0
    %305 = vmatpush1.xpose.msra.mxu0 0.0
    %306 = vmatprep.subr.mxu0 0.0
    %307 = vmatpush1.xpose.msra.mxu0 0.0
    %308 = vmatprep.subr.mxu0 0.0
    %309 = vmatpush1.xpose.msra.mxu0 0.0
    %310 = vmatprep.mubr.f32.mxu0 0.0
    %311 = vmatmul.mubr.f32.gmra.mrb[0].mxu0 %v242
    %v312 = vpop.f32.mrb[0].mxu0
    %v313 = vadd.f32 0.0, %v312
    %v314 = vpop.f32.mrb[0].mxu0
    %315 = vdwg.mxu0
    %317 = vrot.lane.b32.xlu0 %v234, 64
    %v318 = vpop.permute.xlu0 %317
    %v319 = vsel %vm241, %v234, 0
    %v321 = vsel %vm241, %v318, 0
    %323 = vmatprep.subr.mxu0 0.0
    %324 = vmatpush1.xpose.msra.mxu0 %v321
    %325 = vmatprep.subr.mxu0 0.0
    %326 = vmatpush1.xpose.msra.mxu0 0.0
    %327 = vmatprep.subr.mxu0 0.0
    %328 = vmatpush1.xpose.msra.mxu0 0.0
    %329 = vmatprep.subr.mxu0 0.0
    %330 = vmatpush1.xpose.msra.mxu0 0.0
    %331 = vmatprep.subr.mxu0 0.0
    %332 = vmatpush1.xpose.msra.mxu0 0.0
    %333 = vmatprep.subr.mxu0 0.0
    %334 = vmatpush1.xpose.msra.mxu0 0.0
    %335 = vmatprep.subr.mxu0 0.0
    %336 = vmatpush1.xpose.msra.mxu0 0.0
    %337 = vmatprep.subr.mxu0 0.0
    %338 = vmatpush1.xpose.msra.mxu0 0.0
    %339 = vmatprep.subr.mxu0 0.0
    %340 = vmatpush1.xpose.msra.mxu0 0.0
    %341 = vmatprep.subr.mxu0 0.0
    %342 = vmatpush1.xpose.msra.mxu0 0.0
    %343 = vmatprep.subr.mxu0 0.0
    %344 = vmatpush1.xpose.msra.mxu0 0.0
    %345 = vmatprep.subr.mxu0 0.0
    %346 = vmatpush1.xpose.msra.mxu0 0.0
    %347 = vmatprep.subr.mxu0 0.0
    %348 = vmatpush1.xpose.msra.mxu0 0.0
    %349 = vmatprep.subr.mxu0 0.0
    %350 = vmatpush1.xpose.msra.mxu0 0.0
    %351 = vmatprep.subr.mxu0 0.0
    %352 = vmatpush1.xpose.msra.mxu0 0.0
    %353 = vmatprep.subr.mxu0 0.0
    %354 = vmatpush1.xpose.msra.mxu0 0.0
    %355 = vmatprep.subr.mxu0 0.0
    %356 = vmatpush1.xpose.msra.mxu0 0.0
    %357 = vmatprep.subr.mxu0 0.0
    %358 = vmatpush1.xpose.msra.mxu0 0.0
    %359 = vmatprep.subr.mxu0 0.0
    %360 = vmatpush1.xpose.msra.mxu0 0.0
    %361 = vmatprep.subr.mxu0 0.0
    %362 = vmatpush1.xpose.msra.mxu0 0.0
    %363 = vmatprep.subr.mxu0 0.0
    %364 = vmatpush1.xpose.msra.mxu0 0.0
    %365 = vmatprep.subr.mxu0 0.0
    %366 = vmatpush1.xpose.msra.mxu0 0.0
    %367 = vmatprep.subr.mxu0 0.0
    %368 = vmatpush1.xpose.msra.mxu0 0.0
    %369 = vmatprep.subr.mxu0 0.0
    %370 = vmatpush1.xpose.msra.mxu0 0.0
    %371 = vmatprep.subr.mxu0 0.0
    %372 = vmatpush1.xpose.msra.mxu0 0.0
    %373 = vmatprep.subr.mxu0 0.0
    %374 = vmatpush1.xpose.msra.mxu0 0.0
    %375 = vmatprep.subr.mxu0 0.0
    %376 = vmatpush1.xpose.msra.mxu0 0.0
    %377 = vmatprep.subr.mxu0 0.0
    %378 = vmatpush1.xpose.msra.mxu0 0.0
    %379 = vmatprep.subr.mxu0 0.0
    %380 = vmatpush1.xpose.msra.mxu0 0.0
    %381 = vmatprep.subr.mxu0 0.0
    %382 = vmatpush1.xpose.msra.mxu0 0.0
    %383 = vmatprep.subr.mxu0 0.0
    %384 = vmatpush1.xpose.msra.mxu0 0.0
    %385 = vmatprep.subr.mxu0 0.0
    %386 = vmatpush1.xpose.msra.mxu0 0.0
    %387 = vmatprep.mubr.f32.mxu0 0.0
    %388 = vmatmul.mubr.f32.gmra.mrb[0].mxu0 %v319
    %v389 = vpop.f32.mrb[0].mxu0
    %v390 = vadd.f32 0.0, %v389
    %v391 = vpop.f32.mrb[0].mxu0
    %392 = vdwg.mxu0
    %393 = vrot.lane.b32.xlu0 %v228, 120
    %v394 = vpop.permute.xlu0 %393
    %395 = vrot.lane.b32.xlu0 %v228, 56
    %v396 = vpop.permute.xlu0 %395
    %v397 = vsel %vm241, %v394, 0
    %v399 = vsel %vm241, %v396, 0
    %401 = vmatprep.subr.mxu0 0.0
    %402 = vmatpush1.xpose.msra.mxu0 %v399
    %403 = vmatprep.subr.mxu0 0.0
    %404 = vmatpush1.xpose.msra.mxu0 0.0
    %405 = vmatprep.subr.mxu0 0.0
    %406 = vmatpush1.xpose.msra.mxu0 0.0
    %407 = vmatprep.subr.mxu0 0.0
    %408 = vmatpush1.xpose.msra.mxu0 0.0
    %409 = vmatprep.subr.mxu0 0.0
    %410 = vmatpush1.xpose.msra.mxu0 0.0
    %411 = vmatprep.subr.mxu0 0.0
    %412 = vmatpush1.xpose.msra.mxu0 0.0
    %413 = vmatprep.subr.mxu0 0.0
    %414 = vmatpush1.xpose.msra.mxu0 0.0
    %415 = vmatprep.subr.mxu0 0.0
    %416 = vmatpush1.xpose.msra.mxu0 0.0
    %417 = vmatprep.subr.mxu0 0.0
    %418 = vmatpush1.xpose.msra.mxu0 0.0
    %419 = vmatprep.subr.mxu0 0.0
    %420 = vmatpush1.xpose.msra.mxu0 0.0
    %421 = vmatprep.subr.mxu0 0.0
    %422 = vmatpush1.xpose.msra.mxu0 0.0
    %423 = vmatprep.subr.mxu0 0.0
    %424 = vmatpush1.xpose.msra.mxu0 0.0
    %425 = vmatprep.subr.mxu0 0.0
    %426 = vmatpush1.xpose.msra.mxu0 0.0
    %427 = vmatprep.subr.mxu0 0.0
    %428 = vmatpush1.xpose.msra.mxu0 0.0
    %429 = vmatprep.subr.mxu0 0.0
    %430 = vmatpush1.xpose.msra.mxu0 0.0
    %431 = vmatprep.subr.mxu0 0.0
    %432 = vmatpush1.xpose.msra.mxu0 0.0
    %433 = vmatprep.subr.mxu0 0.0
    %434 = vmatpush1.xpose.msra.mxu0 0.0
    %435 = vmatprep.subr.mxu0 0.0
    %436 = vmatpush1.xpose.msra.mxu0 0.0
    %437 = vmatprep.subr.mxu0 0.0
    %438 = vmatpush1.xpose.msra.mxu0 0.0
    %439 = vmatprep.subr.mxu0 0.0
    %440 = vmatpush1.xpose.msra.mxu0 0.0
    %441 = vmatprep.subr.mxu0 0.0
    %442 = vmatpush1.xpose.msra.mxu0 0.0
    %443 = vmatprep.subr.mxu0 0.0
    %444 = vmatpush1.xpose.msra.mxu0 0.0
    %445 = vmatprep.subr.mxu0 0.0
    %446 = vmatpush1.xpose.msra.mxu0 0.0
    %447 = vmatprep.subr.mxu0 0.0
    %448 = vmatpush1.xpose.msra.mxu0 0.0
    %449 = vmatprep.subr.mxu0 0.0
    %450 = vmatpush1.xpose.msra.mxu0 0.0
    %451 = vmatprep.subr.mxu0 0.0
    %452 = vmatpush1.xpose.msra.mxu0 0.0
    %453 = vmatprep.subr.mxu0 0.0
    %454 = vmatpush1.xpose.msra.mxu0 0.0
    %455 = vmatprep.subr.mxu0 0.0
    %456 = vmatpush1.xpose.msra.mxu0 0.0
    %457 = vmatprep.subr.mxu0 0.0
    %458 = vmatpush1.xpose.msra.mxu0 0.0
    %459 = vmatprep.subr.mxu0 0.0
    %460 = vmatpush1.xpose.msra.mxu0 0.0
    %461 = vmatprep.subr.mxu0 0.0
    %462 = vmatpush1.xpose.msra.mxu0 0.0
    %463 = vmatprep.subr.mxu0 0.0
    %464 = vmatpush1.xpose.msra.mxu0 0.0
    %465 = vmatprep.mubr.f32.mxu0 0.0
    %466 = vmatmul.mubr.f32.gmra.mrb[0].mxu0 %v397
    %v467 = vpop.f32.mrb[0].mxu0
    %v468 = vadd.f32 0.0, %v467
    %v469 = vpop.f32.mrb[0].mxu0
    %470 = vdwg.mxu0
    %471 = vrot.lane.b32.xlu0 %v234, 120
    %v472 = vpop.permute.xlu0 %471
    %473 = vrot.lane.b32.xlu0 %v234, 56
    %v474 = vpop.permute.xlu0 %473
    %v475 = vsel %vm241, %v472, 0
    %v477 = vsel %vm241, %v474, 0
    %479 = vmatprep.subr.mxu0 0.0
    %480 = vmatpush1.xpose.msra.mxu0 %v477
    %481 = vmatprep.subr.mxu0 0.0
    %482 = vmatpush1.xpose.msra.mxu0 0.0
    %483 = vmatprep.subr.mxu0 0.0
    %484 = vmatpush1.xpose.msra.mxu0 0.0
    %485 = vmatprep.subr.mxu0 0.0
    %486 = vmatpush1.xpose.msra.mxu0 0.0
    %487 = vmatprep.subr.mxu0 0.0
    %488 = vmatpush1.xpose.msra.mxu0 0.0
    %489 = vmatprep.subr.mxu0 0.0
    %490 = vmatpush1.xpose.msra.mxu0 0.0
    %491 = vmatprep.subr.mxu0 0.0
    %492 = vmatpush1.xpose.msra.mxu0 0.0
    %493 = vmatprep.subr.mxu0 0.0
    %494 = vmatpush1.xpose.msra.mxu0 0.0
    %495 = vmatprep.subr.mxu0 0.0
    %496 = vmatpush1.xpose.msra.mxu0 0.0
    %497 = vmatprep.subr.mxu0 0.0
    %498 = vmatpush1.xpose.msra.mxu0 0.0
    %499 = vmatprep.subr.mxu0 0.0
    %500 = vmatpush1.xpose.msra.mxu0 0.0
    %501 = vmatprep.subr.mxu0 0.0
    %502 = vmatpush1.xpose.msra.mxu0 0.0
    %503 = vmatprep.subr.mxu0 0.0
    %504 = vmatpush1.xpose.msra.mxu0 0.0
    %505 = vmatprep.subr.mxu0 0.0
    %506 = vmatpush1.xpose.msra.mxu0 0.0
    %507 = vmatprep.subr.mxu0 0.0
    %508 = vmatpush1.xpose.msra.mxu0 0.0
    %509 = vmatprep.subr.mxu0 0.0
    %510 = vmatpush1.xpose.msra.mxu0 0.0
    %511 = vmatprep.subr.mxu0 0.0
    %512 = vmatpush1.xpose.msra.mxu0 0.0
    %513 = vmatprep.subr.mxu0 0.0
    %514 = vmatpush1.xpose.msra.mxu0 0.0
    %515 = vmatprep.subr.mxu0 0.0
    %516 = vmatpush1.xpose.msra.mxu0 0.0
    %517 = vmatprep.subr.mxu0 0.0
    %518 = vmatpush1.xpose.msra.mxu0 0.0
    %519 = vmatprep.subr.mxu0 0.0
    %520 = vmatpush1.xpose.msra.mxu0 0.0
    %521 = vmatprep.subr.mxu0 0.0
    %522 = vmatpush1.xpose.msra.mxu0 0.0
    %523 = vmatprep.subr.mxu0 0.0
    %524 = vmatpush1.xpose.msra.mxu0 0.0
    %525 = vmatprep.subr.mxu0 0.0
    %526 = vmatpush1.xpose.msra.mxu0 0.0
    %527 = vmatprep.subr.mxu0 0.0
    %528 = vmatpush1.xpose.msra.mxu0 0.0
    %529 = vmatprep.subr.mxu0 0.0
    %530 = vmatpush1.xpose.msra.mxu0 0.0
    %531 = vmatprep.subr.mxu0 0.0
    %532 = vmatpush1.xpose.msra.mxu0 0.0
    %533 = vmatprep.subr.mxu0 0.0
    %534 = vmatpush1.xpose.msra.mxu0 0.0
    %535 = vmatprep.subr.mxu0 0.0
    %536 = vmatpush1.xpose.msra.mxu0 0.0
    %537 = vmatprep.subr.mxu0 0.0
    %538 = vmatpush1.xpose.msra.mxu0 0.0
    %539 = vmatprep.subr.mxu0 0.0
    %540 = vmatpush1.xpose.msra.mxu0 0.0
    %541 = vmatprep.subr.mxu0 0.0
    %542 = vmatpush1.xpose.msra.mxu0 0.0
    %543 = vmatprep.mubr.f32.mxu0 0.0
    %544 = vmatmul.mubr.f32.gmra.mrb[0].mxu0 %v475
    %v545 = vpop.f32.mrb[0].mxu0
    %v546 = vadd.f32 0.0, %v545
    %v547 = vpop.f32.mrb[0].mxu0
    %548 = vdwg.mxu0
    %549 = vrot.lane.b32.xlu0 %v228, 112
    %v550 = vpop.permute.xlu0 %549
    %551 = vrot.lane.b32.xlu0 %v228, 48
    %v552 = vpop.permute.xlu0 %551
    %v553 = vsel %vm241, %v550, 0
    %v555 = vsel %vm241, %v552, 0
    %557 = vmatprep.subr.mxu0 0.0
    %558 = vmatpush1.xpose.msra.mxu0 %v555
    %559 = vmatprep.subr.mxu0 0.0
    %560 = vmatpush1.xpose.msra.mxu0 0.0
    %561 = vmatprep.subr.mxu0 0.0
    %562 = vmatpush1.xpose.msra.mxu0 0.0
    %563 = vmatprep.subr.mxu0 0.0
    %564 = vmatpush1.xpose.msra.mxu0 0.0
    %565 = vmatprep.subr.mxu0 0.0
    %566 = vmatpush1.xpose.msra.mxu0 0.0
    %567 = vmatprep.subr.mxu0 0.0
    %568 = vmatpush1.xpose.msra.mxu0 0.0
    %569 = vmatprep.subr.mxu0 0.0
    %570 = vmatpush1.xpose.msra.mxu0 0.0
    %571 = vmatprep.subr.mxu0 0.0
    %572 = vmatpush1.xpose.msra.mxu0 0.0
    %573 = vmatprep.subr.mxu0 0.0
    %574 = vmatpush1.xpose.msra.mxu0 0.0
    %575 = vmatprep.subr.mxu0 0.0
    %576 = vmatpush1.xpose.msra.mxu0 0.0
    %577 = vmatprep.subr.mxu0 0.0
    %578 = vmatpush1.xpose.msra.mxu0 0.0
    %579 = vmatprep.subr.mxu0 0.0
    %580 = vmatpush1.xpose.msra.mxu0 0.0
    %581 = vmatprep.subr.mxu0 0.0
    %582 = vmatpush1.xpose.msra.mxu0 0.0
    %583 = vmatprep.subr.mxu0 0.0
    %584 = vmatpush1.xpose.msra.mxu0 0.0
    %585 = vmatprep.subr.mxu0 0.0
    %586 = vmatpush1.xpose.msra.mxu0 0.0
    %587 = vmatprep.subr.mxu0 0.0
    %588 = vmatpush1.xpose.msra.mxu0 0.0
    %589 = vmatprep.subr.mxu0 0.0
    %590 = vmatpush1.xpose.msra.mxu0 0.0
    %591 = vmatprep.subr.mxu0 0.0
    %592 = vmatpush1.xpose.msra.mxu0 0.0
    %593 = vmatprep.subr.mxu0 0.0
    %594 = vmatpush1.xpose.msra.mxu0 0.0
    %595 = vmatprep.subr.mxu0 0.0
    %596 = vmatpush1.xpose.msra.mxu0 0.0
    %597 = vmatprep.subr.mxu0 0.0
    %598 = vmatpush1.xpose.msra.mxu0 0.0
    %599 = vmatprep.subr.mxu0 0.0
    %600 = vmatpush1.xpose.msra.mxu0 0.0
    %601 = vmatprep.subr.mxu0 0.0
    %602 = vmatpush1.xpose.msra.mxu0 0.0
    %603 = vmatprep.subr.mxu0 0.0
    %604 = vmatpush1.xpose.msra.mxu0 0.0
    %605 = vmatprep.subr.mxu0 0.0
    %606 = vmatpush1.xpose.msra.mxu0 0.0
    %607 = vmatprep.subr.mxu0 0.0
    %608 = vmatpush1.xpose.msra.mxu0 0.0
    %609 = vmatprep.subr.mxu0 0.0
    %610 = vmatpush1.xpose.msra.mxu0 0.0
    %611 = vmatprep.subr.mxu0 0.0
    %612 = vmatpush1.xpose.msra.mxu0 0.0
    %613 = vmatprep.subr.mxu0 0.0
    %614 = vmatpush1.xpose.msra.mxu0 0.0
    %615 = vmatprep.subr.mxu0 0.0
    %616 = vmatpush1.xpose.msra.mxu0 0.0
    %617 = vmatprep.subr.mxu0 0.0
    %618 = vmatpush1.xpose.msra.mxu0 0.0
    %619 = vmatprep.subr.mxu0 0.0
    %620 = vmatpush1.xpose.msra.mxu0 0.0
    %621 = vmatprep.mubr.f32.mxu0 0.0
    %622 = vmatmul.mubr.f32.gmra.mrb[0].mxu0 %v553
    %v623 = vpop.f32.mrb[0].mxu0
    %v624 = vadd.f32 0.0, %v623
    %v625 = vpop.f32.mrb[0].mxu0
    %626 = vdwg.mxu0
    %627 = vrot.lane.b32.xlu0 %v234, 112
    %v628 = vpop.permute.xlu0 %627
    %629 = vrot.lane.b32.xlu0 %v234, 48
    %v630 = vpop.permute.xlu0 %629
    %v631 = vsel %vm241, %v628, 0
    %v633 = vsel %vm241, %v630, 0
    %635 = vmatprep.subr.mxu0 0.0
    %636 = vmatpush1.xpose.msra.mxu0 %v633
    %637 = vmatprep.subr.mxu0 0.0
    %638 = vmatpush1.xpose.msra.mxu0 0.0
    %639 = vmatprep.subr.mxu0 0.0
    %640 = vmatpush1.xpose.msra.mxu0 0.0
    %641 = vmatprep.subr.mxu0 0.0
    %642 = vmatpush1.xpose.msra.mxu0 0.0
    %643 = vmatprep.subr.mxu0 0.0
    %644 = vmatpush1.xpose.msra.mxu0 0.0
    %645 = vmatprep.subr.mxu0 0.0
    %646 = vmatpush1.xpose.msra.mxu0 0.0
    %647 = vmatprep.subr.mxu0 0.0
    %648 = vmatpush1.xpose.msra.mxu0 0.0
    %649 = vmatprep.subr.mxu0 0.0
    %650 = vmatpush1.xpose.msra.mxu0 0.0
    %651 = vmatprep.subr.mxu0 0.0
    %652 = vmatpush1.xpose.msra.mxu0 0.0
    %653 = vmatprep.subr.mxu0 0.0
    %654 = vmatpush1.xpose.msra.mxu0 0.0
    %655 = vmatprep.subr.mxu0 0.0
    %656 = vmatpush1.xpose.msra.mxu0 0.0
    %657 = vmatprep.subr.mxu0 0.0
    %658 = vmatpush1.xpose.msra.mxu0 0.0
    %659 = vmatprep.subr.mxu0 0.0
    %660 = vmatpush1.xpose.msra.mxu0 0.0
    %661 = vmatprep.subr.mxu0 0.0
    %662 = vmatpush1.xpose.msra.mxu0 0.0
    %663 = vmatprep.subr.mxu0 0.0
    %664 = vmatpush1.xpose.msra.mxu0 0.0
    %665 = vmatprep.subr.mxu0 0.0
    %666 = vmatpush1.xpose.msra.mxu0 0.0
    %667 = vmatprep.subr.mxu0 0.0
    %668 = vmatpush1.xpose.msra.mxu0 0.0
    %669 = vmatprep.subr.mxu0 0.0
    %670 = vmatpush1.xpose.msra.mxu0 0.0
    %671 = vmatprep.subr.mxu0 0.0
    %672 = vmatpush1.xpose.msra.mxu0 0.0
    %673 = vmatprep.subr.mxu0 0.0
    %674 = vmatpush1.xpose.msra.mxu0 0.0
    %675 = vmatprep.subr.mxu0 0.0
    %676 = vmatpush1.xpose.msra.mxu0 0.0
    %677 = vmatprep.subr.mxu0 0.0
    %678 = vmatpush1.xpose.msra.mxu0 0.0
    %679 = vmatprep.subr.mxu0 0.0
    %680 = vmatpush1.xpose.msra.mxu0 0.0
    %681 = vmatprep.subr.mxu0 0.0
    %682 = vmatpush1.xpose.msra.mxu0 0.0
    %683 = vmatprep.subr.mxu0 0.0
    %684 = vmatpush1.xpose.msra.mxu0 0.0
    %685 = vmatprep.subr.mxu0 0.0
    %686 = vmatpush1.xpose.msra.mxu0 0.0
    %687 = vmatprep.subr.mxu0 0.0
    %688 = vmatpush1.xpose.msra.mxu0 0.0
    %689 = vmatprep.subr.mxu0 0.0
    %690 = vmatpush1.xpose.msra.mxu0 0.0
    %691 = vmatprep.subr.mxu0 0.0
    %692 = vmatpush1.xpose.msra.mxu0 0.0
    %693 = vmatprep.subr.mxu0 0.0
    %694 = vmatpush1.xpose.msra.mxu0 0.0
    %695 = vmatprep.subr.mxu0 0.0
    %696 = vmatpush1.xpose.msra.mxu0 0.0
    %697 = vmatprep.subr.mxu0 0.0
    %698 = vmatpush1.xpose.msra.mxu0 0.0
    %699 = vmatprep.mubr.f32.mxu0 0.0
    %700 = vmatmul.mubr.f32.gmra.mrb[0].mxu0 %v631
    %v701 = vpop.f32.mrb[0].mxu0
    %v702 = vadd.f32 0.0, %v701
    %v703 = vpop.f32.mrb[0].mxu0
    %704 = vdwg.mxu0
    %705 = vrot.lane.b32.xlu0 %v228, 104
    %v706 = vpop.permute.xlu0 %705
    %707 = vrot.lane.b32.xlu0 %v228, 40
    %v708 = vpop.permute.xlu0 %707
    %v709 = vsel %vm241, %v706, 0
    %v711 = vsel %vm241, %v708, 0
    %713 = vmatprep.subr.mxu0 0.0
    %714 = vmatpush1.xpose.msra.mxu0 %v711
    %715 = vmatprep.subr.mxu0 0.0
    %716 = vmatpush1.xpose.msra.mxu0 0.0
    %717 = vmatprep.subr.mxu0 0.0
    %718 = vmatpush1.xpose.msra.mxu0 0.0
    %719 = vmatprep.subr.mxu0 0.0
    %720 = vmatpush1.xpose.msra.mxu0 0.0
    %721 = vmatprep.subr.mxu0 0.0
    %722 = vmatpush1.xpose.msra.mxu0 0.0
    %723 = vmatprep.subr.mxu0 0.0
    %724 = vmatpush1.xpose.msra.mxu0 0.0
    %725 = vmatprep.subr.mxu0 0.0
    %726 = vmatpush1.xpose.msra.mxu0 0.0
    %727 = vmatprep.subr.mxu0 0.0
    %728 = vmatpush1.xpose.msra.mxu0 0.0
    %729 = vmatprep.subr.mxu0 0.0
    %730 = vmatpush1.xpose.msra.mxu0 0.0
    %731 = vmatprep.subr.mxu0 0.0
    %732 = vmatpush1.xpose.msra.mxu0 0.0
    %733 = vmatprep.subr.mxu0 0.0
    %734 = vmatpush1.xpose.msra.mxu0 0.0
    %735 = vmatprep.subr.mxu0 0.0
    %736 = vmatpush1.xpose.msra.mxu0 0.0
    %737 = vmatprep.subr.mxu0 0.0
    %738 = vmatpush1.xpose.msra.mxu0 0.0
    %739 = vmatprep.subr.mxu0 0.0
    %740 = vmatpush1.xpose.msra.mxu0 0.0
    %741 = vmatprep.subr.mxu0 0.0
    %742 = vmatpush1.xpose.msra.mxu0 0.0
    %743 = vmatprep.subr.mxu0 0.0
    %744 = vmatpush1.xpose.msra.mxu0 0.0
    %745 = vmatprep.subr.mxu0 0.0
    %746 = vmatpush1.xpose.msra.mxu0 0.0
    %747 = vmatprep.subr.mxu0 0.0
    %748 = vmatpush1.xpose.msra.mxu0 0.0
    %749 = vmatprep.subr.mxu0 0.0
    %750 = vmatpush1.xpose.msra.mxu0 0.0
    %751 = vmatprep.subr.mxu0 0.0
    %752 = vmatpush1.xpose.msra.mxu0 0.0
    %753 = vmatprep.subr.mxu0 0.0
    %754 = vmatpush1.xpose.msra.mxu0 0.0
    %755 = vmatprep.subr.mxu0 0.0
    %756 = vmatpush1.xpose.msra.mxu0 0.0
    %757 = vmatprep.subr.mxu0 0.0
    %758 = vmatpush1.xpose.msra.mxu0 0.0
    %759 = vmatprep.subr.mxu0 0.0
    %760 = vmatpush1.xpose.msra.mxu0 0.0
    %761 = vmatprep.subr.mxu0 0.0
    %762 = vmatpush1.xpose.msra.mxu0 0.0
    %763 = vmatprep.subr.mxu0 0.0
    %764 = vmatpush1.xpose.msra.mxu0 0.0
    %765 = vmatprep.subr.mxu0 0.0
    %766 = vmatpush1.xpose.msra.mxu0 0.0
    %767 = vmatprep.subr.mxu0 0.0
    %768 = vmatpush1.xpose.msra.mxu0 0.0
    %769 = vmatprep.subr.mxu0 0.0
    %770 = vmatpush1.xpose.msra.mxu0 0.0
    %771 = vmatprep.subr.mxu0 0.0
    %772 = vmatpush1.xpose.msra.mxu0 0.0
    %773 = vmatprep.subr.mxu0 0.0
    %774 = vmatpush1.xpose.msra.mxu0 0.0
    %775 = vmatprep.subr.mxu0 0.0
    %776 = vmatpush1.xpose.msra.mxu0 0.0
    %777 = vmatprep.mubr.f32.mxu0 0.0
    %778 = vmatmul.mubr.f32.gmra.mrb[0].mxu0 %v709
    %v779 = vpop.f32.mrb[0].mxu0
    %v780 = vadd.f32 0.0, %v779
    %v781 = vpop.f32.mrb[0].mxu0
    %782 = vdwg.mxu0
    %783 = vrot.lane.b32.xlu0 %v234, 104
    %v784 = vpop.permute.xlu0 %783
    %785 = vrot.lane.b32.xlu0 %v234, 40
    %v786 = vpop.permute.xlu0 %785
    %v787 = vsel %vm241, %v784, 0
    %v789 = vsel %vm241, %v786, 0
    %791 = vmatprep.subr.mxu0 0.0
    %792 = vmatpush1.xpose.msra.mxu0 %v789
    %793 = vmatprep.subr.mxu0 0.0
    %794 = vmatpush1.xpose.msra.mxu0 0.0
    %795 = vmatprep.subr.mxu0 0.0
    %796 = vmatpush1.xpose.msra.mxu0 0.0
    %797 = vmatprep.subr.mxu0 0.0
    %798 = vmatpush1.xpose.msra.mxu0 0.0
    %799 = vmatprep.subr.mxu0 0.0
    %800 = vmatpush1.xpose.msra.mxu0 0.0
    %801 = vmatprep.subr.mxu0 0.0
    %802 = vmatpush1.xpose.msra.mxu0 0.0
    %803 = vmatprep.subr.mxu0 0.0
    %804 = vmatpush1.xpose.msra.mxu0 0.0
    %805 = vmatprep.subr.mxu0 0.0
    %806 = vmatpush1.xpose.msra.mxu0 0.0
    %807 = vmatprep.subr.mxu0 0.0
    %808 = vmatpush1.xpose.msra.mxu0 0.0
    %809 = vmatprep.subr.mxu0 0.0
    %810 = vmatpush1.xpose.msra.mxu0 0.0
    %811 = vmatprep.subr.mxu0 0.0
    %812 = vmatpush1.xpose.msra.mxu0 0.0
    %813 = vmatprep.subr.mxu0 0.0
    %814 = vmatpush1.xpose.msra.mxu0 0.0
    %815 = vmatprep.subr.mxu0 0.0
    %816 = vmatpush1.xpose.msra.mxu0 0.0
    %817 = vmatprep.subr.mxu0 0.0
    %818 = vmatpush1.xpose.msra.mxu0 0.0
    %819 = vmatprep.subr.mxu0 0.0
    %820 = vmatpush1.xpose.msra.mxu0 0.0
    %821 = vmatprep.subr.mxu0 0.0
    %822 = vmatpush1.xpose.msra.mxu0 0.0
    %823 = vmatprep.subr.mxu0 0.0
    %824 = vmatpush1.xpose.msra.mxu0 0.0
    %825 = vmatprep.subr.mxu0 0.0
    %826 = vmatpush1.xpose.msra.mxu0 0.0
    %827 = vmatprep.subr.mxu0 0.0
    %828 = vmatpush1.xpose.msra.mxu0 0.0
    %829 = vmatprep.subr.mxu0 0.0
    %830 = vmatpush1.xpose.msra.mxu0 0.0
    %831 = vmatprep.subr.mxu0 0.0
    %832 = vmatpush1.xpose.msra.mxu0 0.0
    %833 = vmatprep.subr.mxu0 0.0
    %834 = vmatpush1.xpose.msra.mxu0 0.0
    %835 = vmatprep.subr.mxu0 0.0
    %836 = vmatpush1.xpose.msra.mxu0 0.0
    %837 = vmatprep.subr.mxu0 0.0
    %838 = vmatpush1.xpose.msra.mxu0 0.0
    %839 = vmatprep.subr.mxu0 0.0
    %840 = vmatpush1.xpose.msra.mxu0 0.0
    %841 = vmatprep.subr.mxu0 0.0
    %842 = vmatpush1.xpose.msra.mxu0 0.0
    %843 = vmatprep.subr.mxu0 0.0
    %844 = vmatpush1.xpose.msra.mxu0 0.0
    %845 = vmatprep.subr.mxu0 0.0
    %846 = vmatpush1.xpose.msra.mxu0 0.0
    %847 = vmatprep.subr.mxu0 0.0
    %848 = vmatpush1.xpose.msra.mxu0 0.0
    %849 = vmatprep.subr.mxu0 0.0
    %850 = vmatpush1.xpose.msra.mxu0 0.0
    %851 = vmatprep.subr.mxu0 0.0
    %852 = vmatpush1.xpose.msra.mxu0 0.0
    %853 = vmatprep.subr.mxu0 0.0
    %854 = vmatpush1.xpose.msra.mxu0 0.0
    %855 = vmatprep.mubr.f32.mxu0 0.0
    %856 = vmatmul.mubr.f32.gmra.mrb[0].mxu0 %v787
    %v857 = vpop.f32.mrb[0].mxu0
    %v858 = vadd.f32 0.0, %v857
    %v859 = vpop.f32.mrb[0].mxu0
    %860 = vdwg.mxu0
    %861 = vrot.lane.b32.xlu0 %v228, 96
    %v862 = vpop.permute.xlu0 %861
    %863 = vrot.lane.b32.xlu0 %v228, 32
    %v864 = vpop.permute.xlu0 %863
    %v865 = vsel %vm241, %v862, 0
    %v867 = vsel %vm241, %v864, 0
    %869 = vmatprep.subr.mxu0 0.0
    %870 = vmatpush1.xpose.msra.mxu0 %v867
    %871 = vmatprep.subr.mxu0 0.0
    %872 = vmatpush1.xpose.msra.mxu0 0.0
    %873 = vmatprep.subr.mxu0 0.0
    %874 = vmatpush1.xpose.msra.mxu0 0.0
    %875 = vmatprep.subr.mxu0 0.0
    %876 = vmatpush1.xpose.msra.mxu0 0.0
    %877 = vmatprep.subr.mxu0 0.0
    %878 = vmatpush1.xpose.msra.mxu0 0.0
    %879 = vmatprep.subr.mxu0 0.0
    %880 = vmatpush1.xpose.msra.mxu0 0.0
    %881 = vmatprep.subr.mxu0 0.0
    %882 = vmatpush1.xpose.msra.mxu0 0.0
    %883 = vmatprep.subr.mxu0 0.0
    %884 = vmatpush1.xpose.msra.mxu0 0.0
    %885 = vmatprep.subr.mxu0 0.0
    %886 = vmatpush1.xpose.msra.mxu0 0.0
    %887 = vmatprep.subr.mxu0 0.0
    %888 = vmatpush1.xpose.msra.mxu0 0.0
    %889 = vmatprep.subr.mxu0 0.0
    %890 = vmatpush1.xpose.msra.mxu0 0.0
    %891 = vmatprep.subr.mxu0 0.0
    %892 = vmatpush1.xpose.msra.mxu0 0.0
    %893 = vmatprep.subr.mxu0 0.0
    %894 = vmatpush1.xpose.msra.mxu0 0.0
    %895 = vmatprep.subr.mxu0 0.0
    %896 = vmatpush1.xpose.msra.mxu0 0.0
    %897 = vmatprep.subr.mxu0 0.0
    %898 = vmatpush1.xpose.msra.mxu0 0.0
    %899 = vmatprep.subr.mxu0 0.0
    %900 = vmatpush1.xpose.msra.mxu0 0.0
    %901 = vmatprep.subr.mxu0 0.0
    %902 = vmatpush1.xpose.msra.mxu0 0.0
    %903 = vmatprep.subr.mxu0 0.0
    %904 = vmatpush1.xpose.msra.mxu0 0.0
    %905 = vmatprep.subr.mxu0 0.0
    %906 = vmatpush1.xpose.msra.mxu0 0.0
    %907 = vmatprep.subr.mxu0 0.0
    %908 = vmatpush1.xpose.msra.mxu0 0.0
    %909 = vmatprep.subr.mxu0 0.0
    %910 = vmatpush1.xpose.msra.mxu0 0.0
    %911 = vmatprep.subr.mxu0 0.0
    %912 = vmatpush1.xpose.msra.mxu0 0.0
    %913 = vmatprep.subr.mxu0 0.0
    %914 = vmatpush1.xpose.msra.mxu0 0.0
    %915 = vmatprep.subr.mxu0 0.0
    %916 = vmatpush1.xpose.msra.mxu0 0.0
    %917 = vmatprep.subr.mxu0 0.0
    %918 = vmatpush1.xpose.msra.mxu0 0.0
    %919 = vmatprep.subr.mxu0 0.0
    %920 = vmatpush1.xpose.msra.mxu0 0.0
    %921 = vmatprep.subr.mxu0 0.0
    %922 = vmatpush1.xpose.msra.mxu0 0.0
    %923 = vmatprep.subr.mxu0 0.0
    %924 = vmatpush1.xpose.msra.mxu0 0.0
    %925 = vmatprep.subr.mxu0 0.0
    %926 = vmatpush1.xpose.msra.mxu0 0.0
    %927 = vmatprep.subr.mxu0 0.0
    %928 = vmatpush1.xpose.msra.mxu0 0.0
    %929 = vmatprep.subr.mxu0 0.0
    %930 = vmatpush1.xpose.msra.mxu0 0.0
    %931 = vmatprep.subr.mxu0 0.0
    %932 = vmatpush1.xpose.msra.mxu0 0.0
    %933 = vmatprep.mubr.f32.mxu0 0.0
    %934 = vmatmul.mubr.f32.gmra.mrb[0].mxu0 %v865
    %v935 = vpop.f32.mrb[0].mxu0
    %v936 = vadd.f32 0.0, %v935
    %v937 = vpop.f32.mrb[0].mxu0
    %938 = vdwg.mxu0
    %939 = vrot.lane.b32.xlu0 %v234, 96
    %v940 = vpop.permute.xlu0 %939
    %941 = vrot.lane.b32.xlu0 %v234, 32
    %v942 = vpop.permute.xlu0 %941
    %v943 = vsel %vm241, %v940, 0
    %v945 = vsel %vm241, %v942, 0
    %947 = vmatprep.subr.mxu0 0.0
    %948 = vmatpush1.xpose.msra.mxu0 %v945
    %949 = vmatprep.subr.mxu0 0.0
    %950 = vmatpush1.xpose.msra.mxu0 0.0
    %951 = vmatprep.subr.mxu0 0.0
    %952 = vmatpush1.xpose.msra.mxu0 0.0
    %953 = vmatprep.subr.mxu0 0.0
    %954 = vmatpush1.xpose.msra.mxu0 0.0
    %955 = vmatprep.subr.mxu0 0.0
    %956 = vmatpush1.xpose.msra.mxu0 0.0
    %957 = vmatprep.subr.mxu0 0.0
    %958 = vmatpush1.xpose.msra.mxu0 0.0
    %959 = vmatprep.subr.mxu0 0.0
    %960 = vmatpush1.xpose.msra.mxu0 0.0
    %961 = vmatprep.subr.mxu0 0.0
    %962 = vmatpush1.xpose.msra.mxu0 0.0
    %963 = vmatprep.subr.mxu0 0.0
    %964 = vmatpush1.xpose.msra.mxu0 0.0
    %965 = vmatprep.subr.mxu0 0.0
    %966 = vmatpush1.xpose.msra.mxu0 0.0
    %967 = vmatprep.subr.mxu0 0.0
    %968 = vmatpush1.xpose.msra.mxu0 0.0
    %969 = vmatprep.subr.mxu0 0.0
    %970 = vmatpush1.xpose.msra.mxu0 0.0
    %971 = vmatprep.subr.mxu0 0.0
    %972 = vmatpush1.xpose.msra.mxu0 0.0
    %973 = vmatprep.subr.mxu0 0.0
    %974 = vmatpush1.xpose.msra.mxu0 0.0
    %975 = vmatprep.subr.mxu0 0.0
    %976 = vmatpush1.xpose.msra.mxu0 0.0
    %977 = vmatprep.subr.mxu0 0.0
    %978 = vmatpush1.xpose.msra.mxu0 0.0
    %979 = vmatprep.subr.mxu0 0.0
    %980 = vmatpush1.xpose.msra.mxu0 0.0
    %981 = vmatprep.subr.mxu0 0.0
    %982 = vmatpush1.xpose.msra.mxu0 0.0
    %983 = vmatprep.subr.mxu0 0.0
    %984 = vmatpush1.xpose.msra.mxu0 0.0
    %985 = vmatprep.subr.mxu0 0.0
    %986 = vmatpush1.xpose.msra.mxu0 0.0
    %987 = vmatprep.subr.mxu0 0.0
    %988 = vmatpush1.xpose.msra.mxu0 0.0
    %989 = vmatprep.subr.mxu0 0.0
    %990 = vmatpush1.xpose.msra.mxu0 0.0
    %991 = vmatprep.subr.mxu0 0.0
    %992 = vmatpush1.xpose.msra.mxu0 0.0
    %993 = vmatprep.subr.mxu0 0.0
    %994 = vmatpush1.xpose.msra.mxu0 0.0
    %995 = vmatprep.subr.mxu0 0.0
    %996 = vmatpush1.xpose.msra.mxu0 0.0
    %997 = vmatprep.subr.mxu0 0.0
    %998 = vmatpush1.xpose.msra.mxu0 0.0
    %999 = vmatprep.subr.mxu0 0.0
    %1000 = vmatpush1.xpose.msra.mxu0 0.0
    %1001 = vmatprep.subr.mxu0 0.0
    %1002 = vmatpush1.xpose.msra.mxu0 0.0
    %1003 = vmatprep.subr.mxu0 0.0
    %1004 = vmatpush1.xpose.msra.mxu0 0.0
    %1005 = vmatprep.subr.mxu0 0.0
    %1006 = vmatpush1.xpose.msra.mxu0 0.0
    %1007 = vmatprep.subr.mxu0 0.0
    %1008 = vmatpush1.xpose.msra.mxu0 0.0
    %1009 = vmatprep.subr.mxu0 0.0
    %1010 = vmatpush1.xpose.msra.mxu0 0.0
    %1011 = vmatprep.mubr.f32.mxu0 0.0
    %1012 = vmatmul.mubr.f32.gmra.mrb[0].mxu0 %v943
    %v1013 = vpop.f32.mrb[0].mxu0
    %v1014 = vadd.f32 0.0, %v1013
    %v1015 = vpop.f32.mrb[0].mxu0
    %1016 = vdwg.mxu0
    %1017 = vrot.lane.b32.xlu0 %v228, 88
    %v1018 = vpop.permute.xlu0 %1017
    %1019 = vrot.lane.b32.xlu0 %v228, 24
    %v1020 = vpop.permute.xlu0 %1019
    %v1021 = vsel %vm241, %v1018, 0
    %v1023 = vsel %vm241, %v1020, 0
    %1025 = vmatprep.subr.mxu0 0.0
    %1026 = vmatpush1.xpose.msra.mxu0 %v1023
    %1027 = vmatprep.subr.mxu0 0.0
    %1028 = vmatpush1.xpose.msra.mxu0 0.0
    %1029 = vmatprep.subr.mxu0 0.0
    %1030 = vmatpush1.xpose.msra.mxu0 0.0
    %1031 = vmatprep.subr.mxu0 0.0
    %1032 = vmatpush1.xpose.msra.mxu0 0.0
    %1033 = vmatprep.subr.mxu0 0.0
    %1034 = vmatpush1.xpose.msra.mxu0 0.0
    %1035 = vmatprep.subr.mxu0 0.0
    %1036 = vmatpush1.xpose.msra.mxu0 0.0
    %1037 = vmatprep.subr.mxu0 0.0
    %1038 = vmatpush1.xpose.msra.mxu0 0.0
    %1039 = vmatprep.subr.mxu0 0.0
    %1040 = vmatpush1.xpose.msra.mxu0 0.0
    %1041 = vmatprep.subr.mxu0 0.0
    %1042 = vmatpush1.xpose.msra.mxu0 0.0
    %1043 = vmatprep.subr.mxu0 0.0
    %1044 = vmatpush1.xpose.msra.mxu0 0.0
    %1045 = vmatprep.subr.mxu0 0.0
    %1046 = vmatpush1.xpose.msra.mxu0 0.0
    %1047 = vmatprep.subr.mxu0 0.0
    %1048 = vmatpush1.xpose.msra.mxu0 0.0
    %1049 = vmatprep.subr.mxu0 0.0
    %1050 = vmatpush1.xpose.msra.mxu0 0.0
    %1051 = vmatprep.subr.mxu0 0.0
    %1052 = vmatpush1.xpose.msra.mxu0 0.0
    %1053 = vmatprep.subr.mxu0 0.0
    %1054 = vmatpush1.xpose.msra.mxu0 0.0
    %1055 = vmatprep.subr.mxu0 0.0
    %1056 = vmatpush1.xpose.msra.mxu0 0.0
    %1057 = vmatprep.subr.mxu0 0.0
    %1058 = vmatpush1.xpose.msra.mxu0 0.0
    %1059 = vmatprep.subr.mxu0 0.0
    %1060 = vmatpush1.xpose.msra.mxu0 0.0
    %1061 = vmatprep.subr.mxu0 0.0
    %1062 = vmatpush1.xpose.msra.mxu0 0.0
    %1063 = vmatprep.subr.mxu0 0.0
    %1064 = vmatpush1.xpose.msra.mxu0 0.0
    %1065 = vmatprep.subr.mxu0 0.0
    %1066 = vmatpush1.xpose.msra.mxu0 0.0
    %1067 = vmatprep.subr.mxu0 0.0
    %1068 = vmatpush1.xpose.msra.mxu0 0.0
    %1069 = vmatprep.subr.mxu0 0.0
    %1070 = vmatpush1.xpose.msra.mxu0 0.0
    %1071 = vmatprep.subr.mxu0 0.0
    %1072 = vmatpush1.xpose.msra.mxu0 0.0
    %1073 = vmatprep.subr.mxu0 0.0
    %1074 = vmatpush1.xpose.msra.mxu0 0.0
    %1075 = vmatprep.subr.mxu0 0.0
    %1076 = vmatpush1.xpose.msra.mxu0 0.0
    %1077 = vmatprep.subr.mxu0 0.0
    %1078 = vmatpush1.xpose.msra.mxu0 0.0
    %1079 = vmatprep.subr.mxu0 0.0
    %1080 = vmatpush1.xpose.msra.mxu0 0.0
    %1081 = vmatprep.subr.mxu0 0.0
    %1082 = vmatpush1.xpose.msra.mxu0 0.0
    %1083 = vmatprep.subr.mxu0 0.0
    %1084 = vmatpush1.xpose.msra.mxu0 0.0
    %1085 = vmatprep.subr.mxu0 0.0
    %1086 = vmatpush1.xpose.msra.mxu0 0.0
    %1087 = vmatprep.subr.mxu0 0.0
    %1088 = vmatpush1.xpose.msra.mxu0 0.0
    %1089 = vmatprep.mubr.f32.mxu0 0.0
    %1090 = vmatmul.mubr.f32.gmra.mrb[0].mxu0 %v1021
    %v1091 = vpop.f32.mrb[0].mxu0
    %v1092 = vadd.f32 0.0, %v1091
    %v1093 = vpop.f32.mrb[0].mxu0
    %1094 = vdwg.mxu0
    %1095 = vrot.lane.b32.xlu0 %v234, 88
    %v1096 = vpop.permute.xlu0 %1095
    %1097 = vrot.lane.b32.xlu0 %v234, 24
    %v1098 = vpop.permute.xlu0 %1097
    %v1099 = vsel %vm241, %v1096, 0
    %v1101 = vsel %vm241, %v1098, 0
    %1103 = vmatprep.subr.mxu0 0.0
    %1104 = vmatpush1.xpose.msra.mxu0 %v1101
    %1105 = vmatprep.subr.mxu0 0.0
    %1106 = vmatpush1.xpose.msra.mxu0 0.0
    %1107 = vmatprep.subr.mxu0 0.0
    %1108 = vmatpush1.xpose.msra.mxu0 0.0
    %1109 = vmatprep.subr.mxu0 0.0
    %1110 = vmatpush1.xpose.msra.mxu0 0.0
    %1111 = vmatprep.subr.mxu0 0.0
    %1112 = vmatpush1.xpose.msra.mxu0 0.0
    %1113 = vmatprep.subr.mxu0 0.0
    %1114 = vmatpush1.xpose.msra.mxu0 0.0
    %1115 = vmatprep.subr.mxu0 0.0
    %1116 = vmatpush1.xpose.msra.mxu0 0.0
    %1117 = vmatprep.subr.mxu0 0.0
    %1118 = vmatpush1.xpose.msra.mxu0 0.0
    %1119 = vmatprep.subr.mxu0 0.0
    %1120 = vmatpush1.xpose.msra.mxu0 0.0
    %1121 = vmatprep.subr.mxu0 0.0
    %1122 = vmatpush1.xpose.msra.mxu0 0.0
    %1123 = vmatprep.subr.mxu0 0.0
    %1124 = vmatpush1.xpose.msra.mxu0 0.0
    %1125 = vmatprep.subr.mxu0 0.0
    %1126 = vmatpush1.xpose.msra.mxu0 0.0
    %1127 = vmatprep.subr.mxu0 0.0
    %1128 = vmatpush1.xpose.msra.mxu0 0.0
    %1129 = vmatprep.subr.mxu0 0.0
    %1130 = vmatpush1.xpose.msra.mxu0 0.0
    %1131 = vmatprep.subr.mxu0 0.0
    %1132 = vmatpush1.xpose.msra.mxu0 0.0
    %1133 = vmatprep.subr.mxu0 0.0
    %1134 = vmatpush1.xpose.msra.mxu0 0.0
    %1135 = vmatprep.subr.mxu0 0.0
    %1136 = vmatpush1.xpose.msra.mxu0 0.0
    %1137 = vmatprep.subr.mxu0 0.0
    %1138 = vmatpush1.xpose.msra.mxu0 0.0
    %1139 = vmatprep.subr.mxu0 0.0
    %1140 = vmatpush1.xpose.msra.mxu0 0.0
    %1141 = vmatprep.subr.mxu0 0.0
    %1142 = vmatpush1.xpose.msra.mxu0 0.0
    %1143 = vmatprep.subr.mxu0 0.0
    %1144 = vmatpush1.xpose.msra.mxu0 0.0
    %1145 = vmatprep.subr.mxu0 0.0
    %1146 = vmatpush1.xpose.msra.mxu0 0.0
    %1147 = vmatprep.subr.mxu0 0.0
    %1148 = vmatpush1.xpose.msra.mxu0 0.0
    %1149 = vmatprep.subr.mxu0 0.0
    %1150 = vmatpush1.xpose.msra.mxu0 0.0
    %1151 = vmatprep.subr.mxu0 0.0
    %1152 = vmatpush1.xpose.msra.mxu0 0.0
    %1153 = vmatprep.subr.mxu0 0.0
    %1154 = vmatpush1.xpose.msra.mxu0 0.0
    %1155 = vmatprep.subr.mxu0 0.0
    %1156 = vmatpush1.xpose.msra.mxu0 0.0
    %1157 = vmatprep.subr.mxu0 0.0
    %1158 = vmatpush1.xpose.msra.mxu0 0.0
    %1159 = vmatprep.subr.mxu0 0.0
    %1160 = vmatpush1.xpose.msra.mxu0 0.0
    %1161 = vmatprep.subr.mxu0 0.0
    %1162 = vmatpush1.xpose.msra.mxu0 0.0
    %1163 = vmatprep.subr.mxu0 0.0
    %1164 = vmatpush1.xpose.msra.mxu0 0.0
    %1165 = vmatprep.subr.mxu0 0.0
    %1166 = vmatpush1.xpose.msra.mxu0 0.0
    %1167 = vmatprep.mubr.f32.mxu0 0.0
    %1168 = vmatmul.mubr.f32.gmra.mrb[0].mxu0 %v1099
    %v1169 = vpop.f32.mrb[0].mxu0
    %v1170 = vadd.f32 0.0, %v1169
    %v1171 = vpop.f32.mrb[0].mxu0
    %1172 = vdwg.mxu0
    %1173 = vrot.lane.b32.xlu0 %v228, 80
    %v1174 = vpop.permute.xlu0 %1173
    %1175 = vrot.lane.b32.xlu0 %v228, 16
    %v1176 = vpop.permute.xlu0 %1175
    %v1177 = vsel %vm241, %v1174, 0
    %v1179 = vsel %vm241, %v1176, 0
    %1181 = vmatprep.subr.mxu0 0.0
    %1182 = vmatpush1.xpose.msra.mxu0 %v1179
    %1183 = vmatprep.subr.mxu0 0.0
    %1184 = vmatpush1.xpose.msra.mxu0 0.0
    %1185 = vmatprep.subr.mxu0 0.0
    %1186 = vmatpush1.xpose.msra.mxu0 0.0
    %1187 = vmatprep.subr.mxu0 0.0
    %1188 = vmatpush1.xpose.msra.mxu0 0.0
    %1189 = vmatprep.subr.mxu0 0.0
    %1190 = vmatpush1.xpose.msra.mxu0 0.0
    %1191 = vmatprep.subr.mxu0 0.0
    %1192 = vmatpush1.xpose.msra.mxu0 0.0
    %1193 = vmatprep.subr.mxu0 0.0
    %1194 = vmatpush1.xpose.msra.mxu0 0.0
    %1195 = vmatprep.subr.mxu0 0.0
    %1196 = vmatpush1.xpose.msra.mxu0 0.0
    %1197 = vmatprep.subr.mxu0 0.0
    %1198 = vmatpush1.xpose.msra.mxu0 0.0
    %1199 = vmatprep.subr.mxu0 0.0
    %1200 = vmatpush1.xpose.msra.mxu0 0.0
    %1201 = vmatprep.subr.mxu0 0.0
    %1202 = vmatpush1.xpose.msra.mxu0 0.0
    %1203 = vmatprep.subr.mxu0 0.0
    %1204 = vmatpush1.xpose.msra.mxu0 0.0
    %1205 = vmatprep.subr.mxu0 0.0
    %1206 = vmatpush1.xpose.msra.mxu0 0.0
    %1207 = vmatprep.subr.mxu0 0.0
    %1208 = vmatpush1.xpose.msra.mxu0 0.0
    %1209 = vmatprep.subr.mxu0 0.0
    %1210 = vmatpush1.xpose.msra.mxu0 0.0
    %1211 = vmatprep.subr.mxu0 0.0
    %1212 = vmatpush1.xpose.msra.mxu0 0.0
    %1213 = vmatprep.subr.mxu0 0.0
    %1214 = vmatpush1.xpose.msra.mxu0 0.0
    %1215 = vmatprep.subr.mxu0 0.0
    %1216 = vmatpush1.xpose.msra.mxu0 0.0
    %1217 = vmatprep.subr.mxu0 0.0
    %1218 = vmatpush1.xpose.msra.mxu0 0.0
    %1219 = vmatprep.subr.mxu0 0.0
    %1220 = vmatpush1.xpose.msra.mxu0 0.0
    %1221 = vmatprep.subr.mxu0 0.0
    %1222 = vmatpush1.xpose.msra.mxu0 0.0
    %1223 = vmatprep.subr.mxu0 0.0
    %1224 = vmatpush1.xpose.msra.mxu0 0.0
    %1225 = vmatprep.subr.mxu0 0.0
    %1226 = vmatpush1.xpose.msra.mxu0 0.0
    %1227 = vmatprep.subr.mxu0 0.0
    %1228 = vmatpush1.xpose.msra.mxu0 0.0
    %1229 = vmatprep.subr.mxu0 0.0
    %1230 = vmatpush1.xpose.msra.mxu0 0.0
    %1231 = vmatprep.subr.mxu0 0.0
    %1232 = vmatpush1.xpose.msra.mxu0 0.0
    %1233 = vmatprep.subr.mxu0 0.0
    %1234 = vmatpush1.xpose.msra.mxu0 0.0
    %1235 = vmatprep.subr.mxu0 0.0
    %1236 = vmatpush1.xpose.msra.mxu0 0.0
    %1237 = vmatprep.subr.mxu0 0.0
    %1238 = vmatpush1.xpose.msra.mxu0 0.0
    %1239 = vmatprep.subr.mxu0 0.0
    %1240 = vmatpush1.xpose.msra.mxu0 0.0
    %1241 = vmatprep.subr.mxu0 0.0
    %1242 = vmatpush1.xpose.msra.mxu0 0.0
    %1243 = vmatprep.subr.mxu0 0.0
    %1244 = vmatpush1.xpose.msra.mxu0 0.0
    %1245 = vmatprep.mubr.f32.mxu0 0.0
    %1246 = vmatmul.mubr.f32.gmra.mrb[0].mxu0 %v1177
    %v1247 = vpop.f32.mrb[0].mxu0
    %v1248 = vadd.f32 0.0, %v1247
    %v1249 = vpop.f32.mrb[0].mxu0
    %1250 = vdwg.mxu0
    %1251 = vrot.lane.b32.xlu0 %v234, 80
    %v1252 = vpop.permute.xlu0 %1251
    %1253 = vrot.lane.b32.xlu0 %v234, 16
    %v1254 = vpop.permute.xlu0 %1253
    %v1255 = vsel %vm241, %v1252, 0
    %v1257 = vsel %vm241, %v1254, 0
    %1259 = vmatprep.subr.mxu0 0.0
    %1260 = vmatpush1.xpose.msra.mxu0 %v1257
    %1261 = vmatprep.subr.mxu0 0.0
    %1262 = vmatpush1.xpose.msra.mxu0 0.0
    %1263 = vmatprep.subr.mxu0 0.0
    %1264 = vmatpush1.xpose.msra.mxu0 0.0
    %1265 = vmatprep.subr.mxu0 0.0
    %1266 = vmatpush1.xpose.msra.mxu0 0.0
    %1267 = vmatprep.subr.mxu0 0.0
    %1268 = vmatpush1.xpose.msra.mxu0 0.0
    %1269 = vmatprep.subr.mxu0 0.0
    %1270 = vmatpush1.xpose.msra.mxu0 0.0
    %1271 = vmatprep.subr.mxu0 0.0
    %1272 = vmatpush1.xpose.msra.mxu0 0.0
    %1273 = vmatprep.subr.mxu0 0.0
    %1274 = vmatpush1.xpose.msra.mxu0 0.0
    %1275 = vmatprep.subr.mxu0 0.0
    %1276 = vmatpush1.xpose.msra.mxu0 0.0
    %1277 = vmatprep.subr.mxu0 0.0
    %1278 = vmatpush1.xpose.msra.mxu0 0.0
    %1279 = vmatprep.subr.mxu0 0.0
    %1280 = vmatpush1.xpose.msra.mxu0 0.0
    %1281 = vmatprep.subr.mxu0 0.0
    %1282 = vmatpush1.xpose.msra.mxu0 0.0
    %1283 = vmatprep.subr.mxu0 0.0
    %1284 = vmatpush1.xpose.msra.mxu0 0.0
    %1285 = vmatprep.subr.mxu0 0.0
    %1286 = vmatpush1.xpose.msra.mxu0 0.0
    %1287 = vmatprep.subr.mxu0 0.0
    %1288 = vmatpush1.xpose.msra.mxu0 0.0
    %1289 = vmatprep.subr.mxu0 0.0
    %1290 = vmatpush1.xpose.msra.mxu0 0.0
    %1291 = vmatprep.subr.mxu0 0.0
    %1292 = vmatpush1.xpose.msra.mxu0 0.0
    %1293 = vmatprep.subr.mxu0 0.0
    %1294 = vmatpush1.xpose.msra.mxu0 0.0
    %1295 = vmatprep.subr.mxu0 0.0
    %1296 = vmatpush1.xpose.msra.mxu0 0.0
    %1297 = vmatprep.subr.mxu0 0.0
    %1298 = vmatpush1.xpose.msra.mxu0 0.0
    %1299 = vmatprep.subr.mxu0 0.0
    %1300 = vmatpush1.xpose.msra.mxu0 0.0
    %1301 = vmatprep.subr.mxu0 0.0
    %1302 = vmatpush1.xpose.msra.mxu0 0.0
    %1303 = vmatprep.subr.mxu0 0.0
    %1304 = vmatpush1.xpose.msra.mxu0 0.0
    %1305 = vmatprep.subr.mxu0 0.0
    %1306 = vmatpush1.xpose.msra.mxu0 0.0
    %1307 = vmatprep.subr.mxu0 0.0
    %1308 = vmatpush1.xpose.msra.mxu0 0.0
    %1309 = vmatprep.subr.mxu0 0.0
    %1310 = vmatpush1.xpose.msra.mxu0 0.0
    %1311 = vmatprep.subr.mxu0 0.0
    %1312 = vmatpush1.xpose.msra.mxu0 0.0
    %1313 = vmatprep.subr.mxu0 0.0
    %1314 = vmatpush1.xpose.msra.mxu0 0.0
    %1315 = vmatprep.subr.mxu0 0.0
    %1316 = vmatpush1.xpose.msra.mxu0 0.0
    %1317 = vmatprep.subr.mxu0 0.0
    %1318 = vmatpush1.xpose.msra.mxu0 0.0
    %1319 = vmatprep.subr.mxu0 0.0
    %1320 = vmatpush1.xpose.msra.mxu0 0.0
    %1321 = vmatprep.subr.mxu0 0.0
    %1322 = vmatpush1.xpose.msra.mxu0 0.0
    %1323 = vmatprep.mubr.f32.mxu0 0.0
    %1324 = vmatmul.mubr.f32.gmra.mrb[0].mxu0 %v1255
    %v1325 = vpop.f32.mrb[0].mxu0
    %v1326 = vadd.f32 0.0, %v1325
    %v1327 = vpop.f32.mrb[0].mxu0
    %1328 = vdwg.mxu0
    %1329 = vrot.lane.b32.xlu0 %v228, 72
    %v1330 = vpop.permute.xlu0 %1329
    %1331 = vrot.lane.b32.xlu0 %v228, 8
    %v1332 = vpop.permute.xlu0 %1331
    %v1333 = vsel %vm241, %v1330, 0
    %v1335 = vsel %vm241, %v1332, 0
    %1337 = vmatprep.subr.mxu0 0.0
    %1338 = vmatpush1.xpose.msra.mxu0 %v1335
    %1339 = vmatprep.subr.mxu0 0.0
    %1340 = vmatpush1.xpose.msra.mxu0 0.0
    %1341 = vmatprep.subr.mxu0 0.0
    %1342 = vmatpush1.xpose.msra.mxu0 0.0
    %1343 = vmatprep.subr.mxu0 0.0
    %1344 = vmatpush1.xpose.msra.mxu0 0.0
    %1345 = vmatprep.subr.mxu0 0.0
    %1346 = vmatpush1.xpose.msra.mxu0 0.0
    %1347 = vmatprep.subr.mxu0 0.0
    %1348 = vmatpush1.xpose.msra.mxu0 0.0
    %1349 = vmatprep.subr.mxu0 0.0
    %1350 = vmatpush1.xpose.msra.mxu0 0.0
    %1351 = vmatprep.subr.mxu0 0.0
    %1352 = vmatpush1.xpose.msra.mxu0 0.0
    %1353 = vmatprep.subr.mxu0 0.0
    %1354 = vmatpush1.xpose.msra.mxu0 0.0
    %1355 = vmatprep.subr.mxu0 0.0
    %1356 = vmatpush1.xpose.msra.mxu0 0.0
    %1357 = vmatprep.subr.mxu0 0.0
    %1358 = vmatpush1.xpose.msra.mxu0 0.0
    %1359 = vmatprep.subr.mxu0 0.0
    %1360 = vmatpush1.xpose.msra.mxu0 0.0
    %1361 = vmatprep.subr.mxu0 0.0
    %1362 = vmatpush1.xpose.msra.mxu0 0.0
    %1363 = vmatprep.subr.mxu0 0.0
    %1364 = vmatpush1.xpose.msra.mxu0 0.0
    %1365 = vmatprep.subr.mxu0 0.0
    %1366 = vmatpush1.xpose.msra.mxu0 0.0
    %1367 = vmatprep.subr.mxu0 0.0
    %1368 = vmatpush1.xpose.msra.mxu0 0.0
    %1369 = vmatprep.subr.mxu0 0.0
    %1370 = vmatpush1.xpose.msra.mxu0 0.0
    %1371 = vmatprep.subr.mxu0 0.0
    %1372 = vmatpush1.xpose.msra.mxu0 0.0
    %1373 = vmatprep.subr.mxu0 0.0
    %1374 = vmatpush1.xpose.msra.mxu0 0.0
    %1375 = vmatprep.subr.mxu0 0.0
    %1376 = vmatpush1.xpose.msra.mxu0 0.0
    %1377 = vmatprep.subr.mxu0 0.0
    %1378 = vmatpush1.xpose.msra.mxu0 0.0
    %1379 = vmatprep.subr.mxu0 0.0
    %1380 = vmatpush1.xpose.msra.mxu0 0.0
    %1381 = vmatprep.subr.mxu0 0.0
    %1382 = vmatpush1.xpose.msra.mxu0 0.0
    %1383 = vmatprep.subr.mxu0 0.0
    %1384 = vmatpush1.xpose.msra.mxu0 0.0
    %1385 = vmatprep.subr.mxu0 0.0
    %1386 = vmatpush1.xpose.msra.mxu0 0.0
    %1387 = vmatprep.subr.mxu0 0.0
    %1388 = vmatpush1.xpose.msra.mxu0 0.0
    %1389 = vmatprep.subr.mxu0 0.0
    %1390 = vmatpush1.xpose.msra.mxu0 0.0
    %1391 = vmatprep.subr.mxu0 0.0
    %1392 = vmatpush1.xpose.msra.mxu0 0.0
    %1393 = vmatprep.subr.mxu0 0.0
    %1394 = vmatpush1.xpose.msra.mxu0 0.0
    %1395 = vmatprep.subr.mxu0 0.0
    %1396 = vmatpush1.xpose.msra.mxu0 0.0
    %1397 = vmatprep.subr.mxu0 0.0
    %1398 = vmatpush1.xpose.msra.mxu0 0.0
    %1399 = vmatprep.subr.mxu0 0.0
    %1400 = vmatpush1.xpose.msra.mxu0 0.0
    %1401 = vmatprep.mubr.f32.mxu0 0.0
    %1402 = vmatmul.mubr.f32.gmra.mrb[0].mxu0 %v1333
    %v1403 = vpop.f32.mrb[0].mxu0
    %v1404 = vadd.f32 0.0, %v1403
    %v1405 = vpop.f32.mrb[0].mxu0
    %1406 = vdwg.mxu0
    %1407 = vrot.lane.b32.xlu0 %v234, 72
    %v1408 = vpop.permute.xlu0 %1407
    %1409 = vrot.lane.b32.xlu0 %v234, 8
    %v1410 = vpop.permute.xlu0 %1409
    %v1411 = vsel %vm241, %v1408, 0
    %v1413 = vsel %vm241, %v1410, 0
    %1415 = vmatprep.subr.mxu0 0.0
    %1416 = vmatpush1.xpose.msra.mxu0 %v1413
    %1417 = vmatprep.subr.mxu0 0.0
    %1418 = vmatpush1.xpose.msra.mxu0 0.0
    %1419 = vmatprep.subr.mxu0 0.0
    %1420 = vmatpush1.xpose.msra.mxu0 0.0
    %1421 = vmatprep.subr.mxu0 0.0
    %1422 = vmatpush1.xpose.msra.mxu0 0.0
    %1423 = vmatprep.subr.mxu0 0.0
    %1424 = vmatpush1.xpose.msra.mxu0 0.0
    %1425 = vmatprep.subr.mxu0 0.0
    %1426 = vmatpush1.xpose.msra.mxu0 0.0
    %1427 = vmatprep.subr.mxu0 0.0
    %1428 = vmatpush1.xpose.msra.mxu0 0.0
    %1429 = vmatprep.subr.mxu0 0.0
    %1430 = vmatpush1.xpose.msra.mxu0 0.0
    %1431 = vmatprep.subr.mxu0 0.0
    %1432 = vmatpush1.xpose.msra.mxu0 0.0
    %1433 = vmatprep.subr.mxu0 0.0
    %1434 = vmatpush1.xpose.msra.mxu0 0.0
    %1435 = vmatprep.subr.mxu0 0.0
    %1436 = vmatpush1.xpose.msra.mxu0 0.0
    %1437 = vmatprep.subr.mxu0 0.0
    %1438 = vmatpush1.xpose.msra.mxu0 0.0
    %1439 = vmatprep.subr.mxu0 0.0
    %1440 = vmatpush1.xpose.msra.mxu0 0.0
    %1441 = vmatprep.subr.mxu0 0.0
    %1442 = vmatpush1.xpose.msra.mxu0 0.0
    %1443 = vmatprep.subr.mxu0 0.0
    %1444 = vmatpush1.xpose.msra.mxu0 0.0
    %1445 = vmatprep.subr.mxu0 0.0
    %1446 = vmatpush1.xpose.msra.mxu0 0.0
    %1447 = vmatprep.subr.mxu0 0.0
    %1448 = vmatpush1.xpose.msra.mxu0 0.0
    %1449 = vmatprep.subr.mxu0 0.0
    %1450 = vmatpush1.xpose.msra.mxu0 0.0
    %1451 = vmatprep.subr.mxu0 0.0
    %1452 = vmatpush1.xpose.msra.mxu0 0.0
    %1453 = vmatprep.subr.mxu0 0.0
    %1454 = vmatpush1.xpose.msra.mxu0 0.0
    %1455 = vmatprep.subr.mxu0 0.0
    %1456 = vmatpush1.xpose.msra.mxu0 0.0
    %1457 = vmatprep.subr.mxu0 0.0
    %1458 = vmatpush1.xpose.msra.mxu0 0.0
    %1459 = vmatprep.subr.mxu0 0.0
    %1460 = vmatpush1.xpose.msra.mxu0 0.0
    %1461 = vmatprep.subr.mxu0 0.0
    %1462 = vmatpush1.xpose.msra.mxu0 0.0
    %1463 = vmatprep.subr.mxu0 0.0
    %1464 = vmatpush1.xpose.msra.mxu0 0.0
    %1465 = vmatprep.subr.mxu0 0.0
    %1466 = vmatpush1.xpose.msra.mxu0 0.0
    %1467 = vmatprep.subr.mxu0 0.0
    %1468 = vmatpush1.xpose.msra.mxu0 0.0
    %1469 = vmatprep.subr.mxu0 0.0
    %1470 = vmatpush1.xpose.msra.mxu0 0.0
    %1471 = vmatprep.subr.mxu0 0.0
    %1472 = vmatpush1.xpose.msra.mxu0 0.0
    %1473 = vmatprep.subr.mxu0 0.0
    %1474 = vmatpush1.xpose.msra.mxu0 0.0
    %1475 = vmatprep.subr.mxu0 0.0
    %1476 = vmatpush1.xpose.msra.mxu0 0.0
    %1477 = vmatprep.subr.mxu0 0.0
    %1478 = vmatpush1.xpose.msra.mxu0 0.0
    %1479 = vmatprep.mubr.f32.mxu0 0.0
    %1480 = vmatmul.mubr.f32.gmra.mrb[0].mxu0 %v1411
    %v1481 = vpop.f32.mrb[0].mxu0
    %v1482 = vadd.f32 0.0, %v1481
    %v1483 = vpop.f32.mrb[0].mxu0
    %1484 = vdwg.mxu0
    %v1485 = vmul.f32 %v313, 0.35355338
    %v1486 = vmul.f32 %v468, 0.35355338
    %v1487 = vmul.f32 %v624, 0.35355338
    %v1488 = vmul.f32 %v780, 0.35355338
    %v1489 = vmul.f32 %v936, 0.35355338
    %v1490 = vmul.f32 %v1092, 0.35355338
    %v1491 = vmul.f32 %v1248, 0.35355338
    %v1492 = vmul.f32 %v1404, 0.35355338
    %v1493 = vmul.f32 %v390, 0.35355338
    %v1494 = vmul.f32 %v546, 0.35355338
    %v1495 = vmul.f32 %v702, 0.35355338
    %v1496 = vmul.f32 %v858, 0.35355338
    %v1497 = vmul.f32 %v1014, 0.35355338
    %v1498 = vmul.f32 %v1170, 0.35355338
    %v1499 = vmul.f32 %v1326, 0.35355338
    %v1500 = vmul.f32 %v1482, 0.35355338
    %v1501 = vsel %vm241, %v1485, -inf
    %1502 = vmax.xlane.f32.xlu0 %v1501
    %v1503 = vpop.xlane.xlu0 %1502
    %v1504 = vsel %vm241, %v1486, -inf
    %1505 = vmax.xlane.f32.xlu0 %v1504
    %v1506 = vpop.xlane.xlu0 %1505
    %v1507 = vsel %vm241, %v1487, -inf
    %1508 = vmax.xlane.f32.xlu0 %v1507
    %v1509 = vpop.xlane.xlu0 %1508
    %v1510 = vsel %vm241, %v1488, -inf
    %1511 = vmax.xlane.f32.xlu0 %v1510
    %v1512 = vpop.xlane.xlu0 %1511
    %v1513 = vsel %vm241, %v1489, -inf
    %1514 = vmax.xlane.f32.xlu0 %v1513
    %v1515 = vpop.xlane.xlu0 %1514
    %v1516 = vsel %vm241, %v1490, -inf
    %1517 = vmax.xlane.f32.xlu0 %v1516
    %v1518 = vpop.xlane.xlu0 %1517
    %v1519 = vsel %vm241, %v1491, -inf
    %1520 = vmax.xlane.f32.xlu0 %v1519
    %v1521 = vpop.xlane.xlu0 %1520
    %v1522 = vsel %vm241, %v1492, -inf
    %1523 = vmax.xlane.f32.xlu0 %v1522
    %v1524 = vpop.xlane.xlu0 %1523
    %v1525 = vsel %vm241, %v1493, -inf
    %1526 = vmax.xlane.f32.xlu0 %v1525
    %v1527 = vpop.xlane.xlu0 %1526
    %v1528 = vsel %vm241, %v1494, -inf
    %1529 = vmax.xlane.f32.xlu0 %v1528
    %v1530 = vpop.xlane.xlu0 %1529
    %v1531 = vsel %vm241, %v1495, -inf
    %1532 = vmax.xlane.f32.xlu0 %v1531
    %v1533 = vpop.xlane.xlu0 %1532
    %v1534 = vsel %vm241, %v1496, -inf
    %1535 = vmax.xlane.f32.xlu0 %v1534
    %v1536 = vpop.xlane.xlu0 %1535
    %v1537 = vsel %vm241, %v1497, -inf
    %1538 = vmax.xlane.f32.xlu0 %v1537
    %v1539 = vpop.xlane.xlu0 %1538
    %v1540 = vsel %vm241, %v1498, -inf
    %1541 = vmax.xlane.f32.xlu0 %v1540
    %v1542 = vpop.xlane.xlu0 %1541
    %v1543 = vsel %vm241, %v1499, -inf
    %1544 = vmax.xlane.f32.xlu0 %v1543
    %v1545 = vpop.xlane.xlu0 %1544
    %v1546 = vsel %vm241, %v1500, -inf
    %1547 = vmax.xlane.f32.xlu0 %v1546
    %v1548 = vpop.xlane.xlu0 %1547
    %v1549 = vsub.f32 %v1485, %v1503
    %v1550 = vsub.f32 %v1486, %v1506
    %v1551 = vsub.f32 %v1487, %v1509
    %v1552 = vsub.f32 %v1488, %v1512
    %v1553 = vsub.f32 %v1489, %v1515
    %v1554 = vsub.f32 %v1490, %v1518
    %v1555 = vsub.f32 %v1491, %v1521
    %v1556 = vsub.f32 %v1492, %v1524
    %v1557 = vsub.f32 %v1493, %v1527
    %v1558 = vsub.f32 %v1494, %v1530
    %v1559 = vsub.f32 %v1495, %v1533
    %v1560 = vsub.f32 %v1496, %v1536
    %v1561 = vsub.f32 %v1497, %v1539
    %v1562 = vsub.f32 %v1498, %v1542
    %v1563 = vsub.f32 %v1499, %v1545
    %v1564 = vsub.f32 %v1500, %v1548
    %v1565 = vmul.f32 %v1549, 1.442695
    %v1566 = vpow.pop %v1565
    %v1567 = vmul.f32 %v1550, 1.442695
    %v1568 = vpow.pop %v1567
    %v1569 = vmul.f32 %v1551, 1.442695
    %v1570 = vpow.pop %v1569
    %v1571 = vmul.f32 %v1552, 1.442695
    %v1572 = vpow.pop %v1571
    %v1573 = vmul.f32 %v1553, 1.442695
    %v1574 = vpow.pop %v1573
    %v1575 = vmul.f32 %v1554, 1.442695
    %v1576 = vpow.pop %v1575
    %v1577 = vmul.f32 %v1555, 1.442695
    %v1578 = vpow.pop %v1577
    %v1579 = vmul.f32 %v1556, 1.442695
    %v1580 = vpow.pop %v1579
    %v1581 = vmul.f32 %v1557, 1.442695
    %v1582 = vpow.pop %v1581
    %v1583 = vmul.f32 %v1558, 1.442695
    %v1584 = vpow.pop %v1583
    %v1585 = vmul.f32 %v1559, 1.442695
    %v1586 = vpow.pop %v1585
    %v1587 = vmul.f32 %v1560, 1.442695
    %v1588 = vpow.pop %v1587
    %v1589 = vmul.f32 %v1561, 1.442695
    %v1590 = vpow.pop %v1589
    %v1591 = vmul.f32 %v1562, 1.442695
    %v1592 = vpow.pop %v1591
    %v1593 = vmul.f32 %v1563, 1.442695
    %v1594 = vpow.pop %v1593
    %v1595 = vmul.f32 %v1564, 1.442695
    %v1596 = vpow.pop %v1595
    %v1597 = vsel %vm241, %v1566, 0.0
    %1598 = vadd.xlane.f32.xlu0 %v1597
    %v1599 = vpop.xlane.xlu0 %1598
    %v1600 = vsel %vm241, %v1568, 0.0
    %1601 = vadd.xlane.f32.xlu0 %v1600
    %v1602 = vpop.xlane.xlu0 %1601
    %v1603 = vsel %vm241, %v1570, 0.0
    %1604 = vadd.xlane.f32.xlu0 %v1603
    %v1605 = vpop.xlane.xlu0 %1604
    %v1606 = vsel %vm241, %v1572, 0.0
    %1607 = vadd.xlane.f32.xlu0 %v1606
    %v1608 = vpop.xlane.xlu0 %1607
    %v1609 = vsel %vm241, %v1574, 0.0
    %1610 = vadd.xlane.f32.xlu0 %v1609
    %v1611 = vpop.xlane.xlu0 %1610
    %v1612 = vsel %vm241, %v1576, 0.0
    %1613 = vadd.xlane.f32.xlu0 %v1612
    %v1614 = vpop.xlane.xlu0 %1613
    %v1615 = vsel %vm241, %v1578, 0.0
    %1616 = vadd.xlane.f32.xlu0 %v1615
    %v1617 = vpop.xlane.xlu0 %1616
    %v1618 = vsel %vm241, %v1580, 0.0
    %1619 = vadd.xlane.f32.xlu0 %v1618
    %v1620 = vpop.xlane.xlu0 %1619
    %v1621 = vsel %vm241, %v1582, 0.0
    %1622 = vadd.xlane.f32.xlu0 %v1621
    %v1623 = vpop.xlane.xlu0 %1622
    %v1624 = vsel %vm241, %v1584, 0.0
    %1625 = vadd.xlane.f32.xlu0 %v1624
    %v1626 = vpop.xlane.xlu0 %1625
    %v1627 = vsel %vm241, %v1586, 0.0
    %1628 = vadd.xlane.f32.xlu0 %v1627
    %v1629 = vpop.xlane.xlu0 %1628
    %v1630 = vsel %vm241, %v1588, 0.0
    %1631 = vadd.xlane.f32.xlu0 %v1630
    %v1632 = vpop.xlane.xlu0 %1631
    %v1633 = vsel %vm241, %v1590, 0.0
    %1634 = vadd.xlane.f32.xlu0 %v1633
    %v1635 = vpop.xlane.xlu0 %1634
    %v1636 = vsel %vm241, %v1592, 0.0
    %1637 = vadd.xlane.f32.xlu0 %v1636
    %v1638 = vpop.xlane.xlu0 %1637
    %v1639 = vsel %vm241, %v1594, 0.0
    %1640 = vadd.xlane.f32.xlu0 %v1639
    %v1641 = vpop.xlane.xlu0 %1640
    %v1642 = vsel %vm241, %v1596, 0.0
    %1643 = vadd.xlane.f32.xlu0 %v1642
    %v1644 = vpop.xlane.xlu0 %1643
    %v1645 = vrcp.pop %v1599
    %v1646 = vrcp.pop %v1602
    %v1647 = vrcp.pop %v1605
    %v1648 = vrcp.pop %v1608
    %v1649 = vrcp.pop %v1611
    %v1650 = vrcp.pop %v1614
    %v1651 = vrcp.pop %v1617
    %v1652 = vrcp.pop %v1620
    %v1653 = vrcp.pop %v1623
    %v1654 = vrcp.pop %v1626
    %v1655 = vrcp.pop %v1629
    %v1656 = vrcp.pop %v1632
    %v1657 = vrcp.pop %v1635
    %v1658 = vrcp.pop %v1638
    %v1659 = vrcp.pop %v1641
    %v1660 = vrcp.pop %v1644
    %v1661 = vmul.f32 %v1566, %v1645
    %v1662 = vmul.f32 %v1568, %v1646
    %v1663 = vmul.f32 %v1570, %v1647
    %v1664 = vmul.f32 %v1572, %v1648
    %v1665 = vmul.f32 %v1574, %v1649
    %v1666 = vmul.f32 %v1576, %v1650
    %v1667 = vmul.f32 %v1578, %v1651
    %v1668 = vmul.f32 %v1580, %v1652
    %v1669 = vmul.f32 %v1582, %v1653
    %v1670 = vmul.f32 %v1584, %v1654
    %v1671 = vmul.f32 %v1586, %v1655
    %v1672 = vmul.f32 %v1588, %v1656
    %v1673 = vmul.f32 %v1590, %v1657
    %v1674 = vmul.f32 %v1592, %v1658
    %v1675 = vmul.f32 %v1594, %v1659
    %v1676 = vmul.f32 %v1596, %v1660
    %v1678 = vsel %vm241, %v1661, 0
    %1680 = vmatprep.subr.mxu0 0.0
    %1681 = vmatpush1.msra.mxu0 %v230
    %1682 = vmatprep.subr.mxu0 0.0
    %1683 = vmatpush1.msra.mxu0 0.0
    %1684 = vmatprep.subr.mxu0 0.0
    %1685 = vmatpush1.msra.mxu0 0.0
    %1686 = vmatprep.subr.mxu0 0.0
    %1687 = vmatpush1.msra.mxu0 0.0
    %1688 = vmatprep.subr.mxu0 0.0
    %1689 = vmatpush1.msra.mxu0 0.0
    %1690 = vmatprep.subr.mxu0 0.0
    %1691 = vmatpush1.msra.mxu0 0.0
    %1692 = vmatprep.subr.mxu0 0.0
    %1693 = vmatpush1.msra.mxu0 0.0
    %1694 = vmatprep.subr.mxu0 0.0
    %1695 = vmatpush1.msra.mxu0 0.0
    %1696 = vmatprep.subr.mxu0 0.0
    %1697 = vmatpush1.msra.mxu0 0.0
    %1698 = vmatprep.subr.mxu0 0.0
    %1699 = vmatpush1.msra.mxu0 0.0
    %1700 = vmatprep.subr.mxu0 0.0
    %1701 = vmatpush1.msra.mxu0 0.0
    %1702 = vmatprep.subr.mxu0 0.0
    %1703 = vmatpush1.msra.mxu0 0.0
    %1704 = vmatprep.subr.mxu0 0.0
    %1705 = vmatpush1.msra.mxu0 0.0
    %1706 = vmatprep.subr.mxu0 0.0
    %1707 = vmatpush1.msra.mxu0 0.0
    %1708 = vmatprep.subr.mxu0 0.0
    %1709 = vmatpush1.msra.mxu0 0.0
    %1710 = vmatprep.subr.mxu0 0.0
    %1711 = vmatpush1.msra.mxu0 0.0
    %1712 = vmatprep.subr.mxu0 0.0
    %1713 = vmatpush1.msra.mxu0 0.0
    %1714 = vmatprep.subr.mxu0 0.0
    %1715 = vmatpush1.msra.mxu0 0.0
    %1716 = vmatprep.subr.mxu0 0.0
    %1717 = vmatpush1.msra.mxu0 0.0
    %1718 = vmatprep.subr.mxu0 0.0
    %1719 = vmatpush1.msra.mxu0 0.0
    %1720 = vmatprep.subr.mxu0 0.0
    %1721 = vmatpush1.msra.mxu0 0.0
    %1722 = vmatprep.subr.mxu0 0.0
    %1723 = vmatpush1.msra.mxu0 0.0
    %1724 = vmatprep.subr.mxu0 0.0
    %1725 = vmatpush1.msra.mxu0 0.0
    %1726 = vmatprep.subr.mxu0 0.0
    %1727 = vmatpush1.msra.mxu0 0.0
    %1728 = vmatprep.subr.mxu0 0.0
    %1729 = vmatpush1.msra.mxu0 0.0
    %1730 = vmatprep.subr.mxu0 0.0
    %1731 = vmatpush1.msra.mxu0 0.0
    %1732 = vmatprep.subr.mxu0 0.0
    %1733 = vmatpush1.msra.mxu0 0.0
    %1734 = vmatprep.subr.mxu0 0.0
    %1735 = vmatpush1.msra.mxu0 0.0
    %1736 = vmatprep.subr.mxu0 0.0
    %1737 = vmatpush1.msra.mxu0 0.0
    %1738 = vmatprep.subr.mxu0 0.0
    %1739 = vmatpush1.msra.mxu0 0.0
    %1740 = vmatprep.subr.mxu0 0.0
    %1741 = vmatpush1.msra.mxu0 0.0
    %1742 = vmatprep.subr.mxu0 0.0
    %1743 = vmatpush1.msra.mxu0 0.0
    %1744 = vmatprep.mubr.f32.mxu0 0.0
    %1745 = vmatmul.mubr.f32.gmra.mrb[0].mxu0 %v1678
    %v1746 = vpop.f32.mrb[0].mxu0
    %v1747 = vadd.f32 0.0, %v1746
    %v1748 = vpop.f32.mrb[0].mxu0
    %1749 = vdwg.mxu0
    %v1751 = vsel %vm241, %v1669, 0
    %1753 = vmatprep.subr.mxu0 0.0
    %1754 = vmatpush1.msra.mxu0 %v236
    %1755 = vmatprep.subr.mxu0 0.0
    %1756 = vmatpush1.msra.mxu0 0.0
    %1757 = vmatprep.subr.mxu0 0.0
    %1758 = vmatpush1.msra.mxu0 0.0
    %1759 = vmatprep.subr.mxu0 0.0
    %1760 = vmatpush1.msra.mxu0 0.0
    %1761 = vmatprep.subr.mxu0 0.0
    %1762 = vmatpush1.msra.mxu0 0.0
    %1763 = vmatprep.subr.mxu0 0.0
    %1764 = vmatpush1.msra.mxu0 0.0
    %1765 = vmatprep.subr.mxu0 0.0
    %1766 = vmatpush1.msra.mxu0 0.0
    %1767 = vmatprep.subr.mxu0 0.0
    %1768 = vmatpush1.msra.mxu0 0.0
    %1769 = vmatprep.subr.mxu0 0.0
    %1770 = vmatpush1.msra.mxu0 0.0
    %1771 = vmatprep.subr.mxu0 0.0
    %1772 = vmatpush1.msra.mxu0 0.0
    %1773 = vmatprep.subr.mxu0 0.0
    %1774 = vmatpush1.msra.mxu0 0.0
    %1775 = vmatprep.subr.mxu0 0.0
    %1776 = vmatpush1.msra.mxu0 0.0
    %1777 = vmatprep.subr.mxu0 0.0
    %1778 = vmatpush1.msra.mxu0 0.0
    %1779 = vmatprep.subr.mxu0 0.0
    %1780 = vmatpush1.msra.mxu0 0.0
    %1781 = vmatprep.subr.mxu0 0.0
    %1782 = vmatpush1.msra.mxu0 0.0
    %1783 = vmatprep.subr.mxu0 0.0
    %1784 = vmatpush1.msra.mxu0 0.0
    %1785 = vmatprep.subr.mxu0 0.0
    %1786 = vmatpush1.msra.mxu0 0.0
    %1787 = vmatprep.subr.mxu0 0.0
    %1788 = vmatpush1.msra.mxu0 0.0
    %1789 = vmatprep.subr.mxu0 0.0
    %1790 = vmatpush1.msra.mxu0 0.0
    %1791 = vmatprep.subr.mxu0 0.0
    %1792 = vmatpush1.msra.mxu0 0.0
    %1793 = vmatprep.subr.mxu0 0.0
    %1794 = vmatpush1.msra.mxu0 0.0
    %1795 = vmatprep.subr.mxu0 0.0
    %1796 = vmatpush1.msra.mxu0 0.0
    %1797 = vmatprep.subr.mxu0 0.0
    %1798 = vmatpush1.msra.mxu0 0.0
    %1799 = vmatprep.subr.mxu0 0.0
    %1800 = vmatpush1.msra.mxu0 0.0
    %1801 = vmatprep.subr.mxu0 0.0
    %1802 = vmatpush1.msra.mxu0 0.0
    %1803 = vmatprep.subr.mxu0 0.0
    %1804 = vmatpush1.msra.mxu0 0.0
    %1805 = vmatprep.subr.mxu0 0.0
    %1806 = vmatpush1.msra.mxu0 0.0
    %1807 = vmatprep.subr.mxu0 0.0
    %1808 = vmatpush1.msra.mxu0 0.0
    %1809 = vmatprep.subr.mxu0 0.0
    %1810 = vmatpush1.msra.mxu0 0.0
    %1811 = vmatprep.subr.mxu0 0.0
    %1812 = vmatpush1.msra.mxu0 0.0
    %1813 = vmatprep.subr.mxu0 0.0
    %1814 = vmatpush1.msra.mxu0 0.0
    %1815 = vmatprep.subr.mxu0 0.0
    %1816 = vmatpush1.msra.mxu0 0.0
    %1817 = vmatprep.mubr.f32.mxu0 0.0
    %1818 = vmatmul.mubr.f32.gmra.mrb[0].mxu0 %v1751
    %v1819 = vpop.f32.mrb[0].mxu0
    %v1820 = vadd.f32 0.0, %v1819
    %v1821 = vpop.f32.mrb[0].mxu0
    %1822 = vdwg.mxu0
    %1824 = vrot.lane.b32.xlu0 %v230, 120
    %v1825 = vpop.permute.xlu0 %1824
    %v1828 = vsel %vm241, %v1662, 0
    %1830 = vmatprep.subr.mxu0 0.0
    %1831 = vmatpush1.msra.mxu0 %v1825
    %1832 = vmatprep.subr.mxu0 0.0
    %1833 = vmatpush1.msra.mxu0 0.0
    %1834 = vmatprep.subr.mxu0 0.0
    %1835 = vmatpush1.msra.mxu0 0.0
    %1836 = vmatprep.subr.mxu0 0.0
    %1837 = vmatpush1.msra.mxu0 0.0
    %1838 = vmatprep.subr.mxu0 0.0
    %1839 = vmatpush1.msra.mxu0 0.0
    %1840 = vmatprep.subr.mxu0 0.0
    %1841 = vmatpush1.msra.mxu0 0.0
    %1842 = vmatprep.subr.mxu0 0.0
    %1843 = vmatpush1.msra.mxu0 0.0
    %1844 = vmatprep.subr.mxu0 0.0
    %1845 = vmatpush1.msra.mxu0 0.0
    %1846 = vmatprep.subr.mxu0 0.0
    %1847 = vmatpush1.msra.mxu0 0.0
    %1848 = vmatprep.subr.mxu0 0.0
    %1849 = vmatpush1.msra.mxu0 0.0
    %1850 = vmatprep.subr.mxu0 0.0
    %1851 = vmatpush1.msra.mxu0 0.0
    %1852 = vmatprep.subr.mxu0 0.0
    %1853 = vmatpush1.msra.mxu0 0.0
    %1854 = vmatprep.subr.mxu0 0.0
    %1855 = vmatpush1.msra.mxu0 0.0
    %1856 = vmatprep.subr.mxu0 0.0
    %1857 = vmatpush1.msra.mxu0 0.0
    %1858 = vmatprep.subr.mxu0 0.0
    %1859 = vmatpush1.msra.mxu0 0.0
    %1860 = vmatprep.subr.mxu0 0.0
    %1861 = vmatpush1.msra.mxu0 0.0
    %1862 = vmatprep.subr.mxu0 0.0
    %1863 = vmatpush1.msra.mxu0 0.0
    %1864 = vmatprep.subr.mxu0 0.0
    %1865 = vmatpush1.msra.mxu0 0.0
    %1866 = vmatprep.subr.mxu0 0.0
    %1867 = vmatpush1.msra.mxu0 0.0
    %1868 = vmatprep.subr.mxu0 0.0
    %1869 = vmatpush1.msra.mxu0 0.0
    %1870 = vmatprep.subr.mxu0 0.0
    %1871 = vmatpush1.msra.mxu0 0.0
    %1872 = vmatprep.subr.mxu0 0.0
    %1873 = vmatpush1.msra.mxu0 0.0
    %1874 = vmatprep.subr.mxu0 0.0
    %1875 = vmatpush1.msra.mxu0 0.0
    %1876 = vmatprep.subr.mxu0 0.0
    %1877 = vmatpush1.msra.mxu0 0.0
    %1878 = vmatprep.subr.mxu0 0.0
    %1879 = vmatpush1.msra.mxu0 0.0
    %1880 = vmatprep.subr.mxu0 0.0
    %1881 = vmatpush1.msra.mxu0 0.0
    %1882 = vmatprep.subr.mxu0 0.0
    %1883 = vmatpush1.msra.mxu0 0.0
    %1884 = vmatprep.subr.mxu0 0.0
    %1885 = vmatpush1.msra.mxu0 0.0
    %1886 = vmatprep.subr.mxu0 0.0
    %1887 = vmatpush1.msra.mxu0 0.0
    %1888 = vmatprep.subr.mxu0 0.0
    %1889 = vmatpush1.msra.mxu0 0.0
    %1890 = vmatprep.subr.mxu0 0.0
    %1891 = vmatpush1.msra.mxu0 0.0
    %1892 = vmatprep.subr.mxu0 0.0
    %1893 = vmatpush1.msra.mxu0 0.0
    %1894 = vmatprep.mubr.f32.mxu0 0.0
    %1895 = vmatmul.mubr.f32.gmra.mrb[0].mxu0 %v1828
    %v1896 = vpop.f32.mrb[0].mxu0
    %v1897 = vadd.f32 0.0, %v1896
    %v1898 = vpop.f32.mrb[0].mxu0
    %1899 = vdwg.mxu0
    %1901 = vrot.lane.b32.xlu0 %v236, 120
    %v1902 = vpop.permute.xlu0 %1901
    %v1905 = vsel %vm241, %v1670, 0
    %1907 = vmatprep.subr.mxu0 0.0
    %1908 = vmatpush1.msra.mxu0 %v1902
    %1909 = vmatprep.subr.mxu0 0.0
    %1910 = vmatpush1.msra.mxu0 0.0
    %1911 = vmatprep.subr.mxu0 0.0
    %1912 = vmatpush1.msra.mxu0 0.0
    %1913 = vmatprep.subr.mxu0 0.0
    %1914 = vmatpush1.msra.mxu0 0.0
    %1915 = vmatprep.subr.mxu0 0.0
    %1916 = vmatpush1.msra.mxu0 0.0
    %1917 = vmatprep.subr.mxu0 0.0
    %1918 = vmatpush1.msra.mxu0 0.0
    %1919 = vmatprep.subr.mxu0 0.0
    %1920 = vmatpush1.msra.mxu0 0.0
    %1921 = vmatprep.subr.mxu0 0.0
    %1922 = vmatpush1.msra.mxu0 0.0
    %1923 = vmatprep.subr.mxu0 0.0
    %1924 = vmatpush1.msra.mxu0 0.0
    %1925 = vmatprep.subr.mxu0 0.0
    %1926 = vmatpush1.msra.mxu0 0.0
    %1927 = vmatprep.subr.mxu0 0.0
    %1928 = vmatpush1.msra.mxu0 0.0
    %1929 = vmatprep.subr.mxu0 0.0
    %1930 = vmatpush1.msra.mxu0 0.0
    %1931 = vmatprep.subr.mxu0 0.0
    %1932 = vmatpush1.msra.mxu0 0.0
    %1933 = vmatprep.subr.mxu0 0.0
    %1934 = vmatpush1.msra.mxu0 0.0
    %1935 = vmatprep.subr.mxu0 0.0
    %1936 = vmatpush1.msra.mxu0 0.0
    %1937 = vmatprep.subr.mxu0 0.0
    %1938 = vmatpush1.msra.mxu0 0.0
    %1939 = vmatprep.subr.mxu0 0.0
    %1940 = vmatpush1.msra.mxu0 0.0
    %1941 = vmatprep.subr.mxu0 0.0
    %1942 = vmatpush1.msra.mxu0 0.0
    %1943 = vmatprep.subr.mxu0 0.0
    %1944 = vmatpush1.msra.mxu0 0.0
    %1945 = vmatprep.subr.mxu0 0.0
    %1946 = vmatpush1.msra.mxu0 0.0
    %1947 = vmatprep.subr.mxu0 0.0
    %1948 = vmatpush1.msra.mxu0 0.0
    %1949 = vmatprep.subr.mxu0 0.0
    %1950 = vmatpush1.msra.mxu0 0.0
    %1951 = vmatprep.subr.mxu0 0.0
    %1952 = vmatpush1.msra.mxu0 0.0
    %1953 = vmatprep.subr.mxu0 0.0
    %1954 = vmatpush1.msra.mxu0 0.0
    %1955 = vmatprep.subr.mxu0 0.0
    %1956 = vmatpush1.msra.mxu0 0.0
    %1957 = vmatprep.subr.mxu0 0.0
    %1958 = vmatpush1.msra.mxu0 0.0
    %1959 = vmatprep.subr.mxu0 0.0
    %1960 = vmatpush1.msra.mxu0 0.0
    %1961 = vmatprep.subr.mxu0 0.0
    %1962 = vmatpush1.msra.mxu0 0.0
    %1963 = vmatprep.subr.mxu0 0.0
    %1964 = vmatpush1.msra.mxu0 0.0
    %1965 = vmatprep.subr.mxu0 0.0
    %1966 = vmatpush1.msra.mxu0 0.0
    %1967 = vmatprep.subr.mxu0 0.0
    %1968 = vmatpush1.msra.mxu0 0.0
    %1969 = vmatprep.subr.mxu0 0.0
    %1970 = vmatpush1.msra.mxu0 0.0
    %1971 = vmatprep.mubr.f32.mxu0 0.0
    %1972 = vmatmul.mubr.f32.gmra.mrb[0].mxu0 %v1905
    %v1973 = vpop.f32.mrb[0].mxu0
    %v1974 = vadd.f32 0.0, %v1973
    %v1975 = vpop.f32.mrb[0].mxu0
    %1976 = vdwg.mxu0
    %1977 = vrot.lane.b32.xlu0 %v230, 112
    %v1978 = vpop.permute.xlu0 %1977
    %v1981 = vsel %vm241, %v1663, 0
    %1983 = vmatprep.subr.mxu0 0.0
    %1984 = vmatpush1.msra.mxu0 %v1978
    %1985 = vmatprep.subr.mxu0 0.0
    %1986 = vmatpush1.msra.mxu0 0.0
    %1987 = vmatprep.subr.mxu0 0.0
    %1988 = vmatpush1.msra.mxu0 0.0
    %1989 = vmatprep.subr.mxu0 0.0
    %1990 = vmatpush1.msra.mxu0 0.0
    %1991 = vmatprep.subr.mxu0 0.0
    %1992 = vmatpush1.msra.mxu0 0.0
    %1993 = vmatprep.subr.mxu0 0.0
    %1994 = vmatpush1.msra.mxu0 0.0
    %1995 = vmatprep.subr.mxu0 0.0
    %1996 = vmatpush1.msra.mxu0 0.0
    %1997 = vmatprep.subr.mxu0 0.0
    %1998 = vmatpush1.msra.mxu0 0.0
    %1999 = vmatprep.subr.mxu0 0.0
    %2000 = vmatpush1.msra.mxu0 0.0
    %2001 = vmatprep.subr.mxu0 0.0
    %2002 = vmatpush1.msra.mxu0 0.0
    %2003 = vmatprep.subr.mxu0 0.0
    %2004 = vmatpush1.msra.mxu0 0.0
    %2005 = vmatprep.subr.mxu0 0.0
    %2006 = vmatpush1.msra.mxu0 0.0
    %2007 = vmatprep.subr.mxu0 0.0
    %2008 = vmatpush1.msra.mxu0 0.0
    %2009 = vmatprep.subr.mxu0 0.0
    %2010 = vmatpush1.msra.mxu0 0.0
    %2011 = vmatprep.subr.mxu0 0.0
    %2012 = vmatpush1.msra.mxu0 0.0
    %2013 = vmatprep.subr.mxu0 0.0
    %2014 = vmatpush1.msra.mxu0 0.0
    %2015 = vmatprep.subr.mxu0 0.0
    %2016 = vmatpush1.msra.mxu0 0.0
    %2017 = vmatprep.subr.mxu0 0.0
    %2018 = vmatpush1.msra.mxu0 0.0
    %2019 = vmatprep.subr.mxu0 0.0
    %2020 = vmatpush1.msra.mxu0 0.0
    %2021 = vmatprep.subr.mxu0 0.0
    %2022 = vmatpush1.msra.mxu0 0.0
    %2023 = vmatprep.subr.mxu0 0.0
    %2024 = vmatpush1.msra.mxu0 0.0
    %2025 = vmatprep.subr.mxu0 0.0
    %2026 = vmatpush1.msra.mxu0 0.0
    %2027 = vmatprep.subr.mxu0 0.0
    %2028 = vmatpush1.msra.mxu0 0.0
    %2029 = vmatprep.subr.mxu0 0.0
    %2030 = vmatpush1.msra.mxu0 0.0
    %2031 = vmatprep.subr.mxu0 0.0
    %2032 = vmatpush1.msra.mxu0 0.0
    %2033 = vmatprep.subr.mxu0 0.0
    %2034 = vmatpush1.msra.mxu0 0.0
    %2035 = vmatprep.subr.mxu0 0.0
    %2036 = vmatpush1.msra.mxu0 0.0
    %2037 = vmatprep.subr.mxu0 0.0
    %2038 = vmatpush1.msra.mxu0 0.0
    %2039 = vmatprep.subr.mxu0 0.0
    %2040 = vmatpush1.msra.mxu0 0.0
    %2041 = vmatprep.subr.mxu0 0.0
    %2042 = vmatpush1.msra.mxu0 0.0
    %2043 = vmatprep.subr.mxu0 0.0
    %2044 = vmatpush1.msra.mxu0 0.0
    %2045 = vmatprep.subr.mxu0 0.0
    %2046 = vmatpush1.msra.mxu0 0.0
    %2047 = vmatprep.mubr.f32.mxu0 0.0
    %2048 = vmatmul.mubr.f32.gmra.mrb[0].mxu0 %v1981
    %v2049 = vpop.f32.mrb[0].mxu0
    %v2050 = vadd.f32 0.0, %v2049
    %v2051 = vpop.f32.mrb[0].mxu0
    %2052 = vdwg.mxu0
    %2053 = vrot.lane.b32.xlu0 %v236, 112
    %v2054 = vpop.permute.xlu0 %2053
    %v2057 = vsel %vm241, %v1671, 0
    %2059 = vmatprep.subr.mxu0 0.0
    %2060 = vmatpush1.msra.mxu0 %v2054
    %2061 = vmatprep.subr.mxu0 0.0
    %2062 = vmatpush1.msra.mxu0 0.0
    %2063 = vmatprep.subr.mxu0 0.0
    %2064 = vmatpush1.msra.mxu0 0.0
    %2065 = vmatprep.subr.mxu0 0.0
    %2066 = vmatpush1.msra.mxu0 0.0
    %2067 = vmatprep.subr.mxu0 0.0
    %2068 = vmatpush1.msra.mxu0 0.0
    %2069 = vmatprep.subr.mxu0 0.0
    %2070 = vmatpush1.msra.mxu0 0.0
    %2071 = vmatprep.subr.mxu0 0.0
    %2072 = vmatpush1.msra.mxu0 0.0
    %2073 = vmatprep.subr.mxu0 0.0
    %2074 = vmatpush1.msra.mxu0 0.0
    %2075 = vmatprep.subr.mxu0 0.0
    %2076 = vmatpush1.msra.mxu0 0.0
    %2077 = vmatprep.subr.mxu0 0.0
    %2078 = vmatpush1.msra.mxu0 0.0
    %2079 = vmatprep.subr.mxu0 0.0
    %2080 = vmatpush1.msra.mxu0 0.0
    %2081 = vmatprep.subr.mxu0 0.0
    %2082 = vmatpush1.msra.mxu0 0.0
    %2083 = vmatprep.subr.mxu0 0.0
    %2084 = vmatpush1.msra.mxu0 0.0
    %2085 = vmatprep.subr.mxu0 0.0
    %2086 = vmatpush1.msra.mxu0 0.0
    %2087 = vmatprep.subr.mxu0 0.0
    %2088 = vmatpush1.msra.mxu0 0.0
    %2089 = vmatprep.subr.mxu0 0.0
    %2090 = vmatpush1.msra.mxu0 0.0
    %2091 = vmatprep.subr.mxu0 0.0
    %2092 = vmatpush1.msra.mxu0 0.0
    %2093 = vmatprep.subr.mxu0 0.0
    %2094 = vmatpush1.msra.mxu0 0.0
    %2095 = vmatprep.subr.mxu0 0.0
    %2096 = vmatpush1.msra.mxu0 0.0
    %2097 = vmatprep.subr.mxu0 0.0
    %2098 = vmatpush1.msra.mxu0 0.0
    %2099 = vmatprep.subr.mxu0 0.0
    %2100 = vmatpush1.msra.mxu0 0.0
    %2101 = vmatprep.subr.mxu0 0.0
    %2102 = vmatpush1.msra.mxu0 0.0
    %2103 = vmatprep.subr.mxu0 0.0
    %2104 = vmatpush1.msra.mxu0 0.0
    %2105 = vmatprep.subr.mxu0 0.0
    %2106 = vmatpush1.msra.mxu0 0.0
    %2107 = vmatprep.subr.mxu0 0.0
    %2108 = vmatpush1.msra.mxu0 0.0
    %2109 = vmatprep.subr.mxu0 0.0
    %2110 = vmatpush1.msra.mxu0 0.0
    %2111 = vmatprep.subr.mxu0 0.0
    %2112 = vmatpush1.msra.mxu0 0.0
    %2113 = vmatprep.subr.mxu0 0.0
    %2114 = vmatpush1.msra.mxu0 0.0
    %2115 = vmatprep.subr.mxu0 0.0
    %2116 = vmatpush1.msra.mxu0 0.0
    %2117 = vmatprep.subr.mxu0 0.0
    %2118 = vmatpush1.msra.mxu0 0.0
    %2119 = vmatprep.subr.mxu0 0.0
    %2120 = vmatpush1.msra.mxu0 0.0
    %2121 = vmatprep.subr.mxu0 0.0
    %2122 = vmatpush1.msra.mxu0 0.0
    %2123 = vmatprep.mubr.f32.mxu0 0.0
    %2124 = vmatmul.mubr.f32.gmra.mrb[0].mxu0 %v2057
    %v2125 = vpop.f32.mrb[0].mxu0
    %v2126 = vadd.f32 0.0, %v2125
    %v2127 = vpop.f32.mrb[0].mxu0
    %2128 = vdwg.mxu0
    %2129 = vrot.lane.b32.xlu0 %v230, 104
    %v2130 = vpop.permute.xlu0 %2129
    %v2133 = vsel %vm241, %v1664, 0
    %2135 = vmatprep.subr.mxu0 0.0
    %2136 = vmatpush1.msra.mxu0 %v2130
    %2137 = vmatprep.subr.mxu0 0.0
    %2138 = vmatpush1.msra.mxu0 0.0
    %2139 = vmatprep.subr.mxu0 0.0
    %2140 = vmatpush1.msra.mxu0 0.0
    %2141 = vmatprep.subr.mxu0 0.0
    %2142 = vmatpush1.msra.mxu0 0.0
    %2143 = vmatprep.subr.mxu0 0.0
    %2144 = vmatpush1.msra.mxu0 0.0
    %2145 = vmatprep.subr.mxu0 0.0
    %2146 = vmatpush1.msra.mxu0 0.0
    %2147 = vmatprep.subr.mxu0 0.0
    %2148 = vmatpush1.msra.mxu0 0.0
    %2149 = vmatprep.subr.mxu0 0.0
    %2150 = vmatpush1.msra.mxu0 0.0
    %2151 = vmatprep.subr.mxu0 0.0
    %2152 = vmatpush1.msra.mxu0 0.0
    %2153 = vmatprep.subr.mxu0 0.0
    %2154 = vmatpush1.msra.mxu0 0.0
    %2155 = vmatprep.subr.mxu0 0.0
    %2156 = vmatpush1.msra.mxu0 0.0
    %2157 = vmatprep.subr.mxu0 0.0
    %2158 = vmatpush1.msra.mxu0 0.0
    %2159 = vmatprep.subr.mxu0 0.0
    %2160 = vmatpush1.msra.mxu0 0.0
    %2161 = vmatprep.subr.mxu0 0.0
    %2162 = vmatpush1.msra.mxu0 0.0
    %2163 = vmatprep.subr.mxu0 0.0
    %2164 = vmatpush1.msra.mxu0 0.0
    %2165 = vmatprep.subr.mxu0 0.0
    %2166 = vmatpush1.msra.mxu0 0.0
    %2167 = vmatprep.subr.mxu0 0.0
    %2168 = vmatpush1.msra.mxu0 0.0
    %2169 = vmatprep.subr.mxu0 0.0
    %2170 = vmatpush1.msra.mxu0 0.0
    %2171 = vmatprep.subr.mxu0 0.0
    %2172 = vmatpush1.msra.mxu0 0.0
    %2173 = vmatprep.subr.mxu0 0.0
    %2174 = vmatpush1.msra.mxu0 0.0
    %2175 = vmatprep.subr.mxu0 0.0
    %2176 = vmatpush1.msra.mxu0 0.0
    %2177 = vmatprep.subr.mxu0 0.0
    %2178 = vmatpush1.msra.mxu0 0.0
    %2179 = vmatprep.subr.mxu0 0.0
    %2180 = vmatpush1.msra.mxu0 0.0
    %2181 = vmatprep.subr.mxu0 0.0
    %2182 = vmatpush1.msra.mxu0 0.0
    %2183 = vmatprep.subr.mxu0 0.0
    %2184 = vmatpush1.msra.mxu0 0.0
    %2185 = vmatprep.subr.mxu0 0.0
    %2186 = vmatpush1.msra.mxu0 0.0
    %2187 = vmatprep.subr.mxu0 0.0
    %2188 = vmatpush1.msra.mxu0 0.0
    %2189 = vmatprep.subr.mxu0 0.0
    %2190 = vmatpush1.msra.mxu0 0.0
    %2191 = vmatprep.subr.mxu0 0.0
    %2192 = vmatpush1.msra.mxu0 0.0
    %2193 = vmatprep.subr.mxu0 0.0
    %2194 = vmatpush1.msra.mxu0 0.0
    %2195 = vmatprep.subr.mxu0 0.0
    %2196 = vmatpush1.msra.mxu0 0.0
    %2197 = vmatprep.subr.mxu0 0.0
    %2198 = vmatpush1.msra.mxu0 0.0
    %2199 = vmatprep.mubr.f32.mxu0 0.0
    %2200 = vmatmul.mubr.f32.gmra.mrb[0].mxu0 %v2133
    %v2201 = vpop.f32.mrb[0].mxu0
    %v2202 = vadd.f32 0.0, %v2201
    %v2203 = vpop.f32.mrb[0].mxu0
    %2204 = vdwg.mxu0
    %2205 = vrot.lane.b32.xlu0 %v236, 104
    %v2206 = vpop.permute.xlu0 %2205
    %v2209 = vsel %vm241, %v1672, 0
    %2211 = vmatprep.subr.mxu0 0.0
    %2212 = vmatpush1.msra.mxu0 %v2206
    %2213 = vmatprep.subr.mxu0 0.0
    %2214 = vmatpush1.msra.mxu0 0.0
    %2215 = vmatprep.subr.mxu0 0.0
    %2216 = vmatpush1.msra.mxu0 0.0
    %2217 = vmatprep.subr.mxu0 0.0
    %2218 = vmatpush1.msra.mxu0 0.0
    %2219 = vmatprep.subr.mxu0 0.0
    %2220 = vmatpush1.msra.mxu0 0.0
    %2221 = vmatprep.subr.mxu0 0.0
    %2222 = vmatpush1.msra.mxu0 0.0
    %2223 = vmatprep.subr.mxu0 0.0
    %2224 = vmatpush1.msra.mxu0 0.0
    %2225 = vmatprep.subr.mxu0 0.0
    %2226 = vmatpush1.msra.mxu0 0.0
    %2227 = vmatprep.subr.mxu0 0.0
    %2228 = vmatpush1.msra.mxu0 0.0
    %2229 = vmatprep.subr.mxu0 0.0
    %2230 = vmatpush1.msra.mxu0 0.0
    %2231 = vmatprep.subr.mxu0 0.0
    %2232 = vmatpush1.msra.mxu0 0.0
    %2233 = vmatprep.subr.mxu0 0.0
    %2234 = vmatpush1.msra.mxu0 0.0
    %2235 = vmatprep.subr.mxu0 0.0
    %2236 = vmatpush1.msra.mxu0 0.0
    %2237 = vmatprep.subr.mxu0 0.0
    %2238 = vmatpush1.msra.mxu0 0.0
    %2239 = vmatprep.subr.mxu0 0.0
    %2240 = vmatpush1.msra.mxu0 0.0
    %2241 = vmatprep.subr.mxu0 0.0
    %2242 = vmatpush1.msra.mxu0 0.0
    %2243 = vmatprep.subr.mxu0 0.0
    %2244 = vmatpush1.msra.mxu0 0.0
    %2245 = vmatprep.subr.mxu0 0.0
    %2246 = vmatpush1.msra.mxu0 0.0
    %2247 = vmatprep.subr.mxu0 0.0
    %2248 = vmatpush1.msra.mxu0 0.0
    %2249 = vmatprep.subr.mxu0 0.0
    %2250 = vmatpush1.msra.mxu0 0.0
    %2251 = vmatprep.subr.mxu0 0.0
    %2252 = vmatpush1.msra.mxu0 0.0
    %2253 = vmatprep.subr.mxu0 0.0
    %2254 = vmatpush1.msra.mxu0 0.0
    %2255 = vmatprep.subr.mxu0 0.0
    %2256 = vmatpush1.msra.mxu0 0.0
    %2257 = vmatprep.subr.mxu0 0.0
    %2258 = vmatpush1.msra.mxu0 0.0
    %2259 = vmatprep.subr.mxu0 0.0
    %2260 = vmatpush1.msra.mxu0 0.0
    %2261 = vmatprep.subr.mxu0 0.0
    %2262 = vmatpush1.msra.mxu0 0.0
    %2263 = vmatprep.subr.mxu0 0.0
    %2264 = vmatpush1.msra.mxu0 0.0
    %2265 = vmatprep.subr.mxu0 0.0
    %2266 = vmatpush1.msra.mxu0 0.0
    %2267 = vmatprep.subr.mxu0 0.0
    %2268 = vmatpush1.msra.mxu0 0.0
    %2269 = vmatprep.subr.mxu0 0.0
    %2270 = vmatpush1.msra.mxu0 0.0
    %2271 = vmatprep.subr.mxu0 0.0
    %2272 = vmatpush1.msra.mxu0 0.0
    %2273 = vmatprep.subr.mxu0 0.0
    %2274 = vmatpush1.msra.mxu0 0.0
    %2275 = vmatprep.mubr.f32.mxu0 0.0
    %2276 = vmatmul.mubr.f32.gmra.mrb[0].mxu0 %v2209
    %v2277 = vpop.f32.mrb[0].mxu0
    %v2278 = vadd.f32 0.0, %v2277
    %v2279 = vpop.f32.mrb[0].mxu0
    %2280 = vdwg.mxu0
    %2281 = vrot.lane.b32.xlu0 %v230, 96
    %v2282 = vpop.permute.xlu0 %2281
    %v2285 = vsel %vm241, %v1665, 0
    %2287 = vmatprep.subr.mxu0 0.0
    %2288 = vmatpush1.msra.mxu0 %v2282
    %2289 = vmatprep.subr.mxu0 0.0
    %2290 = vmatpush1.msra.mxu0 0.0
    %2291 = vmatprep.subr.mxu0 0.0
    %2292 = vmatpush1.msra.mxu0 0.0
    %2293 = vmatprep.subr.mxu0 0.0
    %2294 = vmatpush1.msra.mxu0 0.0
    %2295 = vmatprep.subr.mxu0 0.0
    %2296 = vmatpush1.msra.mxu0 0.0
    %2297 = vmatprep.subr.mxu0 0.0
    %2298 = vmatpush1.msra.mxu0 0.0
    %2299 = vmatprep.subr.mxu0 0.0
    %2300 = vmatpush1.msra.mxu0 0.0
    %2301 = vmatprep.subr.mxu0 0.0
    %2302 = vmatpush1.msra.mxu0 0.0
    %2303 = vmatprep.subr.mxu0 0.0
    %2304 = vmatpush1.msra.mxu0 0.0
    %2305 = vmatprep.subr.mxu0 0.0
    %2306 = vmatpush1.msra.mxu0 0.0
    %2307 = vmatprep.subr.mxu0 0.0
    %2308 = vmatpush1.msra.mxu0 0.0
    %2309 = vmatprep.subr.mxu0 0.0
    %2310 = vmatpush1.msra.mxu0 0.0
    %2311 = vmatprep.subr.mxu0 0.0
    %2312 = vmatpush1.msra.mxu0 0.0
    %2313 = vmatprep.subr.mxu0 0.0
    %2314 = vmatpush1.msra.mxu0 0.0
    %2315 = vmatprep.subr.mxu0 0.0
    %2316 = vmatpush1.msra.mxu0 0.0
    %2317 = vmatprep.subr.mxu0 0.0
    %2318 = vmatpush1.msra.mxu0 0.0
    %2319 = vmatprep.subr.mxu0 0.0
    %2320 = vmatpush1.msra.mxu0 0.0
    %2321 = vmatprep.subr.mxu0 0.0
    %2322 = vmatpush1.msra.mxu0 0.0
    %2323 = vmatprep.subr.mxu0 0.0
    %2324 = vmatpush1.msra.mxu0 0.0
    %2325 = vmatprep.subr.mxu0 0.0
    %2326 = vmatpush1.msra.mxu0 0.0
    %2327 = vmatprep.subr.mxu0 0.0
    %2328 = vmatpush1.msra.mxu0 0.0
    %2329 = vmatprep.subr.mxu0 0.0
    %2330 = vmatpush1.msra.mxu0 0.0
    %2331 = vmatprep.subr.mxu0 0.0
    %2332 = vmatpush1.msra.mxu0 0.0
    %2333 = vmatprep.subr.mxu0 0.0
    %2334 = vmatpush1.msra.mxu0 0.0
    %2335 = vmatprep.subr.mxu0 0.0
    %2336 = vmatpush1.msra.mxu0 0.0
    %2337 = vmatprep.subr.mxu0 0.0
    %2338 = vmatpush1.msra.mxu0 0.0
    %2339 = vmatprep.subr.mxu0 0.0
    %2340 = vmatpush1.msra.mxu0 0.0
    %2341 = vmatprep.subr.mxu0 0.0
    %2342 = vmatpush1.msra.mxu0 0.0
    %2343 = vmatprep.subr.mxu0 0.0
    %2344 = vmatpush1.msra.mxu0 0.0
    %2345 = vmatprep.subr.mxu0 0.0
    %2346 = vmatpush1.msra.mxu0 0.0
    %2347 = vmatprep.subr.mxu0 0.0
    %2348 = vmatpush1.msra.mxu0 0.0
    %2349 = vmatprep.subr.mxu0 0.0
    %2350 = vmatpush1.msra.mxu0 0.0
    %2351 = vmatprep.mubr.f32.mxu0 0.0
    %2352 = vmatmul.mubr.f32.gmra.mrb[0].mxu0 %v2285
    %v2353 = vpop.f32.mrb[0].mxu0
    %v2354 = vadd.f32 0.0, %v2353
    %v2355 = vpop.f32.mrb[0].mxu0
    %2356 = vdwg.mxu0
    %2357 = vrot.lane.b32.xlu0 %v236, 96
    %v2358 = vpop.permute.xlu0 %2357
    %v2361 = vsel %vm241, %v1673, 0
    %2363 = vmatprep.subr.mxu0 0.0
    %2364 = vmatpush1.msra.mxu0 %v2358
    %2365 = vmatprep.subr.mxu0 0.0
    %2366 = vmatpush1.msra.mxu0 0.0
    %2367 = vmatprep.subr.mxu0 0.0
    %2368 = vmatpush1.msra.mxu0 0.0
    %2369 = vmatprep.subr.mxu0 0.0
    %2370 = vmatpush1.msra.mxu0 0.0
    %2371 = vmatprep.subr.mxu0 0.0
    %2372 = vmatpush1.msra.mxu0 0.0
    %2373 = vmatprep.subr.mxu0 0.0
    %2374 = vmatpush1.msra.mxu0 0.0
    %2375 = vmatprep.subr.mxu0 0.0
    %2376 = vmatpush1.msra.mxu0 0.0
    %2377 = vmatprep.subr.mxu0 0.0
    %2378 = vmatpush1.msra.mxu0 0.0
    %2379 = vmatprep.subr.mxu0 0.0
    %2380 = vmatpush1.msra.mxu0 0.0
    %2381 = vmatprep.subr.mxu0 0.0
    %2382 = vmatpush1.msra.mxu0 0.0
    %2383 = vmatprep.subr.mxu0 0.0
    %2384 = vmatpush1.msra.mxu0 0.0
    %2385 = vmatprep.subr.mxu0 0.0
    %2386 = vmatpush1.msra.mxu0 0.0
    %2387 = vmatprep.subr.mxu0 0.0
    %2388 = vmatpush1.msra.mxu0 0.0
    %2389 = vmatprep.subr.mxu0 0.0
    %2390 = vmatpush1.msra.mxu0 0.0
    %2391 = vmatprep.subr.mxu0 0.0
    %2392 = vmatpush1.msra.mxu0 0.0
    %2393 = vmatprep.subr.mxu0 0.0
    %2394 = vmatpush1.msra.mxu0 0.0
    %2395 = vmatprep.subr.mxu0 0.0
    %2396 = vmatpush1.msra.mxu0 0.0
    %2397 = vmatprep.subr.mxu0 0.0
    %2398 = vmatpush1.msra.mxu0 0.0
    %2399 = vmatprep.subr.mxu0 0.0
    %2400 = vmatpush1.msra.mxu0 0.0
    %2401 = vmatprep.subr.mxu0 0.0
    %2402 = vmatpush1.msra.mxu0 0.0
    %2403 = vmatprep.subr.mxu0 0.0
    %2404 = vmatpush1.msra.mxu0 0.0
    %2405 = vmatprep.subr.mxu0 0.0
    %2406 = vmatpush1.msra.mxu0 0.0
    %2407 = vmatprep.subr.mxu0 0.0
    %2408 = vmatpush1.msra.mxu0 0.0
    %2409 = vmatprep.subr.mxu0 0.0
    %2410 = vmatpush1.msra.mxu0 0.0
    %2411 = vmatprep.subr.mxu0 0.0
    %2412 = vmatpush1.msra.mxu0 0.0
    %2413 = vmatprep.subr.mxu0 0.0
    %2414 = vmatpush1.msra.mxu0 0.0
    %2415 = vmatprep.subr.mxu0 0.0
    %2416 = vmatpush1.msra.mxu0 0.0
    %2417 = vmatprep.subr.mxu0 0.0
    %2418 = vmatpush1.msra.mxu0 0.0
    %2419 = vmatprep.subr.mxu0 0.0
    %2420 = vmatpush1.msra.mxu0 0.0
    %2421 = vmatprep.subr.mxu0 0.0
    %2422 = vmatpush1.msra.mxu0 0.0
    %2423 = vmatprep.subr.mxu0 0.0
    %2424 = vmatpush1.msra.mxu0 0.0
    %2425 = vmatprep.subr.mxu0 0.0
    %2426 = vmatpush1.msra.mxu0 0.0
    %2427 = vmatprep.mubr.f32.mxu0 0.0
    %2428 = vmatmul.mubr.f32.gmra.mrb[0].mxu0 %v2361
    %v2429 = vpop.f32.mrb[0].mxu0
    %v2430 = vadd.f32 0.0, %v2429
    %v2431 = vpop.f32.mrb[0].mxu0
    %2432 = vdwg.mxu0
    %2433 = vrot.lane.b32.xlu0 %v230, 88
    %v2434 = vpop.permute.xlu0 %2433
    %v2437 = vsel %vm241, %v1666, 0
    %2439 = vmatprep.subr.mxu0 0.0
    %2440 = vmatpush1.msra.mxu0 %v2434
    %2441 = vmatprep.subr.mxu0 0.0
    %2442 = vmatpush1.msra.mxu0 0.0
    %2443 = vmatprep.subr.mxu0 0.0
    %2444 = vmatpush1.msra.mxu0 0.0
    %2445 = vmatprep.subr.mxu0 0.0
    %2446 = vmatpush1.msra.mxu0 0.0
    %2447 = vmatprep.subr.mxu0 0.0
    %2448 = vmatpush1.msra.mxu0 0.0
    %2449 = vmatprep.subr.mxu0 0.0
    %2450 = vmatpush1.msra.mxu0 0.0
    %2451 = vmatprep.subr.mxu0 0.0
    %2452 = vmatpush1.msra.mxu0 0.0
    %2453 = vmatprep.subr.mxu0 0.0
    %2454 = vmatpush1.msra.mxu0 0.0
    %2455 = vmatprep.subr.mxu0 0.0
    %2456 = vmatpush1.msra.mxu0 0.0
    %2457 = vmatprep.subr.mxu0 0.0
    %2458 = vmatpush1.msra.mxu0 0.0
    %2459 = vmatprep.subr.mxu0 0.0
    %2460 = vmatpush1.msra.mxu0 0.0
    %2461 = vmatprep.subr.mxu0 0.0
    %2462 = vmatpush1.msra.mxu0 0.0
    %2463 = vmatprep.subr.mxu0 0.0
    %2464 = vmatpush1.msra.mxu0 0.0
    %2465 = vmatprep.subr.mxu0 0.0
    %2466 = vmatpush1.msra.mxu0 0.0
    %2467 = vmatprep.subr.mxu0 0.0
    %2468 = vmatpush1.msra.mxu0 0.0
    %2469 = vmatprep.subr.mxu0 0.0
    %2470 = vmatpush1.msra.mxu0 0.0
    %2471 = vmatprep.subr.mxu0 0.0
    %2472 = vmatpush1.msra.mxu0 0.0
    %2473 = vmatprep.subr.mxu0 0.0
    %2474 = vmatpush1.msra.mxu0 0.0
    %2475 = vmatprep.subr.mxu0 0.0
    %2476 = vmatpush1.msra.mxu0 0.0
    %2477 = vmatprep.subr.mxu0 0.0
    %2478 = vmatpush1.msra.mxu0 0.0
    %2479 = vmatprep.subr.mxu0 0.0
    %2480 = vmatpush1.msra.mxu0 0.0
    %2481 = vmatprep.subr.mxu0 0.0
    %2482 = vmatpush1.msra.mxu0 0.0
    %2483 = vmatprep.subr.mxu0 0.0
    %2484 = vmatpush1.msra.mxu0 0.0
    %2485 = vmatprep.subr.mxu0 0.0
    %2486 = vmatpush1.msra.mxu0 0.0
    %2487 = vmatprep.subr.mxu0 0.0
    %2488 = vmatpush1.msra.mxu0 0.0
    %2489 = vmatprep.subr.mxu0 0.0
    %2490 = vmatpush1.msra.mxu0 0.0
    %2491 = vmatprep.subr.mxu0 0.0
    %2492 = vmatpush1.msra.mxu0 0.0
    %2493 = vmatprep.subr.mxu0 0.0
    %2494 = vmatpush1.msra.mxu0 0.0
    %2495 = vmatprep.subr.mxu0 0.0
    %2496 = vmatpush1.msra.mxu0 0.0
    %2497 = vmatprep.subr.mxu0 0.0
    %2498 = vmatpush1.msra.mxu0 0.0
    %2499 = vmatprep.subr.mxu0 0.0
    %2500 = vmatpush1.msra.mxu0 0.0
    %2501 = vmatprep.subr.mxu0 0.0
    %2502 = vmatpush1.msra.mxu0 0.0
    %2503 = vmatprep.mubr.f32.mxu0 0.0
    %2504 = vmatmul.mubr.f32.gmra.mrb[0].mxu0 %v2437
    %v2505 = vpop.f32.mrb[0].mxu0
    %v2506 = vadd.f32 0.0, %v2505
    %v2507 = vpop.f32.mrb[0].mxu0
    %2508 = vdwg.mxu0
    %2509 = vrot.lane.b32.xlu0 %v236, 88
    %v2510 = vpop.permute.xlu0 %2509
    %v2513 = vsel %vm241, %v1674, 0
    %2515 = vmatprep.subr.mxu0 0.0
    %2516 = vmatpush1.msra.mxu0 %v2510
    %2517 = vmatprep.subr.mxu0 0.0
    %2518 = vmatpush1.msra.mxu0 0.0
    %2519 = vmatprep.subr.mxu0 0.0
    %2520 = vmatpush1.msra.mxu0 0.0
    %2521 = vmatprep.subr.mxu0 0.0
    %2522 = vmatpush1.msra.mxu0 0.0
    %2523 = vmatprep.subr.mxu0 0.0
    %2524 = vmatpush1.msra.mxu0 0.0
    %2525 = vmatprep.subr.mxu0 0.0
    %2526 = vmatpush1.msra.mxu0 0.0
    %2527 = vmatprep.subr.mxu0 0.0
    %2528 = vmatpush1.msra.mxu0 0.0
    %2529 = vmatprep.subr.mxu0 0.0
    %2530 = vmatpush1.msra.mxu0 0.0
    %2531 = vmatprep.subr.mxu0 0.0
    %2532 = vmatpush1.msra.mxu0 0.0
    %2533 = vmatprep.subr.mxu0 0.0
    %2534 = vmatpush1.msra.mxu0 0.0
    %2535 = vmatprep.subr.mxu0 0.0
    %2536 = vmatpush1.msra.mxu0 0.0
    %2537 = vmatprep.subr.mxu0 0.0
    %2538 = vmatpush1.msra.mxu0 0.0
    %2539 = vmatprep.subr.mxu0 0.0
    %2540 = vmatpush1.msra.mxu0 0.0
    %2541 = vmatprep.subr.mxu0 0.0
    %2542 = vmatpush1.msra.mxu0 0.0
    %2543 = vmatprep.subr.mxu0 0.0
    %2544 = vmatpush1.msra.mxu0 0.0
    %2545 = vmatprep.subr.mxu0 0.0
    %2546 = vmatpush1.msra.mxu0 0.0
    %2547 = vmatprep.subr.mxu0 0.0
    %2548 = vmatpush1.msra.mxu0 0.0
    %2549 = vmatprep.subr.mxu0 0.0
    %2550 = vmatpush1.msra.mxu0 0.0
    %2551 = vmatprep.subr.mxu0 0.0
    %2552 = vmatpush1.msra.mxu0 0.0
    %2553 = vmatprep.subr.mxu0 0.0
    %2554 = vmatpush1.msra.mxu0 0.0
    %2555 = vmatprep.subr.mxu0 0.0
    %2556 = vmatpush1.msra.mxu0 0.0
    %2557 = vmatprep.subr.mxu0 0.0
    %2558 = vmatpush1.msra.mxu0 0.0
    %2559 = vmatprep.subr.mxu0 0.0
    %2560 = vmatpush1.msra.mxu0 0.0
    %2561 = vmatprep.subr.mxu0 0.0
    %2562 = vmatpush1.msra.mxu0 0.0
    %2563 = vmatprep.subr.mxu0 0.0
    %2564 = vmatpush1.msra.mxu0 0.0
    %2565 = vmatprep.subr.mxu0 0.0
    %2566 = vmatpush1.msra.mxu0 0.0
    %2567 = vmatprep.subr.mxu0 0.0
    %2568 = vmatpush1.msra.mxu0 0.0
    %2569 = vmatprep.subr.mxu0 0.0
    %2570 = vmatpush1.msra.mxu0 0.0
    %2571 = vmatprep.subr.mxu0 0.0
    %2572 = vmatpush1.msra.mxu0 0.0
    %2573 = vmatprep.subr.mxu0 0.0
    %2574 = vmatpush1.msra.mxu0 0.0
    %2575 = vmatprep.subr.mxu0 0.0
    %2576 = vmatpush1.msra.mxu0 0.0
    %2577 = vmatprep.subr.mxu0 0.0
    %2578 = vmatpush1.msra.mxu0 0.0
    %2579 = vmatprep.mubr.f32.mxu0 0.0
    %2580 = vmatmul.mubr.f32.gmra.mrb[0].mxu0 %v2513
    %v2581 = vpop.f32.mrb[0].mxu0
    %v2582 = vadd.f32 0.0, %v2581
    %v2583 = vpop.f32.mrb[0].mxu0
    %2584 = vdwg.mxu0
    %2585 = vrot.lane.b32.xlu0 %v230, 80
    %v2586 = vpop.permute.xlu0 %2585
    %v2589 = vsel %vm241, %v1667, 0
    %2591 = vmatprep.subr.mxu0 0.0
    %2592 = vmatpush1.msra.mxu0 %v2586
    %2593 = vmatprep.subr.mxu0 0.0
    %2594 = vmatpush1.msra.mxu0 0.0
    %2595 = vmatprep.subr.mxu0 0.0
    %2596 = vmatpush1.msra.mxu0 0.0
    %2597 = vmatprep.subr.mxu0 0.0
    %2598 = vmatpush1.msra.mxu0 0.0
    %2599 = vmatprep.subr.mxu0 0.0
    %2600 = vmatpush1.msra.mxu0 0.0
    %2601 = vmatprep.subr.mxu0 0.0
    %2602 = vmatpush1.msra.mxu0 0.0
    %2603 = vmatprep.subr.mxu0 0.0
    %2604 = vmatpush1.msra.mxu0 0.0
    %2605 = vmatprep.subr.mxu0 0.0
    %2606 = vmatpush1.msra.mxu0 0.0
    %2607 = vmatprep.subr.mxu0 0.0
    %2608 = vmatpush1.msra.mxu0 0.0
    %2609 = vmatprep.subr.mxu0 0.0
    %2610 = vmatpush1.msra.mxu0 0.0
    %2611 = vmatprep.subr.mxu0 0.0
    %2612 = vmatpush1.msra.mxu0 0.0
    %2613 = vmatprep.subr.mxu0 0.0
    %2614 = vmatpush1.msra.mxu0 0.0
    %2615 = vmatprep.subr.mxu0 0.0
    %2616 = vmatpush1.msra.mxu0 0.0
    %2617 = vmatprep.subr.mxu0 0.0
    %2618 = vmatpush1.msra.mxu0 0.0
    %2619 = vmatprep.subr.mxu0 0.0
    %2620 = vmatpush1.msra.mxu0 0.0
    %2621 = vmatprep.subr.mxu0 0.0
    %2622 = vmatpush1.msra.mxu0 0.0
    %2623 = vmatprep.subr.mxu0 0.0
    %2624 = vmatpush1.msra.mxu0 0.0
    %2625 = vmatprep.subr.mxu0 0.0
    %2626 = vmatpush1.msra.mxu0 0.0
    %2627 = vmatprep.subr.mxu0 0.0
    %2628 = vmatpush1.msra.mxu0 0.0
    %2629 = vmatprep.subr.mxu0 0.0
    %2630 = vmatpush1.msra.mxu0 0.0
    %2631 = vmatprep.subr.mxu0 0.0
    %2632 = vmatpush1.msra.mxu0 0.0
    %2633 = vmatprep.subr.mxu0 0.0
    %2634 = vmatpush1.msra.mxu0 0.0
    %2635 = vmatprep.subr.mxu0 0.0
    %2636 = vmatpush1.msra.mxu0 0.0
    %2637 = vmatprep.subr.mxu0 0.0
    %2638 = vmatpush1.msra.mxu0 0.0
    %2639 = vmatprep.subr.mxu0 0.0
    %2640 = vmatpush1.msra.mxu0 0.0
    %2641 = vmatprep.subr.mxu0 0.0
    %2642 = vmatpush1.msra.mxu0 0.0
    %2643 = vmatprep.subr.mxu0 0.0
    %2644 = vmatpush1.msra.mxu0 0.0
    %2645 = vmatprep.subr.mxu0 0.0
    %2646 = vmatpush1.msra.mxu0 0.0
    %2647 = vmatprep.subr.mxu0 0.0
    %2648 = vmatpush1.msra.mxu0 0.0
    %2649 = vmatprep.subr.mxu0 0.0
    %2650 = vmatpush1.msra.mxu0 0.0
    %2651 = vmatprep.subr.mxu0 0.0
    %2652 = vmatpush1.msra.mxu0 0.0
    %2653 = vmatprep.subr.mxu0 0.0
    %2654 = vmatpush1.msra.mxu0 0.0
    %2655 = vmatprep.mubr.f32.mxu0 0.0
    %2656 = vmatmul.mubr.f32.gmra.mrb[0].mxu0 %v2589
    %v2657 = vpop.f32.mrb[0].mxu0
    %v2658 = vadd.f32 0.0, %v2657
    %v2659 = vpop.f32.mrb[0].mxu0
    %2660 = vdwg.mxu0
    %2661 = vrot.lane.b32.xlu0 %v236, 80
    %v2662 = vpop.permute.xlu0 %2661
    %v2665 = vsel %vm241, %v1675, 0
    %2667 = vmatprep.subr.mxu0 0.0
    %2668 = vmatpush1.msra.mxu0 %v2662
    %2669 = vmatprep.subr.mxu0 0.0
    %2670 = vmatpush1.msra.mxu0 0.0
    %2671 = vmatprep.subr.mxu0 0.0
    %2672 = vmatpush1.msra.mxu0 0.0
    %2673 = vmatprep.subr.mxu0 0.0
    %2674 = vmatpush1.msra.mxu0 0.0
    %2675 = vmatprep.subr.mxu0 0.0
    %2676 = vmatpush1.msra.mxu0 0.0
    %2677 = vmatprep.subr.mxu0 0.0
    %2678 = vmatpush1.msra.mxu0 0.0
    %2679 = vmatprep.subr.mxu0 0.0
    %2680 = vmatpush1.msra.mxu0 0.0
    %2681 = vmatprep.subr.mxu0 0.0
    %2682 = vmatpush1.msra.mxu0 0.0
    %2683 = vmatprep.subr.mxu0 0.0
    %2684 = vmatpush1.msra.mxu0 0.0
    %2685 = vmatprep.subr.mxu0 0.0
    %2686 = vmatpush1.msra.mxu0 0.0
    %2687 = vmatprep.subr.mxu0 0.0
    %2688 = vmatpush1.msra.mxu0 0.0
    %2689 = vmatprep.subr.mxu0 0.0
    %2690 = vmatpush1.msra.mxu0 0.0
    %2691 = vmatprep.subr.mxu0 0.0
    %2692 = vmatpush1.msra.mxu0 0.0
    %2693 = vmatprep.subr.mxu0 0.0
    %2694 = vmatpush1.msra.mxu0 0.0
    %2695 = vmatprep.subr.mxu0 0.0
    %2696 = vmatpush1.msra.mxu0 0.0
    %2697 = vmatprep.subr.mxu0 0.0
    %2698 = vmatpush1.msra.mxu0 0.0
    %2699 = vmatprep.subr.mxu0 0.0
    %2700 = vmatpush1.msra.mxu0 0.0
    %2701 = vmatprep.subr.mxu0 0.0
    %2702 = vmatpush1.msra.mxu0 0.0
    %2703 = vmatprep.subr.mxu0 0.0
    %2704 = vmatpush1.msra.mxu0 0.0
    %2705 = vmatprep.subr.mxu0 0.0
    %2706 = vmatpush1.msra.mxu0 0.0
    %2707 = vmatprep.subr.mxu0 0.0
    %2708 = vmatpush1.msra.mxu0 0.0
    %2709 = vmatprep.subr.mxu0 0.0
    %2710 = vmatpush1.msra.mxu0 0.0
    %2711 = vmatprep.subr.mxu0 0.0
    %2712 = vmatpush1.msra.mxu0 0.0
    %2713 = vmatprep.subr.mxu0 0.0
    %2714 = vmatpush1.msra.mxu0 0.0
    %2715 = vmatprep.subr.mxu0 0.0
    %2716 = vmatpush1.msra.mxu0 0.0
    %2717 = vmatprep.subr.mxu0 0.0
    %2718 = vmatpush1.msra.mxu0 0.0
    %2719 = vmatprep.subr.mxu0 0.0
    %2720 = vmatpush1.msra.mxu0 0.0
    %2721 = vmatprep.subr.mxu0 0.0
    %2722 = vmatpush1.msra.mxu0 0.0
    %2723 = vmatprep.subr.mxu0 0.0
    %2724 = vmatpush1.msra.mxu0 0.0
    %2725 = vmatprep.subr.mxu0 0.0
    %2726 = vmatpush1.msra.mxu0 0.0
    %2727 = vmatprep.subr.mxu0 0.0
    %2728 = vmatpush1.msra.mxu0 0.0
    %2729 = vmatprep.subr.mxu0 0.0
    %2730 = vmatpush1.msra.mxu0 0.0
    %2731 = vmatprep.mubr.f32.mxu0 0.0
    %2732 = vmatmul.mubr.f32.gmra.mrb[0].mxu0 %v2665
    %v2733 = vpop.f32.mrb[0].mxu0
    %v2734 = vadd.f32 0.0, %v2733
    %v2735 = vpop.f32.mrb[0].mxu0
    %2736 = vdwg.mxu0
    %2737 = vrot.lane.b32.xlu0 %v230, 72
    %v2738 = vpop.permute.xlu0 %2737
    %v2741 = vsel %vm241, %v1668, 0
    %2743 = vmatprep.subr.mxu0 0.0
    %2744 = vmatpush1.msra.mxu0 %v2738
    %2745 = vmatprep.subr.mxu0 0.0
    %2746 = vmatpush1.msra.mxu0 0.0
    %2747 = vmatprep.subr.mxu0 0.0
    %2748 = vmatpush1.msra.mxu0 0.0
    %2749 = vmatprep.subr.mxu0 0.0
    %2750 = vmatpush1.msra.mxu0 0.0
    %2751 = vmatprep.subr.mxu0 0.0
    %2752 = vmatpush1.msra.mxu0 0.0
    %2753 = vmatprep.subr.mxu0 0.0
    %2754 = vmatpush1.msra.mxu0 0.0
    %2755 = vmatprep.subr.mxu0 0.0
    %2756 = vmatpush1.msra.mxu0 0.0
    %2757 = vmatprep.subr.mxu0 0.0
    %2758 = vmatpush1.msra.mxu0 0.0
    %2759 = vmatprep.subr.mxu0 0.0
    %2760 = vmatpush1.msra.mxu0 0.0
    %2761 = vmatprep.subr.mxu0 0.0
    %2762 = vmatpush1.msra.mxu0 0.0
    %2763 = vmatprep.subr.mxu0 0.0
    %2764 = vmatpush1.msra.mxu0 0.0
    %2765 = vmatprep.subr.mxu0 0.0
    %2766 = vmatpush1.msra.mxu0 0.0
    %2767 = vmatprep.subr.mxu0 0.0
    %2768 = vmatpush1.msra.mxu0 0.0
    %2769 = vmatprep.subr.mxu0 0.0
    %2770 = vmatpush1.msra.mxu0 0.0
    %2771 = vmatprep.subr.mxu0 0.0
    %2772 = vmatpush1.msra.mxu0 0.0
    %2773 = vmatprep.subr.mxu0 0.0
    %2774 = vmatpush1.msra.mxu0 0.0
    %2775 = vmatprep.subr.mxu0 0.0
    %2776 = vmatpush1.msra.mxu0 0.0
    %2777 = vmatprep.subr.mxu0 0.0
    %2778 = vmatpush1.msra.mxu0 0.0
    %2779 = vmatprep.subr.mxu0 0.0
    %2780 = vmatpush1.msra.mxu0 0.0
    %2781 = vmatprep.subr.mxu0 0.0
    %2782 = vmatpush1.msra.mxu0 0.0
    %2783 = vmatprep.subr.mxu0 0.0
    %2784 = vmatpush1.msra.mxu0 0.0
    %2785 = vmatprep.subr.mxu0 0.0
    %2786 = vmatpush1.msra.mxu0 0.0
    %2787 = vmatprep.subr.mxu0 0.0
    %2788 = vmatpush1.msra.mxu0 0.0
    %2789 = vmatprep.subr.mxu0 0.0
    %2790 = vmatpush1.msra.mxu0 0.0
    %2791 = vmatprep.subr.mxu0 0.0
    %2792 = vmatpush1.msra.mxu0 0.0
    %2793 = vmatprep.subr.mxu0 0.0
    %2794 = vmatpush1.msra.mxu0 0.0
    %2795 = vmatprep.subr.mxu0 0.0
    %2796 = vmatpush1.msra.mxu0 0.0
    %2797 = vmatprep.subr.mxu0 0.0
    %2798 = vmatpush1.msra.mxu0 0.0
    %2799 = vmatprep.subr.mxu0 0.0
    %2800 = vmatpush1.msra.mxu0 0.0
    %2801 = vmatprep.subr.mxu0 0.0
    %2802 = vmatpush1.msra.mxu0 0.0
    %2803 = vmatprep.subr.mxu0 0.0
    %2804 = vmatpush1.msra.mxu0 0.0
    %2805 = vmatprep.subr.mxu0 0.0
    %2806 = vmatpush1.msra.mxu0 0.0
    %2807 = vmatprep.mubr.f32.mxu0 0.0
    %2808 = vmatmul.mubr.f32.gmra.mrb[0].mxu0 %v2741
    %v2809 = vpop.f32.mrb[0].mxu0
    %v2810 = vadd.f32 0.0, %v2809
    %v2811 = vpop.f32.mrb[0].mxu0
    %2812 = vdwg.mxu0
    %2813 = vrot.lane.b32.xlu0 %v236, 72
    %v2814 = vpop.permute.xlu0 %2813
    %v2817 = vsel %vm241, %v1676, 0
    %2819 = vmatprep.subr.mxu0 0.0
    %2820 = vmatpush1.msra.mxu0 %v2814
    %2821 = vmatprep.subr.mxu0 0.0
    %2822 = vmatpush1.msra.mxu0 0.0
    %2823 = vmatprep.subr.mxu0 0.0
    %2824 = vmatpush1.msra.mxu0 0.0
    %2825 = vmatprep.subr.mxu0 0.0
    %2826 = vmatpush1.msra.mxu0 0.0
    %2827 = vmatprep.subr.mxu0 0.0
    %2828 = vmatpush1.msra.mxu0 0.0
    %2829 = vmatprep.subr.mxu0 0.0
    %2830 = vmatpush1.msra.mxu0 0.0
    %2831 = vmatprep.subr.mxu0 0.0
    %2832 = vmatpush1.msra.mxu0 0.0
    %2833 = vmatprep.subr.mxu0 0.0
    %2834 = vmatpush1.msra.mxu0 0.0
    %2835 = vmatprep.subr.mxu0 0.0
    %2836 = vmatpush1.msra.mxu0 0.0
    %2837 = vmatprep.subr.mxu0 0.0
    %2838 = vmatpush1.msra.mxu0 0.0
    %2839 = vmatprep.subr.mxu0 0.0
    %2840 = vmatpush1.msra.mxu0 0.0
    %2841 = vmatprep.subr.mxu0 0.0
    %2842 = vmatpush1.msra.mxu0 0.0
    %2843 = vmatprep.subr.mxu0 0.0
    %2844 = vmatpush1.msra.mxu0 0.0
    %2845 = vmatprep.subr.mxu0 0.0
    %2846 = vmatpush1.msra.mxu0 0.0
    %2847 = vmatprep.subr.mxu0 0.0
    %2848 = vmatpush1.msra.mxu0 0.0
    %2849 = vmatprep.subr.mxu0 0.0
    %2850 = vmatpush1.msra.mxu0 0.0
    %2851 = vmatprep.subr.mxu0 0.0
    %2852 = vmatpush1.msra.mxu0 0.0
    %2853 = vmatprep.subr.mxu0 0.0
    %2854 = vmatpush1.msra.mxu0 0.0
    %2855 = vmatprep.subr.mxu0 0.0
    %2856 = vmatpush1.msra.mxu0 0.0
    %2857 = vmatprep.subr.mxu0 0.0
    %2858 = vmatpush1.msra.mxu0 0.0
    %2859 = vmatprep.subr.mxu0 0.0
    %2860 = vmatpush1.msra.mxu0 0.0
    %2861 = vmatprep.subr.mxu0 0.0
    %2862 = vmatpush1.msra.mxu0 0.0
    %2863 = vmatprep.subr.mxu0 0.0
    %2864 = vmatpush1.msra.mxu0 0.0
    %2865 = vmatprep.subr.mxu0 0.0
    %2866 = vmatpush1.msra.mxu0 0.0
    %2867 = vmatprep.subr.mxu0 0.0
    %2868 = vmatpush1.msra.mxu0 0.0
    %2869 = vmatprep.subr.mxu0 0.0
    %2870 = vmatpush1.msra.mxu0 0.0
    %2871 = vmatprep.subr.mxu0 0.0
    %2872 = vmatpush1.msra.mxu0 0.0
    %2873 = vmatprep.subr.mxu0 0.0
    %2874 = vmatpush1.msra.mxu0 0.0
    %2875 = vmatprep.subr.mxu0 0.0
    %2876 = vmatpush1.msra.mxu0 0.0
    %2877 = vmatprep.subr.mxu0 0.0
    %2878 = vmatpush1.msra.mxu0 0.0
    %2879 = vmatprep.subr.mxu0 0.0
    %2880 = vmatpush1.msra.mxu0 0.0
    %2881 = vmatprep.subr.mxu0 0.0
    %2882 = vmatpush1.msra.mxu0 0.0
    %2883 = vmatprep.mubr.f32.mxu0 0.0
    %2884 = vmatmul.mubr.f32.gmra.mrb[0].mxu0 %v2817
    %v2885 = vpop.f32.mrb[0].mxu0
    %v2886 = vadd.f32 0.0, %v2885
    %v2887 = vpop.f32.mrb[0].mxu0
    %2888 = vdwg.mxu0
    %2891 = vrot.lane.b32.xlu0 %v1897, 8
    %v2892 = vpop.permute.xlu0 %2891
    %2893 = vrot.lane.b32.xlu0 %v1974, 8
    %v2894 = vpop.permute.xlu0 %2893
    %2899 = vrot.lane.b32.xlu0 %v2050, 16
    %v2900 = vpop.permute.xlu0 %2899
    %2901 = vrot.lane.b32.xlu0 %v2126, 16
    %v2902 = vpop.permute.xlu0 %2901
    %2907 = vrot.lane.b32.xlu0 %v2202, 24
    %v2908 = vpop.permute.xlu0 %2907
    %2909 = vrot.lane.b32.xlu0 %v2278, 24
    %v2910 = vpop.permute.xlu0 %2909
    %2915 = vrot.lane.b32.xlu0 %v2354, 32
    %v2916 = vpop.permute.xlu0 %2915
    %2917 = vrot.lane.b32.xlu0 %v2430, 32
    %v2918 = vpop.permute.xlu0 %2917
    %2923 = vrot.lane.b32.xlu0 %v2506, 40
    %v2924 = vpop.permute.xlu0 %2923
    %2925 = vrot.lane.b32.xlu0 %v2582, 40
    %v2926 = vpop.permute.xlu0 %2925
    %2931 = vrot.lane.b32.xlu0 %v2658, 48
    %v2932 = vpop.permute.xlu0 %2931
    %2933 = vrot.lane.b32.xlu0 %v2734, 48
    %v2934 = vpop.permute.xlu0 %2933
    %2939 = vrot.lane.b32.xlu0 %v2810, 56
    %v2940 = vpop.permute.xlu0 %2939
    %2941 = vrot.lane.b32.xlu0 %v2886, 56
    %v2942 = vpop.permute.xlu0 %2941
    %v2945 = vsel %vm241, %v1747, %v2892
    %v2946 = vsel %vm241, %v1820, %v2894
    %vm2947 = vcmask 130048
    %v2948 = vsel %vm2947, %v2945, %v2900
    %v2949 = vsel %vm2947, %v2946, %v2902
    %vm2950 = vcmask 195584
    %v2951 = vsel %vm2950, %v2948, %v2908
    %v2952 = vsel %vm2950, %v2949, %v2910
    %vm2953 = vcmask 261120
    %v2954 = vsel %vm2953, %v2951, %v2916
    %v2955 = vsel %vm2953, %v2952, %v2918
    %vm2956 = vcmask 326656
    %v2957 = vsel %vm2956, %v2954, %v2924
    %v2958 = vsel %vm2956, %v2955, %v2926
    %vm2959 = vcmask 392192
    %v2960 = vsel %vm2959, %v2957, %v2932
    %v2961 = vsel %vm2959, %v2958, %v2934
    %vm2962 = vcmask 457728
    %v2963 = vsel %vm2962, %v2960, %v2940
    %v2964 = vsel %vm2962, %v2961, %v2942
    %v2965 = vld [vmem:[%s5] sm:$0xff]
    %v2966 = vld [vmem:[%s5 + $0x8] sm:$0xff]
    %v2967 = vld [vmem:[%s5 + $0x10] sm:$0xff]
    %v2968 = vld [vmem:[%s5 + $0x18] sm:$0xff]
    %v2969 = vld [vmem:[%s5 + $0x20] sm:$0xff]
    %v2970 = vld [vmem:[%s5 + $0x28] sm:$0xff]
    %v2971 = vld [vmem:[%s5 + $0x30] sm:$0xff]
    %v2972 = vld [vmem:[%s5 + $0x38] sm:$0xff]
    %v2973 = vlaneseq
    %v2974 = vshrl.u32 %v2973, 7
    %v2975 = vsub.s32 1, %v2974
    %v2976 = vrot.slane %v128, %v2975
    %v2978 = vsel %vm154, %v2963, 0
    %v2981 = vsel %vm154, %v2964, 0
    %2983 = vmatprep.subr.mxu0 0.0
    %2984 = vmatpush1.msra.mxu0 %v2965
    %2985 = vmatprep.subr.mxu0 0.0
    %2986 = vmatpush1.msra.mxu0 %v2966
    %2987 = vmatprep.subr.mxu0 0.0
    %2988 = vmatpush1.msra.mxu0 %v2967
    %2989 = vmatprep.subr.mxu0 0.0
    %2990 = vmatpush1.msra.mxu0 %v2968
    %2991 = vmatprep.subr.mxu0 0.0
    %2992 = vmatpush1.msra.mxu0 %v2969
    %2993 = vmatprep.subr.mxu0 0.0
    %2994 = vmatpush1.msra.mxu0 %v2970
    %2995 = vmatprep.subr.mxu0 0.0
    %2996 = vmatpush1.msra.mxu0 %v2971
    %2997 = vmatprep.subr.mxu0 0.0
    %2998 = vmatpush1.msra.mxu0 %v2972
    %2999 = vmatprep.subr.mxu0 0.0
    %3000 = vmatpush1.msra.mxu0 0.0
    %3001 = vmatprep.subr.mxu0 0.0
    %3002 = vmatpush1.msra.mxu0 0.0
    %3003 = vmatprep.subr.mxu0 0.0
    %3004 = vmatpush1.msra.mxu0 0.0
    %3005 = vmatprep.subr.mxu0 0.0
    %3006 = vmatpush1.msra.mxu0 0.0
    %3007 = vmatprep.subr.mxu0 0.0
    %3008 = vmatpush1.msra.mxu0 0.0
    %3009 = vmatprep.subr.mxu0 0.0
    %3010 = vmatpush1.msra.mxu0 0.0
    %3011 = vmatprep.subr.mxu0 0.0
    %3012 = vmatpush1.msra.mxu0 0.0
    %3013 = vmatprep.subr.mxu0 0.0
    %3014 = vmatpush1.msra.mxu0 0.0
    %3015 = vmatprep.subr.mxu0 0.0
    %3016 = vmatpush1.msra.mxu0 0.0
    %3017 = vmatprep.subr.mxu0 0.0
    %3018 = vmatpush1.msra.mxu0 0.0
    %3019 = vmatprep.subr.mxu0 0.0
    %3020 = vmatpush1.msra.mxu0 0.0
    %3021 = vmatprep.subr.mxu0 0.0
    %3022 = vmatpush1.msra.mxu0 0.0
    %3023 = vmatprep.subr.mxu0 0.0
    %3024 = vmatpush1.msra.mxu0 0.0
    %3025 = vmatprep.subr.mxu0 0.0
    %3026 = vmatpush1.msra.mxu0 0.0
    %3027 = vmatprep.subr.mxu0 0.0
    %3028 = vmatpush1.msra.mxu0 0.0
    %3029 = vmatprep.subr.mxu0 0.0
    %3030 = vmatpush1.msra.mxu0 0.0
    %3031 = vmatprep.subr.mxu0 0.0
    %3032 = vmatpush1.msra.mxu0 0.0
    %3033 = vmatprep.subr.mxu0 0.0
    %3034 = vmatpush1.msra.mxu0 0.0
    %3035 = vmatprep.subr.mxu0 0.0
    %3036 = vmatpush1.msra.mxu0 0.0
    %3037 = vmatprep.subr.mxu0 0.0
    %3038 = vmatpush1.msra.mxu0 0.0
    %3039 = vmatprep.subr.mxu0 0.0
    %3040 = vmatpush1.msra.mxu0 0.0
    %3041 = vmatprep.subr.mxu0 0.0
    %3042 = vmatpush1.msra.mxu0 0.0
    %3043 = vmatprep.subr.mxu0 0.0
    %3044 = vmatpush1.msra.mxu0 0.0
    %3045 = vmatprep.subr.mxu0 0.0
    %3046 = vmatpush1.msra.mxu0 0.0
    %3047 = vmatprep.mubr.f32.mxu0 0.0
    %3048 = vmatmul.mubr.f32.gmra.mrb[0].mxu0 %v2978
    %v3049 = vpop.f32.mrb[0].mxu0
    %v3050 = vadd.f32 %v2976, %v3049
    %v3051 = vpop.f32.mrb[0].mxu0
    %3052 = vmatprep.mubr.f32.mxu0 0.0
    %3053 = vmatmul.mubr.f32.gmra.mrb[0].mxu0 %v2981
    %v3054 = vpop.f32.mrb[0].mxu0
    %v3055 = vadd.f32 %v2976, %v3054
    %v3056 = vpop.f32.mrb[0].mxu0
    %3057 = vdwg.mxu0
    %v3058 = vadd.f32 %v126, %v3050
    %v3059 = vadd.f32 %v127, %v3055
    %v3060 = vsel %vm154, %v3058, 0.0
    %3061 = vadd.xlane.f32.xlu0 %v3060
    %v3062 = vpop.xlane.xlu0 %3061
    %v3063 = vsel %vm154, %v3059, 0.0
    %3064 = vadd.xlane.f32.xlu0 %v3063
    %v3065 = vpop.xlane.xlu0 %3064
    %v3066 = vrcp.pop 64.0
    %v3067 = vmul.f32 %v3062, %v3066
    %v3068 = vmul.f32 %v3065, %v3066
    %v3069 = vsub.f32 %v3058, %v3067
    %v3070 = vsub.f32 %v3059, %v3068
    %v3071 = vmul.f32 %v3069, %v3069
    %v3072 = vmul.f32 %v3070, %v3070
    %v3073 = vsel %vm154, %v3071, 0.0
    %3074 = vadd.xlane.f32.xlu0 %v3073
    %v3075 = vpop.xlane.xlu0 %3074
    %v3076 = vsel %vm154, %v3072, 0.0
    %3077 = vadd.xlane.f32.xlu0 %v3076
    %v3078 = vpop.xlane.xlu0 %3077
    %v3079 = vmul.f32 %v3075, %v3066
    %v3080 = vmul.f32 %v3078, %v3066
    %v3081 = vadd.f32 %v3079, 1e-05
    %v3082 = vadd.f32 %v3080, 1e-05
    %v3083 = vrsqrt.pop %v3081
    %v3084 = vrsqrt.pop %v3082
    %v3085 = vmul.f32 %v3069, %v3083
    %v3086 = vmul.f32 %v3070, %v3084
    %v3087 = vlaneseq
    %v3088 = vshrl.u32 %v3087, 7
    %v3089 = vsub.s32 4, %v3088
    %v3090 = vrot.slane %v128, %v3089
    %v3091 = vmul.f32 %v3085, %v3090
    %v3092 = vmul.f32 %v3086, %v3090
    %v3093 = vlaneseq
    %v3094 = vshrl.u32 %v3093, 7
    %v3095 = vsub.s32 5, %v3094
    %v3096 = vrot.slane %v128, %v3095
    %v3097 = vadd.f32 %v3091, %v3096
    %v3098 = vadd.f32 %v3092, %v3096
    %v3099 = vld [vmem:[#allocation7] sm:$0xff]
    %v3100 = vld [vmem:[#allocation7 + $0x8] sm:$0xff]
    %v3101 = vld [vmem:[#allocation7 + $0x10] sm:$0xff]
    %v3102 = vld [vmem:[#allocation7 + $0x18] sm:$0xff]
    %v3103 = vld [vmem:[#allocation7 + $0x20] sm:$0xff]
    %v3104 = vld [vmem:[#allocation7 + $0x28] sm:$0xff]
    %v3105 = vld [vmem:[#allocation7 + $0x30] sm:$0xff]
    %v3106 = vld [vmem:[#allocation7 + $0x38] sm:$0xff]
    %v3107 = vlaneseq
    %v3108 = vshrl.u32 %v3107, 7
    %v3109 = vsub.s32 2, %v3108
    %v3110 = vrot.slane %v128, %v3109
    %v3112 = vsel %vm154, %v3097, 0
    %v3115 = vsel %vm154, %v3098, 0
    %3117 = vmatprep.subr.mxu0 0.0
    %3118 = vmatpush1.msra.mxu0 %v3099
    %3119 = vmatprep.subr.mxu0 0.0
    %3120 = vmatpush1.msra.mxu0 %v3100
    %3121 = vmatprep.subr.mxu0 0.0
    %3122 = vmatpush1.msra.mxu0 %v3101
    %3123 = vmatprep.subr.mxu0 0.0
    %3124 = vmatpush1.msra.mxu0 %v3102
    %3125 = vmatprep.subr.mxu0 0.0
    %3126 = vmatpush1.msra.mxu0 %v3103
    %3127 = vmatprep.subr.mxu0 0.0
    %3128 = vmatpush1.msra.mxu0 %v3104
    %3129 = vmatprep.subr.mxu0 0.0
    %3130 = vmatpush1.msra.mxu0 %v3105
    %3131 = vmatprep.subr.mxu0 0.0
    %3132 = vmatpush1.msra.mxu0 %v3106
    %3133 = vmatprep.subr.mxu0 0.0
    %3134 = vmatpush1.msra.mxu0 0.0
    %3135 = vmatprep.subr.mxu0 0.0
    %3136 = vmatpush1.msra.mxu0 0.0
    %3137 = vmatprep.subr.mxu0 0.0
    %3138 = vmatpush1.msra.mxu0 0.0
    %3139 = vmatprep.subr.mxu0 0.0
    %3140 = vmatpush1.msra.mxu0 0.0
    %3141 = vmatprep.subr.mxu0 0.0
    %3142 = vmatpush1.msra.mxu0 0.0
    %3143 = vmatprep.subr.mxu0 0.0
    %3144 = vmatpush1.msra.mxu0 0.0
    %3145 = vmatprep.subr.mxu0 0.0
    %3146 = vmatpush1.msra.mxu0 0.0
    %3147 = vmatprep.subr.mxu0 0.0
    %3148 = vmatpush1.msra.mxu0 0.0
    %3149 = vmatprep.subr.mxu0 0.0
    %3150 = vmatpush1.msra.mxu0 0.0
    %3151 = vmatprep.subr.mxu0 0.0
    %3152 = vmatpush1.msra.mxu0 0.0
    %3153 = vmatprep.subr.mxu0 0.0
    %3154 = vmatpush1.msra.mxu0 0.0
    %3155 = vmatprep.subr.mxu0 0.0
    %3156 = vmatpush1.msra.mxu0 0.0
    %3157 = vmatprep.subr.mxu0 0.0
    %3158 = vmatpush1.msra.mxu0 0.0
    %3159 = vmatprep.subr.mxu0 0.0
    %3160 = vmatpush1.msra.mxu0 0.0
    %3161 = vmatprep.subr.mxu0 0.0
    %3162 = vmatpush1.msra.mxu0 0.0
    %3163 = vmatprep.subr.mxu0 0.0
    %3164 = vmatpush1.msra.mxu0 0.0
    %3165 = vmatprep.subr.mxu0 0.0
    %3166 = vmatpush1.msra.mxu0 0.0
    %3167 = vmatprep.subr.mxu0 0.0
    %3168 = vmatpush1.msra.mxu0 0.0
    %3169 = vmatprep.subr.mxu0 0.0
    %3170 = vmatpush1.msra.mxu0 0.0
    %3171 = vmatprep.subr.mxu0 0.0
    %3172 = vmatpush1.msra.mxu0 0.0
    %3173 = vmatprep.subr.mxu0 0.0
    %3174 = vmatpush1.msra.mxu0 0.0
    %3175 = vmatprep.subr.mxu0 0.0
    %3176 = vmatpush1.msra.mxu0 0.0
    %3177 = vmatprep.subr.mxu0 0.0
    %3178 = vmatpush1.msra.mxu0 0.0
    %3179 = vmatprep.subr.mxu0 0.0
    %3180 = vmatpush1.msra.mxu0 0.0
    %3181 = vmatprep.mubr.f32.mxu0 0.0
    %3182 = vmatmul.mubr.f32.gmra.mrb[0].mxu0 %v3112
    %v3183 = vpop.f32.mrb[0].mxu0
    %v3184 = vadd.f32 %v3110, %v3183
    %v3185 = vpop.f32.mrb[0].mxu0
    %3186 = vmatprep.mubr.f32.mxu0 0.0
    %3187 = vmatmul.mubr.f32.gmra.mrb[0].mxu0 %v3115
    %v3188 = vpop.f32.mrb[0].mxu0
    %v3189 = vadd.f32 %v3110, %v3188
    %v3190 = vpop.f32.mrb[0].mxu0
    %3191 = vdwg.mxu0
    %v3192 = vmax.f32 %v3184, 0.0
    %v3193 = vmax.f32 %v3189, 0.0
    %v3194 = vld [vmem:[%s7] sm:$0xff]
    %v3195 = vld [vmem:[%s7 + $0x8] sm:$0xff]
    %v3196 = vld [vmem:[%s7 + $0x10] sm:$0xff]
    %v3197 = vld [vmem:[%s7 + $0x18] sm:$0xff]
    %v3198 = vld [vmem:[%s7 + $0x20] sm:$0xff]
    %v3199 = vld [vmem:[%s7 + $0x28] sm:$0xff]
    %v3200 = vld [vmem:[%s7 + $0x30] sm:$0xff]
    %v3201 = vld [vmem:[%s7 + $0x38] sm:$0xff]
    %v3202 = vld [vmem:[%s7 + $0x40] sm:$0xff]
    %v3203 = vld [vmem:[%s7 + $0x48] sm:$0xff]
    %v3204 = vld [vmem:[%s7 + $0x50] sm:$0xff]
    %v3205 = vld [vmem:[%s7 + $0x58] sm:$0xff]
    %v3206 = vld [vmem:[%s7 + $0x60] sm:$0xff]
    %v3207 = vld [vmem:[%s7 + $0x68] sm:$0xff]
    %v3208 = vld [vmem:[%s7 + $0x70] sm:$0xff]
    %v3209 = vld [vmem:[%s7 + $0x78] sm:$0xff]
    %v3210 = vlaneseq
    %v3211 = vshrl.u32 %v3210, 7
    %v3212 = vsub.s32 3, %v3211
    %v3213 = vrot.slane %v128, %v3212
    %3214 = vmatprep.subr.mxu0 0.0
    %3215 = vmatpush1.msra.mxu0 %v3194
    %3216 = vmatprep.subr.mxu0 0.0
    %3217 = vmatpush1.msra.mxu0 %v3195
    %3218 = vmatprep.subr.mxu0 0.0
    %3219 = vmatpush1.msra.mxu0 %v3196
    %3220 = vmatprep.subr.mxu0 0.0
    %3221 = vmatpush1.msra.mxu0 %v3197
    %3222 = vmatprep.subr.mxu0 0.0
    %3223 = vmatpush1.msra.mxu0 %v3198
    %3224 = vmatprep.subr.mxu0 0.0
    %3225 = vmatpush1.msra.mxu0 %v3199
    %3226 = vmatprep.subr.mxu0 0.0
    %3227 = vmatpush1.msra.mxu0 %v3200
    %3228 = vmatprep.subr.mxu0 0.0
    %3229 = vmatpush1.msra.mxu0 %v3201
    %3230 = vmatprep.subr.mxu0 0.0
    %3231 = vmatpush1.msra.mxu0 %v3202
    %3232 = vmatprep.subr.mxu0 0.0
    %3233 = vmatpush1.msra.mxu0 %v3203
    %3234 = vmatprep.subr.mxu0 0.0
    %3235 = vmatpush1.msra.mxu0 %v3204
    %3236 = vmatprep.subr.mxu0 0.0
    %3237 = vmatpush1.msra.mxu0 %v3205
    %3238 = vmatprep.subr.mxu0 0.0
    %3239 = vmatpush1.msra.mxu0 %v3206
    %3240 = vmatprep.subr.mxu0 0.0
    %3241 = vmatpush1.msra.mxu0 %v3207
    %3242 = vmatprep.subr.mxu0 0.0
    %3243 = vmatpush1.msra.mxu0 %v3208
    %3244 = vmatprep.subr.mxu0 0.0
    %3245 = vmatpush1.msra.mxu0 %v3209
    %3246 = vmatprep.subr.mxu0 0.0
    %3247 = vmatpush1.msra.mxu0 0.0
    %3248 = vmatprep.subr.mxu0 0.0
    %3249 = vmatpush1.msra.mxu0 0.0
    %3250 = vmatprep.subr.mxu0 0.0
    %3251 = vmatpush1.msra.mxu0 0.0
    %3252 = vmatprep.subr.mxu0 0.0
    %3253 = vmatpush1.msra.mxu0 0.0
    %3254 = vmatprep.subr.mxu0 0.0
    %3255 = vmatpush1.msra.mxu0 0.0
    %3256 = vmatprep.subr.mxu0 0.0
    %3257 = vmatpush1.msra.mxu0 0.0
    %3258 = vmatprep.subr.mxu0 0.0
    %3259 = vmatpush1.msra.mxu0 0.0
    %3260 = vmatprep.subr.mxu0 0.0
    %3261 = vmatpush1.msra.mxu0 0.0
    %3262 = vmatprep.subr.mxu0 0.0
    %3263 = vmatpush1.msra.mxu0 0.0
    %3264 = vmatprep.subr.mxu0 0.0
    %3265 = vmatpush1.msra.mxu0 0.0
    %3266 = vmatprep.subr.mxu0 0.0
    %3267 = vmatpush1.msra.mxu0 0.0
    %3268 = vmatprep.subr.mxu0 0.0
    %3269 = vmatpush1.msra.mxu0 0.0
    %3270 = vmatprep.subr.mxu0 0.0
    %3271 = vmatpush1.msra.mxu0 0.0
    %3272 = vmatprep.subr.mxu0 0.0
    %3273 = vmatpush1.msra.mxu0 0.0
    %3274 = vmatprep.subr.mxu0 0.0
    %3275 = vmatpush1.msra.mxu0 0.0
    %3276 = vmatprep.subr.mxu0 0.0
    %3277 = vmatpush1.msra.mxu0 0.0
    %3278 = vmatprep.mubr.f32.mxu0 0.0
    %3279 = vmatmul.mubr.f32.gmra.mrb[0].mxu0 %v3192
    %v3280 = vpop.f32.mrb[0].mxu0
    %v3281 = vadd.f32 %v3213, %v3280
    %v3282 = vpop.f32.mrb[0].mxu0
    %3283 = vmatprep.mubr.f32.mxu0 0.0
    %3284 = vmatmul.mubr.f32.gmra.mrb[0].mxu0 %v3193
    %v3285 = vpop.f32.mrb[0].mxu0
    %v3286 = vadd.f32 %v3213, %v3285
    %v3287 = vpop.f32.mrb[0].mxu0
    %3288 = vdwg.mxu0
    %v3289 = vadd.f32 %v3097, %v3281
    %v3290 = vadd.f32 %v3098, %v3286
    %v3291 = vsel %vm154, %v3289, 0.0
    %3292 = vadd.xlane.f32.xlu0 %v3291
    %v3293 = vpop.xlane.xlu0 %3292
    %v3294 = vsel %vm154, %v3290, 0.0
    %3295 = vadd.xlane.f32.xlu0 %v3294
    %v3296 = vpop.xlane.xlu0 %3295
    %v3297 = vmul.f32 %v3293, %v3066
    %v3298 = vmul.f32 %v3296, %v3066
    %v3299 = vsub.f32 %v3289, %v3297
    %v3300 = vsub.f32 %v3290, %v3298
    %v3301 = vmul.f32 %v3299, %v3299
    %v3302 = vmul.f32 %v3300, %v3300
    %v3303 = vsel %vm154, %v3301, 0.0
    %3304 = vadd.xlane.f32.xlu0 %v3303
    %v3305 = vpop.xlane.xlu0 %3304
    %v3306 = vsel %vm154, %v3302, 0.0
    %3307 = vadd.xlane.f32.xlu0 %v3306
    %v3308 = vpop.xlane.xlu0 %3307
    %v3309 = vmul.f32 %v3305, %v3066
    %v3310 = vmul.f32 %v3308, %v3066
    %v3311 = vadd.f32 %v3309, 1e-05
    %v3312 = vadd.f32 %v3310, 1e-05
    %v3313 = vrsqrt.pop %v3311
    %v3314 = vrsqrt.pop %v3312
    %v3315 = vmul.f32 %v3299, %v3313
    %v3316 = vmul.f32 %v3300, %v3314
    %v3317 = vlaneseq
    %v3318 = vshrl.u32 %v3317, 7
    %v3319 = vsub.s32 6, %v3318
    %v3320 = vrot.slane %v128, %v3319
    %v3321 = vmul.f32 %v3315, %v3320
    %v3322 = vmul.f32 %v3316, %v3320
    %v3323 = vlaneseq
    %v3324 = vshrl.u32 %v3323, 7
    %v3325 = vsub.s32 7, %v3324
    %v3326 = vrot.slane %v128, %v3325
    %v3327 = vadd.f32 %v3321, %v3326
    %v3328 = vadd.f32 %v3322, %v3326
    %s3329 = scalar_lea.vmem %s3, 16
    %v3330 = vld [vmem:[%s3329] sm:$0xff]
    %v3331 = vld [vmem:[%s3329 + $0x8] sm:$0xff]
    %s3332 = scalar_lea.vmem %s4, 128
    %v3333 = vld [vmem:[%s3332] sm:$0xff]
    %v3334 = vld [vmem:[%s3332 + $0x8] sm:$0xff]
    %v3335 = vld [vmem:[%s3332 + $0x10] sm:$0xff]
    %v3336 = vld [vmem:[%s3332 + $0x18] sm:$0xff]
    %v3337 = vld [vmem:[%s3332 + $0x20] sm:$0xff]
    %v3338 = vld [vmem:[%s3332 + $0x28] sm:$0xff]
    %v3339 = vld [vmem:[%s3332 + $0x30] sm:$0xff]
    %v3340 = vld [vmem:[%s3332 + $0x38] sm:$0xff]
    %v3341 = vld [vmem:[%s3332 + $0x40] sm:$0xff]
    %v3342 = vld [vmem:[%s3332 + $0x48] sm:$0xff]
    %v3343 = vld [vmem:[%s3332 + $0x50] sm:$0xff]
    %v3344 = vld [vmem:[%s3332 + $0x58] sm:$0xff]
    %v3345 = vld [vmem:[%s3332 + $0x60] sm:$0xff]
    %v3346 = vld [vmem:[%s3332 + $0x68] sm:$0xff]
    %v3347 = vld [vmem:[%s3332 + $0x70] sm:$0xff]
    %v3348 = vld [vmem:[%s3332 + $0x78] sm:$0xff]
    %v3349 = vlaneseq
    %v3350 = vshrl.u32 %v3349, 7
    %v3351 = vsub.s32 0, %v3350
    %v3352 = vrot.slane %v3330, %v3351
    %v3353 = vlaneseq
    %v3354 = vshrl.u32 %v3353, 7
    %v3355 = vsub.s32 0, %v3354
    %v3356 = vrot.slane %v3331, %v3355
    %v3358 = vsel %vm154, %v3327, 0
    %v3361 = vsel %vm154, %v3328, 0
    %3363 = vmatprep.subr.mxu0 %v3334
    %3364 = vmatpush1.msra.mxu0 %v3333
    %3365 = vmatprep.subr.mxu0 %v3336
    %3366 = vmatpush1.msra.mxu0 %v3335
    %3367 = vmatprep.subr.mxu0 %v3338
    %3368 = vmatpush1.msra.mxu0 %v3337
    %3369 = vmatprep.subr.mxu0 %v3340
    %3370 = vmatpush1.msra.mxu0 %v3339
    %3371 = vmatprep.subr.mxu0 %v3342
    %3372 = vmatpush1.msra.mxu0 %v3341
    %3373 = vmatprep.subr.mxu0 %v3344
    %3374 = vmatpush1.msra.mxu0 %v3343
    %3375 = vmatprep.subr.mxu0 %v3346
    %3376 = vmatpush1.msra.mxu0 %v3345
    %3377 = vmatprep.subr.mxu0 %v3348
    %3378 = vmatpush1.msra.mxu0 %v3347
    %3379 = vmatprep.subr.mxu0 0.0
    %3380 = vmatpush1.msra.mxu0 0.0
    %3381 = vmatprep.subr.mxu0 0.0
    %3382 = vmatpush1.msra.mxu0 0.0
    %3383 = vmatprep.subr.mxu0 0.0
    %3384 = vmatpush1.msra.mxu0 0.0
    %3385 = vmatprep.subr.mxu0 0.0
    %3386 = vmatpush1.msra.mxu0 0.0
    %3387 = vmatprep.subr.mxu0 0.0
    %3388 = vmatpush1.msra.mxu0 0.0
    %3389 = vmatprep.subr.mxu0 0.0
    %3390 = vmatpush1.msra.mxu0 0.0
    %3391 = vmatprep.subr.mxu0 0.0
    %3392 = vmatpush1.msra.mxu0 0.0
    %3393 = vmatprep.subr.mxu0 0.0
    %3394 = vmatpush1.msra.mxu0 0.0
    %3395 = vmatprep.subr.mxu0 0.0
    %3396 = vmatpush1.msra.mxu0 0.0
    %3397 = vmatprep.subr.mxu0 0.0
    %3398 = vmatpush1.msra.mxu0 0.0
    %3399 = vmatprep.subr.mxu0 0.0
    %3400 = vmatpush1.msra.mxu0 0.0
    %3401 = vmatprep.subr.mxu0 0.0
    %3402 = vmatpush1.msra.mxu0 0.0
    %3403 = vmatprep.subr.mxu0 0.0
    %3404 = vmatpush1.msra.mxu0 0.0
    %3405 = vmatprep.subr.mxu0 0.0
    %3406 = vmatpush1.msra.mxu0 0.0
    %3407 = vmatprep.subr.mxu0 0.0
    %3408 = vmatpush1.msra.mxu0 0.0
    %3409 = vmatprep.subr.mxu0 0.0
    %3410 = vmatpush1.msra.mxu0 0.0
    %3411 = vmatprep.subr.mxu0 0.0
    %3412 = vmatpush1.msra.mxu0 0.0
    %3413 = vmatprep.subr.mxu0 0.0
    %3414 = vmatpush1.msra.mxu0 0.0
    %3415 = vmatprep.subr.mxu0 0.0
    %3416 = vmatpush1.msra.mxu0 0.0
    %3417 = vmatprep.subr.mxu0 0.0
    %3418 = vmatpush1.msra.mxu0 0.0
    %3419 = vmatprep.subr.mxu0 0.0
    %3420 = vmatpush1.msra.mxu0 0.0
    %3421 = vmatprep.subr.mxu0 0.0
    %3422 = vmatpush1.msra.mxu0 0.0
    %3423 = vmatprep.subr.mxu0 0.0
    %3424 = vmatpush1.msra.mxu0 0.0
    %3425 = vmatprep.subr.mxu0 0.0
    %3426 = vmatpush1.msra.mxu0 0.0
    %3427 = vmatprep.mubr.f32.mxu0 0.0
    %3428 = vmatmul.mubr.f32.gmra.mrb[0].mxu0 %v3358
    %v3429 = vpop.f32.mrb[0].mxu0
    %v3430 = vadd.f32 %v3352, %v3429
    %v3431 = vpop.f32.mrb[0].mxu0
    %v3432 = vadd.f32 %v3356, %v3431
    %3433 = vmatprep.mubr.f32.mxu0 0.0
    %3434 = vmatmul.mubr.f32.gmra.mrb[0].mxu0 %v3361
    %v3435 = vpop.f32.mrb[0].mxu0
    %v3436 = vadd.f32 %v3352, %v3435
    %v3437 = vpop.f32.mrb[0].mxu0
    %v3438 = vadd.f32 %v3356, %v3437
    %3439 = vdwg.mxu0
    %3441 = vrot.lane.b32.xlu0 %v3430, 64
    %v3442 = vpop.permute.xlu0 %3441
    %v3443 = vsel %vm241, %v3430, 0
    %v3445 = vsel %vm241, %v3442, 0
    %3447 = vmatprep.subr.mxu0 0.0
    %3448 = vmatpush1.xpose.msra.mxu0 %v3445
    %3449 = vmatprep.subr.mxu0 0.0
    %3450 = vmatpush1.xpose.msra.mxu0 0.0
    %3451 = vmatprep.subr.mxu0 0.0
    %3452 = vmatpush1.xpose.msra.mxu0 0.0
    %3453 = vmatprep.subr.mxu0 0.0
    %3454 = vmatpush1.xpose.msra.mxu0 0.0
    %3455 = vmatprep.subr.mxu0 0.0
    %3456 = vmatpush1.xpose.msra.mxu0 0.0
    %3457 = vmatprep.subr.mxu0 0.0
    %3458 = vmatpush1.xpose.msra.mxu0 0.0
    %3459 = vmatprep.subr.mxu0 0.0
    %3460 = vmatpush1.xpose.msra.mxu0 0.0
    %3461 = vmatprep.subr.mxu0 0.0
    %3462 = vmatpush1.xpose.msra.mxu0 0.0
    %3463 = vmatprep.subr.mxu0 0.0
    %3464 = vmatpush1.xpose.msra.mxu0 0.0
    %3465 = vmatprep.subr.mxu0 0.0
    %3466 = vmatpush1.xpose.msra.mxu0 0.0
    %3467 = vmatprep.subr.mxu0 0.0
    %3468 = vmatpush1.xpose.msra.mxu0 0.0
    %3469 = vmatprep.subr.mxu0 0.0
    %3470 = vmatpush1.xpose.msra.mxu0 0.0
    %3471 = vmatprep.subr.mxu0 0.0
    %3472 = vmatpush1.xpose.msra.mxu0 0.0
    %3473 = vmatprep.subr.mxu0 0.0
    %3474 = vmatpush1.xpose.msra.mxu0 0.0
    %3475 = vmatprep.subr.mxu0 0.0
    %3476 = vmatpush1.xpose.msra.mxu0 0.0
    %3477 = vmatprep.subr.mxu0 0.0
    %3478 = vmatpush1.xpose.msra.mxu0 0.0
    %3479 = vmatprep.subr.mxu0 0.0
    %3480 = vmatpush1.xpose.msra.mxu0 0.0
    %3481 = vmatprep.subr.mxu0 0.0
    %3482 = vmatpush1.xpose.msra.mxu0 0.0
    %3483 = vmatprep.subr.mxu0 0.0
    %3484 = vmatpush1.xpose.msra.mxu0 0.0
    %3485 = vmatprep.subr.mxu0 0.0
    %3486 = vmatpush1.xpose.msra.mxu0 0.0
    %3487 = vmatprep.subr.mxu0 0.0
    %3488 = vmatpush1.xpose.msra.mxu0 0.0
    %3489 = vmatprep.subr.mxu0 0.0
    %3490 = vmatpush1.xpose.msra.mxu0 0.0
    %3491 = vmatprep.subr.mxu0 0.0
    %3492 = vmatpush1.xpose.msra.mxu0 0.0
    %3493 = vmatprep.subr.mxu0 0.0
    %3494 = vmatpush1.xpose.msra.mxu0 0.0
    %3495 = vmatprep.subr.mxu0 0.0
    %3496 = vmatpush1.xpose.msra.mxu0 0.0
    %3497 = vmatprep.subr.mxu0 0.0
    %3498 = vmatpush1.xpose.msra.mxu0 0.0
    %3499 = vmatprep.subr.mxu0 0.0
    %3500 = vmatpush1.xpose.msra.mxu0 0.0
    %3501 = vmatprep.subr.mxu0 0.0
    %3502 = vmatpush1.xpose.msra.mxu0 0.0
    %3503 = vmatprep.subr.mxu0 0.0
    %3504 = vmatpush1.xpose.msra.mxu0 0.0
    %3505 = vmatprep.subr.mxu0 0.0
    %3506 = vmatpush1.xpose.msra.mxu0 0.0
    %3507 = vmatprep.subr.mxu0 0.0
    %3508 = vmatpush1.xpose.msra.mxu0 0.0
    %3509 = vmatprep.subr.mxu0 0.0
    %3510 = vmatpush1.xpose.msra.mxu0 0.0
    %3511 = vmatprep.mubr.f32.mxu0 0.0
    %3512 = vmatmul.mubr.f32.gmra.mrb[0].mxu0 %v3443
    %v3513 = vpop.f32.mrb[0].mxu0
    %v3514 = vadd.f32 0.0, %v3513
    %v3515 = vpop.f32.mrb[0].mxu0
    %3516 = vdwg.mxu0
    %3518 = vrot.lane.b32.xlu0 %v3436, 64
    %v3519 = vpop.permute.xlu0 %3518
    %v3520 = vsel %vm241, %v3436, 0
    %v3522 = vsel %vm241, %v3519, 0
    %3524 = vmatprep.subr.mxu0 0.0
    %3525 = vmatpush1.xpose.msra.mxu0 %v3522
    %3526 = vmatprep.subr.mxu0 0.0
    %3527 = vmatpush1.xpose.msra.mxu0 0.0
    %3528 = vmatprep.subr.mxu0 0.0
    %3529 = vmatpush1.xpose.msra.mxu0 0.0
    %3530 = vmatprep.subr.mxu0 0.0
    %3531 = vmatpush1.xpose.msra.mxu0 0.0
    %3532 = vmatprep.subr.mxu0 0.0
    %3533 = vmatpush1.xpose.msra.mxu0 0.0
    %3534 = vmatprep.subr.mxu0 0.0
    %3535 = vmatpush1.xpose.msra.mxu0 0.0
    %3536 = vmatprep.subr.mxu0 0.0
    %3537 = vmatpush1.xpose.msra.mxu0 0.0
    %3538 = vmatprep.subr.mxu0 0.0
    %3539 = vmatpush1.xpose.msra.mxu0 0.0
    %3540 = vmatprep.subr.mxu0 0.0
    %3541 = vmatpush1.xpose.msra.mxu0 0.0
    %3542 = vmatprep.subr.mxu0 0.0
    %3543 = vmatpush1.xpose.msra.mxu0 0.0
    %3544 = vmatprep.subr.mxu0 0.0
    %3545 = vmatpush1.xpose.msra.mxu0 0.0
    %3546 = vmatprep.subr.mxu0 0.0
    %3547 = vmatpush1.xpose.msra.mxu0 0.0
    %3548 = vmatprep.subr.mxu0 0.0
    %3549 = vmatpush1.xpose.msra.mxu0 0.0
    %3550 = vmatprep.subr.mxu0 0.0
    %3551 = vmatpush1.xpose.msra.mxu0 0.0
    %3552 = vmatprep.subr.mxu0 0.0
    %3553 = vmatpush1.xpose.msra.mxu0 0.0
    %3554 = vmatprep.subr.mxu0 0.0
    %3555 = vmatpush1.xpose.msra.mxu0 0.0
    %3556 = vmatprep.subr.mxu0 0.0
    %3557 = vmatpush1.xpose.msra.mxu0 0.0
    %3558 = vmatprep.subr.mxu0 0.0
    %3559 = vmatpush1.xpose.msra.mxu0 0.0
    %3560 = vmatprep.subr.mxu0 0.0
    %3561 = vmatpush1.xpose.msra.mxu0 0.0
    %3562 = vmatprep.subr.mxu0 0.0
    %3563 = vmatpush1.xpose.msra.mxu0 0.0
    %3564 = vmatprep.subr.mxu0 0.0
    %3565 = vmatpush1.xpose.msra.mxu0 0.0
    %3566 = vmatprep.subr.mxu0 0.0
    %3567 = vmatpush1.xpose.msra.mxu0 0.0
    %3568 = vmatprep.subr.mxu0 0.0
    %3569 = vmatpush1.xpose.msra.mxu0 0.0
    %3570 = vmatprep.subr.mxu0 0.0
    %3571 = vmatpush1.xpose.msra.mxu0 0.0
    %3572 = vmatprep.subr.mxu0 0.0
    %3573 = vmatpush1.xpose.msra.mxu0 0.0
    %3574 = vmatprep.subr.mxu0 0.0
    %3575 = vmatpush1.xpose.msra.mxu0 0.0
    %3576 = vmatprep.subr.mxu0 0.0
    %3577 = vmatpush1.xpose.msra.mxu0 0.0
    %3578 = vmatprep.subr.mxu0 0.0
    %3579 = vmatpush1.xpose.msra.mxu0 0.0
    %3580 = vmatprep.subr.mxu0 0.0
    %3581 = vmatpush1.xpose.msra.mxu0 0.0
    %3582 = vmatprep.subr.mxu0 0.0
    %3583 = vmatpush1.xpose.msra.mxu0 0.0
    %3584 = vmatprep.subr.mxu0 0.0
    %3585 = vmatpush1.xpose.msra.mxu0 0.0
    %3586 = vmatprep.subr.mxu0 0.0
    %3587 = vmatpush1.xpose.msra.mxu0 0.0
    %3588 = vmatprep.mubr.f32.mxu0 0.0
    %3589 = vmatmul.mubr.f32.gmra.mrb[0].mxu0 %v3520
    %v3590 = vpop.f32.mrb[0].mxu0
    %v3591 = vadd.f32 0.0, %v3590
    %v3592 = vpop.f32.mrb[0].mxu0
    %3593 = vdwg.mxu0
    %3594 = vrot.lane.b32.xlu0 %v3430, 120
    %v3595 = vpop.permute.xlu0 %3594
    %3596 = vrot.lane.b32.xlu0 %v3430, 56
    %v3597 = vpop.permute.xlu0 %3596
    %v3598 = vsel %vm241, %v3595, 0
    %v3600 = vsel %vm241, %v3597, 0
    %3602 = vmatprep.subr.mxu0 0.0
    %3603 = vmatpush1.xpose.msra.mxu0 %v3600
    %3604 = vmatprep.subr.mxu0 0.0
    %3605 = vmatpush1.xpose.msra.mxu0 0.0
    %3606 = vmatprep.subr.mxu0 0.0
    %3607 = vmatpush1.xpose.msra.mxu0 0.0
    %3608 = vmatprep.subr.mxu0 0.0
    %3609 = vmatpush1.xpose.msra.mxu0 0.0
    %3610 = vmatprep.subr.mxu0 0.0
    %3611 = vmatpush1.xpose.msra.mxu0 0.0
    %3612 = vmatprep.subr.mxu0 0.0
    %3613 = vmatpush1.xpose.msra.mxu0 0.0
    %3614 = vmatprep.subr.mxu0 0.0
    %3615 = vmatpush1.xpose.msra.mxu0 0.0
    %3616 = vmatprep.subr.mxu0 0.0
    %3617 = vmatpush1.xpose.msra.mxu0 0.0
    %3618 = vmatprep.subr.mxu0 0.0
    %3619 = vmatpush1.xpose.msra.mxu0 0.0
    %3620 = vmatprep.subr.mxu0 0.0
    %3621 = vmatpush1.xpose.msra.mxu0 0.0
    %3622 = vmatprep.subr.mxu0 0.0
    %3623 = vmatpush1.xpose.msra.mxu0 0.0
    %3624 = vmatprep.subr.mxu0 0.0
    %3625 = vmatpush1.xpose.msra.mxu0 0.0
    %3626 = vmatprep.subr.mxu0 0.0
    %3627 = vmatpush1.xpose.msra.mxu0 0.0
    %3628 = vmatprep.subr.mxu0 0.0
    %3629 = vmatpush1.xpose.msra.mxu0 0.0
    %3630 = vmatprep.subr.mxu0 0.0
    %3631 = vmatpush1.xpose.msra.mxu0 0.0
    %3632 = vmatprep.subr.mxu0 0.0
    %3633 = vmatpush1.xpose.msra.mxu0 0.0
    %3634 = vmatprep.subr.mxu0 0.0
    %3635 = vmatpush1.xpose.msra.mxu0 0.0
    %3636 = vmatprep.subr.mxu0 0.0
    %3637 = vmatpush1.xpose.msra.mxu0 0.0
    %3638 = vmatprep.subr.mxu0 0.0
    %3639 = vmatpush1.xpose.msra.mxu0 0.0
    %3640 = vmatprep.subr.mxu0 0.0
    %3641 = vmatpush1.xpose.msra.mxu0 0.0
    %3642 = vmatprep.subr.mxu0 0.0
    %3643 = vmatpush1.xpose.msra.mxu0 0.0
    %3644 = vmatprep.subr.mxu0 0.0
    %3645 = vmatpush1.xpose.msra.mxu0 0.0
    %3646 = vmatprep.subr.mxu0 0.0
    %3647 = vmatpush1.xpose.msra.mxu0 0.0
    %3648 = vmatprep.subr.mxu0 0.0
    %3649 = vmatpush1.xpose.msra.mxu0 0.0
    %3650 = vmatprep.subr.mxu0 0.0
    %3651 = vmatpush1.xpose.msra.mxu0 0.0
    %3652 = vmatprep.subr.mxu0 0.0
    %3653 = vmatpush1.xpose.msra.mxu0 0.0
    %3654 = vmatprep.subr.mxu0 0.0
    %3655 = vmatpush1.xpose.msra.mxu0 0.0
    %3656 = vmatprep.subr.mxu0 0.0
    %3657 = vmatpush1.xpose.msra.mxu0 0.0
    %3658 = vmatprep.subr.mxu0 0.0
    %3659 = vmatpush1.xpose.msra.mxu0 0.0
    %3660 = vmatprep.subr.mxu0 0.0
    %3661 = vmatpush1.xpose.msra.mxu0 0.0
    %3662 = vmatprep.subr.mxu0 0.0
    %3663 = vmatpush1.xpose.msra.mxu0 0.0
    %3664 = vmatprep.subr.mxu0 0.0
    %3665 = vmatpush1.xpose.msra.mxu0 0.0
    %3666 = vmatprep.mubr.f32.mxu0 0.0
    %3667 = vmatmul.mubr.f32.gmra.mrb[0].mxu0 %v3598
    %v3668 = vpop.f32.mrb[0].mxu0
    %v3669 = vadd.f32 0.0, %v3668
    %v3670 = vpop.f32.mrb[0].mxu0
    %3671 = vdwg.mxu0
    %3672 = vrot.lane.b32.xlu0 %v3436, 120
    %v3673 = vpop.permute.xlu0 %3672
    %3674 = vrot.lane.b32.xlu0 %v3436, 56
    %v3675 = vpop.permute.xlu0 %3674
    %v3676 = vsel %vm241, %v3673, 0
    %v3678 = vsel %vm241, %v3675, 0
    %3680 = vmatprep.subr.mxu0 0.0
    %3681 = vmatpush1.xpose.msra.mxu0 %v3678
    %3682 = vmatprep.subr.mxu0 0.0
    %3683 = vmatpush1.xpose.msra.mxu0 0.0
    %3684 = vmatprep.subr.mxu0 0.0
    %3685 = vmatpush1.xpose.msra.mxu0 0.0
    %3686 = vmatprep.subr.mxu0 0.0
    %3687 = vmatpush1.xpose.msra.mxu0 0.0
    %3688 = vmatprep.subr.mxu0 0.0
    %3689 = vmatpush1.xpose.msra.mxu0 0.0
    %3690 = vmatprep.subr.mxu0 0.0
    %3691 = vmatpush1.xpose.msra.mxu0 0.0
    %3692 = vmatprep.subr.mxu0 0.0
    %3693 = vmatpush1.xpose.msra.mxu0 0.0
    %3694 = vmatprep.subr.mxu0 0.0
    %3695 = vmatpush1.xpose.msra.mxu0 0.0
    %3696 = vmatprep.subr.mxu0 0.0
    %3697 = vmatpush1.xpose.msra.mxu0 0.0
    %3698 = vmatprep.subr.mxu0 0.0
    %3699 = vmatpush1.xpose.msra.mxu0 0.0
    %3700 = vmatprep.subr.mxu0 0.0
    %3701 = vmatpush1.xpose.msra.mxu0 0.0
    %3702 = vmatprep.subr.mxu0 0.0
    %3703 = vmatpush1.xpose.msra.mxu0 0.0
    %3704 = vmatprep.subr.mxu0 0.0
    %3705 = vmatpush1.xpose.msra.mxu0 0.0
    %3706 = vmatprep.subr.mxu0 0.0
    %3707 = vmatpush1.xpose.msra.mxu0 0.0
    %3708 = vmatprep.subr.mxu0 0.0
    %3709 = vmatpush1.xpose.msra.mxu0 0.0
    %3710 = vmatprep.subr.mxu0 0.0
    %3711 = vmatpush1.xpose.msra.mxu0 0.0
    %3712 = vmatprep.subr.mxu0 0.0
    %3713 = vmatpush1.xpose.msra.mxu0 0.0
    %3714 = vmatprep.subr.mxu0 0.0
    %3715 = vmatpush1.xpose.msra.mxu0 0.0
    %3716 = vmatprep.subr.mxu0 0.0
    %3717 = vmatpush1.xpose.msra.mxu0 0.0
    %3718 = vmatprep.subr.mxu0 0.0
    %3719 = vmatpush1.xpose.msra.mxu0 0.0
    %3720 = vmatprep.subr.mxu0 0.0
    %3721 = vmatpush1.xpose.msra.mxu0 0.0
    %3722 = vmatprep.subr.mxu0 0.0
    %3723 = vmatpush1.xpose.msra.mxu0 0.0
    %3724 = vmatprep.subr.mxu0 0.0
    %3725 = vmatpush1.xpose.msra.mxu0 0.0
    %3726 = vmatprep.subr.mxu0 0.0
    %3727 = vmatpush1.xpose.msra.mxu0 0.0
    %3728 = vmatprep.subr.mxu0 0.0
    %3729 = vmatpush1.xpose.msra.mxu0 0.0
    %3730 = vmatprep.subr.mxu0 0.0
    %3731 = vmatpush1.xpose.msra.mxu0 0.0
    %3732 = vmatprep.subr.mxu0 0.0
    %3733 = vmatpush1.xpose.msra.mxu0 0.0
    %3734 = vmatprep.subr.mxu0 0.0
    %3735 = vmatpush1.xpose.msra.mxu0 0.0
    %3736 = vmatprep.subr.mxu0 0.0
    %3737 = vmatpush1.xpose.msra.mxu0 0.0
    %3738 = vmatprep.subr.mxu0 0.0
    %3739 = vmatpush1.xpose.msra.mxu0 0.0
    %3740 = vmatprep.subr.mxu0 0.0
    %3741 = vmatpush1.xpose.msra.mxu0 0.0
    %3742 = vmatprep.subr.mxu0 0.0
    %3743 = vmatpush1.xpose.msra.mxu0 0.0
    %3744 = vmatprep.mubr.f32.mxu0 0.0
    %3745 = vmatmul.mubr.f32.gmra.mrb[0].mxu0 %v3676
    %v3746 = vpop.f32.mrb[0].mxu0
    %v3747 = vadd.f32 0.0, %v3746
    %v3748 = vpop.f32.mrb[0].mxu0
    %3749 = vdwg.mxu0
    %3750 = vrot.lane.b32.xlu0 %v3430, 112
    %v3751 = vpop.permute.xlu0 %3750
    %3752 = vrot.lane.b32.xlu0 %v3430, 48
    %v3753 = vpop.permute.xlu0 %3752
    %v3754 = vsel %vm241, %v3751, 0
    %v3756 = vsel %vm241, %v3753, 0
    %3758 = vmatprep.subr.mxu0 0.0
    %3759 = vmatpush1.xpose.msra.mxu0 %v3756
    %3760 = vmatprep.subr.mxu0 0.0
    %3761 = vmatpush1.xpose.msra.mxu0 0.0
    %3762 = vmatprep.subr.mxu0 0.0
    %3763 = vmatpush1.xpose.msra.mxu0 0.0
    %3764 = vmatprep.subr.mxu0 0.0
    %3765 = vmatpush1.xpose.msra.mxu0 0.0
    %3766 = vmatprep.subr.mxu0 0.0
    %3767 = vmatpush1.xpose.msra.mxu0 0.0
    %3768 = vmatprep.subr.mxu0 0.0
    %3769 = vmatpush1.xpose.msra.mxu0 0.0
    %3770 = vmatprep.subr.mxu0 0.0
    %3771 = vmatpush1.xpose.msra.mxu0 0.0
    %3772 = vmatprep.subr.mxu0 0.0
    %3773 = vmatpush1.xpose.msra.mxu0 0.0
    %3774 = vmatprep.subr.mxu0 0.0
    %3775 = vmatpush1.xpose.msra.mxu0 0.0
    %3776 = vmatprep.subr.mxu0 0.0
    %3777 = vmatpush1.xpose.msra.mxu0 0.0
    %3778 = vmatprep.subr.mxu0 0.0
    %3779 = vmatpush1.xpose.msra.mxu0 0.0
    %3780 = vmatprep.subr.mxu0 0.0
    %3781 = vmatpush1.xpose.msra.mxu0 0.0
    %3782 = vmatprep.subr.mxu0 0.0
    %3783 = vmatpush1.xpose.msra.mxu0 0.0
    %3784 = vmatprep.subr.mxu0 0.0
    %3785 = vmatpush1.xpose.msra.mxu0 0.0
    %3786 = vmatprep.subr.mxu0 0.0
    %3787 = vmatpush1.xpose.msra.mxu0 0.0
    %3788 = vmatprep.subr.mxu0 0.0
    %3789 = vmatpush1.xpose.msra.mxu0 0.0
    %3790 = vmatprep.subr.mxu0 0.0
    %3791 = vmatpush1.xpose.msra.mxu0 0.0
    %3792 = vmatprep.subr.mxu0 0.0
    %3793 = vmatpush1.xpose.msra.mxu0 0.0
    %3794 = vmatprep.subr.mxu0 0.0
    %3795 = vmatpush1.xpose.msra.mxu0 0.0
    %3796 = vmatprep.subr.mxu0 0.0
    %3797 = vmatpush1.xpose.msra.mxu0 0.0
    %3798 = vmatprep.subr.mxu0 0.0
    %3799 = vmatpush1.xpose.msra.mxu0 0.0
    %3800 = vmatprep.subr.mxu0 0.0
    %3801 = vmatpush1.xpose.msra.mxu0 0.0
    %3802 = vmatprep.subr.mxu0 0.0
    %3803 = vmatpush1.xpose.msra.mxu0 0.0
    %3804 = vmatprep.subr.mxu0 0.0
    %3805 = vmatpush1.xpose.msra.mxu0 0.0
    %3806 = vmatprep.subr.mxu0 0.0
    %3807 = vmatpush1.xpose.msra.mxu0 0.0
    %3808 = vmatprep.subr.mxu0 0.0
    %3809 = vmatpush1.xpose.msra.mxu0 0.0
    %3810 = vmatprep.subr.mxu0 0.0
    %3811 = vmatpush1.xpose.msra.mxu0 0.0
    %3812 = vmatprep.subr.mxu0 0.0
    %3813 = vmatpush1.xpose.msra.mxu0 0.0
    %3814 = vmatprep.subr.mxu0 0.0
    %3815 = vmatpush1.xpose.msra.mxu0 0.0
    %3816 = vmatprep.subr.mxu0 0.0
    %3817 = vmatpush1.xpose.msra.mxu0 0.0
    %3818 = vmatprep.subr.mxu0 0.0
    %3819 = vmatpush1.xpose.msra.mxu0 0.0
    %3820 = vmatprep.subr.mxu0 0.0
    %3821 = vmatpush1.xpose.msra.mxu0 0.0
    %3822 = vmatprep.mubr.f32.mxu0 0.0
    %3823 = vmatmul.mubr.f32.gmra.mrb[0].mxu0 %v3754
    %v3824 = vpop.f32.mrb[0].mxu0
    %v3825 = vadd.f32 0.0, %v3824
    %v3826 = vpop.f32.mrb[0].mxu0
    %3827 = vdwg.mxu0
    %3828 = vrot.lane.b32.xlu0 %v3436, 112
    %v3829 = vpop.permute.xlu0 %3828
    %3830 = vrot.lane.b32.xlu0 %v3436, 48
    %v3831 = vpop.permute.xlu0 %3830
    %v3832 = vsel %vm241, %v3829, 0
    %v3834 = vsel %vm241, %v3831, 0
    %3836 = vmatprep.subr.mxu0 0.0
    %3837 = vmatpush1.xpose.msra.mxu0 %v3834
    %3838 = vmatprep.subr.mxu0 0.0
    %3839 = vmatpush1.xpose.msra.mxu0 0.0
    %3840 = vmatprep.subr.mxu0 0.0
    %3841 = vmatpush1.xpose.msra.mxu0 0.0
    %3842 = vmatprep.subr.mxu0 0.0
    %3843 = vmatpush1.xpose.msra.mxu0 0.0
    %3844 = vmatprep.subr.mxu0 0.0
    %3845 = vmatpush1.xpose.msra.mxu0 0.0
    %3846 = vmatprep.subr.mxu0 0.0
    %3847 = vmatpush1.xpose.msra.mxu0 0.0
    %3848 = vmatprep.subr.mxu0 0.0
    %3849 = vmatpush1.xpose.msra.mxu0 0.0
    %3850 = vmatprep.subr.mxu0 0.0
    %3851 = vmatpush1.xpose.msra.mxu0 0.0
    %3852 = vmatprep.subr.mxu0 0.0
    %3853 = vmatpush1.xpose.msra.mxu0 0.0
    %3854 = vmatprep.subr.mxu0 0.0
    %3855 = vmatpush1.xpose.msra.mxu0 0.0
    %3856 = vmatprep.subr.mxu0 0.0
    %3857 = vmatpush1.xpose.msra.mxu0 0.0
    %3858 = vmatprep.subr.mxu0 0.0
    %3859 = vmatpush1.xpose.msra.mxu0 0.0
    %3860 = vmatprep.subr.mxu0 0.0
    %3861 = vmatpush1.xpose.msra.mxu0 0.0
    %3862 = vmatprep.subr.mxu0 0.0
    %3863 = vmatpush1.xpose.msra.mxu0 0.0
    %3864 = vmatprep.subr.mxu0 0.0
    %3865 = vmatpush1.xpose.msra.mxu0 0.0
    %3866 = vmatprep.subr.mxu0 0.0
    %3867 = vmatpush1.xpose.msra.mxu0 0.0
    %3868 = vmatprep.subr.mxu0 0.0
    %3869 = vmatpush1.xpose.msra.mxu0 0.0
    %3870 = vmatprep.subr.mxu0 0.0
    %3871 = vmatpush1.xpose.msra.mxu0 0.0
    %3872 = vmatprep.subr.mxu0 0.0
    %3873 = vmatpush1.xpose.msra.mxu0 0.0
    %3874 = vmatprep.subr.mxu0 0.0
    %3875 = vmatpush1.xpose.msra.mxu0 0.0
    %3876 = vmatprep.subr.mxu0 0.0
    %3877 = vmatpush1.xpose.msra.mxu0 0.0
    %3878 = vmatprep.subr.mxu0 0.0
    %3879 = vmatpush1.xpose.msra.mxu0 0.0
    %3880 = vmatprep.subr.mxu0 0.0
    %3881 = vmatpush1.xpose.msra.mxu0 0.0
    %3882 = vmatprep.subr.mxu0 0.0
    %3883 = vmatpush1.xpose.msra.mxu0 0.0
    %3884 = vmatprep.subr.mxu0 0.0
    %3885 = vmatpush1.xpose.msra.mxu0 0.0
    %3886 = vmatprep.subr.mxu0 0.0
    %3887 = vmatpush1.xpose.msra.mxu0 0.0
    %3888 = vmatprep.subr.mxu0 0.0
    %3889 = vmatpush1.xpose.msra.mxu0 0.0
    %3890 = vmatprep.subr.mxu0 0.0
    %3891 = vmatpush1.xpose.msra.mxu0 0.0
    %3892 = vmatprep.subr.mxu0 0.0
    %3893 = vmatpush1.xpose.msra.mxu0 0.0
    %3894 = vmatprep.subr.mxu0 0.0
    %3895 = vmatpush1.xpose.msra.mxu0 0.0
    %3896 = vmatprep.subr.mxu0 0.0
    %3897 = vmatpush1.xpose.msra.mxu0 0.0
    %3898 = vmatprep.subr.mxu0 0.0
    %3899 = vmatpush1.xpose.msra.mxu0 0.0
    %3900 = vmatprep.mubr.f32.mxu0 0.0
    %3901 = vmatmul.mubr.f32.gmra.mrb[0].mxu0 %v3832
    %v3902 = vpop.f32.mrb[0].mxu0
    %v3903 = vadd.f32 0.0, %v3902
    %v3904 = vpop.f32.mrb[0].mxu0
    %3905 = vdwg.mxu0
    %3906 = vrot.lane.b32.xlu0 %v3430, 104
    %v3907 = vpop.permute.xlu0 %3906
    %3908 = vrot.lane.b32.xlu0 %v3430, 40
    %v3909 = vpop.permute.xlu0 %3908
    %v3910 = vsel %vm241, %v3907, 0
    %v3912 = vsel %vm241, %v3909, 0
    %3914 = vmatprep.subr.mxu0 0.0
    %3915 = vmatpush1.xpose.msra.mxu0 %v3912
    %3916 = vmatprep.subr.mxu0 0.0
    %3917 = vmatpush1.xpose.msra.mxu0 0.0
    %3918 = vmatprep.subr.mxu0 0.0
    %3919 = vmatpush1.xpose.msra.mxu0 0.0
    %3920 = vmatprep.subr.mxu0 0.0
    %3921 = vmatpush1.xpose.msra.mxu0 0.0
    %3922 = vmatprep.subr.mxu0 0.0
    %3923 = vmatpush1.xpose.msra.mxu0 0.0
    %3924 = vmatprep.subr.mxu0 0.0
    %3925 = vmatpush1.xpose.msra.mxu0 0.0
    %3926 = vmatprep.subr.mxu0 0.0
    %3927 = vmatpush1.xpose.msra.mxu0 0.0
    %3928 = vmatprep.subr.mxu0 0.0
    %3929 = vmatpush1.xpose.msra.mxu0 0.0
    %3930 = vmatprep.subr.mxu0 0.0
    %3931 = vmatpush1.xpose.msra.mxu0 0.0
    %3932 = vmatprep.subr.mxu0 0.0
    %3933 = vmatpush1.xpose.msra.mxu0 0.0
    %3934 = vmatprep.subr.mxu0 0.0
    %3935 = vmatpush1.xpose.msra.mxu0 0.0
    %3936 = vmatprep.subr.mxu0 0.0
    %3937 = vmatpush1.xpose.msra.mxu0 0.0
    %3938 = vmatprep.subr.mxu0 0.0
    %3939 = vmatpush1.xpose.msra.mxu0 0.0
    %3940 = vmatprep.subr.mxu0 0.0
    %3941 = vmatpush1.xpose.msra.mxu0 0.0
    %3942 = vmatprep.subr.mxu0 0.0
    %3943 = vmatpush1.xpose.msra.mxu0 0.0
    %3944 = vmatprep.subr.mxu0 0.0
    %3945 = vmatpush1.xpose.msra.mxu0 0.0
    %3946 = vmatprep.subr.mxu0 0.0
    %3947 = vmatpush1.xpose.msra.mxu0 0.0
    %3948 = vmatprep.subr.mxu0 0.0
    %3949 = vmatpush1.xpose.msra.mxu0 0.0
    %3950 = vmatprep.subr.mxu0 0.0
    %3951 = vmatpush1.xpose.msra.mxu0 0.0
    %3952 = vmatprep.subr.mxu0 0.0
    %3953 = vmatpush1.xpose.msra.mxu0 0.0
    %3954 = vmatprep.subr.mxu0 0.0
    %3955 = vmatpush1.xpose.msra.mxu0 0.0
    %3956 = vmatprep.subr.mxu0 0.0
    %3957 = vmatpush1.xpose.msra.mxu0 0.0
    %3958 = vmatprep.subr.mxu0 0.0
    %3959 = vmatpush1.xpose.msra.mxu0 0.0
    %3960 = vmatprep.subr.mxu0 0.0
    %3961 = vmatpush1.xpose.msra.mxu0 0.0
    %3962 = vmatprep.subr.mxu0 0.0
    %3963 = vmatpush1.xpose.msra.mxu0 0.0
    %3964 = vmatprep.subr.mxu0 0.0
    %3965 = vmatpush1.xpose.msra.mxu0 0.0
    %3966 = vmatprep.subr.mxu0 0.0
    %3967 = vmatpush1.xpose.msra.mxu0 0.0
    %3968 = vmatprep.subr.mxu0 0.0
    %3969 = vmatpush1.xpose.msra.mxu0 0.0
    %3970 = vmatprep.subr.mxu0 0.0
    %3971 = vmatpush1.xpose.msra.mxu0 0.0
    %3972 = vmatprep.subr.mxu0 0.0
    %3973 = vmatpush1.xpose.msra.mxu0 0.0
    %3974 = vmatprep.subr.mxu0 0.0
    %3975 = vmatpush1.xpose.msra.mxu0 0.0
    %3976 = vmatprep.subr.mxu0 0.0
    %3977 = vmatpush1.xpose.msra.mxu0 0.0
    %3978 = vmatprep.mubr.f32.mxu0 0.0
    %3979 = vmatmul.mubr.f32.gmra.mrb[0].mxu0 %v3910
    %v3980 = vpop.f32.mrb[0].mxu0
    %v3981 = vadd.f32 0.0, %v3980
    %v3982 = vpop.f32.mrb[0].mxu0
    %3983 = vdwg.mxu0
    %3984 = vrot.lane.b32.xlu0 %v3436, 104
    %v3985 = vpop.permute.xlu0 %3984
    %3986 = vrot.lane.b32.xlu0 %v3436, 40
    %v3987 = vpop.permute.xlu0 %3986
    %v3988 = vsel %vm241, %v3985, 0
    %v3990 = vsel %vm241, %v3987, 0
    %3992 = vmatprep.subr.mxu0 0.0
    %3993 = vmatpush1.xpose.msra.mxu0 %v3990
    %3994 = vmatprep.subr.mxu0 0.0
    %3995 = vmatpush1.xpose.msra.mxu0 0.0
    %3996 = vmatprep.subr.mxu0 0.0
    %3997 = vmatpush1.xpose.msra.mxu0 0.0
    %3998 = vmatprep.subr.mxu0 0.0
    %3999 = vmatpush1.xpose.msra.mxu0 0.0
    %4000 = vmatprep.subr.mxu0 0.0
    %4001 = vmatpush1.xpose.msra.mxu0 0.0
    %4002 = vmatprep.subr.mxu0 0.0
    %4003 = vmatpush1.xpose.msra.mxu0 0.0
    %4004 = vmatprep.subr.mxu0 0.0
    %4005 = vmatpush1.xpose.msra.mxu0 0.0
    %4006 = vmatprep.subr.mxu0 0.0
    %4007 = vmatpush1.xpose.msra.mxu0 0.0
    %4008 = vmatprep.subr.mxu0 0.0
    %4009 = vmatpush1.xpose.msra.mxu0 0.0
    %4010 = vmatprep.subr.mxu0 0.0
    %4011 = vmatpush1.xpose.msra.mxu0 0.0
    %4012 = vmatprep.subr.mxu0 0.0
    %4013 = vmatpush1.xpose.msra.mxu0 0.0
    %4014 = vmatprep.subr.mxu0 0.0
    %4015 = vmatpush1.xpose.msra.mxu0 0.0
    %4016 = vmatprep.subr.mxu0 0.0
    %4017 = vmatpush1.xpose.msra.mxu0 0.0
    %4018 = vmatprep.subr.mxu0 0.0
    %4019 = vmatpush1.xpose.msra.mxu0 0.0
    %4020 = vmatprep.subr.mxu0 0.0
    %4021 = vmatpush1.xpose.msra.mxu0 0.0
    %4022 = vmatprep.subr.mxu0 0.0
    %4023 = vmatpush1.xpose.msra.mxu0 0.0
    %4024 = vmatprep.subr.mxu0 0.0
    %4025 = vmatpush1.xpose.msra.mxu0 0.0
    %4026 = vmatprep.subr.mxu0 0.0
    %4027 = vmatpush1.xpose.msra.mxu0 0.0
    %4028 = vmatprep.subr.mxu0 0.0
    %4029 = vmatpush1.xpose.msra.mxu0 0.0
    %4030 = vmatprep.subr.mxu0 0.0
    %4031 = vmatpush1.xpose.msra.mxu0 0.0
    %4032 = vmatprep.subr.mxu0 0.0
    %4033 = vmatpush1.xpose.msra.mxu0 0.0
    %4034 = vmatprep.subr.mxu0 0.0
    %4035 = vmatpush1.xpose.msra.mxu0 0.0
    %4036 = vmatprep.subr.mxu0 0.0
    %4037 = vmatpush1.xpose.msra.mxu0 0.0
    %4038 = vmatprep.subr.mxu0 0.0
    %4039 = vmatpush1.xpose.msra.mxu0 0.0
    %4040 = vmatprep.subr.mxu0 0.0
    %4041 = vmatpush1.xpose.msra.mxu0 0.0
    %4042 = vmatprep.subr.mxu0 0.0
    %4043 = vmatpush1.xpose.msra.mxu0 0.0
    %4044 = vmatprep.subr.mxu0 0.0
    %4045 = vmatpush1.xpose.msra.mxu0 0.0
    %4046 = vmatprep.subr.mxu0 0.0
    %4047 = vmatpush1.xpose.msra.mxu0 0.0
    %4048 = vmatprep.subr.mxu0 0.0
    %4049 = vmatpush1.xpose.msra.mxu0 0.0
    %4050 = vmatprep.subr.mxu0 0.0
    %4051 = vmatpush1.xpose.msra.mxu0 0.0
    %4052 = vmatprep.subr.mxu0 0.0
    %4053 = vmatpush1.xpose.msra.mxu0 0.0
    %4054 = vmatprep.subr.mxu0 0.0
    %4055 = vmatpush1.xpose.msra.mxu0 0.0
    %4056 = vmatprep.mubr.f32.mxu0 0.0
    %4057 = vmatmul.mubr.f32.gmra.mrb[0].mxu0 %v3988
    %v4058 = vpop.f32.mrb[0].mxu0
    %v4059 = vadd.f32 0.0, %v4058
    %v4060 = vpop.f32.mrb[0].mxu0
    %4061 = vdwg.mxu0
    %4062 = vrot.lane.b32.xlu0 %v3430, 96
    %v4063 = vpop.permute.xlu0 %4062
    %4064 = vrot.lane.b32.xlu0 %v3430, 32
    %v4065 = vpop.permute.xlu0 %4064
    %v4066 = vsel %vm241, %v4063, 0
    %v4068 = vsel %vm241, %v4065, 0
    %4070 = vmatprep.subr.mxu0 0.0
    %4071 = vmatpush1.xpose.msra.mxu0 %v4068
    %4072 = vmatprep.subr.mxu0 0.0
    %4073 = vmatpush1.xpose.msra.mxu0 0.0
    %4074 = vmatprep.subr.mxu0 0.0
    %4075 = vmatpush1.xpose.msra.mxu0 0.0
    %4076 = vmatprep.subr.mxu0 0.0
    %4077 = vmatpush1.xpose.msra.mxu0 0.0
    %4078 = vmatprep.subr.mxu0 0.0
    %4079 = vmatpush1.xpose.msra.mxu0 0.0
    %4080 = vmatprep.subr.mxu0 0.0
    %4081 = vmatpush1.xpose.msra.mxu0 0.0
    %4082 = vmatprep.subr.mxu0 0.0
    %4083 = vmatpush1.xpose.msra.mxu0 0.0
    %4084 = vmatprep.subr.mxu0 0.0
    %4085 = vmatpush1.xpose.msra.mxu0 0.0
    %4086 = vmatprep.subr.mxu0 0.0
    %4087 = vmatpush1.xpose.msra.mxu0 0.0
    %4088 = vmatprep.subr.mxu0 0.0
    %4089 = vmatpush1.xpose.msra.mxu0 0.0
    %4090 = vmatprep.subr.mxu0 0.0
    %4091 = vmatpush1.xpose.msra.mxu0 0.0
    %4092 = vmatprep.subr.mxu0 0.0
    %4093 = vmatpush1.xpose.msra.mxu0 0.0
    %4094 = vmatprep.subr.mxu0 0.0
    %4095 = vmatpush1.xpose.msra.mxu0 0.0
    %4096 = vmatprep.subr.mxu0 0.0
    %4097 = vmatpush1.xpose.msra.mxu0 0.0
    %4098 = vmatprep.subr.mxu0 0.0
    %4099 = vmatpush1.xpose.msra.mxu0 0.0
    %4100 = vmatprep.subr.mxu0 0.0
    %4101 = vmatpush1.xpose.msra.mxu0 0.0
    %4102 = vmatprep.subr.mxu0 0.0
    %4103 = vmatpush1.xpose.msra.mxu0 0.0
    %4104 = vmatprep.subr.mxu0 0.0
    %4105 = vmatpush1.xpose.msra.mxu0 0.0
    %4106 = vmatprep.subr.mxu0 0.0
    %4107 = vmatpush1.xpose.msra.mxu0 0.0
    %4108 = vmatprep.subr.mxu0 0.0
    %4109 = vmatpush1.xpose.msra.mxu0 0.0
    %4110 = vmatprep.subr.mxu0 0.0
    %4111 = vmatpush1.xpose.msra.mxu0 0.0
    %4112 = vmatprep.subr.mxu0 0.0
    %4113 = vmatpush1.xpose.msra.mxu0 0.0
    %4114 = vmatprep.subr.mxu0 0.0
    %4115 = vmatpush1.xpose.msra.mxu0 0.0
    %4116 = vmatprep.subr.mxu0 0.0
    %4117 = vmatpush1.xpose.msra.mxu0 0.0
    %4118 = vmatprep.subr.mxu0 0.0
    %4119 = vmatpush1.xpose.msra.mxu0 0.0
    %4120 = vmatprep.subr.mxu0 0.0
    %4121 = vmatpush1.xpose.msra.mxu0 0.0
    %4122 = vmatprep.subr.mxu0 0.0
    %4123 = vmatpush1.xpose.msra.mxu0 0.0
    %4124 = vmatprep.subr.mxu0 0.0
    %4125 = vmatpush1.xpose.msra.mxu0 0.0
    %4126 = vmatprep.subr.mxu0 0.0
    %4127 = vmatpush1.xpose.msra.mxu0 0.0
    %4128 = vmatprep.subr.mxu0 0.0
    %4129 = vmatpush1.xpose.msra.mxu0 0.0
    %4130 = vmatprep.subr.mxu0 0.0
    %4131 = vmatpush1.xpose.msra.mxu0 0.0
    %4132 = vmatprep.subr.mxu0 0.0
    %4133 = vmatpush1.xpose.msra.mxu0 0.0
    %4134 = vmatprep.mubr.f32.mxu0 0.0
    %4135 = vmatmul.mubr.f32.gmra.mrb[0].mxu0 %v4066
    %v4136 = vpop.f32.mrb[0].mxu0
    %v4137 = vadd.f32 0.0, %v4136
    %v4138 = vpop.f32.mrb[0].mxu0
    %4139 = vdwg.mxu0
    %4140 = vrot.lane.b32.xlu0 %v3436, 96
    %v4141 = vpop.permute.xlu0 %4140
    %4142 = vrot.lane.b32.xlu0 %v3436, 32
    %v4143 = vpop.permute.xlu0 %4142
    %v4144 = vsel %vm241, %v4141, 0
    %v4146 = vsel %vm241, %v4143, 0
    %4148 = vmatprep.subr.mxu0 0.0
    %4149 = vmatpush1.xpose.msra.mxu0 %v4146
    %4150 = vmatprep.subr.mxu0 0.0
    %4151 = vmatpush1.xpose.msra.mxu0 0.0
    %4152 = vmatprep.subr.mxu0 0.0
    %4153 = vmatpush1.xpose.msra.mxu0 0.0
    %4154 = vmatprep.subr.mxu0 0.0
    %4155 = vmatpush1.xpose.msra.mxu0 0.0
    %4156 = vmatprep.subr.mxu0 0.0
    %4157 = vmatpush1.xpose.msra.mxu0 0.0
    %4158 = vmatprep.subr.mxu0 0.0
    %4159 = vmatpush1.xpose.msra.mxu0 0.0
    %4160 = vmatprep.subr.mxu0 0.0
    %4161 = vmatpush1.xpose.msra.mxu0 0.0
    %4162 = vmatprep.subr.mxu0 0.0
    %4163 = vmatpush1.xpose.msra.mxu0 0.0
    %4164 = vmatprep.subr.mxu0 0.0
    %4165 = vmatpush1.xpose.msra.mxu0 0.0
    %4166 = vmatprep.subr.mxu0 0.0
    %4167 = vmatpush1.xpose.msra.mxu0 0.0
    %4168 = vmatprep.subr.mxu0 0.0
    %4169 = vmatpush1.xpose.msra.mxu0 0.0
    %4170 = vmatprep.subr.mxu0 0.0
    %4171 = vmatpush1.xpose.msra.mxu0 0.0
    %4172 = vmatprep.subr.mxu0 0.0
    %4173 = vmatpush1.xpose.msra.mxu0 0.0
    %4174 = vmatprep.subr.mxu0 0.0
    %4175 = vmatpush1.xpose.msra.mxu0 0.0
    %4176 = vmatprep.subr.mxu0 0.0
    %4177 = vmatpush1.xpose.msra.mxu0 0.0
    %4178 = vmatprep.subr.mxu0 0.0
    %4179 = vmatpush1.xpose.msra.mxu0 0.0
    %4180 = vmatprep.subr.mxu0 0.0
    %4181 = vmatpush1.xpose.msra.mxu0 0.0
    %4182 = vmatprep.subr.mxu0 0.0
    %4183 = vmatpush1.xpose.msra.mxu0 0.0
    %4184 = vmatprep.subr.mxu0 0.0
    %4185 = vmatpush1.xpose.msra.mxu0 0.0
    %4186 = vmatprep.subr.mxu0 0.0
    %4187 = vmatpush1.xpose.msra.mxu0 0.0
    %4188 = vmatprep.subr.mxu0 0.0
    %4189 = vmatpush1.xpose.msra.mxu0 0.0
    %4190 = vmatprep.subr.mxu0 0.0
    %4191 = vmatpush1.xpose.msra.mxu0 0.0
    %4192 = vmatprep.subr.mxu0 0.0
    %4193 = vmatpush1.xpose.msra.mxu0 0.0
    %4194 = vmatprep.subr.mxu0 0.0
    %4195 = vmatpush1.xpose.msra.mxu0 0.0
    %4196 = vmatprep.subr.mxu0 0.0
    %4197 = vmatpush1.xpose.msra.mxu0 0.0
    %4198 = vmatprep.subr.mxu0 0.0
    %4199 = vmatpush1.xpose.msra.mxu0 0.0
    %4200 = vmatprep.subr.mxu0 0.0
    %4201 = vmatpush1.xpose.msra.mxu0 0.0
    %4202 = vmatprep.subr.mxu0 0.0
    %4203 = vmatpush1.xpose.msra.mxu0 0.0
    %4204 = vmatprep.subr.mxu0 0.0
    %4205 = vmatpush1.xpose.msra.mxu0 0.0
    %4206 = vmatprep.subr.mxu0 0.0
    %4207 = vmatpush1.xpose.msra.mxu0 0.0
    %4208 = vmatprep.subr.mxu0 0.0
    %4209 = vmatpush1.xpose.msra.mxu0 0.0
    %4210 = vmatprep.subr.mxu0 0.0
    %4211 = vmatpush1.xpose.msra.mxu0 0.0
    %4212 = vmatprep.mubr.f32.mxu0 0.0
    %4213 = vmatmul.mubr.f32.gmra.mrb[0].mxu0 %v4144
    %v4214 = vpop.f32.mrb[0].mxu0
    %v4215 = vadd.f32 0.0, %v4214
    %v4216 = vpop.f32.mrb[0].mxu0
    %4217 = vdwg.mxu0
    %4218 = vrot.lane.b32.xlu0 %v3430, 88
    %v4219 = vpop.permute.xlu0 %4218
    %4220 = vrot.lane.b32.xlu0 %v3430, 24
    %v4221 = vpop.permute.xlu0 %4220
    %v4222 = vsel %vm241, %v4219, 0
    %v4224 = vsel %vm241, %v4221, 0
    %4226 = vmatprep.subr.mxu0 0.0
    %4227 = vmatpush1.xpose.msra.mxu0 %v4224
    %4228 = vmatprep.subr.mxu0 0.0
    %4229 = vmatpush1.xpose.msra.mxu0 0.0
    %4230 = vmatprep.subr.mxu0 0.0
    %4231 = vmatpush1.xpose.msra.mxu0 0.0
    %4232 = vmatprep.subr.mxu0 0.0
    %4233 = vmatpush1.xpose.msra.mxu0 0.0
    %4234 = vmatprep.subr.mxu0 0.0
    %4235 = vmatpush1.xpose.msra.mxu0 0.0
    %4236 = vmatprep.subr.mxu0 0.0
    %4237 = vmatpush1.xpose.msra.mxu0 0.0
    %4238 = vmatprep.subr.mxu0 0.0
    %4239 = vmatpush1.xpose.msra.mxu0 0.0
    %4240 = vmatprep.subr.mxu0 0.0
    %4241 = vmatpush1.xpose.msra.mxu0 0.0
    %4242 = vmatprep.subr.mxu0 0.0
    %4243 = vmatpush1.xpose.msra.mxu0 0.0
    %4244 = vmatprep.subr.mxu0 0.0
    %4245 = vmatpush1.xpose.msra.mxu0 0.0
    %4246 = vmatprep.subr.mxu0 0.0
    %4247 = vmatpush1.xpose.msra.mxu0 0.0
    %4248 = vmatprep.subr.mxu0 0.0
    %4249 = vmatpush1.xpose.msra.mxu0 0.0
    %4250 = vmatprep.subr.mxu0 0.0
    %4251 = vmatpush1.xpose.msra.mxu0 0.0
    %4252 = vmatprep.subr.mxu0 0.0
    %4253 = vmatpush1.xpose.msra.mxu0 0.0
    %4254 = vmatprep.subr.mxu0 0.0
    %4255 = vmatpush1.xpose.msra.mxu0 0.0
    %4256 = vmatprep.subr.mxu0 0.0
    %4257 = vmatpush1.xpose.msra.mxu0 0.0
    %4258 = vmatprep.subr.mxu0 0.0
    %4259 = vmatpush1.xpose.msra.mxu0 0.0
    %4260 = vmatprep.subr.mxu0 0.0
    %4261 = vmatpush1.xpose.msra.mxu0 0.0
    %4262 = vmatprep.subr.mxu0 0.0
    %4263 = vmatpush1.xpose.msra.mxu0 0.0
    %4264 = vmatprep.subr.mxu0 0.0
    %4265 = vmatpush1.xpose.msra.mxu0 0.0
    %4266 = vmatprep.subr.mxu0 0.0
    %4267 = vmatpush1.xpose.msra.mxu0 0.0
    %4268 = vmatprep.subr.mxu0 0.0
    %4269 = vmatpush1.xpose.msra.mxu0 0.0
    %4270 = vmatprep.subr.mxu0 0.0
    %4271 = vmatpush1.xpose.msra.mxu0 0.0
    %4272 = vmatprep.subr.mxu0 0.0
    %4273 = vmatpush1.xpose.msra.mxu0 0.0
    %4274 = vmatprep.subr.mxu0 0.0
    %4275 = vmatpush1.xpose.msra.mxu0 0.0
    %4276 = vmatprep.subr.mxu0 0.0
    %4277 = vmatpush1.xpose.msra.mxu0 0.0
    %4278 = vmatprep.subr.mxu0 0.0
    %4279 = vmatpush1.xpose.msra.mxu0 0.0
    %4280 = vmatprep.subr.mxu0 0.0
    %4281 = vmatpush1.xpose.msra.mxu0 0.0
    %4282 = vmatprep.subr.mxu0 0.0
    %4283 = vmatpush1.xpose.msra.mxu0 0.0
    %4284 = vmatprep.subr.mxu0 0.0
    %4285 = vmatpush1.xpose.msra.mxu0 0.0
    %4286 = vmatprep.subr.mxu0 0.0
    %4287 = vmatpush1.xpose.msra.mxu0 0.0
    %4288 = vmatprep.subr.mxu0 0.0
    %4289 = vmatpush1.xpose.msra.mxu0 0.0
    %4290 = vmatprep.mubr.f32.mxu0 0.0
    %4291 = vmatmul.mubr.f32.gmra.mrb[0].mxu0 %v4222
    %v4292 = vpop.f32.mrb[0].mxu0
    %v4293 = vadd.f32 0.0, %v4292
    %v4294 = vpop.f32.mrb[0].mxu0
    %4295 = vdwg.mxu0
    %4296 = vrot.lane.b32.xlu0 %v3436, 88
    %v4297 = vpop.permute.xlu0 %4296
    %4298 = vrot.lane.b32.xlu0 %v3436, 24
    %v4299 = vpop.permute.xlu0 %4298
    %v4300 = vsel %vm241, %v4297, 0
    %v4302 = vsel %vm241, %v4299, 0
    %4304 = vmatprep.subr.mxu0 0.0
    %4305 = vmatpush1.xpose.msra.mxu0 %v4302
    %4306 = vmatprep.subr.mxu0 0.0
    %4307 = vmatpush1.xpose.msra.mxu0 0.0
    %4308 = vmatprep.subr.mxu0 0.0
    %4309 = vmatpush1.xpose.msra.mxu0 0.0
    %4310 = vmatprep.subr.mxu0 0.0
    %4311 = vmatpush1.xpose.msra.mxu0 0.0
    %4312 = vmatprep.subr.mxu0 0.0
    %4313 = vmatpush1.xpose.msra.mxu0 0.0
    %4314 = vmatprep.subr.mxu0 0.0
    %4315 = vmatpush1.xpose.msra.mxu0 0.0
    %4316 = vmatprep.subr.mxu0 0.0
    %4317 = vmatpush1.xpose.msra.mxu0 0.0
    %4318 = vmatprep.subr.mxu0 0.0
    %4319 = vmatpush1.xpose.msra.mxu0 0.0
    %4320 = vmatprep.subr.mxu0 0.0
    %4321 = vmatpush1.xpose.msra.mxu0 0.0
    %4322 = vmatprep.subr.mxu0 0.0
    %4323 = vmatpush1.xpose.msra.mxu0 0.0
    %4324 = vmatprep.subr.mxu0 0.0
    %4325 = vmatpush1.xpose.msra.mxu0 0.0
    %4326 = vmatprep.subr.mxu0 0.0
    %4327 = vmatpush1.xpose.msra.mxu0 0.0
    %4328 = vmatprep.subr.mxu0 0.0
    %4329 = vmatpush1.xpose.msra.mxu0 0.0
    %4330 = vmatprep.subr.mxu0 0.0
    %4331 = vmatpush1.xpose.msra.mxu0 0.0
    %4332 = vmatprep.subr.mxu0 0.0
    %4333 = vmatpush1.xpose.msra.mxu0 0.0
    %4334 = vmatprep.subr.mxu0 0.0
    %4335 = vmatpush1.xpose.msra.mxu0 0.0
    %4336 = vmatprep.subr.mxu0 0.0
    %4337 = vmatpush1.xpose.msra.mxu0 0.0
    %4338 = vmatprep.subr.mxu0 0.0
    %4339 = vmatpush1.xpose.msra.mxu0 0.0
    %4340 = vmatprep.subr.mxu0 0.0
    %4341 = vmatpush1.xpose.msra.mxu0 0.0
    %4342 = vmatprep.subr.mxu0 0.0
    %4343 = vmatpush1.xpose.msra.mxu0 0.0
    %4344 = vmatprep.subr.mxu0 0.0
    %4345 = vmatpush1.xpose.msra.mxu0 0.0
    %4346 = vmatprep.subr.mxu0 0.0
    %4347 = vmatpush1.xpose.msra.mxu0 0.0
    %4348 = vmatprep.subr.mxu0 0.0
    %4349 = vmatpush1.xpose.msra.mxu0 0.0
    %4350 = vmatprep.subr.mxu0 0.0
    %4351 = vmatpush1.xpose.msra.mxu0 0.0
    %4352 = vmatprep.subr.mxu0 0.0
    %4353 = vmatpush1.xpose.msra.mxu0 0.0
    %4354 = vmatprep.subr.mxu0 0.0
    %4355 = vmatpush1.xpose.msra.mxu0 0.0
    %4356 = vmatprep.subr.mxu0 0.0
    %4357 = vmatpush1.xpose.msra.mxu0 0.0
    %4358 = vmatprep.subr.mxu0 0.0
    %4359 = vmatpush1.xpose.msra.mxu0 0.0
    %4360 = vmatprep.subr.mxu0 0.0
    %4361 = vmatpush1.xpose.msra.mxu0 0.0
    %4362 = vmatprep.subr.mxu0 0.0
    %4363 = vmatpush1.xpose.msra.mxu0 0.0
    %4364 = vmatprep.subr.mxu0 0.0
    %4365 = vmatpush1.xpose.msra.mxu0 0.0
    %4366 = vmatprep.subr.mxu0 0.0
    %4367 = vmatpush1.xpose.msra.mxu0 0.0
    %4368 = vmatprep.mubr.f32.mxu0 0.0
    %4369 = vmatmul.mubr.f32.gmra.mrb[0].mxu0 %v4300
    %v4370 = vpop.f32.mrb[0].mxu0
    %v4371 = vadd.f32 0.0, %v4370
    %v4372 = vpop.f32.mrb[0].mxu0
    %4373 = vdwg.mxu0
    %4374 = vrot.lane.b32.xlu0 %v3430, 80
    %v4375 = vpop.permute.xlu0 %4374
    %4376 = vrot.lane.b32.xlu0 %v3430, 16
    %v4377 = vpop.permute.xlu0 %4376
    %v4378 = vsel %vm241, %v4375, 0
    %v4380 = vsel %vm241, %v4377, 0
    %4382 = vmatprep.subr.mxu0 0.0
    %4383 = vmatpush1.xpose.msra.mxu0 %v4380
    %4384 = vmatprep.subr.mxu0 0.0
    %4385 = vmatpush1.xpose.msra.mxu0 0.0
    %4386 = vmatprep.subr.mxu0 0.0
    %4387 = vmatpush1.xpose.msra.mxu0 0.0
    %4388 = vmatprep.subr.mxu0 0.0
    %4389 = vmatpush1.xpose.msra.mxu0 0.0
    %4390 = vmatprep.subr.mxu0 0.0
    %4391 = vmatpush1.xpose.msra.mxu0 0.0
    %4392 = vmatprep.subr.mxu0 0.0
    %4393 = vmatpush1.xpose.msra.mxu0 0.0
    %4394 = vmatprep.subr.mxu0 0.0
    %4395 = vmatpush1.xpose.msra.mxu0 0.0
    %4396 = vmatprep.subr.mxu0 0.0
    %4397 = vmatpush1.xpose.msra.mxu0 0.0
    %4398 = vmatprep.subr.mxu0 0.0
    %4399 = vmatpush1.xpose.msra.mxu0 0.0
    %4400 = vmatprep.subr.mxu0 0.0
    %4401 = vmatpush1.xpose.msra.mxu0 0.0
    %4402 = vmatprep.subr.mxu0 0.0
    %4403 = vmatpush1.xpose.msra.mxu0 0.0
    %4404 = vmatprep.subr.mxu0 0.0
    %4405 = vmatpush1.xpose.msra.mxu0 0.0
    %4406 = vmatprep.subr.mxu0 0.0
    %4407 = vmatpush1.xpose.msra.mxu0 0.0
    %4408 = vmatprep.subr.mxu0 0.0
    %4409 = vmatpush1.xpose.msra.mxu0 0.0
    %4410 = vmatprep.subr.mxu0 0.0
    %4411 = vmatpush1.xpose.msra.mxu0 0.0
    %4412 = vmatprep.subr.mxu0 0.0
    %4413 = vmatpush1.xpose.msra.mxu0 0.0
    %4414 = vmatprep.subr.mxu0 0.0
    %4415 = vmatpush1.xpose.msra.mxu0 0.0
    %4416 = vmatprep.subr.mxu0 0.0
    %4417 = vmatpush1.xpose.msra.mxu0 0.0
    %4418 = vmatprep.subr.mxu0 0.0
    %4419 = vmatpush1.xpose.msra.mxu0 0.0
    %4420 = vmatprep.subr.mxu0 0.0
    %4421 = vmatpush1.xpose.msra.mxu0 0.0
    %4422 = vmatprep.subr.mxu0 0.0
    %4423 = vmatpush1.xpose.msra.mxu0 0.0
    %4424 = vmatprep.subr.mxu0 0.0
    %4425 = vmatpush1.xpose.msra.mxu0 0.0
    %4426 = vmatprep.subr.mxu0 0.0
    %4427 = vmatpush1.xpose.msra.mxu0 0.0
    %4428 = vmatprep.subr.mxu0 0.0
    %4429 = vmatpush1.xpose.msra.mxu0 0.0
    %4430 = vmatprep.subr.mxu0 0.0
    %4431 = vmatpush1.xpose.msra.mxu0 0.0
    %4432 = vmatprep.subr.mxu0 0.0
    %4433 = vmatpush1.xpose.msra.mxu0 0.0
    %4434 = vmatprep.subr.mxu0 0.0
    %4435 = vmatpush1.xpose.msra.mxu0 0.0
    %4436 = vmatprep.subr.mxu0 0.0
    %4437 = vmatpush1.xpose.msra.mxu0 0.0
    %4438 = vmatprep.subr.mxu0 0.0
    %4439 = vmatpush1.xpose.msra.mxu0 0.0
    %4440 = vmatprep.subr.mxu0 0.0
    %4441 = vmatpush1.xpose.msra.mxu0 0.0
    %4442 = vmatprep.subr.mxu0 0.0
    %4443 = vmatpush1.xpose.msra.mxu0 0.0
    %4444 = vmatprep.subr.mxu0 0.0
    %4445 = vmatpush1.xpose.msra.mxu0 0.0
    %4446 = vmatprep.mubr.f32.mxu0 0.0
    %4447 = vmatmul.mubr.f32.gmra.mrb[0].mxu0 %v4378
    %v4448 = vpop.f32.mrb[0].mxu0
    %v4449 = vadd.f32 0.0, %v4448
    %v4450 = vpop.f32.mrb[0].mxu0
    %4451 = vdwg.mxu0
    %4452 = vrot.lane.b32.xlu0 %v3436, 80
    %v4453 = vpop.permute.xlu0 %4452
    %4454 = vrot.lane.b32.xlu0 %v3436, 16
    %v4455 = vpop.permute.xlu0 %4454
    %v4456 = vsel %vm241, %v4453, 0
    %v4458 = vsel %vm241, %v4455, 0
    %4460 = vmatprep.subr.mxu0 0.0
    %4461 = vmatpush1.xpose.msra.mxu0 %v4458
    %4462 = vmatprep.subr.mxu0 0.0
    %4463 = vmatpush1.xpose.msra.mxu0 0.0
    %4464 = vmatprep.subr.mxu0 0.0
    %4465 = vmatpush1.xpose.msra.mxu0 0.0
    %4466 = vmatprep.subr.mxu0 0.0
    %4467 = vmatpush1.xpose.msra.mxu0 0.0
    %4468 = vmatprep.subr.mxu0 0.0
    %4469 = vmatpush1.xpose.msra.mxu0 0.0
    %4470 = vmatprep.subr.mxu0 0.0
    %4471 = vmatpush1.xpose.msra.mxu0 0.0
    %4472 = vmatprep.subr.mxu0 0.0
    %4473 = vmatpush1.xpose.msra.mxu0 0.0
    %4474 = vmatprep.subr.mxu0 0.0
    %4475 = vmatpush1.xpose.msra.mxu0 0.0
    %4476 = vmatprep.subr.mxu0 0.0
    %4477 = vmatpush1.xpose.msra.mxu0 0.0
    %4478 = vmatprep.subr.mxu0 0.0
    %4479 = vmatpush1.xpose.msra.mxu0 0.0
    %4480 = vmatprep.subr.mxu0 0.0
    %4481 = vmatpush1.xpose.msra.mxu0 0.0
    %4482 = vmatprep.subr.mxu0 0.0
    %4483 = vmatpush1.xpose.msra.mxu0 0.0
    %4484 = vmatprep.subr.mxu0 0.0
    %4485 = vmatpush1.xpose.msra.mxu0 0.0
    %4486 = vmatprep.subr.mxu0 0.0
    %4487 = vmatpush1.xpose.msra.mxu0 0.0
    %4488 = vmatprep.subr.mxu0 0.0
    %4489 = vmatpush1.xpose.msra.mxu0 0.0
    %4490 = vmatprep.subr.mxu0 0.0
    %4491 = vmatpush1.xpose.msra.mxu0 0.0
    %4492 = vmatprep.subr.mxu0 0.0
    %4493 = vmatpush1.xpose.msra.mxu0 0.0
    %4494 = vmatprep.subr.mxu0 0.0
    %4495 = vmatpush1.xpose.msra.mxu0 0.0
    %4496 = vmatprep.subr.mxu0 0.0
    %4497 = vmatpush1.xpose.msra.mxu0 0.0
    %4498 = vmatprep.subr.mxu0 0.0
    %4499 = vmatpush1.xpose.msra.mxu0 0.0
    %4500 = vmatprep.subr.mxu0 0.0
    %4501 = vmatpush1.xpose.msra.mxu0 0.0
    %4502 = vmatprep.subr.mxu0 0.0
    %4503 = vmatpush1.xpose.msra.mxu0 0.0
    %4504 = vmatprep.subr.mxu0 0.0
    %4505 = vmatpush1.xpose.msra.mxu0 0.0
    %4506 = vmatprep.subr.mxu0 0.0
    %4507 = vmatpush1.xpose.msra.mxu0 0.0
    %4508 = vmatprep.subr.mxu0 0.0
    %4509 = vmatpush1.xpose.msra.mxu0 0.0
    %4510 = vmatprep.subr.mxu0 0.0
    %4511 = vmatpush1.xpose.msra.mxu0 0.0
    %4512 = vmatprep.subr.mxu0 0.0
    %4513 = vmatpush1.xpose.msra.mxu0 0.0
    %4514 = vmatprep.subr.mxu0 0.0
    %4515 = vmatpush1.xpose.msra.mxu0 0.0
    %4516 = vmatprep.subr.mxu0 0.0
    %4517 = vmatpush1.xpose.msra.mxu0 0.0
    %4518 = vmatprep.subr.mxu0 0.0
    %4519 = vmatpush1.xpose.msra.mxu0 0.0
    %4520 = vmatprep.subr.mxu0 0.0
    %4521 = vmatpush1.xpose.msra.mxu0 0.0
    %4522 = vmatprep.subr.mxu0 0.0
    %4523 = vmatpush1.xpose.msra.mxu0 0.0
    %4524 = vmatprep.mubr.f32.mxu0 0.0
    %4525 = vmatmul.mubr.f32.gmra.mrb[0].mxu0 %v4456
    %v4526 = vpop.f32.mrb[0].mxu0
    %v4527 = vadd.f32 0.0, %v4526
    %v4528 = vpop.f32.mrb[0].mxu0
    %4529 = vdwg.mxu0
    %4530 = vrot.lane.b32.xlu0 %v3430, 72
    %v4531 = vpop.permute.xlu0 %4530
    %4532 = vrot.lane.b32.xlu0 %v3430, 8
    %v4533 = vpop.permute.xlu0 %4532
    %v4534 = vsel %vm241, %v4531, 0
    %v4536 = vsel %vm241, %v4533, 0
    %4538 = vmatprep.subr.mxu0 0.0
    %4539 = vmatpush1.xpose.msra.mxu0 %v4536
    %4540 = vmatprep.subr.mxu0 0.0
    %4541 = vmatpush1.xpose.msra.mxu0 0.0
    %4542 = vmatprep.subr.mxu0 0.0
    %4543 = vmatpush1.xpose.msra.mxu0 0.0
    %4544 = vmatprep.subr.mxu0 0.0
    %4545 = vmatpush1.xpose.msra.mxu0 0.0
    %4546 = vmatprep.subr.mxu0 0.0
    %4547 = vmatpush1.xpose.msra.mxu0 0.0
    %4548 = vmatprep.subr.mxu0 0.0
    %4549 = vmatpush1.xpose.msra.mxu0 0.0
    %4550 = vmatprep.subr.mxu0 0.0
    %4551 = vmatpush1.xpose.msra.mxu0 0.0
    %4552 = vmatprep.subr.mxu0 0.0
    %4553 = vmatpush1.xpose.msra.mxu0 0.0
    %4554 = vmatprep.subr.mxu0 0.0
    %4555 = vmatpush1.xpose.msra.mxu0 0.0
    %4556 = vmatprep.subr.mxu0 0.0
    %4557 = vmatpush1.xpose.msra.mxu0 0.0
    %4558 = vmatprep.subr.mxu0 0.0
    %4559 = vmatpush1.xpose.msra.mxu0 0.0
    %4560 = vmatprep.subr.mxu0 0.0
    %4561 = vmatpush1.xpose.msra.mxu0 0.0
    %4562 = vmatprep.subr.mxu0 0.0
    %4563 = vmatpush1.xpose.msra.mxu0 0.0
    %4564 = vmatprep.subr.mxu0 0.0
    %4565 = vmatpush1.xpose.msra.mxu0 0.0
    %4566 = vmatprep.subr.mxu0 0.0
    %4567 = vmatpush1.xpose.msra.mxu0 0.0
    %4568 = vmatprep.subr.mxu0 0.0
    %4569 = vmatpush1.xpose.msra.mxu0 0.0
    %4570 = vmatprep.subr.mxu0 0.0
    %4571 = vmatpush1.xpose.msra.mxu0 0.0
    %4572 = vmatprep.subr.mxu0 0.0
    %4573 = vmatpush1.xpose.msra.mxu0 0.0
    %4574 = vmatprep.subr.mxu0 0.0
    %4575 = vmatpush1.xpose.msra.mxu0 0.0
    %4576 = vmatprep.subr.mxu0 0.0
    %4577 = vmatpush1.xpose.msra.mxu0 0.0
    %4578 = vmatprep.subr.mxu0 0.0
    %4579 = vmatpush1.xpose.msra.mxu0 0.0
    %4580 = vmatprep.subr.mxu0 0.0
    %4581 = vmatpush1.xpose.msra.mxu0 0.0
    %4582 = vmatprep.subr.mxu0 0.0
    %4583 = vmatpush1.xpose.msra.mxu0 0.0
    %4584 = vmatprep.subr.mxu0 0.0
    %4585 = vmatpush1.xpose.msra.mxu0 0.0
    %4586 = vmatprep.subr.mxu0 0.0
    %4587 = vmatpush1.xpose.msra.mxu0 0.0
    %4588 = vmatprep.subr.mxu0 0.0
    %4589 = vmatpush1.xpose.msra.mxu0 0.0
    %4590 = vmatprep.subr.mxu0 0.0
    %4591 = vmatpush1.xpose.msra.mxu0 0.0
    %4592 = vmatprep.subr.mxu0 0.0
    %4593 = vmatpush1.xpose.msra.mxu0 0.0
    %4594 = vmatprep.subr.mxu0 0.0
    %4595 = vmatpush1.xpose.msra.mxu0 0.0
    %4596 = vmatprep.subr.mxu0 0.0
    %4597 = vmatpush1.xpose.msra.mxu0 0.0
    %4598 = vmatprep.subr.mxu0 0.0
    %4599 = vmatpush1.xpose.msra.mxu0 0.0
    %4600 = vmatprep.subr.mxu0 0.0
    %4601 = vmatpush1.xpose.msra.mxu0 0.0
    %4602 = vmatprep.mubr.f32.mxu0 0.0
    %4603 = vmatmul.mubr.f32.gmra.mrb[0].mxu0 %v4534
    %v4604 = vpop.f32.mrb[0].mxu0
    %v4605 = vadd.f32 0.0, %v4604
    %v4606 = vpop.f32.mrb[0].mxu0
    %4607 = vdwg.mxu0
    %4608 = vrot.lane.b32.xlu0 %v3436, 72
    %v4609 = vpop.permute.xlu0 %4608
    %4610 = vrot.lane.b32.xlu0 %v3436, 8
    %v4611 = vpop.permute.xlu0 %4610
    %v4612 = vsel %vm241, %v4609, 0
    %v4614 = vsel %vm241, %v4611, 0
    %4616 = vmatprep.subr.mxu0 0.0
    %4617 = vmatpush1.xpose.msra.mxu0 %v4614
    %4618 = vmatprep.subr.mxu0 0.0
    %4619 = vmatpush1.xpose.msra.mxu0 0.0
    %4620 = vmatprep.subr.mxu0 0.0
    %4621 = vmatpush1.xpose.msra.mxu0 0.0
    %4622 = vmatprep.subr.mxu0 0.0
    %4623 = vmatpush1.xpose.msra.mxu0 0.0
    %4624 = vmatprep.subr.mxu0 0.0
    %4625 = vmatpush1.xpose.msra.mxu0 0.0
    %4626 = vmatprep.subr.mxu0 0.0
    %4627 = vmatpush1.xpose.msra.mxu0 0.0
    %4628 = vmatprep.subr.mxu0 0.0
    %4629 = vmatpush1.xpose.msra.mxu0 0.0
    %4630 = vmatprep.subr.mxu0 0.0
    %4631 = vmatpush1.xpose.msra.mxu0 0.0
    %4632 = vmatprep.subr.mxu0 0.0
    %4633 = vmatpush1.xpose.msra.mxu0 0.0
    %4634 = vmatprep.subr.mxu0 0.0
    %4635 = vmatpush1.xpose.msra.mxu0 0.0
    %4636 = vmatprep.subr.mxu0 0.0
    %4637 = vmatpush1.xpose.msra.mxu0 0.0
    %4638 = vmatprep.subr.mxu0 0.0
    %4639 = vmatpush1.xpose.msra.mxu0 0.0
    %4640 = vmatprep.subr.mxu0 0.0
    %4641 = vmatpush1.xpose.msra.mxu0 0.0
    %4642 = vmatprep.subr.mxu0 0.0
    %4643 = vmatpush1.xpose.msra.mxu0 0.0
    %4644 = vmatprep.subr.mxu0 0.0
    %4645 = vmatpush1.xpose.msra.mxu0 0.0
    %4646 = vmatprep.subr.mxu0 0.0
    %4647 = vmatpush1.xpose.msra.mxu0 0.0
    %4648 = vmatprep.subr.mxu0 0.0
    %4649 = vmatpush1.xpose.msra.mxu0 0.0
    %4650 = vmatprep.subr.mxu0 0.0
    %4651 = vmatpush1.xpose.msra.mxu0 0.0
    %4652 = vmatprep.subr.mxu0 0.0
    %4653 = vmatpush1.xpose.msra.mxu0 0.0
    %4654 = vmatprep.subr.mxu0 0.0
    %4655 = vmatpush1.xpose.msra.mxu0 0.0
    %4656 = vmatprep.subr.mxu0 0.0
    %4657 = vmatpush1.xpose.msra.mxu0 0.0
    %4658 = vmatprep.subr.mxu0 0.0
    %4659 = vmatpush1.xpose.msra.mxu0 0.0
    %4660 = vmatprep.subr.mxu0 0.0
    %4661 = vmatpush1.xpose.msra.mxu0 0.0
    %4662 = vmatprep.subr.mxu0 0.0
    %4663 = vmatpush1.xpose.msra.mxu0 0.0
    %4664 = vmatprep.subr.mxu0 0.0
    %4665 = vmatpush1.xpose.msra.mxu0 0.0
    %4666 = vmatprep.subr.mxu0 0.0
    %4667 = vmatpush1.xpose.msra.mxu0 0.0
    %4668 = vmatprep.subr.mxu0 0.0
    %4669 = vmatpush1.xpose.msra.mxu0 0.0
    %4670 = vmatprep.subr.mxu0 0.0
    %4671 = vmatpush1.xpose.msra.mxu0 0.0
    %4672 = vmatprep.subr.mxu0 0.0
    %4673 = vmatpush1.xpose.msra.mxu0 0.0
    %4674 = vmatprep.subr.mxu0 0.0
    %4675 = vmatpush1.xpose.msra.mxu0 0.0
    %4676 = vmatprep.subr.mxu0 0.0
    %4677 = vmatpush1.xpose.msra.mxu0 0.0
    %4678 = vmatprep.subr.mxu0 0.0
    %4679 = vmatpush1.xpose.msra.mxu0 0.0
    %4680 = vmatprep.mubr.f32.mxu0 0.0
    %4681 = vmatmul.mubr.f32.gmra.mrb[0].mxu0 %v4612
    %v4682 = vpop.f32.mrb[0].mxu0
    %v4683 = vadd.f32 0.0, %v4682
    %v4684 = vpop.f32.mrb[0].mxu0
    %4685 = vdwg.mxu0
    %v4686 = vmul.f32 %v3514, 0.35355338
    %v4687 = vmul.f32 %v3669, 0.35355338
    %v4688 = vmul.f32 %v3825, 0.35355338
    %v4689 = vmul.f32 %v3981, 0.35355338
    %v4690 = vmul.f32 %v4137, 0.35355338
    %v4691 = vmul.f32 %v4293, 0.35355338
    %v4692 = vmul.f32 %v4449, 0.35355338
    %v4693 = vmul.f32 %v4605, 0.35355338
    %v4694 = vmul.f32 %v3591, 0.35355338
    %v4695 = vmul.f32 %v3747, 0.35355338
    %v4696 = vmul.f32 %v3903, 0.35355338
    %v4697 = vmul.f32 %v4059, 0.35355338
    %v4698 = vmul.f32 %v4215, 0.35355338
    %v4699 = vmul.f32 %v4371, 0.35355338
    %v4700 = vmul.f32 %v4527, 0.35355338
    %v4701 = vmul.f32 %v4683, 0.35355338
    %v4702 = vsel %vm241, %v4686, -inf
    %4703 = vmax.xlane.f32.xlu0 %v4702
    %v4704 = vpop.xlane.xlu0 %4703
    %v4705 = vsel %vm241, %v4687, -inf
    %4706 = vmax.xlane.f32.xlu0 %v4705
    %v4707 = vpop.xlane.xlu0 %4706
    %v4708 = vsel %vm241, %v4688, -inf
    %4709 = vmax.xlane.f32.xlu0 %v4708
    %v4710 = vpop.xlane.xlu0 %4709
    %v4711 = vsel %vm241, %v4689, -inf
    %4712 = vmax.xlane.f32.xlu0 %v4711
    %v4713 = vpop.xlane.xlu0 %4712
    %v4714 = vsel %vm241, %v4690, -inf
    %4715 = vmax.xlane.f32.xlu0 %v4714
    %v4716 = vpop.xlane.xlu0 %4715
    %v4717 = vsel %vm241, %v4691, -inf
    %4718 = vmax.xlane.f32.xlu0 %v4717
    %v4719 = vpop.xlane.xlu0 %4718
    %v4720 = vsel %vm241, %v4692, -inf
    %4721 = vmax.xlane.f32.xlu0 %v4720
    %v4722 = vpop.xlane.xlu0 %4721
    %v4723 = vsel %vm241, %v4693, -inf
    %4724 = vmax.xlane.f32.xlu0 %v4723
    %v4725 = vpop.xlane.xlu0 %4724
    %v4726 = vsel %vm241, %v4694, -inf
    %4727 = vmax.xlane.f32.xlu0 %v4726
    %v4728 = vpop.xlane.xlu0 %4727
    %v4729 = vsel %vm241, %v4695, -inf
    %4730 = vmax.xlane.f32.xlu0 %v4729
    %v4731 = vpop.xlane.xlu0 %4730
    %v4732 = vsel %vm241, %v4696, -inf
    %4733 = vmax.xlane.f32.xlu0 %v4732
    %v4734 = vpop.xlane.xlu0 %4733
    %v4735 = vsel %vm241, %v4697, -inf
    %4736 = vmax.xlane.f32.xlu0 %v4735
    %v4737 = vpop.xlane.xlu0 %4736
    %v4738 = vsel %vm241, %v4698, -inf
    %4739 = vmax.xlane.f32.xlu0 %v4738
    %v4740 = vpop.xlane.xlu0 %4739
    %v4741 = vsel %vm241, %v4699, -inf
    %4742 = vmax.xlane.f32.xlu0 %v4741
    %v4743 = vpop.xlane.xlu0 %4742
    %v4744 = vsel %vm241, %v4700, -inf
    %4745 = vmax.xlane.f32.xlu0 %v4744
    %v4746 = vpop.xlane.xlu0 %4745
    %v4747 = vsel %vm241, %v4701, -inf
    %4748 = vmax.xlane.f32.xlu0 %v4747
    %v4749 = vpop.xlane.xlu0 %4748
    %v4750 = vsub.f32 %v4686, %v4704
    %v4751 = vsub.f32 %v4687, %v4707
    %v4752 = vsub.f32 %v4688, %v4710
    %v4753 = vsub.f32 %v4689, %v4713
    %v4754 = vsub.f32 %v4690, %v4716
    %v4755 = vsub.f32 %v4691, %v4719
    %v4756 = vsub.f32 %v4692, %v4722
    %v4757 = vsub.f32 %v4693, %v4725
    %v4758 = vsub.f32 %v4694, %v4728
    %v4759 = vsub.f32 %v4695, %v4731
    %v4760 = vsub.f32 %v4696, %v4734
    %v4761 = vsub.f32 %v4697, %v4737
    %v4762 = vsub.f32 %v4698, %v4740
    %v4763 = vsub.f32 %v4699, %v4743
    %v4764 = vsub.f32 %v4700, %v4746
    %v4765 = vsub.f32 %v4701, %v4749
    %v4766 = vmul.f32 %v4750, 1.442695
    %v4767 = vpow.pop %v4766
    %v4768 = vmul.f32 %v4751, 1.442695
    %v4769 = vpow.pop %v4768
    %v4770 = vmul.f32 %v4752, 1.442695
    %v4771 = vpow.pop %v4770
    %v4772 = vmul.f32 %v4753, 1.442695
    %v4773 = vpow.pop %v4772
    %v4774 = vmul.f32 %v4754, 1.442695
    %v4775 = vpow.pop %v4774
    %v4776 = vmul.f32 %v4755, 1.442695
    %v4777 = vpow.pop %v4776
    %v4778 = vmul.f32 %v4756, 1.442695
    %v4779 = vpow.pop %v4778
    %v4780 = vmul.f32 %v4757, 1.442695
    %v4781 = vpow.pop %v4780
    %v4782 = vmul.f32 %v4758, 1.442695
    %v4783 = vpow.pop %v4782
    %v4784 = vmul.f32 %v4759, 1.442695
    %v4785 = vpow.pop %v4784
    %v4786 = vmul.f32 %v4760, 1.442695
    %v4787 = vpow.pop %v4786
    %v4788 = vmul.f32 %v4761, 1.442695
    %v4789 = vpow.pop %v4788
    %v4790 = vmul.f32 %v4762, 1.442695
    %v4791 = vpow.pop %v4790
    %v4792 = vmul.f32 %v4763, 1.442695
    %v4793 = vpow.pop %v4792
    %v4794 = vmul.f32 %v4764, 1.442695
    %v4795 = vpow.pop %v4794
    %v4796 = vmul.f32 %v4765, 1.442695
    %v4797 = vpow.pop %v4796
    %v4798 = vsel %vm241, %v4767, 0.0
    %4799 = vadd.xlane.f32.xlu0 %v4798
    %v4800 = vpop.xlane.xlu0 %4799
    %v4801 = vsel %vm241, %v4769, 0.0
    %4802 = vadd.xlane.f32.xlu0 %v4801
    %v4803 = vpop.xlane.xlu0 %4802
    %v4804 = vsel %vm241, %v4771, 0.0
    %4805 = vadd.xlane.f32.xlu0 %v4804
    %v4806 = vpop.xlane.xlu0 %4805
    %v4807 = vsel %vm241, %v4773, 0.0
    %4808 = vadd.xlane.f32.xlu0 %v4807
    %v4809 = vpop.xlane.xlu0 %4808
    %v4810 = vsel %vm241, %v4775, 0.0
    %4811 = vadd.xlane.f32.xlu0 %v4810
    %v4812 = vpop.xlane.xlu0 %4811
    %v4813 = vsel %vm241, %v4777, 0.0
    %4814 = vadd.xlane.f32.xlu0 %v4813
    %v4815 = vpop.xlane.xlu0 %4814
    %v4816 = vsel %vm241, %v4779, 0.0
    %4817 = vadd.xlane.f32.xlu0 %v4816
    %v4818 = vpop.xlane.xlu0 %4817
    %v4819 = vsel %vm241, %v4781, 0.0
    %4820 = vadd.xlane.f32.xlu0 %v4819
    %v4821 = vpop.xlane.xlu0 %4820
    %v4822 = vsel %vm241, %v4783, 0.0
    %4823 = vadd.xlane.f32.xlu0 %v4822
    %v4824 = vpop.xlane.xlu0 %4823
    %v4825 = vsel %vm241, %v4785, 0.0
    %4826 = vadd.xlane.f32.xlu0 %v4825
    %v4827 = vpop.xlane.xlu0 %4826
    %v4828 = vsel %vm241, %v4787, 0.0
    %4829 = vadd.xlane.f32.xlu0 %v4828
    %v4830 = vpop.xlane.xlu0 %4829
    %v4831 = vsel %vm241, %v4789, 0.0
    %4832 = vadd.xlane.f32.xlu0 %v4831
    %v4833 = vpop.xlane.xlu0 %4832
    %v4834 = vsel %vm241, %v4791, 0.0
    %4835 = vadd.xlane.f32.xlu0 %v4834
    %v4836 = vpop.xlane.xlu0 %4835
    %v4837 = vsel %vm241, %v4793, 0.0
    %4838 = vadd.xlane.f32.xlu0 %v4837
    %v4839 = vpop.xlane.xlu0 %4838
    %v4840 = vsel %vm241, %v4795, 0.0
    %4841 = vadd.xlane.f32.xlu0 %v4840
    %v4842 = vpop.xlane.xlu0 %4841
    %v4843 = vsel %vm241, %v4797, 0.0
    %4844 = vadd.xlane.f32.xlu0 %v4843
    %v4845 = vpop.xlane.xlu0 %4844
    %v4846 = vrcp.pop %v4800
    %v4847 = vrcp.pop %v4803
    %v4848 = vrcp.pop %v4806
    %v4849 = vrcp.pop %v4809
    %v4850 = vrcp.pop %v4812
    %v4851 = vrcp.pop %v4815
    %v4852 = vrcp.pop %v4818
    %v4853 = vrcp.pop %v4821
    %v4854 = vrcp.pop %v4824
    %v4855 = vrcp.pop %v4827
    %v4856 = vrcp.pop %v4830
    %v4857 = vrcp.pop %v4833
    %v4858 = vrcp.pop %v4836
    %v4859 = vrcp.pop %v4839
    %v4860 = vrcp.pop %v4842
    %v4861 = vrcp.pop %v4845
    %v4862 = vmul.f32 %v4767, %v4846
    %v4863 = vmul.f32 %v4769, %v4847
    %v4864 = vmul.f32 %v4771, %v4848
    %v4865 = vmul.f32 %v4773, %v4849
    %v4866 = vmul.f32 %v4775, %v4850
    %v4867 = vmul.f32 %v4777, %v4851
    %v4868 = vmul.f32 %v4779, %v4852
    %v4869 = vmul.f32 %v4781, %v4853
    %v4870 = vmul.f32 %v4783, %v4854
    %v4871 = vmul.f32 %v4785, %v4855
    %v4872 = vmul.f32 %v4787, %v4856
    %v4873 = vmul.f32 %v4789, %v4857
    %v4874 = vmul.f32 %v4791, %v4858
    %v4875 = vmul.f32 %v4793, %v4859
    %v4876 = vmul.f32 %v4795, %v4860
    %v4877 = vmul.f32 %v4797, %v4861
    %v4879 = vsel %vm241, %v4862, 0
    %4881 = vmatprep.subr.mxu0 0.0
    %4882 = vmatpush1.msra.mxu0 %v3432
    %4883 = vmatprep.subr.mxu0 0.0
    %4884 = vmatpush1.msra.mxu0 0.0
    %4885 = vmatprep.subr.mxu0 0.0
    %4886 = vmatpush1.msra.mxu0 0.0
    %4887 = vmatprep.subr.mxu0 0.0
    %4888 = vmatpush1.msra.mxu0 0.0
    %4889 = vmatprep.subr.mxu0 0.0
    %4890 = vmatpush1.msra.mxu0 0.0
    %4891 = vmatprep.subr.mxu0 0.0
    %4892 = vmatpush1.msra.mxu0 0.0
    %4893 = vmatprep.subr.mxu0 0.0
    %4894 = vmatpush1.msra.mxu0 0.0
    %4895 = vmatprep.subr.mxu0 0.0
    %4896 = vmatpush1.msra.mxu0 0.0
    %4897 = vmatprep.subr.mxu0 0.0
    %4898 = vmatpush1.msra.mxu0 0.0
    %4899 = vmatprep.subr.mxu0 0.0
    %4900 = vmatpush1.msra.mxu0 0.0
    %4901 = vmatprep.subr.mxu0 0.0
    %4902 = vmatpush1.msra.mxu0 0.0
    %4903 = vmatprep.subr.mxu0 0.0
    %4904 = vmatpush1.msra.mxu0 0.0
    %4905 = vmatprep.subr.mxu0 0.0
    %4906 = vmatpush1.msra.mxu0 0.0
    %4907 = vmatprep.subr.mxu0 0.0
    %4908 = vmatpush1.msra.mxu0 0.0
    %4909 = vmatprep.subr.mxu0 0.0
    %4910 = vmatpush1.msra.mxu0 0.0
    %4911 = vmatprep.subr.mxu0 0.0
    %4912 = vmatpush1.msra.mxu0 0.0
    %4913 = vmatprep.subr.mxu0 0.0
    %4914 = vmatpush1.msra.mxu0 0.0
    %4915 = vmatprep.subr.mxu0 0.0
    %4916 = vmatpush1.msra.mxu0 0.0
    %4917 = vmatprep.subr.mxu0 0.0
    %4918 = vmatpush1.msra.mxu0 0.0
    %4919 = vmatprep.subr.mxu0 0.0
    %4920 = vmatpush1.msra.mxu0 0.0
    %4921 = vmatprep.subr.mxu0 0.0
    %4922 = vmatpush1.msra.mxu0 0.0
    %4923 = vmatprep.subr.mxu0 0.0
    %4924 = vmatpush1.msra.mxu0 0.0
    %4925 = vmatprep.subr.mxu0 0.0
    %4926 = vmatpush1.msra.mxu0 0.0
    %4927 = vmatprep.subr.mxu0 0.0
    %4928 = vmatpush1.msra.mxu0 0.0
    %4929 = vmatprep.subr.mxu0 0.0
    %4930 = vmatpush1.msra.mxu0 0.0
    %4931 = vmatprep.subr.mxu0 0.0
    %4932 = vmatpush1.msra.mxu0 0.0
    %4933 = vmatprep.subr.mxu0 0.0
    %4934 = vmatpush1.msra.mxu0 0.0
    %4935 = vmatprep.subr.mxu0 0.0
    %4936 = vmatpush1.msra.mxu0 0.0
    %4937 = vmatprep.subr.mxu0 0.0
    %4938 = vmatpush1.msra.mxu0 0.0
    %4939 = vmatprep.subr.mxu0 0.0
    %4940 = vmatpush1.msra.mxu0 0.0
    %4941 = vmatprep.subr.mxu0 0.0
    %4942 = vmatpush1.msra.mxu0 0.0
    %4943 = vmatprep.subr.mxu0 0.0
    %4944 = vmatpush1.msra.mxu0 0.0
    %4945 = vmatprep.mubr.f32.mxu0 0.0
    %4946 = vmatmul.mubr.f32.gmra.mrb[0].mxu0 %v4879
    %v4947 = vpop.f32.mrb[0].mxu0
    %v4948 = vadd.f32 0.0, %v4947
    %v4949 = vpop.f32.mrb[0].mxu0
    %4950 = vdwg.mxu0
    %v4952 = vsel %vm241, %v4870, 0
    %4954 = vmatprep.subr.mxu0 0.0
    %4955 = vmatpush1.msra.mxu0 %v3438
    %4956 = vmatprep.subr.mxu0 0.0
    %4957 = vmatpush1.msra.mxu0 0.0
    %4958 = vmatprep.subr.mxu0 0.0
    %4959 = vmatpush1.msra.mxu0 0.0
    %4960 = vmatprep.subr.mxu0 0.0
    %4961 = vmatpush1.msra.mxu0 0.0
    %4962 = vmatprep.subr.mxu0 0.0
    %4963 = vmatpush1.msra.mxu0 0.0
    %4964 = vmatprep.subr.mxu0 0.0
    %4965 = vmatpush1.msra.mxu0 0.0
    %4966 = vmatprep.subr.mxu0 0.0
    %4967 = vmatpush1.msra.mxu0 0.0
    %4968 = vmatprep.subr.mxu0 0.0
    %4969 = vmatpush1.msra.mxu0 0.0
    %4970 = vmatprep.subr.mxu0 0.0
    %4971 = vmatpush1.msra.mxu0 0.0
    %4972 = vmatprep.subr.mxu0 0.0
    %4973 = vmatpush1.msra.mxu0 0.0
    %4974 = vmatprep.subr.mxu0 0.0
    %4975 = vmatpush1.msra.mxu0 0.0
    %4976 = vmatprep.subr.mxu0 0.0
    %4977 = vmatpush1.msra.mxu0 0.0
    %4978 = vmatprep.subr.mxu0 0.0
    %4979 = vmatpush1.msra.mxu0 0.0
    %4980 = vmatprep.subr.mxu0 0.0
    %4981 = vmatpush1.msra.mxu0 0.0
    %4982 = vmatprep.subr.mxu0 0.0
    %4983 = vmatpush1.msra.mxu0 0.0
    %4984 = vmatprep.subr.mxu0 0.0
    %4985 = vmatpush1.msra.mxu0 0.0
    %4986 = vmatprep.subr.mxu0 0.0
    %4987 = vmatpush1.msra.mxu0 0.0
    %4988 = vmatprep.subr.mxu0 0.0
    %4989 = vmatpush1.msra.mxu0 0.0
    %4990 = vmatprep.subr.mxu0 0.0
    %4991 = vmatpush1.msra.mxu0 0.0
    %4992 = vmatprep.subr.mxu0 0.0
    %4993 = vmatpush1.msra.mxu0 0.0
    %4994 = vmatprep.subr.mxu0 0.0
    %4995 = vmatpush1.msra.mxu0 0.0
    %4996 = vmatprep.subr.mxu0 0.0
    %4997 = vmatpush1.msra.mxu0 0.0
    %4998 = vmatprep.subr.mxu0 0.0
    %4999 = vmatpush1.msra.mxu0 0.0
    %5000 = vmatprep.subr.mxu0 0.0
    %5001 = vmatpush1.msra.mxu0 0.0
    %5002 = vmatprep.subr.mxu0 0.0
    %5003 = vmatpush1.msra.mxu0 0.0
    %5004 = vmatprep.subr.mxu0 0.0
    %5005 = vmatpush1.msra.mxu0 0.0
    %5006 = vmatprep.subr.mxu0 0.0
    %5007 = vmatpush1.msra.mxu0 0.0
    %5008 = vmatprep.subr.mxu0 0.0
    %5009 = vmatpush1.msra.mxu0 0.0
    %5010 = vmatprep.subr.mxu0 0.0
    %5011 = vmatpush1.msra.mxu0 0.0
    %5012 = vmatprep.subr.mxu0 0.0
    %5013 = vmatpush1.msra.mxu0 0.0
    %5014 = vmatprep.subr.mxu0 0.0
    %5015 = vmatpush1.msra.mxu0 0.0
    %5016 = vmatprep.subr.mxu0 0.0
    %5017 = vmatpush1.msra.mxu0 0.0
    %5018 = vmatprep.mubr.f32.mxu0 0.0
    %5019 = vmatmul.mubr.f32.gmra.mrb[0].mxu0 %v4952
    %v5020 = vpop.f32.mrb[0].mxu0
    %v5021 = vadd.f32 0.0, %v5020
    %v5022 = vpop.f32.mrb[0].mxu0
    %5023 = vdwg.mxu0
    %5025 = vrot.lane.b32.xlu0 %v3432, 120
    %v5026 = vpop.permute.xlu0 %5025
    %v5029 = vsel %vm241, %v4863, 0
    %5031 = vmatprep.subr.mxu0 0.0
    %5032 = vmatpush1.msra.mxu0 %v5026
    %5033 = vmatprep.subr.mxu0 0.0
    %5034 = vmatpush1.msra.mxu0 0.0
    %5035 = vmatprep.subr.mxu0 0.0
    %5036 = vmatpush1.msra.mxu0 0.0
    %5037 = vmatprep.subr.mxu0 0.0
    %5038 = vmatpush1.msra.mxu0 0.0
    %5039 = vmatprep.subr.mxu0 0.0
    %5040 = vmatpush1.msra.mxu0 0.0
    %5041 = vmatprep.subr.mxu0 0.0
    %5042 = vmatpush1.msra.mxu0 0.0
    %5043 = vmatprep.subr.mxu0 0.0
    %5044 = vmatpush1.msra.mxu0 0.0
    %5045 = vmatprep.subr.mxu0 0.0
    %5046 = vmatpush1.msra.mxu0 0.0
    %5047 = vmatprep.subr.mxu0 0.0
    %5048 = vmatpush1.msra.mxu0 0.0
    %5049 = vmatprep.subr.mxu0 0.0
    %5050 = vmatpush1.msra.mxu0 0.0
    %5051 = vmatprep.subr.mxu0 0.0
    %5052 = vmatpush1.msra.mxu0 0.0
    %5053 = vmatprep.subr.mxu0 0.0
    %5054 = vmatpush1.msra.mxu0 0.0
    %5055 = vmatprep.subr.mxu0 0.0
    %5056 = vmatpush1.msra.mxu0 0.0
    %5057 = vmatprep.subr.mxu0 0.0
    %5058 = vmatpush1.msra.mxu0 0.0
    %5059 = vmatprep.subr.mxu0 0.0
    %5060 = vmatpush1.msra.mxu0 0.0
    %5061 = vmatprep.subr.mxu0 0.0
    %5062 = vmatpush1.msra.mxu0 0.0
    %5063 = vmatprep.subr.mxu0 0.0
    %5064 = vmatpush1.msra.mxu0 0.0
    %5065 = vmatprep.subr.mxu0 0.0
    %5066 = vmatpush1.msra.mxu0 0.0
    %5067 = vmatprep.subr.mxu0 0.0
    %5068 = vmatpush1.msra.mxu0 0.0
    %5069 = vmatprep.subr.mxu0 0.0
    %5070 = vmatpush1.msra.mxu0 0.0
    %5071 = vmatprep.subr.mxu0 0.0
    %5072 = vmatpush1.msra.mxu0 0.0
    %5073 = vmatprep.subr.mxu0 0.0
    %5074 = vmatpush1.msra.mxu0 0.0
    %5075 = vmatprep.subr.mxu0 0.0
    %5076 = vmatpush1.msra.mxu0 0.0
    %5077 = vmatprep.subr.mxu0 0.0
    %5078 = vmatpush1.msra.mxu0 0.0
    %5079 = vmatprep.subr.mxu0 0.0
    %5080 = vmatpush1.msra.mxu0 0.0
    %5081 = vmatprep.subr.mxu0 0.0
    %5082 = vmatpush1.msra.mxu0 0.0
    %5083 = vmatprep.subr.mxu0 0.0
    %5084 = vmatpush1.msra.mxu0 0.0
    %5085 = vmatprep.subr.mxu0 0.0
    %5086 = vmatpush1.msra.mxu0 0.0
    %5087 = vmatprep.subr.mxu0 0.0
    %5088 = vmatpush1.msra.mxu0 0.0
    %5089 = vmatprep.subr.mxu0 0.0
    %5090 = vmatpush1.msra.mxu0 0.0
    %5091 = vmatprep.subr.mxu0 0.0
    %5092 = vmatpush1.msra.mxu0 0.0
    %5093 = vmatprep.subr.mxu0 0.0
    %5094 = vmatpush1.msra.mxu0 0.0
    %5095 = vmatprep.mubr.f32.mxu0 0.0
    %5096 = vmatmul.mubr.f32.gmra.mrb[0].mxu0 %v5029
    %v5097 = vpop.f32.mrb[0].mxu0
    %v5098 = vadd.f32 0.0, %v5097
    %v5099 = vpop.f32.mrb[0].mxu0
    %5100 = vdwg.mxu0
    %5102 = vrot.lane.b32.xlu0 %v3438, 120
    %v5103 = vpop.permute.xlu0 %5102
    %v5106 = vsel %vm241, %v4871, 0
    %5108 = vmatprep.subr.mxu0 0.0
    %5109 = vmatpush1.msra.mxu0 %v5103
    %5110 = vmatprep.subr.mxu0 0.0
    %5111 = vmatpush1.msra.mxu0 0.0
    %5112 = vmatprep.subr.mxu0 0.0
    %5113 = vmatpush1.msra.mxu0 0.0
    %5114 = vmatprep.subr.mxu0 0.0
    %5115 = vmatpush1.msra.mxu0 0.0
    %5116 = vmatprep.subr.mxu0 0.0
    %5117 = vmatpush1.msra.mxu0 0.0
    %5118 = vmatprep.subr.mxu0 0.0
    %5119 = vmatpush1.msra.mxu0 0.0
    %5120 = vmatprep.subr.mxu0 0.0
    %5121 = vmatpush1.msra.mxu0 0.0
    %5122 = vmatprep.subr.mxu0 0.0
    %5123 = vmatpush1.msra.mxu0 0.0
    %5124 = vmatprep.subr.mxu0 0.0
    %5125 = vmatpush1.msra.mxu0 0.0
    %5126 = vmatprep.subr.mxu0 0.0
    %5127 = vmatpush1.msra.mxu0 0.0
    %5128 = vmatprep.subr.mxu0 0.0
    %5129 = vmatpush1.msra.mxu0 0.0
    %5130 = vmatprep.subr.mxu0 0.0
    %5131 = vmatpush1.msra.mxu0 0.0
    %5132 = vmatprep.subr.mxu0 0.0
    %5133 = vmatpush1.msra.mxu0 0.0
    %5134 = vmatprep.subr.mxu0 0.0
    %5135 = vmatpush1.msra.mxu0 0.0
    %5136 = vmatprep.subr.mxu0 0.0
    %5137 = vmatpush1.msra.mxu0 0.0
    %5138 = vmatprep.subr.mxu0 0.0
    %5139 = vmatpush1.msra.mxu0 0.0
    %5140 = vmatprep.subr.mxu0 0.0
    %5141 = vmatpush1.msra.mxu0 0.0
    %5142 = vmatprep.subr.mxu0 0.0
    %5143 = vmatpush1.msra.mxu0 0.0
    %5144 = vmatprep.subr.mxu0 0.0
    %5145 = vmatpush1.msra.mxu0 0.0
    %5146 = vmatprep.subr.mxu0 0.0
    %5147 = vmatpush1.msra.mxu0 0.0
    %5148 = vmatprep.subr.mxu0 0.0
    %5149 = vmatpush1.msra.mxu0 0.0
    %5150 = vmatprep.subr.mxu0 0.0
    %5151 = vmatpush1.msra.mxu0 0.0
    %5152 = vmatprep.subr.mxu0 0.0
    %5153 = vmatpush1.msra.mxu0 0.0
    %5154 = vmatprep.subr.mxu0 0.0
    %5155 = vmatpush1.msra.mxu0 0.0
    %5156 = vmatprep.subr.mxu0 0.0
    %5157 = vmatpush1.msra.mxu0 0.0
    %5158 = vmatprep.subr.mxu0 0.0
    %5159 = vmatpush1.msra.mxu0 0.0
    %5160 = vmatprep.subr.mxu0 0.0
    %5161 = vmatpush1.msra.mxu0 0.0
    %5162 = vmatprep.subr.mxu0 0.0
    %5163 = vmatpush1.msra.mxu0 0.0
    %5164 = vmatprep.subr.mxu0 0.0
    %5165 = vmatpush1.msra.mxu0 0.0
    %5166 = vmatprep.subr.mxu0 0.0
    %5167 = vmatpush1.msra.mxu0 0.0
    %5168 = vmatprep.subr.mxu0 0.0
    %5169 = vmatpush1.msra.mxu0 0.0
    %5170 = vmatprep.subr.mxu0 0.0
    %5171 = vmatpush1.msra.mxu0 0.0
    %5172 = vmatprep.mubr.f32.mxu0 0.0
    %5173 = vmatmul.mubr.f32.gmra.mrb[0].mxu0 %v5106
    %v5174 = vpop.f32.mrb[0].mxu0
    %v5175 = vadd.f32 0.0, %v5174
    %v5176 = vpop.f32.mrb[0].mxu0
    %5177 = vdwg.mxu0
    %5178 = vrot.lane.b32.xlu0 %v3432, 112
    %v5179 = vpop.permute.xlu0 %5178
    %v5182 = vsel %vm241, %v4864, 0
    %5184 = vmatprep.subr.mxu0 0.0
    %5185 = vmatpush1.msra.mxu0 %v5179
    %5186 = vmatprep.subr.mxu0 0.0
    %5187 = vmatpush1.msra.mxu0 0.0
    %5188 = vmatprep.subr.mxu0 0.0
    %5189 = vmatpush1.msra.mxu0 0.0
    %5190 = vmatprep.subr.mxu0 0.0
    %5191 = vmatpush1.msra.mxu0 0.0
    %5192 = vmatprep.subr.mxu0 0.0
    %5193 = vmatpush1.msra.mxu0 0.0
    %5194 = vmatprep.subr.mxu0 0.0
    %5195 = vmatpush1.msra.mxu0 0.0
    %5196 = vmatprep.subr.mxu0 0.0
    %5197 = vmatpush1.msra.mxu0 0.0
    %5198 = vmatprep.subr.mxu0 0.0
    %5199 = vmatpush1.msra.mxu0 0.0
    %5200 = vmatprep.subr.mxu0 0.0
    %5201 = vmatpush1.msra.mxu0 0.0
    %5202 = vmatprep.subr.mxu0 0.0
    %5203 = vmatpush1.msra.mxu0 0.0
    %5204 = vmatprep.subr.mxu0 0.0
    %5205 = vmatpush1.msra.mxu0 0.0
    %5206 = vmatprep.subr.mxu0 0.0
    %5207 = vmatpush1.msra.mxu0 0.0
    %5208 = vmatprep.subr.mxu0 0.0
    %5209 = vmatpush1.msra.mxu0 0.0
    %5210 = vmatprep.subr.mxu0 0.0
    %5211 = vmatpush1.msra.mxu0 0.0
    %5212 = vmatprep.subr.mxu0 0.0
    %5213 = vmatpush1.msra.mxu0 0.0
    %5214 = vmatprep.subr.mxu0 0.0
    %5215 = vmatpush1.msra.mxu0 0.0
    %5216 = vmatprep.subr.mxu0 0.0
    %5217 = vmatpush1.msra.mxu0 0.0
    %5218 = vmatprep.subr.mxu0 0.0
    %5219 = vmatpush1.msra.mxu0 0.0
    %5220 = vmatprep.subr.mxu0 0.0
    %5221 = vmatpush1.msra.mxu0 0.0
    %5222 = vmatprep.subr.mxu0 0.0
    %5223 = vmatpush1.msra.mxu0 0.0
    %5224 = vmatprep.subr.mxu0 0.0
    %5225 = vmatpush1.msra.mxu0 0.0
    %5226 = vmatprep.subr.mxu0 0.0
    %5227 = vmatpush1.msra.mxu0 0.0
    %5228 = vmatprep.subr.mxu0 0.0
    %5229 = vmatpush1.msra.mxu0 0.0
    %5230 = vmatprep.subr.mxu0 0.0
    %5231 = vmatpush1.msra.mxu0 0.0
    %5232 = vmatprep.subr.mxu0 0.0
    %5233 = vmatpush1.msra.mxu0 0.0
    %5234 = vmatprep.subr.mxu0 0.0
    %5235 = vmatpush1.msra.mxu0 0.0
    %5236 = vmatprep.subr.mxu0 0.0
    %5237 = vmatpush1.msra.mxu0 0.0
    %5238 = vmatprep.subr.mxu0 0.0
    %5239 = vmatpush1.msra.mxu0 0.0
    %5240 = vmatprep.subr.mxu0 0.0
    %5241 = vmatpush1.msra.mxu0 0.0
    %5242 = vmatprep.subr.mxu0 0.0
    %5243 = vmatpush1.msra.mxu0 0.0
    %5244 = vmatprep.subr.mxu0 0.0
    %5245 = vmatpush1.msra.mxu0 0.0
    %5246 = vmatprep.subr.mxu0 0.0
    %5247 = vmatpush1.msra.mxu0 0.0
    %5248 = vmatprep.mubr.f32.mxu0 0.0
    %5249 = vmatmul.mubr.f32.gmra.mrb[0].mxu0 %v5182
    %v5250 = vpop.f32.mrb[0].mxu0
    %v5251 = vadd.f32 0.0, %v5250
    %v5252 = vpop.f32.mrb[0].mxu0
    %5253 = vdwg.mxu0
    %5254 = vrot.lane.b32.xlu0 %v3438, 112
    %v5255 = vpop.permute.xlu0 %5254
    %v5258 = vsel %vm241, %v4872, 0
    %5260 = vmatprep.subr.mxu0 0.0
    %5261 = vmatpush1.msra.mxu0 %v5255
    %5262 = vmatprep.subr.mxu0 0.0
    %5263 = vmatpush1.msra.mxu0 0.0
    %5264 = vmatprep.subr.mxu0 0.0
    %5265 = vmatpush1.msra.mxu0 0.0
    %5266 = vmatprep.subr.mxu0 0.0
    %5267 = vmatpush1.msra.mxu0 0.0
    %5268 = vmatprep.subr.mxu0 0.0
    %5269 = vmatpush1.msra.mxu0 0.0
    %5270 = vmatprep.subr.mxu0 0.0
    %5271 = vmatpush1.msra.mxu0 0.0
    %5272 = vmatprep.subr.mxu0 0.0
    %5273 = vmatpush1.msra.mxu0 0.0
    %5274 = vmatprep.subr.mxu0 0.0
    %5275 = vmatpush1.msra.mxu0 0.0
    %5276 = vmatprep.subr.mxu0 0.0
    %5277 = vmatpush1.msra.mxu0 0.0
    %5278 = vmatprep.subr.mxu0 0.0
    %5279 = vmatpush1.msra.mxu0 0.0
    %5280 = vmatprep.subr.mxu0 0.0
    %5281 = vmatpush1.msra.mxu0 0.0
    %5282 = vmatprep.subr.mxu0 0.0
    %5283 = vmatpush1.msra.mxu0 0.0
    %5284 = vmatprep.subr.mxu0 0.0
    %5285 = vmatpush1.msra.mxu0 0.0
    %5286 = vmatprep.subr.mxu0 0.0
    %5287 = vmatpush1.msra.mxu0 0.0
    %5288 = vmatprep.subr.mxu0 0.0
    %5289 = vmatpush1.msra.mxu0 0.0
    %5290 = vmatprep.subr.mxu0 0.0
    %5291 = vmatpush1.msra.mxu0 0.0
    %5292 = vmatprep.subr.mxu0 0.0
    %5293 = vmatpush1.msra.mxu0 0.0
    %5294 = vmatprep.subr.mxu0 0.0
    %5295 = vmatpush1.msra.mxu0 0.0
    %5296 = vmatprep.subr.mxu0 0.0
    %5297 = vmatpush1.msra.mxu0 0.0
    %5298 = vmatprep.subr.mxu0 0.0
    %5299 = vmatpush1.msra.mxu0 0.0
    %5300 = vmatprep.subr.mxu0 0.0
    %5301 = vmatpush1.msra.mxu0 0.0
    %5302 = vmatprep.subr.mxu0 0.0
    %5303 = vmatpush1.msra.mxu0 0.0
    %5304 = vmatprep.subr.mxu0 0.0
    %5305 = vmatpush1.msra.mxu0 0.0
    %5306 = vmatprep.subr.mxu0 0.0
    %5307 = vmatpush1.msra.mxu0 0.0
    %5308 = vmatprep.subr.mxu0 0.0
    %5309 = vmatpush1.msra.mxu0 0.0
    %5310 = vmatprep.subr.mxu0 0.0
    %5311 = vmatpush1.msra.mxu0 0.0
    %5312 = vmatprep.subr.mxu0 0.0
    %5313 = vmatpush1.msra.mxu0 0.0
    %5314 = vmatprep.subr.mxu0 0.0
    %5315 = vmatpush1.msra.mxu0 0.0
    %5316 = vmatprep.subr.mxu0 0.0
    %5317 = vmatpush1.msra.mxu0 0.0
    %5318 = vmatprep.subr.mxu0 0.0
    %5319 = vmatpush1.msra.mxu0 0.0
    %5320 = vmatprep.subr.mxu0 0.0
    %5321 = vmatpush1.msra.mxu0 0.0
    %5322 = vmatprep.subr.mxu0 0.0
    %5323 = vmatpush1.msra.mxu0 0.0
    %5324 = vmatprep.mubr.f32.mxu0 0.0
    %5325 = vmatmul.mubr.f32.gmra.mrb[0].mxu0 %v5258
    %v5326 = vpop.f32.mrb[0].mxu0
    %v5327 = vadd.f32 0.0, %v5326
    %v5328 = vpop.f32.mrb[0].mxu0
    %5329 = vdwg.mxu0
    %5330 = vrot.lane.b32.xlu0 %v3432, 104
    %v5331 = vpop.permute.xlu0 %5330
    %v5334 = vsel %vm241, %v4865, 0
    %5336 = vmatprep.subr.mxu0 0.0
    %5337 = vmatpush1.msra.mxu0 %v5331
    %5338 = vmatprep.subr.mxu0 0.0
    %5339 = vmatpush1.msra.mxu0 0.0
    %5340 = vmatprep.subr.mxu0 0.0
    %5341 = vmatpush1.msra.mxu0 0.0
    %5342 = vmatprep.subr.mxu0 0.0
    %5343 = vmatpush1.msra.mxu0 0.0
    %5344 = vmatprep.subr.mxu0 0.0
    %5345 = vmatpush1.msra.mxu0 0.0
    %5346 = vmatprep.subr.mxu0 0.0
    %5347 = vmatpush1.msra.mxu0 0.0
    %5348 = vmatprep.subr.mxu0 0.0
    %5349 = vmatpush1.msra.mxu0 0.0
    %5350 = vmatprep.subr.mxu0 0.0
    %5351 = vmatpush1.msra.mxu0 0.0
    %5352 = vmatprep.subr.mxu0 0.0
    %5353 = vmatpush1.msra.mxu0 0.0
    %5354 = vmatprep.subr.mxu0 0.0
    %5355 = vmatpush1.msra.mxu0 0.0
    %5356 = vmatprep.subr.mxu0 0.0
    %5357 = vmatpush1.msra.mxu0 0.0
    %5358 = vmatprep.subr.mxu0 0.0
    %5359 = vmatpush1.msra.mxu0 0.0
    %5360 = vmatprep.subr.mxu0 0.0
    %5361 = vmatpush1.msra.mxu0 0.0
    %5362 = vmatprep.subr.mxu0 0.0
    %5363 = vmatpush1.msra.mxu0 0.0
    %5364 = vmatprep.subr.mxu0 0.0
    %5365 = vmatpush1.msra.mxu0 0.0
    %5366 = vmatprep.subr.mxu0 0.0
    %5367 = vmatpush1.msra.mxu0 0.0
    %5368 = vmatprep.subr.mxu0 0.0
    %5369 = vmatpush1.msra.mxu0 0.0
    %5370 = vmatprep.subr.mxu0 0.0
    %5371 = vmatpush1.msra.mxu0 0.0
    %5372 = vmatprep.subr.mxu0 0.0
    %5373 = vmatpush1.msra.mxu0 0.0
    %5374 = vmatprep.subr.mxu0 0.0
    %5375 = vmatpush1.msra.mxu0 0.0
    %5376 = vmatprep.subr.mxu0 0.0
    %5377 = vmatpush1.msra.mxu0 0.0
    %5378 = vmatprep.subr.mxu0 0.0
    %5379 = vmatpush1.msra.mxu0 0.0
    %5380 = vmatprep.subr.mxu0 0.0
    %5381 = vmatpush1.msra.mxu0 0.0
    %5382 = vmatprep.subr.mxu0 0.0
    %5383 = vmatpush1.msra.mxu0 0.0
    %5384 = vmatprep.subr.mxu0 0.0
    %5385 = vmatpush1.msra.mxu0 0.0
    %5386 = vmatprep.subr.mxu0 0.0
    %5387 = vmatpush1.msra.mxu0 0.0
    %5388 = vmatprep.subr.mxu0 0.0
    %5389 = vmatpush1.msra.mxu0 0.0
    %5390 = vmatprep.subr.mxu0 0.0
    %5391 = vmatpush1.msra.mxu0 0.0
    %5392 = vmatprep.subr.mxu0 0.0
    %5393 = vmatpush1.msra.mxu0 0.0
    %5394 = vmatprep.subr.mxu0 0.0
    %5395 = vmatpush1.msra.mxu0 0.0
    %5396 = vmatprep.subr.mxu0 0.0
    %5397 = vmatpush1.msra.mxu0 0.0
    %5398 = vmatprep.subr.mxu0 0.0
    %5399 = vmatpush1.msra.mxu0 0.0
    %5400 = vmatprep.mubr.f32.mxu0 0.0
    %5401 = vmatmul.mubr.f32.gmra.mrb[0].mxu0 %v5334
    %v5402 = vpop.f32.mrb[0].mxu0
    %v5403 = vadd.f32 0.0, %v5402
    %v5404 = vpop.f32.mrb[0].mxu0
    %5405 = vdwg.mxu0
    %5406 = vrot.lane.b32.xlu0 %v3438, 104
    %v5407 = vpop.permute.xlu0 %5406
    %v5410 = vsel %vm241, %v4873, 0
    %5412 = vmatprep.subr.mxu0 0.0
    %5413 = vmatpush1.msra.mxu0 %v5407
    %5414 = vmatprep.subr.mxu0 0.0
    %5415 = vmatpush1.msra.mxu0 0.0
    %5416 = vmatprep.subr.mxu0 0.0
    %5417 = vmatpush1.msra.mxu0 0.0
    %5418 = vmatprep.subr.mxu0 0.0
    %5419 = vmatpush1.msra.mxu0 0.0
    %5420 = vmatprep.subr.mxu0 0.0
    %5421 = vmatpush1.msra.mxu0 0.0
    %5422 = vmatprep.subr.mxu0 0.0
    %5423 = vmatpush1.msra.mxu0 0.0
    %5424 = vmatprep.subr.mxu0 0.0
    %5425 = vmatpush1.msra.mxu0 0.0
    %5426 = vmatprep.subr.mxu0 0.0
    %5427 = vmatpush1.msra.mxu0 0.0
    %5428 = vmatprep.subr.mxu0 0.0
    %5429 = vmatpush1.msra.mxu0 0.0
    %5430 = vmatprep.subr.mxu0 0.0
    %5431 = vmatpush1.msra.mxu0 0.0
    %5432 = vmatprep.subr.mxu0 0.0
    %5433 = vmatpush1.msra.mxu0 0.0
    %5434 = vmatprep.subr.mxu0 0.0
    %5435 = vmatpush1.msra.mxu0 0.0
    %5436 = vmatprep.subr.mxu0 0.0
    %5437 = vmatpush1.msra.mxu0 0.0
    %5438 = vmatprep.subr.mxu0 0.0
    %5439 = vmatpush1.msra.mxu0 0.0
    %5440 = vmatprep.subr.mxu0 0.0
    %5441 = vmatpush1.msra.mxu0 0.0
    %5442 = vmatprep.subr.mxu0 0.0
    %5443 = vmatpush1.msra.mxu0 0.0
    %5444 = vmatprep.subr.mxu0 0.0
    %5445 = vmatpush1.msra.mxu0 0.0
    %5446 = vmatprep.subr.mxu0 0.0
    %5447 = vmatpush1.msra.mxu0 0.0
    %5448 = vmatprep.subr.mxu0 0.0
    %5449 = vmatpush1.msra.mxu0 0.0
    %5450 = vmatprep.subr.mxu0 0.0
    %5451 = vmatpush1.msra.mxu0 0.0
    %5452 = vmatprep.subr.mxu0 0.0
    %5453 = vmatpush1.msra.mxu0 0.0
    %5454 = vmatprep.subr.mxu0 0.0
    %5455 = vmatpush1.msra.mxu0 0.0
    %5456 = vmatprep.subr.mxu0 0.0
    %5457 = vmatpush1.msra.mxu0 0.0
    %5458 = vmatprep.subr.mxu0 0.0
    %5459 = vmatpush1.msra.mxu0 0.0
    %5460 = vmatprep.subr.mxu0 0.0
    %5461 = vmatpush1.msra.mxu0 0.0
    %5462 = vmatprep.subr.mxu0 0.0
    %5463 = vmatpush1.msra.mxu0 0.0
    %5464 = vmatprep.subr.mxu0 0.0
    %5465 = vmatpush1.msra.mxu0 0.0
    %5466 = vmatprep.subr.mxu0 0.0
    %5467 = vmatpush1.msra.mxu0 0.0
    %5468 = vmatprep.subr.mxu0 0.0
    %5469 = vmatpush1.msra.mxu0 0.0
    %5470 = vmatprep.subr.mxu0 0.0
    %5471 = vmatpush1.msra.mxu0 0.0
    %5472 = vmatprep.subr.mxu0 0.0
    %5473 = vmatpush1.msra.mxu0 0.0
    %5474 = vmatprep.subr.mxu0 0.0
    %5475 = vmatpush1.msra.mxu0 0.0
    %5476 = vmatprep.mubr.f32.mxu0 0.0
    %5477 = vmatmul.mubr.f32.gmra.mrb[0].mxu0 %v5410
    %v5478 = vpop.f32.mrb[0].mxu0
    %v5479 = vadd.f32 0.0, %v5478
    %v5480 = vpop.f32.mrb[0].mxu0
    %5481 = vdwg.mxu0
    %5482 = vrot.lane.b32.xlu0 %v3432, 96
    %v5483 = vpop.permute.xlu0 %5482
    %v5486 = vsel %vm241, %v4866, 0
    %5488 = vmatprep.subr.mxu0 0.0
    %5489 = vmatpush1.msra.mxu0 %v5483
    %5490 = vmatprep.subr.mxu0 0.0
    %5491 = vmatpush1.msra.mxu0 0.0
    %5492 = vmatprep.subr.mxu0 0.0
    %5493 = vmatpush1.msra.mxu0 0.0
    %5494 = vmatprep.subr.mxu0 0.0
    %5495 = vmatpush1.msra.mxu0 0.0
    %5496 = vmatprep.subr.mxu0 0.0
    %5497 = vmatpush1.msra.mxu0 0.0
    %5498 = vmatprep.subr.mxu0 0.0
    %5499 = vmatpush1.msra.mxu0 0.0
    %5500 = vmatprep.subr.mxu0 0.0
    %5501 = vmatpush1.msra.mxu0 0.0
    %5502 = vmatprep.subr.mxu0 0.0
    %5503 = vmatpush1.msra.mxu0 0.0
    %5504 = vmatprep.subr.mxu0 0.0
    %5505 = vmatpush1.msra.mxu0 0.0
    %5506 = vmatprep.subr.mxu0 0.0
    %5507 = vmatpush1.msra.mxu0 0.0
    %5508 = vmatprep.subr.mxu0 0.0
    %5509 = vmatpush1.msra.mxu0 0.0
    %5510 = vmatprep.subr.mxu0 0.0
    %5511 = vmatpush1.msra.mxu0 0.0
    %5512 = vmatprep.subr.mxu0 0.0
    %5513 = vmatpush1.msra.mxu0 0.0
    %5514 = vmatprep.subr.mxu0 0.0
    %5515 = vmatpush1.msra.mxu0 0.0
    %5516 = vmatprep.subr.mxu0 0.0
    %5517 = vmatpush1.msra.mxu0 0.0
    %5518 = vmatprep.subr.mxu0 0.0
    %5519 = vmatpush1.msra.mxu0 0.0
    %5520 = vmatprep.subr.mxu0 0.0
    %5521 = vmatpush1.msra.mxu0 0.0
    %5522 = vmatprep.subr.mxu0 0.0
    %5523 = vmatpush1.msra.mxu0 0.0
    %5524 = vmatprep.subr.mxu0 0.0
    %5525 = vmatpush1.msra.mxu0 0.0
    %5526 = vmatprep.subr.mxu0 0.0
    %5527 = vmatpush1.msra.mxu0 0.0
    %5528 = vmatprep.subr.mxu0 0.0
    %5529 = vmatpush1.msra.mxu0 0.0
    %5530 = vmatprep.subr.mxu0 0.0
    %5531 = vmatpush1.msra.mxu0 0.0
    %5532 = vmatprep.subr.mxu0 0.0
    %5533 = vmatpush1.msra.mxu0 0.0
    %5534 = vmatprep.subr.mxu0 0.0
    %5535 = vmatpush1.msra.mxu0 0.0
    %5536 = vmatprep.subr.mxu0 0.0
    %5537 = vmatpush1.msra.mxu0 0.0
    %5538 = vmatprep.subr.mxu0 0.0
    %5539 = vmatpush1.msra.mxu0 0.0
    %5540 = vmatprep.subr.mxu0 0.0
    %5541 = vmatpush1.msra.mxu0 0.0
    %5542 = vmatprep.subr.mxu0 0.0
    %5543 = vmatpush1.msra.mxu0 0.0
    %5544 = vmatprep.subr.mxu0 0.0
    %5545 = vmatpush1.msra.mxu0 0.0
    %5546 = vmatprep.subr.mxu0 0.0
    %5547 = vmatpush1.msra.mxu0 0.0
    %5548 = vmatprep.subr.mxu0 0.0
    %5549 = vmatpush1.msra.mxu0 0.0
    %5550 = vmatprep.subr.mxu0 0.0
    %5551 = vmatpush1.msra.mxu0 0.0
    %5552 = vmatprep.mubr.f32.mxu0 0.0
    %5553 = vmatmul.mubr.f32.gmra.mrb[0].mxu0 %v5486
    %v5554 = vpop.f32.mrb[0].mxu0
    %v5555 = vadd.f32 0.0, %v5554
    %v5556 = vpop.f32.mrb[0].mxu0
    %5557 = vdwg.mxu0
    %5558 = vrot.lane.b32.xlu0 %v3438, 96
    %v5559 = vpop.permute.xlu0 %5558
    %v5562 = vsel %vm241, %v4874, 0
    %5564 = vmatprep.subr.mxu0 0.0
    %5565 = vmatpush1.msra.mxu0 %v5559
    %5566 = vmatprep.subr.mxu0 0.0
    %5567 = vmatpush1.msra.mxu0 0.0
    %5568 = vmatprep.subr.mxu0 0.0
    %5569 = vmatpush1.msra.mxu0 0.0
    %5570 = vmatprep.subr.mxu0 0.0
    %5571 = vmatpush1.msra.mxu0 0.0
    %5572 = vmatprep.subr.mxu0 0.0
    %5573 = vmatpush1.msra.mxu0 0.0
    %5574 = vmatprep.subr.mxu0 0.0
    %5575 = vmatpush1.msra.mxu0 0.0
    %5576 = vmatprep.subr.mxu0 0.0
    %5577 = vmatpush1.msra.mxu0 0.0
    %5578 = vmatprep.subr.mxu0 0.0
    %5579 = vmatpush1.msra.mxu0 0.0
    %5580 = vmatprep.subr.mxu0 0.0
    %5581 = vmatpush1.msra.mxu0 0.0
    %5582 = vmatprep.subr.mxu0 0.0
    %5583 = vmatpush1.msra.mxu0 0.0
    %5584 = vmatprep.subr.mxu0 0.0
    %5585 = vmatpush1.msra.mxu0 0.0
    %5586 = vmatprep.subr.mxu0 0.0
    %5587 = vmatpush1.msra.mxu0 0.0
    %5588 = vmatprep.subr.mxu0 0.0
    %5589 = vmatpush1.msra.mxu0 0.0
    %5590 = vmatprep.subr.mxu0 0.0
    %5591 = vmatpush1.msra.mxu0 0.0
    %5592 = vmatprep.subr.mxu0 0.0
    %5593 = vmatpush1.msra.mxu0 0.0
    %5594 = vmatprep.subr.mxu0 0.0
    %5595 = vmatpush1.msra.mxu0 0.0
    %5596 = vmatprep.subr.mxu0 0.0
    %5597 = vmatpush1.msra.mxu0 0.0
    %5598 = vmatprep.subr.mxu0 0.0
    %5599 = vmatpush1.msra.mxu0 0.0
    %5600 = vmatprep.subr.mxu0 0.0
    %5601 = vmatpush1.msra.mxu0 0.0
    %5602 = vmatprep.subr.mxu0 0.0
    %5603 = vmatpush1.msra.mxu0 0.0
    %5604 = vmatprep.subr.mxu0 0.0
    %5605 = vmatpush1.msra.mxu0 0.0
    %5606 = vmatprep.subr.mxu0 0.0
    %5607 = vmatpush1.msra.mxu0 0.0
    %5608 = vmatprep.subr.mxu0 0.0
    %5609 = vmatpush1.msra.mxu0 0.0
    %5610 = vmatprep.subr.mxu0 0.0
    %5611 = vmatpush1.msra.mxu0 0.0
    %5612 = vmatprep.subr.mxu0 0.0
    %5613 = vmatpush1.msra.mxu0 0.0
    %5614 = vmatprep.subr.mxu0 0.0
    %5615 = vmatpush1.msra.mxu0 0.0
    %5616 = vmatprep.subr.mxu0 0.0
    %5617 = vmatpush1.msra.mxu0 0.0
    %5618 = vmatprep.subr.mxu0 0.0
    %5619 = vmatpush1.msra.mxu0 0.0
    %5620 = vmatprep.subr.mxu0 0.0
    %5621 = vmatpush1.msra.mxu0 0.0
    %5622 = vmatprep.subr.mxu0 0.0
    %5623 = vmatpush1.msra.mxu0 0.0
    %5624 = vmatprep.subr.mxu0 0.0
    %5625 = vmatpush1.msra.mxu0 0.0
    %5626 = vmatprep.subr.mxu0 0.0
    %5627 = vmatpush1.msra.mxu0 0.0
    %5628 = vmatprep.mubr.f32.mxu0 0.0
    %5629 = vmatmul.mubr.f32.gmra.mrb[0].mxu0 %v5562
    %v5630 = vpop.f32.mrb[0].mxu0
    %v5631 = vadd.f32 0.0, %v5630
    %v5632 = vpop.f32.mrb[0].mxu0
    %5633 = vdwg.mxu0
    %5634 = vrot.lane.b32.xlu0 %v3432, 88
    %v5635 = vpop.permute.xlu0 %5634
    %v5638 = vsel %vm241, %v4867, 0
    %5640 = vmatprep.subr.mxu0 0.0
    %5641 = vmatpush1.msra.mxu0 %v5635
    %5642 = vmatprep.subr.mxu0 0.0
    %5643 = vmatpush1.msra.mxu0 0.0
    %5644 = vmatprep.subr.mxu0 0.0
    %5645 = vmatpush1.msra.mxu0 0.0
    %5646 = vmatprep.subr.mxu0 0.0
    %5647 = vmatpush1.msra.mxu0 0.0
    %5648 = vmatprep.subr.mxu0 0.0
    %5649 = vmatpush1.msra.mxu0 0.0
    %5650 = vmatprep.subr.mxu0 0.0
    %5651 = vmatpush1.msra.mxu0 0.0
    %5652 = vmatprep.subr.mxu0 0.0
    %5653 = vmatpush1.msra.mxu0 0.0
    %5654 = vmatprep.subr.mxu0 0.0
    %5655 = vmatpush1.msra.mxu0 0.0
    %5656 = vmatprep.subr.mxu0 0.0
    %5657 = vmatpush1.msra.mxu0 0.0
    %5658 = vmatprep.subr.mxu0 0.0
    %5659 = vmatpush1.msra.mxu0 0.0
    %5660 = vmatprep.subr.mxu0 0.0
    %5661 = vmatpush1.msra.mxu0 0.0
    %5662 = vmatprep.subr.mxu0 0.0
    %5663 = vmatpush1.msra.mxu0 0.0
    %5664 = vmatprep.subr.mxu0 0.0
    %5665 = vmatpush1.msra.mxu0 0.0
    %5666 = vmatprep.subr.mxu0 0.0
    %5667 = vmatpush1.msra.mxu0 0.0
    %5668 = vmatprep.subr.mxu0 0.0
    %5669 = vmatpush1.msra.mxu0 0.0
    %5670 = vmatprep.subr.mxu0 0.0
    %5671 = vmatpush1.msra.mxu0 0.0
    %5672 = vmatprep.subr.mxu0 0.0
    %5673 = vmatpush1.msra.mxu0 0.0
    %5674 = vmatprep.subr.mxu0 0.0
    %5675 = vmatpush1.msra.mxu0 0.0
    %5676 = vmatprep.subr.mxu0 0.0
    %5677 = vmatpush1.msra.mxu0 0.0
    %5678 = vmatprep.subr.mxu0 0.0
    %5679 = vmatpush1.msra.mxu0 0.0
    %5680 = vmatprep.subr.mxu0 0.0
    %5681 = vmatpush1.msra.mxu0 0.0
    %5682 = vmatprep.subr.mxu0 0.0
    %5683 = vmatpush1.msra.mxu0 0.0
    %5684 = vmatprep.subr.mxu0 0.0
    %5685 = vmatpush1.msra.mxu0 0.0
    %5686 = vmatprep.subr.mxu0 0.0
    %5687 = vmatpush1.msra.mxu0 0.0
    %5688 = vmatprep.subr.mxu0 0.0
    %5689 = vmatpush1.msra.mxu0 0.0
    %5690 = vmatprep.subr.mxu0 0.0
    %5691 = vmatpush1.msra.mxu0 0.0
    %5692 = vmatprep.subr.mxu0 0.0
    %5693 = vmatpush1.msra.mxu0 0.0
    %5694 = vmatprep.subr.mxu0 0.0
    %5695 = vmatpush1.msra.mxu0 0.0
    %5696 = vmatprep.subr.mxu0 0.0
    %5697 = vmatpush1.msra.mxu0 0.0
    %5698 = vmatprep.subr.mxu0 0.0
    %5699 = vmatpush1.msra.mxu0 0.0
    %5700 = vmatprep.subr.mxu0 0.0
    %5701 = vmatpush1.msra.mxu0 0.0
    %5702 = vmatprep.subr.mxu0 0.0
    %5703 = vmatpush1.msra.mxu0 0.0
    %5704 = vmatprep.mubr.f32.mxu0 0.0
    %5705 = vmatmul.mubr.f32.gmra.mrb[0].mxu0 %v5638
    %v5706 = vpop.f32.mrb[0].mxu0
    %v5707 = vadd.f32 0.0, %v5706
    %v5708 = vpop.f32.mrb[0].mxu0
    %5709 = vdwg.mxu0
    %5710 = vrot.lane.b32.xlu0 %v3438, 88
    %v5711 = vpop.permute.xlu0 %5710
    %v5714 = vsel %vm241, %v4875, 0
    %5716 = vmatprep.subr.mxu0 0.0
    %5717 = vmatpush1.msra.mxu0 %v5711
    %5718 = vmatprep.subr.mxu0 0.0
    %5719 = vmatpush1.msra.mxu0 0.0
    %5720 = vmatprep.subr.mxu0 0.0
    %5721 = vmatpush1.msra.mxu0 0.0
    %5722 = vmatprep.subr.mxu0 0.0
    %5723 = vmatpush1.msra.mxu0 0.0
    %5724 = vmatprep.subr.mxu0 0.0
    %5725 = vmatpush1.msra.mxu0 0.0
    %5726 = vmatprep.subr.mxu0 0.0
    %5727 = vmatpush1.msra.mxu0 0.0
    %5728 = vmatprep.subr.mxu0 0.0
    %5729 = vmatpush1.msra.mxu0 0.0
    %5730 = vmatprep.subr.mxu0 0.0
    %5731 = vmatpush1.msra.mxu0 0.0
    %5732 = vmatprep.subr.mxu0 0.0
    %5733 = vmatpush1.msra.mxu0 0.0
    %5734 = vmatprep.subr.mxu0 0.0
    %5735 = vmatpush1.msra.mxu0 0.0
    %5736 = vmatprep.subr.mxu0 0.0
    %5737 = vmatpush1.msra.mxu0 0.0
    %5738 = vmatprep.subr.mxu0 0.0
    %5739 = vmatpush1.msra.mxu0 0.0
    %5740 = vmatprep.subr.mxu0 0.0
    %5741 = vmatpush1.msra.mxu0 0.0
    %5742 = vmatprep.subr.mxu0 0.0
    %5743 = vmatpush1.msra.mxu0 0.0
    %5744 = vmatprep.subr.mxu0 0.0
    %5745 = vmatpush1.msra.mxu0 0.0
    %5746 = vmatprep.subr.mxu0 0.0
    %5747 = vmatpush1.msra.mxu0 0.0
    %5748 = vmatprep.subr.mxu0 0.0
    %5749 = vmatpush1.msra.mxu0 0.0
    %5750 = vmatprep.subr.mxu0 0.0
    %5751 = vmatpush1.msra.mxu0 0.0
    %5752 = vmatprep.subr.mxu0 0.0
    %5753 = vmatpush1.msra.mxu0 0.0
    %5754 = vmatprep.subr.mxu0 0.0
    %5755 = vmatpush1.msra.mxu0 0.0
    %5756 = vmatprep.subr.mxu0 0.0
    %5757 = vmatpush1.msra.mxu0 0.0
    %5758 = vmatprep.subr.mxu0 0.0
    %5759 = vmatpush1.msra.mxu0 0.0
    %5760 = vmatprep.subr.mxu0 0.0
    %5761 = vmatpush1.msra.mxu0 0.0
    %5762 = vmatprep.subr.mxu0 0.0
    %5763 = vmatpush1.msra.mxu0 0.0
    %5764 = vmatprep.subr.mxu0 0.0
    %5765 = vmatpush1.msra.mxu0 0.0
    %5766 = vmatprep.subr.mxu0 0.0
    %5767 = vmatpush1.msra.mxu0 0.0
    %5768 = vmatprep.subr.mxu0 0.0
    %5769 = vmatpush1.msra.mxu0 0.0
    %5770 = vmatprep.subr.mxu0 0.0
    %5771 = vmatpush1.msra.mxu0 0.0
    %5772 = vmatprep.subr.mxu0 0.0
    %5773 = vmatpush1.msra.mxu0 0.0
    %5774 = vmatprep.subr.mxu0 0.0
    %5775 = vmatpush1.msra.mxu0 0.0
    %5776 = vmatprep.subr.mxu0 0.0
    %5777 = vmatpush1.msra.mxu0 0.0
    %5778 = vmatprep.subr.mxu0 0.0
    %5779 = vmatpush1.msra.mxu0 0.0
    %5780 = vmatprep.mubr.f32.mxu0 0.0
    %5781 = vmatmul.mubr.f32.gmra.mrb[0].mxu0 %v5714
    %v5782 = vpop.f32.mrb[0].mxu0
    %v5783 = vadd.f32 0.0, %v5782
    %v5784 = vpop.f32.mrb[0].mxu0
    %5785 = vdwg.mxu0
    %5786 = vrot.lane.b32.xlu0 %v3432, 80
    %v5787 = vpop.permute.xlu0 %5786
    %v5790 = vsel %vm241, %v4868, 0
    %5792 = vmatprep.subr.mxu0 0.0
    %5793 = vmatpush1.msra.mxu0 %v5787
    %5794 = vmatprep.subr.mxu0 0.0
    %5795 = vmatpush1.msra.mxu0 0.0
    %5796 = vmatprep.subr.mxu0 0.0
    %5797 = vmatpush1.msra.mxu0 0.0
    %5798 = vmatprep.subr.mxu0 0.0
    %5799 = vmatpush1.msra.mxu0 0.0
    %5800 = vmatprep.subr.mxu0 0.0
    %5801 = vmatpush1.msra.mxu0 0.0
    %5802 = vmatprep.subr.mxu0 0.0
    %5803 = vmatpush1.msra.mxu0 0.0
    %5804 = vmatprep.subr.mxu0 0.0
    %5805 = vmatpush1.msra.mxu0 0.0
    %5806 = vmatprep.subr.mxu0 0.0
    %5807 = vmatpush1.msra.mxu0 0.0
    %5808 = vmatprep.subr.mxu0 0.0
    %5809 = vmatpush1.msra.mxu0 0.0
    %5810 = vmatprep.subr.mxu0 0.0
    %5811 = vmatpush1.msra.mxu0 0.0
    %5812 = vmatprep.subr.mxu0 0.0
    %5813 = vmatpush1.msra.mxu0 0.0
    %5814 = vmatprep.subr.mxu0 0.0
    %5815 = vmatpush1.msra.mxu0 0.0
    %5816 = vmatprep.subr.mxu0 0.0
    %5817 = vmatpush1.msra.mxu0 0.0
    %5818 = vmatprep.subr.mxu0 0.0
    %5819 = vmatpush1.msra.mxu0 0.0
    %5820 = vmatprep.subr.mxu0 0.0
    %5821 = vmatpush1.msra.mxu0 0.0
    %5822 = vmatprep.subr.mxu0 0.0
    %5823 = vmatpush1.msra.mxu0 0.0
    %5824 = vmatprep.subr.mxu0 0.0
    %5825 = vmatpush1.msra.mxu0 0.0
    %5826 = vmatprep.subr.mxu0 0.0
    %5827 = vmatpush1.msra.mxu0 0.0
    %5828 = vmatprep.subr.mxu0 0.0
    %5829 = vmatpush1.msra.mxu0 0.0
    %5830 = vmatprep.subr.mxu0 0.0
    %5831 = vmatpush1.msra.mxu0 0.0
    %5832 = vmatprep.subr.mxu0 0.0
    %5833 = vmatpush1.msra.mxu0 0.0
    %5834 = vmatprep.subr.mxu0 0.0
    %5835 = vmatpush1.msra.mxu0 0.0
    %5836 = vmatprep.subr.mxu0 0.0
    %5837 = vmatpush1.msra.mxu0 0.0
    %5838 = vmatprep.subr.mxu0 0.0
    %5839 = vmatpush1.msra.mxu0 0.0
    %5840 = vmatprep.subr.mxu0 0.0
    %5841 = vmatpush1.msra.mxu0 0.0
    %5842 = vmatprep.subr.mxu0 0.0
    %5843 = vmatpush1.msra.mxu0 0.0
    %5844 = vmatprep.subr.mxu0 0.0
    %5845 = vmatpush1.msra.mxu0 0.0
    %5846 = vmatprep.subr.mxu0 0.0
    %5847 = vmatpush1.msra.mxu0 0.0
    %5848 = vmatprep.subr.mxu0 0.0
    %5849 = vmatpush1.msra.mxu0 0.0
    %5850 = vmatprep.subr.mxu0 0.0
    %5851 = vmatpush1.msra.mxu0 0.0
    %5852 = vmatprep.subr.mxu0 0.0
    %5853 = vmatpush1.msra.mxu0 0.0
    %5854 = vmatprep.subr.mxu0 0.0
    %5855 = vmatpush1.msra.mxu0 0.0
    %5856 = vmatprep.mubr.f32.mxu0 0.0
    %5857 = vmatmul.mubr.f32.gmra.mrb[0].mxu0 %v5790
    %v5858 = vpop.f32.mrb[0].mxu0
    %v5859 = vadd.f32 0.0, %v5858
    %v5860 = vpop.f32.mrb[0].mxu0
    %5861 = vdwg.mxu0
    %5862 = vrot.lane.b32.xlu0 %v3438, 80
    %v5863 = vpop.permute.xlu0 %5862
    %v5866 = vsel %vm241, %v4876, 0
    %5868 = vmatprep.subr.mxu0 0.0
    %5869 = vmatpush1.msra.mxu0 %v5863
    %5870 = vmatprep.subr.mxu0 0.0
    %5871 = vmatpush1.msra.mxu0 0.0
    %5872 = vmatprep.subr.mxu0 0.0
    %5873 = vmatpush1.msra.mxu0 0.0
    %5874 = vmatprep.subr.mxu0 0.0
    %5875 = vmatpush1.msra.mxu0 0.0
    %5876 = vmatprep.subr.mxu0 0.0
    %5877 = vmatpush1.msra.mxu0 0.0
    %5878 = vmatprep.subr.mxu0 0.0
    %5879 = vmatpush1.msra.mxu0 0.0
    %5880 = vmatprep.subr.mxu0 0.0
    %5881 = vmatpush1.msra.mxu0 0.0
    %5882 = vmatprep.subr.mxu0 0.0
    %5883 = vmatpush1.msra.mxu0 0.0
    %5884 = vmatprep.subr.mxu0 0.0
    %5885 = vmatpush1.msra.mxu0 0.0
    %5886 = vmatprep.subr.mxu0 0.0
    %5887 = vmatpush1.msra.mxu0 0.0
    %5888 = vmatprep.subr.mxu0 0.0
    %5889 = vmatpush1.msra.mxu0 0.0
    %5890 = vmatprep.subr.mxu0 0.0
    %5891 = vmatpush1.msra.mxu0 0.0
    %5892 = vmatprep.subr.mxu0 0.0
    %5893 = vmatpush1.msra.mxu0 0.0
    %5894 = vmatprep.subr.mxu0 0.0
    %5895 = vmatpush1.msra.mxu0 0.0
    %5896 = vmatprep.subr.mxu0 0.0
    %5897 = vmatpush1.msra.mxu0 0.0
    %5898 = vmatprep.subr.mxu0 0.0
    %5899 = vmatpush1.msra.mxu0 0.0
    %5900 = vmatprep.subr.mxu0 0.0
    %5901 = vmatpush1.msra.mxu0 0.0
    %5902 = vmatprep.subr.mxu0 0.0
    %5903 = vmatpush1.msra.mxu0 0.0
    %5904 = vmatprep.subr.mxu0 0.0
    %5905 = vmatpush1.msra.mxu0 0.0
    %5906 = vmatprep.subr.mxu0 0.0
    %5907 = vmatpush1.msra.mxu0 0.0
    %5908 = vmatprep.subr.mxu0 0.0
    %5909 = vmatpush1.msra.mxu0 0.0
    %5910 = vmatprep.subr.mxu0 0.0
    %5911 = vmatpush1.msra.mxu0 0.0
    %5912 = vmatprep.subr.mxu0 0.0
    %5913 = vmatpush1.msra.mxu0 0.0
    %5914 = vmatprep.subr.mxu0 0.0
    %5915 = vmatpush1.msra.mxu0 0.0
    %5916 = vmatprep.subr.mxu0 0.0
    %5917 = vmatpush1.msra.mxu0 0.0
    %5918 = vmatprep.subr.mxu0 0.0
    %5919 = vmatpush1.msra.mxu0 0.0
    %5920 = vmatprep.subr.mxu0 0.0
    %5921 = vmatpush1.msra.mxu0 0.0
    %5922 = vmatprep.subr.mxu0 0.0
    %5923 = vmatpush1.msra.mxu0 0.0
    %5924 = vmatprep.subr.mxu0 0.0
    %5925 = vmatpush1.msra.mxu0 0.0
    %5926 = vmatprep.subr.mxu0 0.0
    %5927 = vmatpush1.msra.mxu0 0.0
    %5928 = vmatprep.subr.mxu0 0.0
    %5929 = vmatpush1.msra.mxu0 0.0
    %5930 = vmatprep.subr.mxu0 0.0
    %5931 = vmatpush1.msra.mxu0 0.0
    %5932 = vmatprep.mubr.f32.mxu0 0.0
    %5933 = vmatmul.mubr.f32.gmra.mrb[0].mxu0 %v5866
    %v5934 = vpop.f32.mrb[0].mxu0
    %v5935 = vadd.f32 0.0, %v5934
    %v5936 = vpop.f32.mrb[0].mxu0
    %5937 = vdwg.mxu0
    %5938 = vrot.lane.b32.xlu0 %v3432, 72
    %v5939 = vpop.permute.xlu0 %5938
    %v5942 = vsel %vm241, %v4869, 0
    %5944 = vmatprep.subr.mxu0 0.0
    %5945 = vmatpush1.msra.mxu0 %v5939
    %5946 = vmatprep.subr.mxu0 0.0
    %5947 = vmatpush1.msra.mxu0 0.0
    %5948 = vmatprep.subr.mxu0 0.0
    %5949 = vmatpush1.msra.mxu0 0.0
    %5950 = vmatprep.subr.mxu0 0.0
    %5951 = vmatpush1.msra.mxu0 0.0
    %5952 = vmatprep.subr.mxu0 0.0
    %5953 = vmatpush1.msra.mxu0 0.0
    %5954 = vmatprep.subr.mxu0 0.0
    %5955 = vmatpush1.msra.mxu0 0.0
    %5956 = vmatprep.subr.mxu0 0.0
    %5957 = vmatpush1.msra.mxu0 0.0
    %5958 = vmatprep.subr.mxu0 0.0
    %5959 = vmatpush1.msra.mxu0 0.0
    %5960 = vmatprep.subr.mxu0 0.0
    %5961 = vmatpush1.msra.mxu0 0.0
    %5962 = vmatprep.subr.mxu0 0.0
    %5963 = vmatpush1.msra.mxu0 0.0
    %5964 = vmatprep.subr.mxu0 0.0
    %5965 = vmatpush1.msra.mxu0 0.0
    %5966 = vmatprep.subr.mxu0 0.0
    %5967 = vmatpush1.msra.mxu0 0.0
    %5968 = vmatprep.subr.mxu0 0.0
    %5969 = vmatpush1.msra.mxu0 0.0
    %5970 = vmatprep.subr.mxu0 0.0
    %5971 = vmatpush1.msra.mxu0 0.0
    %5972 = vmatprep.subr.mxu0 0.0
    %5973 = vmatpush1.msra.mxu0 0.0
    %5974 = vmatprep.subr.mxu0 0.0
    %5975 = vmatpush1.msra.mxu0 0.0
    %5976 = vmatprep.subr.mxu0 0.0
    %5977 = vmatpush1.msra.mxu0 0.0
    %5978 = vmatprep.subr.mxu0 0.0
    %5979 = vmatpush1.msra.mxu0 0.0
    %5980 = vmatprep.subr.mxu0 0.0
    %5981 = vmatpush1.msra.mxu0 0.0
    %5982 = vmatprep.subr.mxu0 0.0
    %5983 = vmatpush1.msra.mxu0 0.0
    %5984 = vmatprep.subr.mxu0 0.0
    %5985 = vmatpush1.msra.mxu0 0.0
    %5986 = vmatprep.subr.mxu0 0.0
    %5987 = vmatpush1.msra.mxu0 0.0
    %5988 = vmatprep.subr.mxu0 0.0
    %5989 = vmatpush1.msra.mxu0 0.0
    %5990 = vmatprep.subr.mxu0 0.0
    %5991 = vmatpush1.msra.mxu0 0.0
    %5992 = vmatprep.subr.mxu0 0.0
    %5993 = vmatpush1.msra.mxu0 0.0
    %5994 = vmatprep.subr.mxu0 0.0
    %5995 = vmatpush1.msra.mxu0 0.0
    %5996 = vmatprep.subr.mxu0 0.0
    %5997 = vmatpush1.msra.mxu0 0.0
    %5998 = vmatprep.subr.mxu0 0.0
    %5999 = vmatpush1.msra.mxu0 0.0
    %6000 = vmatprep.subr.mxu0 0.0
    %6001 = vmatpush1.msra.mxu0 0.0
    %6002 = vmatprep.subr.mxu0 0.0
    %6003 = vmatpush1.msra.mxu0 0.0
    %6004 = vmatprep.subr.mxu0 0.0
    %6005 = vmatpush1.msra.mxu0 0.0
    %6006 = vmatprep.subr.mxu0 0.0
    %6007 = vmatpush1.msra.mxu0 0.0
    %6008 = vmatprep.mubr.f32.mxu0 0.0
    %6009 = vmatmul.mubr.f32.gmra.mrb[0].mxu0 %v5942
    %v6010 = vpop.f32.mrb[0].mxu0
    %v6011 = vadd.f32 0.0, %v6010
    %v6012 = vpop.f32.mrb[0].mxu0
    %6013 = vdwg.mxu0
    %6014 = vrot.lane.b32.xlu0 %v3438, 72
    %v6015 = vpop.permute.xlu0 %6014
    %v6018 = vsel %vm241, %v4877, 0
    %6020 = vmatprep.subr.mxu0 0.0
    %6021 = vmatpush1.msra.mxu0 %v6015
    %6022 = vmatprep.subr.mxu0 0.0
    %6023 = vmatpush1.msra.mxu0 0.0
    %6024 = vmatprep.subr.mxu0 0.0
    %6025 = vmatpush1.msra.mxu0 0.0
    %6026 = vmatprep.subr.mxu0 0.0
    %6027 = vmatpush1.msra.mxu0 0.0
    %6028 = vmatprep.subr.mxu0 0.0
    %6029 = vmatpush1.msra.mxu0 0.0
    %6030 = vmatprep.subr.mxu0 0.0
    %6031 = vmatpush1.msra.mxu0 0.0
    %6032 = vmatprep.subr.mxu0 0.0
    %6033 = vmatpush1.msra.mxu0 0.0
    %6034 = vmatprep.subr.mxu0 0.0
    %6035 = vmatpush1.msra.mxu0 0.0
    %6036 = vmatprep.subr.mxu0 0.0
    %6037 = vmatpush1.msra.mxu0 0.0
    %6038 = vmatprep.subr.mxu0 0.0
    %6039 = vmatpush1.msra.mxu0 0.0
    %6040 = vmatprep.subr.mxu0 0.0
    %6041 = vmatpush1.msra.mxu0 0.0
    %6042 = vmatprep.subr.mxu0 0.0
    %6043 = vmatpush1.msra.mxu0 0.0
    %6044 = vmatprep.subr.mxu0 0.0
    %6045 = vmatpush1.msra.mxu0 0.0
    %6046 = vmatprep.subr.mxu0 0.0
    %6047 = vmatpush1.msra.mxu0 0.0
    %6048 = vmatprep.subr.mxu0 0.0
    %6049 = vmatpush1.msra.mxu0 0.0
    %6050 = vmatprep.subr.mxu0 0.0
    %6051 = vmatpush1.msra.mxu0 0.0
    %6052 = vmatprep.subr.mxu0 0.0
    %6053 = vmatpush1.msra.mxu0 0.0
    %6054 = vmatprep.subr.mxu0 0.0
    %6055 = vmatpush1.msra.mxu0 0.0
    %6056 = vmatprep.subr.mxu0 0.0
    %6057 = vmatpush1.msra.mxu0 0.0
    %6058 = vmatprep.subr.mxu0 0.0
    %6059 = vmatpush1.msra.mxu0 0.0
    %6060 = vmatprep.subr.mxu0 0.0
    %6061 = vmatpush1.msra.mxu0 0.0
    %6062 = vmatprep.subr.mxu0 0.0
    %6063 = vmatpush1.msra.mxu0 0.0
    %6064 = vmatprep.subr.mxu0 0.0
    %6065 = vmatpush1.msra.mxu0 0.0
    %6066 = vmatprep.subr.mxu0 0.0
    %6067 = vmatpush1.msra.mxu0 0.0
    %6068 = vmatprep.subr.mxu0 0.0
    %6069 = vmatpush1.msra.mxu0 0.0
    %6070 = vmatprep.subr.mxu0 0.0
    %6071 = vmatpush1.msra.mxu0 0.0
    %6072 = vmatprep.subr.mxu0 0.0
    %6073 = vmatpush1.msra.mxu0 0.0
    %6074 = vmatprep.subr.mxu0 0.0
    %6075 = vmatpush1.msra.mxu0 0.0
    %6076 = vmatprep.subr.mxu0 0.0
    %6077 = vmatpush1.msra.mxu0 0.0
    %6078 = vmatprep.subr.mxu0 0.0
    %6079 = vmatpush1.msra.mxu0 0.0
    %6080 = vmatprep.subr.mxu0 0.0
    %6081 = vmatpush1.msra.mxu0 0.0
    %6082 = vmatprep.subr.mxu0 0.0
    %6083 = vmatpush1.msra.mxu0 0.0
    %6084 = vmatprep.mubr.f32.mxu0 0.0
    %6085 = vmatmul.mubr.f32.gmra.mrb[0].mxu0 %v6018
    %v6086 = vpop.f32.mrb[0].mxu0
    %v6087 = vadd.f32 0.0, %v6086
    %v6088 = vpop.f32.mrb[0].mxu0
    %6089 = vdwg.mxu0
    %6092 = vrot.lane.b32.xlu0 %v5098, 8
    %v6093 = vpop.permute.xlu0 %6092
    %6094 = vrot.lane.b32.xlu0 %v5175, 8
    %v6095 = vpop.permute.xlu0 %6094
    %6100 = vrot.lane.b32.xlu0 %v5251, 16
    %v6101 = vpop.permute.xlu0 %6100
    %6102 = vrot.lane.b32.xlu0 %v5327, 16
    %v6103 = vpop.permute.xlu0 %6102
    %6108 = vrot.lane.b32.xlu0 %v5403, 24
    %v6109 = vpop.permute.xlu0 %6108
    %6110 = vrot.lane.b32.xlu0 %v5479, 24
    %v6111 = vpop.permute.xlu0 %6110
    %6116 = vrot.lane.b32.xlu0 %v5555, 32
    %v6117 = vpop.permute.xlu0 %6116
    %6118 = vrot.lane.b32.xlu0 %v5631, 32
    %v6119 = vpop.permute.xlu0 %6118
    %6124 = vrot.lane.b32.xlu0 %v5707, 40
    %v6125 = vpop.permute.xlu0 %6124
    %6126 = vrot.lane.b32.xlu0 %v5783, 40
    %v6127 = vpop.permute.xlu0 %6126
    %6132 = vrot.lane.b32.xlu0 %v5859, 48
    %v6133 = vpop.permute.xlu0 %6132
    %6134 = vrot.lane.b32.xlu0 %v5935, 48
    %v6135 = vpop.permute.xlu0 %6134
    %6140 = vrot.lane.b32.xlu0 %v6011, 56
    %v6141 = vpop.permute.xlu0 %6140
    %6142 = vrot.lane.b32.xlu0 %v6087, 56
    %v6143 = vpop.permute.xlu0 %6142
    %v6146 = vsel %vm241, %v4948, %v6093
    %v6147 = vsel %vm241, %v5021, %v6095
    %v6148 = vsel %vm2947, %v6146, %v6101
    %v6149 = vsel %vm2947, %v6147, %v6103
    %v6150 = vsel %vm2950, %v6148, %v6109
    %v6151 = vsel %vm2950, %v6149, %v6111
    %v6152 = vsel %vm2953, %v6150, %v6117
    %v6153 = vsel %vm2953, %v6151, %v6119
    %v6154 = vsel %vm2956, %v6152, %v6125
    %v6155 = vsel %vm2956, %v6153, %v6127
    %v6156 = vsel %vm2959, %v6154, %v6133
    %v6157 = vsel %vm2959, %v6155, %v6135
    %v6158 = vsel %vm2962, %v6156, %v6141
    %v6159 = vsel %vm2962, %v6157, %v6143
    %s6160 = scalar_lea.vmem %s5, 64
    %v6161 = vld [vmem:[%s6160] sm:$0xff]
    %v6162 = vld [vmem:[%s6160 + $0x8] sm:$0xff]
    %v6163 = vld [vmem:[%s6160 + $0x10] sm:$0xff]
    %v6164 = vld [vmem:[%s6160 + $0x18] sm:$0xff]
    %v6165 = vld [vmem:[%s6160 + $0x20] sm:$0xff]
    %v6166 = vld [vmem:[%s6160 + $0x28] sm:$0xff]
    %v6167 = vld [vmem:[%s6160 + $0x30] sm:$0xff]
    %v6168 = vld [vmem:[%s6160 + $0x38] sm:$0xff]
    %v6169 = vlaneseq
    %v6170 = vshrl.u32 %v6169, 7
    %v6171 = vsub.s32 1, %v6170
    %v6172 = vrot.slane %v3330, %v6171
    %v6174 = vsel %vm154, %v6158, 0
    %v6177 = vsel %vm154, %v6159, 0
    %6179 = vmatprep.subr.mxu0 0.0
    %6180 = vmatpush1.msra.mxu0 %v6161
    %6181 = vmatprep.subr.mxu0 0.0
    %6182 = vmatpush1.msra.mxu0 %v6162
    %6183 = vmatprep.subr.mxu0 0.0
    %6184 = vmatpush1.msra.mxu0 %v6163
    %6185 = vmatprep.subr.mxu0 0.0
    %6186 = vmatpush1.msra.mxu0 %v6164
    %6187 = vmatprep.subr.mxu0 0.0
    %6188 = vmatpush1.msra.mxu0 %v6165
    %6189 = vmatprep.subr.mxu0 0.0
    %6190 = vmatpush1.msra.mxu0 %v6166
    %6191 = vmatprep.subr.mxu0 0.0
    %6192 = vmatpush1.msra.mxu0 %v6167
    %6193 = vmatprep.subr.mxu0 0.0
    %6194 = vmatpush1.msra.mxu0 %v6168
    %6195 = vmatprep.subr.mxu0 0.0
    %6196 = vmatpush1.msra.mxu0 0.0
    %6197 = vmatprep.subr.mxu0 0.0
    %6198 = vmatpush1.msra.mxu0 0.0
    %6199 = vmatprep.subr.mxu0 0.0
    %6200 = vmatpush1.msra.mxu0 0.0
    %6201 = vmatprep.subr.mxu0 0.0
    %6202 = vmatpush1.msra.mxu0 0.0
    %6203 = vmatprep.subr.mxu0 0.0
    %6204 = vmatpush1.msra.mxu0 0.0
    %6205 = vmatprep.subr.mxu0 0.0
    %6206 = vmatpush1.msra.mxu0 0.0
    %6207 = vmatprep.subr.mxu0 0.0
    %6208 = vmatpush1.msra.mxu0 0.0
    %6209 = vmatprep.subr.mxu0 0.0
    %6210 = vmatpush1.msra.mxu0 0.0
    %6211 = vmatprep.subr.mxu0 0.0
    %6212 = vmatpush1.msra.mxu0 0.0
    %6213 = vmatprep.subr.mxu0 0.0
    %6214 = vmatpush1.msra.mxu0 0.0
    %6215 = vmatprep.subr.mxu0 0.0
    %6216 = vmatpush1.msra.mxu0 0.0
    %6217 = vmatprep.subr.mxu0 0.0
    %6218 = vmatpush1.msra.mxu0 0.0
    %6219 = vmatprep.subr.mxu0 0.0
    %6220 = vmatpush1.msra.mxu0 0.0
    %6221 = vmatprep.subr.mxu0 0.0
    %6222 = vmatpush1.msra.mxu0 0.0
    %6223 = vmatprep.subr.mxu0 0.0
    %6224 = vmatpush1.msra.mxu0 0.0
    %6225 = vmatprep.subr.mxu0 0.0
    %6226 = vmatpush1.msra.mxu0 0.0
    %6227 = vmatprep.subr.mxu0 0.0
    %6228 = vmatpush1.msra.mxu0 0.0
    %6229 = vmatprep.subr.mxu0 0.0
    %6230 = vmatpush1.msra.mxu0 0.0
    %6231 = vmatprep.subr.mxu0 0.0
    %6232 = vmatpush1.msra.mxu0 0.0
    %6233 = vmatprep.subr.mxu0 0.0
    %6234 = vmatpush1.msra.mxu0 0.0
    %6235 = vmatprep.subr.mxu0 0.0
    %6236 = vmatpush1.msra.mxu0 0.0
    %6237 = vmatprep.subr.mxu0 0.0
    %6238 = vmatpush1.msra.mxu0 0.0
    %6239 = vmatprep.subr.mxu0 0.0
    %6240 = vmatpush1.msra.mxu0 0.0
    %6241 = vmatprep.subr.mxu0 0.0
    %6242 = vmatpush1.msra.mxu0 0.0
    %6243 = vmatprep.mubr.f32.mxu0 0.0
    %6244 = vmatmul.mubr.f32.gmra.mrb[0].mxu0 %v6174
    %v6245 = vpop.f32.mrb[0].mxu0
    %v6246 = vadd.f32 %v6172, %v6245
    %v6247 = vpop.f32.mrb[0].mxu0
    %6248 = vmatprep.mubr.f32.mxu0 0.0
    %6249 = vmatmul.mubr.f32.gmra.mrb[0].mxu0 %v6177
    %v6250 = vpop.f32.mrb[0].mxu0
    %v6251 = vadd.f32 %v6172, %v6250
    %v6252 = vpop.f32.mrb[0].mxu0
    %6253 = vdwg.mxu0
    %v6254 = vadd.f32 %v3327, %v6246
    %v6255 = vadd.f32 %v3328, %v6251
    %v6256 = vsel %vm154, %v6254, 0.0
    %6257 = vadd.xlane.f32.xlu0 %v6256
    %v6258 = vpop.xlane.xlu0 %6257
    %v6259 = vsel %vm154, %v6255, 0.0
    %6260 = vadd.xlane.f32.xlu0 %v6259
    %v6261 = vpop.xlane.xlu0 %6260
    %v6262 = vmul.f32 %v6258, %v3066
    %v6263 = vmul.f32 %v6261, %v3066
    %v6264 = vsub.f32 %v6254, %v6262
    %v6265 = vsub.f32 %v6255, %v6263
    %v6266 = vmul.f32 %v6264, %v6264
    %v6267 = vmul.f32 %v6265, %v6265
    %v6268 = vsel %vm154, %v6266, 0.0
    %6269 = vadd.xlane.f32.xlu0 %v6268
    %v6270 = vpop.xlane.xlu0 %6269
    %v6271 = vsel %vm154, %v6267, 0.0
    %6272 = vadd.xlane.f32.xlu0 %v6271
    %v6273 = vpop.xlane.xlu0 %6272
    %v6274 = vmul.f32 %v6270, %v3066
    %v6275 = vmul.f32 %v6273, %v3066
    %v6276 = vadd.f32 %v6274, 1e-05
    %v6277 = vadd.f32 %v6275, 1e-05
    %v6278 = vrsqrt.pop %v6276
    %v6279 = vrsqrt.pop %v6277
    %v6280 = vmul.f32 %v6264, %v6278
    %v6281 = vmul.f32 %v6265, %v6279
    %v6282 = vlaneseq
    %v6283 = vshrl.u32 %v6282, 7
    %v6284 = vsub.s32 4, %v6283
    %v6285 = vrot.slane %v3330, %v6284
    %v6286 = vmul.f32 %v6280, %v6285
    %v6287 = vmul.f32 %v6281, %v6285
    %v6288 = vlaneseq
    %v6289 = vshrl.u32 %v6288, 7
    %v6290 = vsub.s32 5, %v6289
    %v6291 = vrot.slane %v3330, %v6290
    %v6292 = vadd.f32 %v6286, %v6291
    %v6293 = vadd.f32 %v6287, %v6291
    %s6294 = scalar_lea.vmem [#allocation7], 64
    %v6295 = vld [vmem:[%s6294] sm:$0xff]
    %v6296 = vld [vmem:[%s6294 + $0x8] sm:$0xff]
    %v6297 = vld [vmem:[%s6294 + $0x10] sm:$0xff]
    %v6298 = vld [vmem:[%s6294 + $0x18] sm:$0xff]
    %v6299 = vld [vmem:[%s6294 + $0x20] sm:$0xff]
    %v6300 = vld [vmem:[%s6294 + $0x28] sm:$0xff]
    %v6301 = vld [vmem:[%s6294 + $0x30] sm:$0xff]
    %v6302 = vld [vmem:[%s6294 + $0x38] sm:$0xff]
    %v6303 = vlaneseq
    %v6304 = vshrl.u32 %v6303, 7
    %v6305 = vsub.s32 2, %v6304
    %v6306 = vrot.slane %v3330, %v6305
    %v6308 = vsel %vm154, %v6292, 0
    %v6311 = vsel %vm154, %v6293, 0
    %6313 = vmatprep.subr.mxu0 0.0
    %6314 = vmatpush1.msra.mxu0 %v6295
    %6315 = vmatprep.subr.mxu0 0.0
    %6316 = vmatpush1.msra.mxu0 %v6296
    %6317 = vmatprep.subr.mxu0 0.0
    %6318 = vmatpush1.msra.mxu0 %v6297
    %6319 = vmatprep.subr.mxu0 0.0
    %6320 = vmatpush1.msra.mxu0 %v6298
    %6321 = vmatprep.subr.mxu0 0.0
    %6322 = vmatpush1.msra.mxu0 %v6299
    %6323 = vmatprep.subr.mxu0 0.0
    %6324 = vmatpush1.msra.mxu0 %v6300
    %6325 = vmatprep.subr.mxu0 0.0
    %6326 = vmatpush1.msra.mxu0 %v6301
    %6327 = vmatprep.subr.mxu0 0.0
    %6328 = vmatpush1.msra.mxu0 %v6302
    %6329 = vmatprep.subr.mxu0 0.0
    %6330 = vmatpush1.msra.mxu0 0.0
    %6331 = vmatprep.subr.mxu0 0.0
    %6332 = vmatpush1.msra.mxu0 0.0
    %6333 = vmatprep.subr.mxu0 0.0
    %6334 = vmatpush1.msra.mxu0 0.0
    %6335 = vmatprep.subr.mxu0 0.0
    %6336 = vmatpush1.msra.mxu0 0.0
    %6337 = vmatprep.subr.mxu0 0.0
    %6338 = vmatpush1.msra.mxu0 0.0
    %6339 = vmatprep.subr.mxu0 0.0
    %6340 = vmatpush1.msra.mxu0 0.0
    %6341 = vmatprep.subr.mxu0 0.0
    %6342 = vmatpush1.msra.mxu0 0.0
    %6343 = vmatprep.subr.mxu0 0.0
    %6344 = vmatpush1.msra.mxu0 0.0
    %6345 = vmatprep.subr.mxu0 0.0
    %6346 = vmatpush1.msra.mxu0 0.0
    %6347 = vmatprep.subr.mxu0 0.0
    %6348 = vmatpush1.msra.mxu0 0.0
    %6349 = vmatprep.subr.mxu0 0.0
    %6350 = vmatpush1.msra.mxu0 0.0
    %6351 = vmatprep.subr.mxu0 0.0
    %6352 = vmatpush1.msra.mxu0 0.0
    %6353 = vmatprep.subr.mxu0 0.0
    %6354 = vmatpush1.msra.mxu0 0.0
    %6355 = vmatprep.subr.mxu0 0.0
    %6356 = vmatpush1.msra.mxu0 0.0
    %6357 = vmatprep.subr.mxu0 0.0
    %6358 = vmatpush1.msra.mxu0 0.0
    %6359 = vmatprep.subr.mxu0 0.0
    %6360 = vmatpush1.msra.mxu0 0.0
    %6361 = vmatprep.subr.mxu0 0.0
    %6362 = vmatpush1.msra.mxu0 0.0
    %6363 = vmatprep.subr.mxu0 0.0
    %6364 = vmatpush1.msra.mxu0 0.0
    %6365 = vmatprep.subr.mxu0 0.0
    %6366 = vmatpush1.msra.mxu0 0.0
    %6367 = vmatprep.subr.mxu0 0.0
    %6368 = vmatpush1.msra.mxu0 0.0
    %6369 = vmatprep.subr.mxu0 0.0
    %6370 = vmatpush1.msra.mxu0 0.0
    %6371 = vmatprep.subr.mxu0 0.0
    %6372 = vmatpush1.msra.mxu0 0.0
    %6373 = vmatprep.subr.mxu0 0.0
    %6374 = vmatpush1.msra.mxu0 0.0
    %6375 = vmatprep.subr.mxu0 0.0
    %6376 = vmatpush1.msra.mxu0 0.0
    %6377 = vmatprep.mubr.f32.mxu0 0.0
    %6378 = vmatmul.mubr.f32.gmra.mrb[0].mxu0 %v6308
    %v6379 = vpop.f32.mrb[0].mxu0
    %v6380 = vadd.f32 %v6306, %v6379
    %v6381 = vpop.f32.mrb[0].mxu0
    %6382 = vmatprep.mubr.f32.mxu0 0.0
    %6383 = vmatmul.mubr.f32.gmra.mrb[0].mxu0 %v6311
    %v6384 = vpop.f32.mrb[0].mxu0
    %v6385 = vadd.f32 %v6306, %v6384
    %v6386 = vpop.f32.mrb[0].mxu0
    %6387 = vdwg.mxu0
    %v6388 = vmax.f32 %v6380, 0.0
    %v6389 = vmax.f32 %v6385, 0.0
    %s6390 = scalar_lea.vmem %s7, 128
    %v6391 = vld [vmem:[%s6390] sm:$0xff]
    %v6392 = vld [vmem:[%s6390 + $0x8] sm:$0xff]
    %v6393 = vld [vmem:[%s6390 + $0x10] sm:$0xff]
    %v6394 = vld [vmem:[%s6390 + $0x18] sm:$0xff]
    %v6395 = vld [vmem:[%s6390 + $0x20] sm:$0xff]
    %v6396 = vld [vmem:[%s6390 + $0x28] sm:$0xff]
    %v6397 = vld [vmem:[%s6390 + $0x30] sm:$0xff]
    %v6398 = vld [vmem:[%s6390 + $0x38] sm:$0xff]
    %v6399 = vld [vmem:[%s6390 + $0x40] sm:$0xff]
    %v6400 = vld [vmem:[%s6390 + $0x48] sm:$0xff]
    %v6401 = vld [vmem:[%s6390 + $0x50] sm:$0xff]
    %v6402 = vld [vmem:[%s6390 + $0x58] sm:$0xff]
    %v6403 = vld [vmem:[%s6390 + $0x60] sm:$0xff]
    %v6404 = vld [vmem:[%s6390 + $0x68] sm:$0xff]
    %v6405 = vld [vmem:[%s6390 + $0x70] sm:$0xff]
    %v6406 = vld [vmem:[%s6390 + $0x78] sm:$0xff]
    %v6407 = vlaneseq
    %v6408 = vshrl.u32 %v6407, 7
    %v6409 = vsub.s32 3, %v6408
    %v6410 = vrot.slane %v3330, %v6409
    %6411 = vmatprep.subr.mxu0 0.0
    %6412 = vmatpush1.msra.mxu0 %v6391
    %6413 = vmatprep.subr.mxu0 0.0
    %6414 = vmatpush1.msra.mxu0 %v6392
    %6415 = vmatprep.subr.mxu0 0.0
    %6416 = vmatpush1.msra.mxu0 %v6393
    %6417 = vmatprep.subr.mxu0 0.0
    %6418 = vmatpush1.msra.mxu0 %v6394
    %6419 = vmatprep.subr.mxu0 0.0
    %6420 = vmatpush1.msra.mxu0 %v6395
    %6421 = vmatprep.subr.mxu0 0.0
    %6422 = vmatpush1.msra.mxu0 %v6396
    %6423 = vmatprep.subr.mxu0 0.0
    %6424 = vmatpush1.msra.mxu0 %v6397
    %6425 = vmatprep.subr.mxu0 0.0
    %6426 = vmatpush1.msra.mxu0 %v6398
    %6427 = vmatprep.subr.mxu0 0.0
    %6428 = vmatpush1.msra.mxu0 %v6399
    %6429 = vmatprep.subr.mxu0 0.0
    %6430 = vmatpush1.msra.mxu0 %v6400
    %6431 = vmatprep.subr.mxu0 0.0
    %6432 = vmatpush1.msra.mxu0 %v6401
    %6433 = vmatprep.subr.mxu0 0.0
    %6434 = vmatpush1.msra.mxu0 %v6402
    %6435 = vmatprep.subr.mxu0 0.0
    %6436 = vmatpush1.msra.mxu0 %v6403
    %6437 = vmatprep.subr.mxu0 0.0
    %6438 = vmatpush1.msra.mxu0 %v6404
    %6439 = vmatprep.subr.mxu0 0.0
    %6440 = vmatpush1.msra.mxu0 %v6405
    %6441 = vmatprep.subr.mxu0 0.0
    %6442 = vmatpush1.msra.mxu0 %v6406
    %6443 = vmatprep.subr.mxu0 0.0
    %6444 = vmatpush1.msra.mxu0 0.0
    %6445 = vmatprep.subr.mxu0 0.0
    %6446 = vmatpush1.msra.mxu0 0.0
    %6447 = vmatprep.subr.mxu0 0.0
    %6448 = vmatpush1.msra.mxu0 0.0
    %6449 = vmatprep.subr.mxu0 0.0
    %6450 = vmatpush1.msra.mxu0 0.0
    %6451 = vmatprep.subr.mxu0 0.0
    %6452 = vmatpush1.msra.mxu0 0.0
    %6453 = vmatprep.subr.mxu0 0.0
    %6454 = vmatpush1.msra.mxu0 0.0
    %6455 = vmatprep.subr.mxu0 0.0
    %6456 = vmatpush1.msra.mxu0 0.0
    %6457 = vmatprep.subr.mxu0 0.0
    %6458 = vmatpush1.msra.mxu0 0.0
    %6459 = vmatprep.subr.mxu0 0.0
    %6460 = vmatpush1.msra.mxu0 0.0
    %6461 = vmatprep.subr.mxu0 0.0
    %6462 = vmatpush1.msra.mxu0 0.0
    %6463 = vmatprep.subr.mxu0 0.0
    %6464 = vmatpush1.msra.mxu0 0.0
    %6465 = vmatprep.subr.mxu0 0.0
    %6466 = vmatpush1.msra.mxu0 0.0
    %6467 = vmatprep.subr.mxu0 0.0
    %6468 = vmatpush1.msra.mxu0 0.0
    %6469 = vmatprep.subr.mxu0 0.0
    %6470 = vmatpush1.msra.mxu0 0.0
    %6471 = vmatprep.subr.mxu0 0.0
    %6472 = vmatpush1.msra.mxu0 0.0
    %6473 = vmatprep.subr.mxu0 0.0
    %6474 = vmatpush1.msra.mxu0 0.0
    %6475 = vmatprep.mubr.f32.mxu0 0.0
    %6476 = vmatmul.mubr.f32.gmra.mrb[0].mxu0 %v6388
    %v6477 = vpop.f32.mrb[0].mxu0
    %v6478 = vadd.f32 %v6410, %v6477
    %v6479 = vpop.f32.mrb[0].mxu0
    %6480 = vmatprep.mubr.f32.mxu0 0.0
    %6481 = vmatmul.mubr.f32.gmra.mrb[0].mxu0 %v6389
    %v6482 = vpop.f32.mrb[0].mxu0
    %v6483 = vadd.f32 %v6410, %v6482
    %v6484 = vpop.f32.mrb[0].mxu0
    %6485 = vdwg.mxu0
    %v6486 = vadd.f32 %v6292, %v6478
    %v6487 = vadd.f32 %v6293, %v6483
    %v6488 = vsel %vm154, %v6486, 0.0
    %6489 = vadd.xlane.f32.xlu0 %v6488
    %v6490 = vpop.xlane.xlu0 %6489
    %v6491 = vsel %vm154, %v6487, 0.0
    %6492 = vadd.xlane.f32.xlu0 %v6491
    %v6493 = vpop.xlane.xlu0 %6492
    %v6494 = vmul.f32 %v6490, %v3066
    %v6495 = vmul.f32 %v6493, %v3066
    %v6496 = vsub.f32 %v6486, %v6494
    %v6497 = vsub.f32 %v6487, %v6495
    %v6498 = vmul.f32 %v6496, %v6496
    %v6499 = vmul.f32 %v6497, %v6497
    %v6500 = vsel %vm154, %v6498, 0.0
    %6501 = vadd.xlane.f32.xlu0 %v6500
    %v6502 = vpop.xlane.xlu0 %6501
    %v6503 = vsel %vm154, %v6499, 0.0
    %6504 = vadd.xlane.f32.xlu0 %v6503
    %v6505 = vpop.xlane.xlu0 %6504
    %v6506 = vmul.f32 %v6502, %v3066
    %v6507 = vmul.f32 %v6505, %v3066
    %v6508 = vadd.f32 %v6506, 1e-05
    %v6509 = vadd.f32 %v6507, 1e-05
    %v6510 = vrsqrt.pop %v6508
    %v6511 = vrsqrt.pop %v6509
    %v6512 = vmul.f32 %v6496, %v6510
    %v6513 = vmul.f32 %v6497, %v6511
    %v6514 = vlaneseq
    %v6515 = vshrl.u32 %v6514, 7
    %v6516 = vsub.s32 6, %v6515
    %v6517 = vrot.slane %v3330, %v6516
    %v6518 = vmul.f32 %v6512, %v6517
    %v6519 = vmul.f32 %v6513, %v6517
    %v6520 = vlaneseq
    %v6521 = vshrl.u32 %v6520, 7
    %v6522 = vsub.s32 7, %v6521
    %v6523 = vrot.slane %v3330, %v6522
    %v6524 = vadd.f32 %v6518, %v6523
    %v6525 = vadd.f32 %v6519, %v6523
    %v6526 = vsel %vm154, %v6524, 0.0
    %v6527 = vrot.slane %v6526, 4
    %v6528 = vadd.f32 %v6526, %v6527
    %v6529 = vrot.slane %v6528, 2
    %v6530 = vadd.f32 %v6528, %v6529
    %v6531 = vrot.slane %v6530, 1
    %v6532 = vadd.f32 %v6530, %v6531
    %v6533 = vsel %vm154, %v6525, 0.0
    %v6534 = vrot.slane %v6533, 4
    %v6535 = vadd.f32 %v6533, %v6534
    %v6536 = vrot.slane %v6535, 2
    %v6537 = vadd.f32 %v6535, %v6536
    %v6538 = vrot.slane %v6537, 1
    %v6539 = vadd.f32 %v6537, %v6538
    %v6540 = vrcp.pop 8.0
    %v6541 = vmul.f32 %v6532, %v6540
    %v6542 = vmul.f32 %v6539, %v6540
    %v6543 = vld [vmem:[#allocation8] sm:$0xff]
    %v6544 = vld [vmem:[#allocation8 + $0x8] sm:$0xff]
    %v6545 = vld [vmem:[#allocation8 + $0x10] sm:$0xff]
    %v6546 = vld [vmem:[#allocation8 + $0x18] sm:$0xff]
    %v6547 = vld [vmem:[#allocation8 + $0x20] sm:$0xff]
    %v6548 = vld [vmem:[#allocation8 + $0x28] sm:$0xff]
    %v6549 = vld [vmem:[#allocation8 + $0x30] sm:$0xff]
    %v6550 = vld [vmem:[#allocation8 + $0x38] sm:$0xff]
    %v6551 = vlaneseq
    %v6552 = vshrl.u32 %v6551, 7
    %v6553 = vsub.s32 2, %v6552
    %v6554 = vrot.slane %v100, %v6553
    %vm6557 = vcmask 1041409
    %v6558 = vsel %vm6557, %v6542, %v6541
    %v6559 = vsel %vm154, %v6558, 0
    %6561 = vmatprep.subr.mxu0 0.0
    %6562 = vmatpush1.msra.mxu0 %v6543
    %6563 = vmatprep.subr.mxu0 0.0
    %6564 = vmatpush1.msra.mxu0 %v6544
    %6565 = vmatprep.subr.mxu0 0.0
    %6566 = vmatpush1.msra.mxu0 %v6545
    %6567 = vmatprep.subr.mxu0 0.0
    %6568 = vmatpush1.msra.mxu0 %v6546
    %6569 = vmatprep.subr.mxu0 0.0
    %6570 = vmatpush1.msra.mxu0 %v6547
    %6571 = vmatprep.subr.mxu0 0.0
    %6572 = vmatpush1.msra.mxu0 %v6548
    %6573 = vmatprep.subr.mxu0 0.0
    %6574 = vmatpush1.msra.mxu0 %v6549
    %6575 = vmatprep.subr.mxu0 0.0
    %6576 = vmatpush1.msra.mxu0 %v6550
    %6577 = vmatprep.subr.mxu0 0.0
    %6578 = vmatpush1.msra.mxu0 0.0
    %6579 = vmatprep.subr.mxu0 0.0
    %6580 = vmatpush1.msra.mxu0 0.0
    %6581 = vmatprep.subr.mxu0 0.0
    %6582 = vmatpush1.msra.mxu0 0.0
    %6583 = vmatprep.subr.mxu0 0.0
    %6584 = vmatpush1.msra.mxu0 0.0
    %6585 = vmatprep.subr.mxu0 0.0
    %6586 = vmatpush1.msra.mxu0 0.0
    %6587 = vmatprep.subr.mxu0 0.0
    %6588 = vmatpush1.msra.mxu0 0.0
    %6589 = vmatprep.subr.mxu0 0.0
    %6590 = vmatpush1.msra.mxu0 0.0
    %6591 = vmatprep.subr.mxu0 0.0
    %6592 = vmatpush1.msra.mxu0 0.0
    %6593 = vmatprep.subr.mxu0 0.0
    %6594 = vmatpush1.msra.mxu0 0.0
    %6595 = vmatprep.subr.mxu0 0.0
    %6596 = vmatpush1.msra.mxu0 0.0
    %6597 = vmatprep.subr.mxu0 0.0
    %6598 = vmatpush1.msra.mxu0 0.0
    %6599 = vmatprep.subr.mxu0 0.0
    %6600 = vmatpush1.msra.mxu0 0.0
    %6601 = vmatprep.subr.mxu0 0.0
    %6602 = vmatpush1.msra.mxu0 0.0
    %6603 = vmatprep.subr.mxu0 0.0
    %6604 = vmatpush1.msra.mxu0 0.0
    %6605 = vmatprep.subr.mxu0 0.0
    %6606 = vmatpush1.msra.mxu0 0.0
    %6607 = vmatprep.subr.mxu0 0.0
    %6608 = vmatpush1.msra.mxu0 0.0
    %6609 = vmatprep.subr.mxu0 0.0
    %6610 = vmatpush1.msra.mxu0 0.0
    %6611 = vmatprep.subr.mxu0 0.0
    %6612 = vmatpush1.msra.mxu0 0.0
    %6613 = vmatprep.subr.mxu0 0.0
    %6614 = vmatpush1.msra.mxu0 0.0
    %6615 = vmatprep.subr.mxu0 0.0
    %6616 = vmatpush1.msra.mxu0 0.0
    %6617 = vmatprep.subr.mxu0 0.0
    %6618 = vmatpush1.msra.mxu0 0.0
    %6619 = vmatprep.subr.mxu0 0.0
    %6620 = vmatpush1.msra.mxu0 0.0
    %6621 = vmatprep.subr.mxu0 0.0
    %6622 = vmatpush1.msra.mxu0 0.0
    %6623 = vmatprep.subr.mxu0 0.0
    %6624 = vmatpush1.msra.mxu0 0.0
    %6625 = vmatprep.mubr.f32.mxu0 0.0
    %6626 = vmatmul.mubr.f32.gmra.mrb[0].mxu0 %v6559
    %v6627 = vpop.f32.mrb[0].mxu0
    %v6628 = vadd.f32 %v6554, %v6627
    %v6629 = vpop.f32.mrb[0].mxu0
    %6630 = vdwg.mxu0
    %v6631 = vmax.f32 %v6628, 0.0
    %v6632 = vld [vmem:[#allocation10] sm:$0xff]
    %v6633 = vld [vmem:[#allocation10 + $0x8] sm:$0xff]
    %v6634 = vld [vmem:[#allocation10 + $0x10] sm:$0xff]
    %v6635 = vld [vmem:[#allocation10 + $0x18] sm:$0xff]
    %v6636 = vld [vmem:[#allocation10 + $0x20] sm:$0xff]
    %v6637 = vld [vmem:[#allocation10 + $0x28] sm:$0xff]
    %v6638 = vld [vmem:[#allocation10 + $0x30] sm:$0xff]
    %v6639 = vld [vmem:[#allocation10 + $0x38] sm:$0xff]
    %v6640 = vlaneseq
    %v6641 = vshrl.u32 %v6640, 7
    %v6642 = vsub.s32 3, %v6641
    %v6643 = vrot.slane %v100, %v6642
    %v6645 = vsel %vm154, %v6631, 0
    %6647 = vmatprep.subr.mxu0 0.0
    %6648 = vmatpush1.msra.mxu0 %v6632
    %6649 = vmatprep.subr.mxu0 0.0
    %6650 = vmatpush1.msra.mxu0 %v6633
    %6651 = vmatprep.subr.mxu0 0.0
    %6652 = vmatpush1.msra.mxu0 %v6634
    %6653 = vmatprep.subr.mxu0 0.0
    %6654 = vmatpush1.msra.mxu0 %v6635
    %6655 = vmatprep.subr.mxu0 0.0
    %6656 = vmatpush1.msra.mxu0 %v6636
    %6657 = vmatprep.subr.mxu0 0.0
    %6658 = vmatpush1.msra.mxu0 %v6637
    %6659 = vmatprep.subr.mxu0 0.0
    %6660 = vmatpush1.msra.mxu0 %v6638
    %6661 = vmatprep.subr.mxu0 0.0
    %6662 = vmatpush1.msra.mxu0 %v6639
    %6663 = vmatprep.subr.mxu0 0.0
    %6664 = vmatpush1.msra.mxu0 0.0
    %6665 = vmatprep.subr.mxu0 0.0
    %6666 = vmatpush1.msra.mxu0 0.0
    %6667 = vmatprep.subr.mxu0 0.0
    %6668 = vmatpush1.msra.mxu0 0.0
    %6669 = vmatprep.subr.mxu0 0.0
    %6670 = vmatpush1.msra.mxu0 0.0
    %6671 = vmatprep.subr.mxu0 0.0
    %6672 = vmatpush1.msra.mxu0 0.0
    %6673 = vmatprep.subr.mxu0 0.0
    %6674 = vmatpush1.msra.mxu0 0.0
    %6675 = vmatprep.subr.mxu0 0.0
    %6676 = vmatpush1.msra.mxu0 0.0
    %6677 = vmatprep.subr.mxu0 0.0
    %6678 = vmatpush1.msra.mxu0 0.0
    %6679 = vmatprep.subr.mxu0 0.0
    %6680 = vmatpush1.msra.mxu0 0.0
    %6681 = vmatprep.subr.mxu0 0.0
    %6682 = vmatpush1.msra.mxu0 0.0
    %6683 = vmatprep.subr.mxu0 0.0
    %6684 = vmatpush1.msra.mxu0 0.0
    %6685 = vmatprep.subr.mxu0 0.0
    %6686 = vmatpush1.msra.mxu0 0.0
    %6687 = vmatprep.subr.mxu0 0.0
    %6688 = vmatpush1.msra.mxu0 0.0
    %6689 = vmatprep.subr.mxu0 0.0
    %6690 = vmatpush1.msra.mxu0 0.0
    %6691 = vmatprep.subr.mxu0 0.0
    %6692 = vmatpush1.msra.mxu0 0.0
    %6693 = vmatprep.subr.mxu0 0.0
    %6694 = vmatpush1.msra.mxu0 0.0
    %6695 = vmatprep.subr.mxu0 0.0
    %6696 = vmatpush1.msra.mxu0 0.0
    %6697 = vmatprep.subr.mxu0 0.0
    %6698 = vmatpush1.msra.mxu0 0.0
    %6699 = vmatprep.subr.mxu0 0.0
    %6700 = vmatpush1.msra.mxu0 0.0
    %6701 = vmatprep.subr.mxu0 0.0
    %6702 = vmatpush1.msra.mxu0 0.0
    %6703 = vmatprep.subr.mxu0 0.0
    %6704 = vmatpush1.msra.mxu0 0.0
    %6705 = vmatprep.subr.mxu0 0.0
    %6706 = vmatpush1.msra.mxu0 0.0
    %6707 = vmatprep.subr.mxu0 0.0
    %6708 = vmatpush1.msra.mxu0 0.0
    %6709 = vmatprep.subr.mxu0 0.0
    %6710 = vmatpush1.msra.mxu0 0.0
    %6711 = vmatprep.mubr.f32.mxu0 0.0
    %6712 = vmatmul.mubr.f32.gmra.mrb[0].mxu0 %v6645
    %v6713 = vpop.f32.mrb[0].mxu0
    %v6714 = vadd.f32 %v6643, %v6713
    %v6715 = vpop.f32.mrb[0].mxu0
    %6716 = vdwg.mxu0
    %6717 = vst [vmem:[#allocation11] sm:$0x3] %v6714
    // Predicated region
    $region62: #{tpu_custom_call.1} parent=1 // pred_check
      _
    $region63: #{tpu_custom_call.1} parent=1 // pred_check_branch
      %6719 = sbr.rel (0) target = $region65
    $region64: #{tpu_custom_call.1} parent=1 // pred_region
      %s6721 = ssub.s32 32, 32
      %6722 = vsyncadd [#allocation4], %s6721
      %s6724 = sshll.u32 [#allocation11], 4
      %s6725 = int_to_ptr.vmem [resolvable:$true] %s6724
      %6727 = dma.vmem_to_hbm [thread:$0]  %s6725, 32, %s10, [#allocation4]
    $region65: #{tpu_custom_call.1} parent=1 // pred_fallthru
      _
    // Predicated region
    $region66: #{tpu_custom_call.1} parent=1 // pred_check
      _
    $region67: #{tpu_custom_call.1} parent=1 // pred_check_branch
      %6729 = sbr.rel (0) target = $region69
    $region68: #{tpu_custom_call.1} parent=1 // pred_region
      %6730 = dma.done [#allocation4], 32
    $region69: #{tpu_custom_call.1} parent=1 // pred_fallthru
      _
    %6731 = vsyncpa [#allocation3], 1
    %6732 = vsyncpa [#allocation6], 1
    %6733 = vsyncpa [#allocation9], 1
    %6734 = vsyncpa [#allocation4], 1

</llo_original>
